<compile_context>
chip_gen: v6e
topology: v6e:2x2x1
jax: 0.10.0
libtpu: 0.0.40
codegen_flags: <defaults>
</compile_context>

<pallas_src>
import functools

import jax
import jax.numpy as jnp
from jax.experimental import pallas as pl
from jax.experimental.pallas import tpu as pltpu

BN_EPS = 1e-5
N = 4                       # CNN(n=4)
IMG_H, IMG_W = 448, 224     # fc1 expects n*8*28*14 features => H/16=28, W/16=14
_CPS = (8, 8, 8, 16)        # per-stage input channels padded to sublane multiples


def _run_stage(src_ref, wa_ref, bsd_ref, se_ref, write_row, *, Hi, Wi, Cp, Cout):
    """One conv3x3(pad=1)+bias+relu+BN(eval)+maxpool2x2 stage for one image.

    src_ref : ((Hi+2)*Cp, Wi+2) bf16  zero-padded input, row index = (row, channel)
    wa_ref  : (3, Cout, 3*Cp)   bf16  taps folded over kh, one matrix per kw
    bsd_ref : (3, Cout, 1)      f32   [conv bias, bn scale, bn shift]
    se_ref  : (Wi-1, Wi//2)     bf16  exact 0/1 even-column selection matrix
    write_row(hp, pooled_bf16)        stores one pooled row (Cout, Wi//2)
    """
    K = 3 * Cp
    a0 = wa_ref[0]
    a1 = wa_ref[1]
    a2 = wa_ref[2]
    # Hoist per-channel broadcasts out of the row loop (broadcasts aren't CSEd).
    bias = jnp.broadcast_to(bsd_ref[0], (Cout, Wi))
    scale = jnp.broadcast_to(bsd_ref[1], (Cout, Wi))
    shift = jnp.broadcast_to(bsd_ref[2], (Cout, Wi))

    def conv_row(h):
        # One aligned load of the 3 padded input rows (all channels), then the
        # kw=0/1/2 taps are in-register lane shifts of that single slab.
        base = pl.multiple_of(h * Cp, Cp)
        slab = src_ref[pl.ds(base, K), :]                       # (3*Cp, Wi+2)
        acc = jnp.dot(a0, slab[:, 0:Wi],
                      preferred_element_type=jnp.float32)
        acc = acc + jnp.dot(a1, slab[:, 1:Wi + 1],
                            preferred_element_type=jnp.float32)
        acc = acc + jnp.dot(a2, slab[:, 2:Wi + 2],
                            preferred_element_type=jnp.float32)
        y = jnp.maximum(acc + bias, 0.0)                        # bias + relu
        return y * scale + shift                                # folded eval BN

    def body(hp, carry):
        z0 = conv_row(2 * hp)
        z1 = conv_row(2 * hp + 1)
        m = jnp.maximum(z0, z1)                                 # pool over H
        mm = jnp.maximum(m[:, :-1], m[:, 1:])                   # adjacent-pair max
        pooled = jnp.dot(mm.astype(jnp.bfloat16), se_ref[...],
                         preferred_element_type=jnp.float32)    # even columns
        write_row(hp, pooled.astype(jnp.bfloat16))
        return carry

    jax.lax.fori_loop(0, Hi // 2, body, 0)


def _fused_cnn_kernel(x_ref, *refs, dims):
    """All four conv stages for one image (one grid step)."""
    wa = refs[0:4]
    bsd = refs[4:8]
    se = refs[8:12]
    o_ref = refs[12]
    act = refs[13:16]            # padded input scratches for stages 2..4

    # Zeroing provides the conv zero padding (borders) and zero channel
    # padding; interiors are fully overwritten below.
    for a in act:
        a[...] = jnp.zeros_like(a)

    srcs = (x_ref,) + tuple(act)
    for s in range(4):
        Hi, Wi, Cp, Cout = dims[s]
        WO = Wi // 2
        if s < 3:
            nxt_ref = act[s]
            nxt_cp = dims[s + 1][2]

            def write_row(hp, pooled, _ref=nxt_ref, _cp=nxt_cp, _co=Cout, _wo=WO):
                # Pooled row -> interior of next stage's padded scratch.
                _ref[pl.ds((hp + 1) * _cp, _co), pl.ds(1, _wo)] = pooled
        else:

            def write_row(hp, pooled):
                o_ref[hp] = pooled                              # (Cout, WO) tile

        _run_stage(srcs[s], wa[s], bsd[s], se[s], write_row,
                   Hi=Hi, Wi=Wi, Cp=Cp, Cout=Cout)


def fused_cnn(xprep, conv_wa, conv_bsd, se_mats, *, img_h, img_w):
    """xprep: (B, (H+2)*Cp1, W+2) bf16 padded image -> (B, 28, 32, 14) bf16."""
    B = xprep.shape[0]
    dims = []
    hi, wi = img_h, img_w
    for wa in conv_wa:
        cout, cp = wa.shape[1], wa.shape[2] // 3
        dims.append((hi, wi, cp, cout))
        hi //= 2
        wi //= 2
    hp_out, wo_out, co_out = dims[-1][0] // 2, dims[-1][1] // 2, dims[-1][3]

    in_specs = [pl.BlockSpec((None,) + xprep.shape[1:], lambda b: (b, 0, 0))]
    for w in conv_wa:
        in_specs.append(pl.BlockSpec(w.shape, lambda b: (0, 0, 0)))
    for p in conv_bsd:
        in_specs.append(pl.BlockSpec(p.shape, lambda b: (0, 0, 0)))
    for s in se_mats:
        in_specs.append(pl.BlockSpec(s.shape, lambda b: (0, 0)))

    scratch = [pltpu.VMEM(((h + 2) * c, w + 2), jnp.bfloat16)
               for (h, w, c, _) in dims[1:]]

    kernel = functools.partial(_fused_cnn_kernel, dims=tuple(dims))
    return pl.pallas_call(
        kernel,
        out_shape=jax.ShapeDtypeStruct((B, hp_out, co_out, wo_out), jnp.bfloat16),
        grid_spec=pltpu.PrefetchScalarGridSpec(
            num_scalar_prefetch=0,
            grid=(B,),
            in_specs=in_specs,
            out_specs=pl.BlockSpec((None, hp_out, co_out, wo_out),
                                   lambda b: (b, 0, 0, 0)),
            scratch_shapes=scratch,
        ),
        compiler_params=pltpu.CompilerParams(
            dimension_semantics=("parallel",),
            vmem_limit_bytes=32 * 1024 * 1024,
        ),
    )(xprep, *conv_wa, *conv_bsd, *se_mats)


def _mlp_kernel(x_ref, w1_ref, b1_ref, w2_ref, b2_ref, o_ref):
    h = jnp.dot(x_ref[...], w1_ref[...],
                preferred_element_type=jnp.float32) + b1_ref[...]
    o_ref[...] = (jnp.dot(h, w2_ref[...], preferred_element_type=jnp.float32)
                  + b2_ref[...]).astype(o_ref.dtype)


def mlp_head(x, w1, b1, w2, b2):
    """x: (B, K) bf16 -> (B, 2) f32; fc1 then fc2 (no activation, per reference)."""
    B, K = x.shape
    Hd = w1.shape[1]
    O = w2.shape[1]
    return pl.pallas_call(
        _mlp_kernel,
        out_shape=jax.ShapeDtypeStruct((B, O), jnp.float32),
        grid_spec=pltpu.PrefetchScalarGridSpec(
            num_scalar_prefetch=0,
            grid=(1,),
            in_specs=[
                pl.BlockSpec((B, K), lambda i: (0, 0)),
                pl.BlockSpec((K, Hd), lambda i: (0, 0)),
                pl.BlockSpec((1, Hd), lambda i: (0, 0)),
                pl.BlockSpec((Hd, O), lambda i: (0, 0)),
                pl.BlockSpec((1, O), lambda i: (0, 0)),
            ],
            out_specs=pl.BlockSpec((B, O), lambda i: (0, 0)),
        ),
        compiler_params=pltpu.CompilerParams(
            dimension_semantics=("arbitrary",),
            vmem_limit_bytes=32 * 1024 * 1024,
        ),
    )(x, w1, b1, w2, b2)


def init_params(key, n=N):
    """Parameters in PyTorch layouts (Conv2d weight = (Cout, Cin, 3, 3))."""
    keys = iter(jax.random.split(key, 32))

    def nk():
        return next(keys)

    conv_layers = []
    for cin, cout in [(3, n), (n, 2 * n), (2 * n, 4 * n), (4 * n, 8 * n)]:
        bound = 1.0 / float(cin * 9) ** 0.5
        conv_layers.append(dict(
            w=jax.random.uniform(nk(), (cout, cin, 3, 3), jnp.float32, -bound, bound),
            b=jax.random.uniform(nk(), (cout,), jnp.float32, -bound, bound),
            gamma=1.0 + 0.1 * jax.random.normal(nk(), (cout,), jnp.float32),
            beta=0.1 * jax.random.normal(nk(), (cout,), jnp.float32),
            mean=0.1 * jax.random.normal(nk(), (cout,), jnp.float32),
            var=1.0 + 0.1 * jax.random.uniform(nk(), (cout,), jnp.float32),
        ))

    fin = n * 8 * 28 * 14
    bd1 = 1.0 / float(fin) ** 0.5
    fc1_w = jax.random.uniform(nk(), (fin, 100), jnp.float32, -bd1, bd1)
    fc1_b = jax.random.uniform(nk(), (100,), jnp.float32, -bd1, bd1)
    bd2 = 1.0 / 10.0
    fc2_w = jax.random.uniform(nk(), (100, 2), jnp.float32, -bd2, bd2)
    fc2_b = jax.random.uniform(nk(), (2,), jnp.float32, -bd2, bd2)
    return dict(conv_layers=conv_layers, fc1_w=fc1_w, fc1_b=fc1_b,
                fc2_w=fc2_w, fc2_b=fc2_b)


def prepare_params(params, n=N, img_h=IMG_H, img_w=IMG_W):
    """Fold / permute / cast all weights ONCE, outside the jitted forward."""
    conv_wa, conv_bsd, se_mats = [], [], []
    wi = img_w
    for layer, cp in zip(params["conv_layers"], _CPS):
        w = layer["w"]                                  # (Cout, Cin, 3, 3)
        cout, cin = w.shape[0], w.shape[1]
        # A[kw, co, kh*Cp + ci] = w[co, ci, kh, kw]; zero-pad ci up to Cp.
        wp = jnp.pad(w, ((0, 0), (0, cp - cin), (0, 0), (0, 0)))
        wa = jnp.transpose(wp, (3, 0, 2, 1)).reshape(3, cout, 3 * cp)
        conv_wa.append(wa.astype(jnp.bfloat16))
        # Eval-mode batchnorm folded to per-channel scale/shift.
        inv = 1.0 / jnp.sqrt(layer["var"] + BN_EPS)
        scale = layer["gamma"] * inv
        shift = layer["beta"] - layer["mean"] * scale
        conv_bsd.append(jnp.stack([layer["b"], scale, shift])
                        .reshape(3, cout, 1).astype(jnp.float32))
        # Exact 0/1 even-column maxpool selection matrix: se[w, wp] = (w == 2wp).
        se_mats.append((jnp.arange(wi - 1)[:, None] ==
                        2 * jnp.arange(wi // 2)[None, :]).astype(jnp.bfloat16))
        wi //= 2

    # fc1: permute rows from torch (c, h, w) flatten order to the kernel's
    # (h, c, w) feature order, pre-cast to bf16.
    c4, h4, w4 = n * 8, img_h // 16, img_w // 16
    w1 = params["fc1_w"].reshape(c4, h4, w4, -1).transpose(1, 0, 2, 3)
    w1 = w1.reshape(c4 * h4 * w4, -1).astype(jnp.bfloat16)
    return dict(
        conv_wa=tuple(conv_wa), conv_bsd=tuple(conv_bsd), se=tuple(se_mats),
        fc1_w=w1,
        fc1_b=params["fc1_b"].reshape(1, -1).astype(jnp.float32),
        fc2_w=params["fc2_w"].astype(jnp.float32),
        fc2_b=params["fc2_b"].reshape(1, -1).astype(jnp.float32),
    )


def cnn_forward(img, prep):
    # img: (B, 3, H, W) NCHW float32
    B, C, H, W = img.shape
    cp1 = prep["conv_wa"][0].shape[2] // 3
    # Only XLA-side prep: NCHW -> (row, channel, width), pad H/W by 1 and
    # channels to cp1, cast bf16, flatten (row, channel) into sublanes.
    x = jnp.transpose(img.astype(jnp.bfloat16), (0, 2, 1, 3))     # (B, H, C, W)
    x = jnp.pad(x, ((0, 0), (1, 1), (0, cp1 - C), (1, 1)))        # (B, H+2, cp1, W+2)
    x = x.reshape(B, (H + 2) * cp1, W + 2)
    feats = fused_cnn(x, prep["conv_wa"], prep["conv_bsd"], prep["se"],
                      img_h=H, img_w=W)                           # (B, 28, 32, 14)
    feats = feats.reshape(B, -1)                                  # (h, c, w) order
    return mlp_head(feats, prep["fc1_w"], prep["fc1_b"],
                    prep["fc2_w"], prep["fc2_b"])


if __name__ == "__main__":
    key = jax.random.PRNGKey(0)
    k_img, k_par = jax.random.split(key)
    img = jax.random.normal(k_img, (2, 3, IMG_H, IMG_W), jnp.float32)
    params = init_params(k_par)
    prep = prepare_params(params)        # one-time weight folding / bf16 cast

    out = jax.jit(cnn_forward)(img, prep)
    out = jax.block_until_ready(out)
    assert out.shape == (2, 2) and out.dtype == jnp.float32
    assert bool(jnp.all(jnp.isfinite(out)))
    print("KERNEL_OK")
</pallas_src>

<mosaic_0001>
module attributes {stable_mosaic.version = 11 : i64} {
  func.func @_fused_cnn_kernel(%arg0: i32, %arg1: memref<1x3600x226xbf16, #tpu.memory_space<vmem>>, %arg2: memref<3x4x24xbf16, #tpu.memory_space<vmem>>, %arg3: memref<3x8x24xbf16, #tpu.memory_space<vmem>>, %arg4: memref<3x16x24xbf16, #tpu.memory_space<vmem>>, %arg5: memref<3x32x48xbf16, #tpu.memory_space<vmem>>, %arg6: memref<3x4x1xf32, #tpu.memory_space<vmem>>, %arg7: memref<3x8x1xf32, #tpu.memory_space<vmem>>, %arg8: memref<3x16x1xf32, #tpu.memory_space<vmem>>, %arg9: memref<3x32x1xf32, #tpu.memory_space<vmem>>, %arg10: memref<223x112xbf16, #tpu.memory_space<vmem>>, %arg11: memref<111x56xbf16, #tpu.memory_space<vmem>>, %arg12: memref<55x28xbf16, #tpu.memory_space<vmem>>, %arg13: memref<27x14xbf16, #tpu.memory_space<vmem>>, %arg14: memref<1x28x32x14xbf16, #tpu.memory_space<vmem>>, %arg15: memref<1808x114xbf16, #tpu.memory_space<vmem>>, %arg16: memref<912x58xbf16, #tpu.memory_space<vmem>>, %arg17: memref<928x30xbf16, #tpu.memory_space<vmem>>) attributes {dimension_semantics = [#tpu.dimension_semantics<parallel>], iteration_bounds = array<i64: 2>, scalar_prefetch = 0 : i64, scratch_operands = 3 : i64, tpu.core_type = #tpu.core_type<tc>, window_params = [{transform_indices = @transform_0, window_bounds = array<i64: 1, 3600, 226>}, {pipeline_mode = #tpu.pipeline_mode<synchronous>, transform_indices = @transform_1, window_bounds = array<i64: 3, 4, 24>}, {pipeline_mode = #tpu.pipeline_mode<synchronous>, transform_indices = @transform_2, window_bounds = array<i64: 3, 8, 24>}, {pipeline_mode = #tpu.pipeline_mode<synchronous>, transform_indices = @transform_3, window_bounds = array<i64: 3, 16, 24>}, {pipeline_mode = #tpu.pipeline_mode<synchronous>, transform_indices = @transform_4, window_bounds = array<i64: 3, 32, 48>}, {pipeline_mode = #tpu.pipeline_mode<synchronous>, transform_indices = @transform_5, window_bounds = array<i64: 3, 4, 1>}, {pipeline_mode = #tpu.pipeline_mode<synchronous>, transform_indices = @transform_6, window_bounds = array<i64: 3, 8, 1>}, {pipeline_mode = #tpu.pipeline_mode<synchronous>, transform_indices = @transform_7, window_bounds = array<i64: 3, 16, 1>}, {pipeline_mode = #tpu.pipeline_mode<synchronous>, transform_indices = @transform_8, window_bounds = array<i64: 3, 32, 1>}, {pipeline_mode = #tpu.pipeline_mode<synchronous>, transform_indices = @transform_9, window_bounds = array<i64: 223, 112>}, {pipeline_mode = #tpu.pipeline_mode<synchronous>, transform_indices = @transform_10, window_bounds = array<i64: 111, 56>}, {pipeline_mode = #tpu.pipeline_mode<synchronous>, transform_indices = @transform_11, window_bounds = array<i64: 55, 28>}, {pipeline_mode = #tpu.pipeline_mode<synchronous>, transform_indices = @transform_12, window_bounds = array<i64: 27, 14>}, {transform_indices = @transform_13, window_bounds = array<i64: 1, 28, 32, 14>}]} {
    %cst = arith.constant 0.000000e+00 : bf16
    %0 = vector.broadcast %cst : bf16 to vector<1808x114xbf16>
    %c0 = arith.constant 0 : index
    %c0_0 = arith.constant 0 : index
    %1 = vector.load %arg15[%c0, %c0_0] : memref<1808x114xbf16, #tpu.memory_space<vmem>>, vector<1808x114xbf16>
    tpu.vector_store %arg15[%c0, %c0_0], %0 {strides = array<i32>} : memref<1808x114xbf16, #tpu.memory_space<vmem>>, vector<1808x114xbf16>,
    %cst_1 = arith.constant 0.000000e+00 : bf16
    %2 = vector.broadcast %cst_1 : bf16 to vector<912x58xbf16>
    %c0_2 = arith.constant 0 : index
    %c0_3 = arith.constant 0 : index
    %3 = vector.load %arg16[%c0_2, %c0_3] : memref<912x58xbf16, #tpu.memory_space<vmem>>, vector<912x58xbf16>
    tpu.vector_store %arg16[%c0_2, %c0_3], %2 {strides = array<i32>} : memref<912x58xbf16, #tpu.memory_space<vmem>>, vector<912x58xbf16>,
    %cst_4 = arith.constant 0.000000e+00 : bf16
    %4 = vector.broadcast %cst_4 : bf16 to vector<928x30xbf16>
    %c0_5 = arith.constant 0 : index
    %c0_6 = arith.constant 0 : index
    %5 = vector.load %arg17[%c0_5, %c0_6] : memref<928x30xbf16, #tpu.memory_space<vmem>>, vector<928x30xbf16>
    tpu.vector_store %arg17[%c0_5, %c0_6], %4 {strides = array<i32>} : memref<928x30xbf16, #tpu.memory_space<vmem>>, vector<928x30xbf16>,
    %c0_7 = arith.constant 0 : index
    %c0_8 = arith.constant 0 : index
    %c0_9 = arith.constant 0 : index
    %6 = vector.load %arg2[%c0_7, %c0_8, %c0_9] : memref<3x4x24xbf16, #tpu.memory_space<vmem>>, vector<1x4x24xbf16>
    %7 = vector.shape_cast %6 : vector<1x4x24xbf16> to vector<4x24xbf16>
    %c1 = arith.constant 1 : index
    %c0_10 = arith.constant 0 : index
    %c0_11 = arith.constant 0 : index
    %8 = vector.load %arg2[%c1, %c0_10, %c0_11] : memref<3x4x24xbf16, #tpu.memory_space<vmem>>, vector<1x4x24xbf16>
    %9 = vector.shape_cast %8 : vector<1x4x24xbf16> to vector<4x24xbf16>
    %c2 = arith.constant 2 : index
    %c0_12 = arith.constant 0 : index
    %c0_13 = arith.constant 0 : index
    %10 = vector.load %arg2[%c2, %c0_12, %c0_13] : memref<3x4x24xbf16, #tpu.memory_space<vmem>>, vector<1x4x24xbf16>
    %11 = vector.shape_cast %10 : vector<1x4x24xbf16> to vector<4x24xbf16>
    %c0_14 = arith.constant 0 : index
    %c0_15 = arith.constant 0 : index
    %c0_16 = arith.constant 0 : index
    %12 = vector.load %arg6[%c0_14, %c0_15, %c0_16] : memref<3x4x1xf32, #tpu.memory_space<vmem>>, vector<1x4x1xf32>
    %13 = vector.shape_cast %12 : vector<1x4x1xf32> to vector<4x1xf32>
    %14 = vector.shape_cast %13 : vector<4x1xf32> to vector<4x1xf32>
    %15 = vector.broadcast %14 : vector<4x1xf32> to vector<4x224xf32>
    %c1_17 = arith.constant 1 : index
    %c0_18 = arith.constant 0 : index
    %c0_19 = arith.constant 0 : index
    %16 = vector.load %arg6[%c1_17, %c0_18, %c0_19] : memref<3x4x1xf32, #tpu.memory_space<vmem>>, vector<1x4x1xf32>
    %17 = vector.shape_cast %16 : vector<1x4x1xf32> to vector<4x1xf32>
    %18 = vector.shape_cast %17 : vector<4x1xf32> to vector<4x1xf32>
    %19 = vector.broadcast %18 : vector<4x1xf32> to vector<4x224xf32>
    %c2_20 = arith.constant 2 : index
    %c0_21 = arith.constant 0 : index
    %c0_22 = arith.constant 0 : index
    %20 = vector.load %arg6[%c2_20, %c0_21, %c0_22] : memref<3x4x1xf32, #tpu.memory_space<vmem>>, vector<1x4x1xf32>
    %21 = vector.shape_cast %20 : vector<1x4x1xf32> to vector<4x1xf32>
    %22 = vector.shape_cast %21 : vector<4x1xf32> to vector<4x1xf32>
    %23 = vector.broadcast %22 : vector<4x1xf32> to vector<4x224xf32>
    %c0_i32 = arith.constant 0 : i32
    %c224_i32 = arith.constant 224 : i32
    %24 = arith.addi %c0_i32, %c224_i32 : i32
    %c1_i32 = arith.constant 1 : i32
    scf.for %arg18 = %c0_i32 to %24 step %c1_i32  : i32 {
      %c2_i32 = arith.constant 2 : i32
      %82 = arith.muli %c2_i32, %arg18 : i32
      %c8_i32 = arith.constant 8 : i32
      %83 = arith.muli %82, %c8_i32 : i32
      %84 = tpu.assume_multiple %83, 8 : i32
      %c0_87 = arith.constant 0 : index
      %85 = arith.index_cast %84 : i32 to index
      %c0_88 = arith.constant 0 : index
      %86 = vector.load %arg1[%c0_87, %85, %c0_88] : memref<1x3600x226xbf16, #tpu.memory_space<vmem>>, vector<1x24x226xbf16>
      %87 = vector.shape_cast %86 : vector<1x24x226xbf16> to vector<24x226xbf16>
      %88 = vector.extract_strided_slice %87 {offsets = [0, 0], sizes = [24, 224], strides = [1, 1]} : vector<24x226xbf16> to vector<24x224xbf16>
      %cst_89 = arith.constant dense<0.000000e+00> : vector<4x224xf32>
      %89 = tpu.matmul %7, %88, %cst_89 {dimension_numbers = #tpu.dot_dimension_numbers<[1], [0], [0], [1], [0, 0, 1, 1], [], []>} : vector<4x24xbf16>, vector<24x224xbf16>, vector<4x224xf32> -> vector<4x224xf32>
      %90 = vector.extract_strided_slice %87 {offsets = [0, 1], sizes = [24, 224], strides = [1, 1]} : vector<24x226xbf16> to vector<24x224xbf16>
      %cst_90 = arith.constant dense<0.000000e+00> : vector<4x224xf32>
      %91 = tpu.matmul %9, %90, %cst_90 {dimension_numbers = #tpu.dot_dimension_numbers<[1], [0], [0], [1], [0, 0, 1, 1], [], []>} : vector<4x24xbf16>, vector<24x224xbf16>, vector<4x224xf32> -> vector<4x224xf32>
      %92 = arith.addf %89, %91 : vector<4x224xf32>
      %93 = vector.extract_strided_slice %87 {offsets = [0, 2], sizes = [24, 224], strides = [1, 1]} : vector<24x226xbf16> to vector<24x224xbf16>
      %cst_91 = arith.constant dense<0.000000e+00> : vector<4x224xf32>
      %94 = tpu.matmul %11, %93, %cst_91 {dimension_numbers = #tpu.dot_dimension_numbers<[1], [0], [0], [1], [0, 0, 1, 1], [], []>} : vector<4x24xbf16>, vector<24x224xbf16>, vector<4x224xf32> -> vector<4x224xf32>
      %95 = arith.addf %92, %94 : vector<4x224xf32>
      %96 = arith.addf %95, %15 : vector<4x224xf32>
      %cst_92 = arith.constant 0.000000e+00 : f32
      %97 = vector.broadcast %cst_92 : f32 to vector<4x224xf32>
      %98 = arith.maximumf %96, %97 : vector<4x224xf32>
      %99 = arith.mulf %98, %19 : vector<4x224xf32>
      %100 = arith.addf %99, %23 : vector<4x224xf32>
      %c2_i32_93 = arith.constant 2 : i32
      %101 = arith.muli %c2_i32_93, %arg18 : i32
      %c1_i32_94 = arith.constant 1 : i32
      %102 = arith.addi %101, %c1_i32_94 : i32
      %c8_i32_95 = arith.constant 8 : i32
      %103 = arith.muli %102, %c8_i32_95 : i32
      %104 = tpu.assume_multiple %103, 8 : i32
      %c0_96 = arith.constant 0 : index
      %105 = arith.index_cast %104 : i32 to index
      %c0_97 = arith.constant 0 : index
      %106 = vector.load %arg1[%c0_96, %105, %c0_97] : memref<1x3600x226xbf16, #tpu.memory_space<vmem>>, vector<1x24x226xbf16>
      %107 = vector.shape_cast %106 : vector<1x24x226xbf16> to vector<24x226xbf16>
      %108 = vector.extract_strided_slice %107 {offsets = [0, 0], sizes = [24, 224], strides = [1, 1]} : vector<24x226xbf16> to vector<24x224xbf16>
      %cst_98 = arith.constant dense<0.000000e+00> : vector<4x224xf32>
      %109 = tpu.matmul %7, %108, %cst_98 {dimension_numbers = #tpu.dot_dimension_numbers<[1], [0], [0], [1], [0, 0, 1, 1], [], []>} : vector<4x24xbf16>, vector<24x224xbf16>, vector<4x224xf32> -> vector<4x224xf32>
      %110 = vector.extract_strided_slice %107 {offsets = [0, 1], sizes = [24, 224], strides = [1, 1]} : vector<24x226xbf16> to vector<24x224xbf16>
      %cst_99 = arith.constant dense<0.000000e+00> : vector<4x224xf32>
      %111 = tpu.matmul %9, %110, %cst_99 {dimension_numbers = #tpu.dot_dimension_numbers<[1], [0], [0], [1], [0, 0, 1, 1], [], []>} : vector<4x24xbf16>, vector<24x224xbf16>, vector<4x224xf32> -> vector<4x224xf32>
      %112 = arith.addf %109, %111 : vector<4x224xf32>
      %113 = vector.extract_strided_slice %107 {offsets = [0, 2], sizes = [24, 224], strides = [1, 1]} : vector<24x226xbf16> to vector<24x224xbf16>
      %cst_100 = arith.constant dense<0.000000e+00> : vector<4x224xf32>
      %114 = tpu.matmul %11, %113, %cst_100 {dimension_numbers = #tpu.dot_dimension_numbers<[1], [0], [0], [1], [0, 0, 1, 1], [], []>} : vector<4x24xbf16>, vector<24x224xbf16>, vector<4x224xf32> -> vector<4x224xf32>
      %115 = arith.addf %112, %114 : vector<4x224xf32>
      %116 = arith.addf %115, %15 : vector<4x224xf32>
      %cst_101 = arith.constant 0.000000e+00 : f32
      %117 = vector.broadcast %cst_101 : f32 to vector<4x224xf32>
      %118 = arith.maximumf %116, %117 : vector<4x224xf32>
      %119 = arith.mulf %118, %19 : vector<4x224xf32>
      %120 = arith.addf %119, %23 : vector<4x224xf32>
      %121 = arith.maximumf %100, %120 : vector<4x224xf32>
      %122 = vector.extract_strided_slice %121 {offsets = [0, 0], sizes = [4, 223], strides = [1, 1]} : vector<4x224xf32> to vector<4x223xf32>
      %123 = vector.extract_strided_slice %121 {offsets = [0, 1], sizes = [4, 223], strides = [1, 1]} : vector<4x224xf32> to vector<4x223xf32>
      %124 = arith.maximumf %122, %123 : vector<4x223xf32>
      %125 = arith.truncf %124 : vector<4x223xf32> to vector<4x223xbf16>
      %c0_102 = arith.constant 0 : index
      %c0_103 = arith.constant 0 : index
      %126 = vector.load %arg10[%c0_102, %c0_103] : memref<223x112xbf16, #tpu.memory_space<vmem>>, vector<223x112xbf16>
      %cst_104 = arith.constant dense<0.000000e+00> : vector<4x112xf32>
      %127 = tpu.matmul %125, %126, %cst_104 {dimension_numbers = #tpu.dot_dimension_numbers<[1], [0], [0], [1], [0, 0, 1, 1], [], []>} : vector<4x223xbf16>, vector<223x112xbf16>, vector<4x112xf32> -> vector<4x112xf32>
      %128 = arith.truncf %127 : vector<4x112xf32> to vector<4x112xbf16>
      %c1_i32_105 = arith.constant 1 : i32
      %129 = arith.addi %arg18, %c1_i32_105 : i32
      %c8_i32_106 = arith.constant 8 : i32
      %130 = arith.muli %129, %c8_i32_106 : i32
      %131 = arith.index_cast %130 : i32 to index
      %c1_107 = arith.constant 1 : index
      %132 = vector.load %arg15[%131, %c1_107] : memref<1808x114xbf16, #tpu.memory_space<vmem>>, vector<4x112xbf16>
      tpu.vector_store %arg15[%131, %c1_107], %128 {strides = array<i32>} : memref<1808x114xbf16, #tpu.memory_space<vmem>>, vector<4x112xbf16>,
    }
    %c224_i32_23 = arith.constant 224 : i32
    %c0_24 = arith.constant 0 : index
    %c0_25 = arith.constant 0 : index
    %c0_26 = arith.constant 0 : index
    %25 = vector.load %arg3[%c0_24, %c0_25, %c0_26] : memref<3x8x24xbf16, #tpu.memory_space<vmem>>, vector<1x8x24xbf16>
    %26 = vector.shape_cast %25 : vector<1x8x24xbf16> to vector<8x24xbf16>
    %c1_27 = arith.constant 1 : index
    %c0_28 = arith.constant 0 : index
    %c0_29 = arith.constant 0 : index
    %27 = vector.load %arg3[%c1_27, %c0_28, %c0_29] : memref<3x8x24xbf16, #tpu.memory_space<vmem>>, vector<1x8x24xbf16>
    %28 = vector.shape_cast %27 : vector<1x8x24xbf16> to vector<8x24xbf16>
    %c2_30 = arith.constant 2 : index
    %c0_31 = arith.constant 0 : index
    %c0_32 = arith.constant 0 : index
    %29 = vector.load %arg3[%c2_30, %c0_31, %c0_32] : memref<3x8x24xbf16, #tpu.memory_space<vmem>>, vector<1x8x24xbf16>
    %30 = vector.shape_cast %29 : vector<1x8x24xbf16> to vector<8x24xbf16>
    %c0_33 = arith.constant 0 : index
    %c0_34 = arith.constant 0 : index
    %c0_35 = arith.constant 0 : index
    %31 = vector.load %arg7[%c0_33, %c0_34, %c0_35] : memref<3x8x1xf32, #tpu.memory_space<vmem>>, vector<1x8x1xf32>
    %32 = vector.shape_cast %31 : vector<1x8x1xf32> to vector<8x1xf32>
    %33 = vector.shape_cast %32 : vector<8x1xf32> to vector<8x1xf32>
    %34 = vector.broadcast %33 : vector<8x1xf32> to vector<8x112xf32>
    %c1_36 = arith.constant 1 : index
    %c0_37 = arith.constant 0 : index
    %c0_38 = arith.constant 0 : index
    %35 = vector.load %arg7[%c1_36, %c0_37, %c0_38] : memref<3x8x1xf32, #tpu.memory_space<vmem>>, vector<1x8x1xf32>
    %36 = vector.shape_cast %35 : vector<1x8x1xf32> to vector<8x1xf32>
    %37 = vector.shape_cast %36 : vector<8x1xf32> to vector<8x1xf32>
    %38 = vector.broadcast %37 : vector<8x1xf32> to vector<8x112xf32>
    %c2_39 = arith.constant 2 : index
    %c0_40 = arith.constant 0 : index
    %c0_41 = arith.constant 0 : index
    %39 = vector.load %arg7[%c2_39, %c0_40, %c0_41] : memref<3x8x1xf32, #tpu.memory_space<vmem>>, vector<1x8x1xf32>
    %40 = vector.shape_cast %39 : vector<1x8x1xf32> to vector<8x1xf32>
    %41 = vector.shape_cast %40 : vector<8x1xf32> to vector<8x1xf32>
    %42 = vector.broadcast %41 : vector<8x1xf32> to vector<8x112xf32>
    %c0_i32_42 = arith.constant 0 : i32
    %c112_i32 = arith.constant 112 : i32
    %43 = arith.addi %c0_i32_42, %c112_i32 : i32
    %c1_i32_43 = arith.constant 1 : i32
    scf.for %arg18 = %c0_i32_42 to %43 step %c1_i32_43  : i32 {
      %c2_i32 = arith.constant 2 : i32
      %82 = arith.muli %c2_i32, %arg18 : i32
      %c8_i32 = arith.constant 8 : i32
      %83 = arith.muli %82, %c8_i32 : i32
      %84 = tpu.assume_multiple %83, 8 : i32
      %85 = arith.index_cast %84 : i32 to index
      %c0_87 = arith.constant 0 : index
      %86 = vector.load %arg15[%85, %c0_87] : memref<1808x114xbf16, #tpu.memory_space<vmem>>, vector<24x114xbf16>
      %87 = vector.extract_strided_slice %86 {offsets = [0, 0], sizes = [24, 112], strides = [1, 1]} : vector<24x114xbf16> to vector<24x112xbf16>
      %cst_88 = arith.constant dense<0.000000e+00> : vector<8x112xf32>
      %88 = tpu.matmul %26, %87, %cst_88 {dimension_numbers = #tpu.dot_dimension_numbers<[1], [0], [0], [1], [0, 0, 1, 1], [], []>} : vector<8x24xbf16>, vector<24x112xbf16>, vector<8x112xf32> -> vector<8x112xf32>
      %89 = vector.extract_strided_slice %86 {offsets = [0, 1], sizes = [24, 112], strides = [1, 1]} : vector<24x114xbf16> to vector<24x112xbf16>
      %cst_89 = arith.constant dense<0.000000e+00> : vector<8x112xf32>
      %90 = tpu.matmul %28, %89, %cst_89 {dimension_numbers = #tpu.dot_dimension_numbers<[1], [0], [0], [1], [0, 0, 1, 1], [], []>} : vector<8x24xbf16>, vector<24x112xbf16>, vector<8x112xf32> -> vector<8x112xf32>
      %91 = arith.addf %88, %90 : vector<8x112xf32>
      %92 = vector.extract_strided_slice %86 {offsets = [0, 2], sizes = [24, 112], strides = [1, 1]} : vector<24x114xbf16> to vector<24x112xbf16>
      %cst_90 = arith.constant dense<0.000000e+00> : vector<8x112xf32>
      %93 = tpu.matmul %30, %92, %cst_90 {dimension_numbers = #tpu.dot_dimension_numbers<[1], [0], [0], [1], [0, 0, 1, 1], [], []>} : vector<8x24xbf16>, vector<24x112xbf16>, vector<8x112xf32> -> vector<8x112xf32>
      %94 = arith.addf %91, %93 : vector<8x112xf32>
      %95 = arith.addf %94, %34 : vector<8x112xf32>
      %cst_91 = arith.constant 0.000000e+00 : f32
      %96 = vector.broadcast %cst_91 : f32 to vector<8x112xf32>
      %97 = arith.maximumf %95, %96 : vector<8x112xf32>
      %98 = arith.mulf %97, %38 : vector<8x112xf32>
      %99 = arith.addf %98, %42 : vector<8x112xf32>
      %c2_i32_92 = arith.constant 2 : i32
      %100 = arith.muli %c2_i32_92, %arg18 : i32
      %c1_i32_93 = arith.constant 1 : i32
      %101 = arith.addi %100, %c1_i32_93 : i32
      %c8_i32_94 = arith.constant 8 : i32
      %102 = arith.muli %101, %c8_i32_94 : i32
      %103 = tpu.assume_multiple %102, 8 : i32
      %104 = arith.index_cast %103 : i32 to index
      %c0_95 = arith.constant 0 : index
      %105 = vector.load %arg15[%104, %c0_95] : memref<1808x114xbf16, #tpu.memory_space<vmem>>, vector<24x114xbf16>
      %106 = vector.extract_strided_slice %105 {offsets = [0, 0], sizes = [24, 112], strides = [1, 1]} : vector<24x114xbf16> to vector<24x112xbf16>
      %cst_96 = arith.constant dense<0.000000e+00> : vector<8x112xf32>
      %107 = tpu.matmul %26, %106, %cst_96 {dimension_numbers = #tpu.dot_dimension_numbers<[1], [0], [0], [1], [0, 0, 1, 1], [], []>} : vector<8x24xbf16>, vector<24x112xbf16>, vector<8x112xf32> -> vector<8x112xf32>
      %108 = vector.extract_strided_slice %105 {offsets = [0, 1], sizes = [24, 112], strides = [1, 1]} : vector<24x114xbf16> to vector<24x112xbf16>
      %cst_97 = arith.constant dense<0.000000e+00> : vector<8x112xf32>
      %109 = tpu.matmul %28, %108, %cst_97 {dimension_numbers = #tpu.dot_dimension_numbers<[1], [0], [0], [1], [0, 0, 1, 1], [], []>} : vector<8x24xbf16>, vector<24x112xbf16>, vector<8x112xf32> -> vector<8x112xf32>
      %110 = arith.addf %107, %109 : vector<8x112xf32>
      %111 = vector.extract_strided_slice %105 {offsets = [0, 2], sizes = [24, 112], strides = [1, 1]} : vector<24x114xbf16> to vector<24x112xbf16>
      %cst_98 = arith.constant dense<0.000000e+00> : vector<8x112xf32>
      %112 = tpu.matmul %30, %111, %cst_98 {dimension_numbers = #tpu.dot_dimension_numbers<[1], [0], [0], [1], [0, 0, 1, 1], [], []>} : vector<8x24xbf16>, vector<24x112xbf16>, vector<8x112xf32> -> vector<8x112xf32>
      %113 = arith.addf %110, %112 : vector<8x112xf32>
      %114 = arith.addf %113, %34 : vector<8x112xf32>
      %cst_99 = arith.constant 0.000000e+00 : f32
      %115 = vector.broadcast %cst_99 : f32 to vector<8x112xf32>
      %116 = arith.maximumf %114, %115 : vector<8x112xf32>
      %117 = arith.mulf %116, %38 : vector<8x112xf32>
      %118 = arith.addf %117, %42 : vector<8x112xf32>
      %119 = arith.maximumf %99, %118 : vector<8x112xf32>
      %120 = vector.extract_strided_slice %119 {offsets = [0, 0], sizes = [8, 111], strides = [1, 1]} : vector<8x112xf32> to vector<8x111xf32>
      %121 = vector.extract_strided_slice %119 {offsets = [0, 1], sizes = [8, 111], strides = [1, 1]} : vector<8x112xf32> to vector<8x111xf32>
      %122 = arith.maximumf %120, %121 : vector<8x111xf32>
      %123 = arith.truncf %122 : vector<8x111xf32> to vector<8x111xbf16>
      %c0_100 = arith.constant 0 : index
      %c0_101 = arith.constant 0 : index
      %124 = vector.load %arg11[%c0_100, %c0_101] : memref<111x56xbf16, #tpu.memory_space<vmem>>, vector<111x56xbf16>
      %cst_102 = arith.constant dense<0.000000e+00> : vector<8x56xf32>
      %125 = tpu.matmul %123, %124, %cst_102 {dimension_numbers = #tpu.dot_dimension_numbers<[1], [0], [0], [1], [0, 0, 1, 1], [], []>} : vector<8x111xbf16>, vector<111x56xbf16>, vector<8x56xf32> -> vector<8x56xf32>
      %126 = arith.truncf %125 : vector<8x56xf32> to vector<8x56xbf16>
      %c1_i32_103 = arith.constant 1 : i32
      %127 = arith.addi %arg18, %c1_i32_103 : i32
      %c8_i32_104 = arith.constant 8 : i32
      %128 = arith.muli %127, %c8_i32_104 : i32
      %129 = arith.index_cast %128 : i32 to index
      %c1_105 = arith.constant 1 : index
      %130 = vector.load %arg16[%129, %c1_105] : memref<912x58xbf16, #tpu.memory_space<vmem>>, vector<8x56xbf16>
      tpu.vector_store %arg16[%129, %c1_105], %126 {strides = array<i32>} : memref<912x58xbf16, #tpu.memory_space<vmem>>, vector<8x56xbf16>,
    }
    %c112_i32_44 = arith.constant 112 : i32
    %c0_45 = arith.constant 0 : index
    %c0_46 = arith.constant 0 : index
    %c0_47 = arith.constant 0 : index
    %44 = vector.load %arg4[%c0_45, %c0_46, %c0_47] : memref<3x16x24xbf16, #tpu.memory_space<vmem>>, vector<1x16x24xbf16>
    %45 = vector.shape_cast %44 : vector<1x16x24xbf16> to vector<16x24xbf16>
    %c1_48 = arith.constant 1 : index
    %c0_49 = arith.constant 0 : index
    %c0_50 = arith.constant 0 : index
    %46 = vector.load %arg4[%c1_48, %c0_49, %c0_50] : memref<3x16x24xbf16, #tpu.memory_space<vmem>>, vector<1x16x24xbf16>
    %47 = vector.shape_cast %46 : vector<1x16x24xbf16> to vector<16x24xbf16>
    %c2_51 = arith.constant 2 : index
    %c0_52 = arith.constant 0 : index
    %c0_53 = arith.constant 0 : index
    %48 = vector.load %arg4[%c2_51, %c0_52, %c0_53] : memref<3x16x24xbf16, #tpu.memory_space<vmem>>, vector<1x16x24xbf16>
    %49 = vector.shape_cast %48 : vector<1x16x24xbf16> to vector<16x24xbf16>
    %c0_54 = arith.constant 0 : index
    %c0_55 = arith.constant 0 : index
    %c0_56 = arith.constant 0 : index
    %50 = vector.load %arg8[%c0_54, %c0_55, %c0_56] : memref<3x16x1xf32, #tpu.memory_space<vmem>>, vector<1x16x1xf32>
    %51 = vector.shape_cast %50 : vector<1x16x1xf32> to vector<16x1xf32>
    %52 = vector.shape_cast %51 : vector<16x1xf32> to vector<16x1xf32>
    %53 = vector.broadcast %52 : vector<16x1xf32> to vector<16x56xf32>
    %c1_57 = arith.constant 1 : index
    %c0_58 = arith.constant 0 : index
    %c0_59 = arith.constant 0 : index
    %54 = vector.load %arg8[%c1_57, %c0_58, %c0_59] : memref<3x16x1xf32, #tpu.memory_space<vmem>>, vector<1x16x1xf32>
    %55 = vector.shape_cast %54 : vector<1x16x1xf32> to vector<16x1xf32>
    %56 = vector.shape_cast %55 : vector<16x1xf32> to vector<16x1xf32>
    %57 = vector.broadcast %56 : vector<16x1xf32> to vector<16x56xf32>
    %c2_60 = arith.constant 2 : index
    %c0_61 = arith.constant 0 : index
    %c0_62 = arith.constant 0 : index
    %58 = vector.load %arg8[%c2_60, %c0_61, %c0_62] : memref<3x16x1xf32, #tpu.memory_space<vmem>>, vector<1x16x1xf32>
    %59 = vector.shape_cast %58 : vector<1x16x1xf32> to vector<16x1xf32>
    %60 = vector.shape_cast %59 : vector<16x1xf32> to vector<16x1xf32>
    %61 = vector.broadcast %60 : vector<16x1xf32> to vector<16x56xf32>
    %c0_i32_63 = arith.constant 0 : i32
    %c56_i32 = arith.constant 56 : i32
    %62 = arith.addi %c0_i32_63, %c56_i32 : i32
    %c1_i32_64 = arith.constant 1 : i32
    scf.for %arg18 = %c0_i32_63 to %62 step %c1_i32_64  : i32 {
      %c2_i32 = arith.constant 2 : i32
      %82 = arith.muli %c2_i32, %arg18 : i32
      %c8_i32 = arith.constant 8 : i32
      %83 = arith.muli %82, %c8_i32 : i32
      %84 = tpu.assume_multiple %83, 8 : i32
      %85 = arith.index_cast %84 : i32 to index
      %c0_87 = arith.constant 0 : index
      %86 = vector.load %arg16[%85, %c0_87] : memref<912x58xbf16, #tpu.memory_space<vmem>>, vector<24x58xbf16>
      %87 = vector.extract_strided_slice %86 {offsets = [0, 0], sizes = [24, 56], strides = [1, 1]} : vector<24x58xbf16> to vector<24x56xbf16>
      %cst_88 = arith.constant dense<0.000000e+00> : vector<16x56xf32>
      %88 = tpu.matmul %45, %87, %cst_88 {dimension_numbers = #tpu.dot_dimension_numbers<[1], [0], [0], [1], [0, 0, 1, 1], [], []>} : vector<16x24xbf16>, vector<24x56xbf16>, vector<16x56xf32> -> vector<16x56xf32>
      %89 = vector.extract_strided_slice %86 {offsets = [0, 1], sizes = [24, 56], strides = [1, 1]} : vector<24x58xbf16> to vector<24x56xbf16>
      %cst_89 = arith.constant dense<0.000000e+00> : vector<16x56xf32>
      %90 = tpu.matmul %47, %89, %cst_89 {dimension_numbers = #tpu.dot_dimension_numbers<[1], [0], [0], [1], [0, 0, 1, 1], [], []>} : vector<16x24xbf16>, vector<24x56xbf16>, vector<16x56xf32> -> vector<16x56xf32>
      %91 = arith.addf %88, %90 : vector<16x56xf32>
      %92 = vector.extract_strided_slice %86 {offsets = [0, 2], sizes = [24, 56], strides = [1, 1]} : vector<24x58xbf16> to vector<24x56xbf16>
      %cst_90 = arith.constant dense<0.000000e+00> : vector<16x56xf32>
      %93 = tpu.matmul %49, %92, %cst_90 {dimension_numbers = #tpu.dot_dimension_numbers<[1], [0], [0], [1], [0, 0, 1, 1], [], []>} : vector<16x24xbf16>, vector<24x56xbf16>, vector<16x56xf32> -> vector<16x56xf32>
      %94 = arith.addf %91, %93 : vector<16x56xf32>
      %95 = arith.addf %94, %53 : vector<16x56xf32>
      %cst_91 = arith.constant 0.000000e+00 : f32
      %96 = vector.broadcast %cst_91 : f32 to vector<16x56xf32>
      %97 = arith.maximumf %95, %96 : vector<16x56xf32>
      %98 = arith.mulf %97, %57 : vector<16x56xf32>
      %99 = arith.addf %98, %61 : vector<16x56xf32>
      %c2_i32_92 = arith.constant 2 : i32
      %100 = arith.muli %c2_i32_92, %arg18 : i32
      %c1_i32_93 = arith.constant 1 : i32
      %101 = arith.addi %100, %c1_i32_93 : i32
      %c8_i32_94 = arith.constant 8 : i32
      %102 = arith.muli %101, %c8_i32_94 : i32
      %103 = tpu.assume_multiple %102, 8 : i32
      %104 = arith.index_cast %103 : i32 to index
      %c0_95 = arith.constant 0 : index
      %105 = vector.load %arg16[%104, %c0_95] : memref<912x58xbf16, #tpu.memory_space<vmem>>, vector<24x58xbf16>
      %106 = vector.extract_strided_slice %105 {offsets = [0, 0], sizes = [24, 56], strides = [1, 1]} : vector<24x58xbf16> to vector<24x56xbf16>
      %cst_96 = arith.constant dense<0.000000e+00> : vector<16x56xf32>
      %107 = tpu.matmul %45, %106, %cst_96 {dimension_numbers = #tpu.dot_dimension_numbers<[1], [0], [0], [1], [0, 0, 1, 1], [], []>} : vector<16x24xbf16>, vector<24x56xbf16>, vector<16x56xf32> -> vector<16x56xf32>
      %108 = vector.extract_strided_slice %105 {offsets = [0, 1], sizes = [24, 56], strides = [1, 1]} : vector<24x58xbf16> to vector<24x56xbf16>
      %cst_97 = arith.constant dense<0.000000e+00> : vector<16x56xf32>
      %109 = tpu.matmul %47, %108, %cst_97 {dimension_numbers = #tpu.dot_dimension_numbers<[1], [0], [0], [1], [0, 0, 1, 1], [], []>} : vector<16x24xbf16>, vector<24x56xbf16>, vector<16x56xf32> -> vector<16x56xf32>
      %110 = arith.addf %107, %109 : vector<16x56xf32>
      %111 = vector.extract_strided_slice %105 {offsets = [0, 2], sizes = [24, 56], strides = [1, 1]} : vector<24x58xbf16> to vector<24x56xbf16>
      %cst_98 = arith.constant dense<0.000000e+00> : vector<16x56xf32>
      %112 = tpu.matmul %49, %111, %cst_98 {dimension_numbers = #tpu.dot_dimension_numbers<[1], [0], [0], [1], [0, 0, 1, 1], [], []>} : vector<16x24xbf16>, vector<24x56xbf16>, vector<16x56xf32> -> vector<16x56xf32>
      %113 = arith.addf %110, %112 : vector<16x56xf32>
      %114 = arith.addf %113, %53 : vector<16x56xf32>
      %cst_99 = arith.constant 0.000000e+00 : f32
      %115 = vector.broadcast %cst_99 : f32 to vector<16x56xf32>
      %116 = arith.maximumf %114, %115 : vector<16x56xf32>
      %117 = arith.mulf %116, %57 : vector<16x56xf32>
      %118 = arith.addf %117, %61 : vector<16x56xf32>
      %119 = arith.maximumf %99, %118 : vector<16x56xf32>
      %120 = vector.extract_strided_slice %119 {offsets = [0, 0], sizes = [16, 55], strides = [1, 1]} : vector<16x56xf32> to vector<16x55xf32>
      %121 = vector.extract_strided_slice %119 {offsets = [0, 1], sizes = [16, 55], strides = [1, 1]} : vector<16x56xf32> to vector<16x55xf32>
      %122 = arith.maximumf %120, %121 : vector<16x55xf32>
      %123 = arith.truncf %122 : vector<16x55xf32> to vector<16x55xbf16>
      %c0_100 = arith.constant 0 : index
      %c0_101 = arith.constant 0 : index
      %124 = vector.load %arg12[%c0_100, %c0_101] : memref<55x28xbf16, #tpu.memory_space<vmem>>, vector<55x28xbf16>
      %cst_102 = arith.constant dense<0.000000e+00> : vector<16x28xf32>
      %125 = tpu.matmul %123, %124, %cst_102 {dimension_numbers = #tpu.dot_dimension_numbers<[1], [0], [0], [1], [0, 0, 1, 1], [], []>} : vector<16x55xbf16>, vector<55x28xbf16>, vector<16x28xf32> -> vector<16x28xf32>
      %126 = arith.truncf %125 : vector<16x28xf32> to vector<16x28xbf16>
      %c1_i32_103 = arith.constant 1 : i32
      %127 = arith.addi %arg18, %c1_i32_103 : i32
      %c16_i32 = arith.constant 16 : i32
      %128 = arith.muli %127, %c16_i32 : i32
      %129 = arith.index_cast %128 : i32 to index
      %c1_104 = arith.constant 1 : index
      %130 = vector.load %arg17[%129, %c1_104] : memref<928x30xbf16, #tpu.memory_space<vmem>>, vector<16x28xbf16>
      tpu.vector_store %arg17[%129, %c1_104], %126 {strides = array<i32>} : memref<928x30xbf16, #tpu.memory_space<vmem>>, vector<16x28xbf16>,
    }
    %c56_i32_65 = arith.constant 56 : i32
    %c0_66 = arith.constant 0 : index
    %c0_67 = arith.constant 0 : index
    %c0_68 = arith.constant 0 : index
    %63 = vector.load %arg5[%c0_66, %c0_67, %c0_68] : memref<3x32x48xbf16, #tpu.memory_space<vmem>>, vector<1x32x48xbf16>
    %64 = vector.shape_cast %63 : vector<1x32x48xbf16> to vector<32x48xbf16>
    %c1_69 = arith.constant 1 : index
    %c0_70 = arith.constant 0 : index
    %c0_71 = arith.constant 0 : index
    %65 = vector.load %arg5[%c1_69, %c0_70, %c0_71] : memref<3x32x48xbf16, #tpu.memory_space<vmem>>, vector<1x32x48xbf16>
    %66 = vector.shape_cast %65 : vector<1x32x48xbf16> to vector<32x48xbf16>
    %c2_72 = arith.constant 2 : index
    %c0_73 = arith.constant 0 : index
    %c0_74 = arith.constant 0 : index
    %67 = vector.load %arg5[%c2_72, %c0_73, %c0_74] : memref<3x32x48xbf16, #tpu.memory_space<vmem>>, vector<1x32x48xbf16>
    %68 = vector.shape_cast %67 : vector<1x32x48xbf16> to vector<32x48xbf16>
    %c0_75 = arith.constant 0 : index
    %c0_76 = arith.constant 0 : index
    %c0_77 = arith.constant 0 : index
    %69 = vector.load %arg9[%c0_75, %c0_76, %c0_77] : memref<3x32x1xf32, #tpu.memory_space<vmem>>, vector<1x32x1xf32>
    %70 = vector.shape_cast %69 : vector<1x32x1xf32> to vector<32x1xf32>
    %71 = vector.shape_cast %70 : vector<32x1xf32> to vector<32x1xf32>
    %72 = vector.broadcast %71 : vector<32x1xf32> to vector<32x28xf32>
    %c1_78 = arith.constant 1 : index
    %c0_79 = arith.constant 0 : index
    %c0_80 = arith.constant 0 : index
    %73 = vector.load %arg9[%c1_78, %c0_79, %c0_80] : memref<3x32x1xf32, #tpu.memory_space<vmem>>, vector<1x32x1xf32>
    %74 = vector.shape_cast %73 : vector<1x32x1xf32> to vector<32x1xf32>
    %75 = vector.shape_cast %74 : vector<32x1xf32> to vector<32x1xf32>
    %76 = vector.broadcast %75 : vector<32x1xf32> to vector<32x28xf32>
    %c2_81 = arith.constant 2 : index
    %c0_82 = arith.constant 0 : index
    %c0_83 = arith.constant 0 : index
    %77 = vector.load %arg9[%c2_81, %c0_82, %c0_83] : memref<3x32x1xf32, #tpu.memory_space<vmem>>, vector<1x32x1xf32>
    %78 = vector.shape_cast %77 : vector<1x32x1xf32> to vector<32x1xf32>
    %79 = vector.shape_cast %78 : vector<32x1xf32> to vector<32x1xf32>
    %80 = vector.broadcast %79 : vector<32x1xf32> to vector<32x28xf32>
    %c0_i32_84 = arith.constant 0 : i32
    %c28_i32 = arith.constant 28 : i32
    %81 = arith.addi %c0_i32_84, %c28_i32 : i32
    %c1_i32_85 = arith.constant 1 : i32
    scf.for %arg18 = %c0_i32_84 to %81 step %c1_i32_85  : i32 {
      %c2_i32 = arith.constant 2 : i32
      %82 = arith.muli %c2_i32, %arg18 : i32
      %c16_i32 = arith.constant 16 : i32
      %83 = arith.muli %82, %c16_i32 : i32
      %84 = tpu.assume_multiple %83, 16 : i32
      %85 = arith.index_cast %84 : i32 to index
      %c0_87 = arith.constant 0 : index
      %86 = vector.load %arg17[%85, %c0_87] : memref<928x30xbf16, #tpu.memory_space<vmem>>, vector<48x30xbf16>
      %87 = vector.extract_strided_slice %86 {offsets = [0, 0], sizes = [48, 28], strides = [1, 1]} : vector<48x30xbf16> to vector<48x28xbf16>
      %cst_88 = arith.constant dense<0.000000e+00> : vector<32x28xf32>
      %88 = tpu.matmul %64, %87, %cst_88 {dimension_numbers = #tpu.dot_dimension_numbers<[1], [0], [0], [1], [0, 0, 1, 1], [], []>} : vector<32x48xbf16>, vector<48x28xbf16>, vector<32x28xf32> -> vector<32x28xf32>
      %89 = vector.extract_strided_slice %86 {offsets = [0, 1], sizes = [48, 28], strides = [1, 1]} : vector<48x30xbf16> to vector<48x28xbf16>
      %cst_89 = arith.constant dense<0.000000e+00> : vector<32x28xf32>
      %90 = tpu.matmul %66, %89, %cst_89 {dimension_numbers = #tpu.dot_dimension_numbers<[1], [0], [0], [1], [0, 0, 1, 1], [], []>} : vector<32x48xbf16>, vector<48x28xbf16>, vector<32x28xf32> -> vector<32x28xf32>
      %91 = arith.addf %88, %90 : vector<32x28xf32>
      %92 = vector.extract_strided_slice %86 {offsets = [0, 2], sizes = [48, 28], strides = [1, 1]} : vector<48x30xbf16> to vector<48x28xbf16>
      %cst_90 = arith.constant dense<0.000000e+00> : vector<32x28xf32>
      %93 = tpu.matmul %68, %92, %cst_90 {dimension_numbers = #tpu.dot_dimension_numbers<[1], [0], [0], [1], [0, 0, 1, 1], [], []>} : vector<32x48xbf16>, vector<48x28xbf16>, vector<32x28xf32> -> vector<32x28xf32>
      %94 = arith.addf %91, %93 : vector<32x28xf32>
      %95 = arith.addf %94, %72 : vector<32x28xf32>
      %cst_91 = arith.constant 0.000000e+00 : f32
      %96 = vector.broadcast %cst_91 : f32 to vector<32x28xf32>
      %97 = arith.maximumf %95, %96 : vector<32x28xf32>
      %98 = arith.mulf %97, %76 : vector<32x28xf32>
      %99 = arith.addf %98, %80 : vector<32x28xf32>
      %c2_i32_92 = arith.constant 2 : i32
      %100 = arith.muli %c2_i32_92, %arg18 : i32
      %c1_i32_93 = arith.constant 1 : i32
      %101 = arith.addi %100, %c1_i32_93 : i32
      %c16_i32_94 = arith.constant 16 : i32
      %102 = arith.muli %101, %c16_i32_94 : i32
      %103 = tpu.assume_multiple %102, 16 : i32
      %104 = arith.index_cast %103 : i32 to index
      %c0_95 = arith.constant 0 : index
      %105 = vector.load %arg17[%104, %c0_95] : memref<928x30xbf16, #tpu.memory_space<vmem>>, vector<48x30xbf16>
      %106 = vector.extract_strided_slice %105 {offsets = [0, 0], sizes = [48, 28], strides = [1, 1]} : vector<48x30xbf16> to vector<48x28xbf16>
      %cst_96 = arith.constant dense<0.000000e+00> : vector<32x28xf32>
      %107 = tpu.matmul %64, %106, %cst_96 {dimension_numbers = #tpu.dot_dimension_numbers<[1], [0], [0], [1], [0, 0, 1, 1], [], []>} : vector<32x48xbf16>, vector<48x28xbf16>, vector<32x28xf32> -> vector<32x28xf32>
      %108 = vector.extract_strided_slice %105 {offsets = [0, 1], sizes = [48, 28], strides = [1, 1]} : vector<48x30xbf16> to vector<48x28xbf16>
      %cst_97 = arith.constant dense<0.000000e+00> : vector<32x28xf32>
      %109 = tpu.matmul %66, %108, %cst_97 {dimension_numbers = #tpu.dot_dimension_numbers<[1], [0], [0], [1], [0, 0, 1, 1], [], []>} : vector<32x48xbf16>, vector<48x28xbf16>, vector<32x28xf32> -> vector<32x28xf32>
      %110 = arith.addf %107, %109 : vector<32x28xf32>
      %111 = vector.extract_strided_slice %105 {offsets = [0, 2], sizes = [48, 28], strides = [1, 1]} : vector<48x30xbf16> to vector<48x28xbf16>
      %cst_98 = arith.constant dense<0.000000e+00> : vector<32x28xf32>
      %112 = tpu.matmul %68, %111, %cst_98 {dimension_numbers = #tpu.dot_dimension_numbers<[1], [0], [0], [1], [0, 0, 1, 1], [], []>} : vector<32x48xbf16>, vector<48x28xbf16>, vector<32x28xf32> -> vector<32x28xf32>
      %113 = arith.addf %110, %112 : vector<32x28xf32>
      %114 = arith.addf %113, %72 : vector<32x28xf32>
      %cst_99 = arith.constant 0.000000e+00 : f32
      %115 = vector.broadcast %cst_99 : f32 to vector<32x28xf32>
      %116 = arith.maximumf %114, %115 : vector<32x28xf32>
      %117 = arith.mulf %116, %76 : vector<32x28xf32>
      %118 = arith.addf %117, %80 : vector<32x28xf32>
      %119 = arith.maximumf %99, %118 : vector<32x28xf32>
      %120 = vector.extract_strided_slice %119 {offsets = [0, 0], sizes = [32, 27], strides = [1, 1]} : vector<32x28xf32> to vector<32x27xf32>
      %121 = vector.extract_strided_slice %119 {offsets = [0, 1], sizes = [32, 27], strides = [1, 1]} : vector<32x28xf32> to vector<32x27xf32>
      %122 = arith.maximumf %120, %121 : vector<32x27xf32>
      %123 = arith.truncf %122 : vector<32x27xf32> to vector<32x27xbf16>
      %c0_100 = arith.constant 0 : index
      %c0_101 = arith.constant 0 : index
      %124 = vector.load %arg13[%c0_100, %c0_101] : memref<27x14xbf16, #tpu.memory_space<vmem>>, vector<27x14xbf16>
      %cst_102 = arith.constant dense<0.000000e+00> : vector<32x14xf32>
      %125 = tpu.matmul %123, %124, %cst_102 {dimension_numbers = #tpu.dot_dimension_numbers<[1], [0], [0], [1], [0, 0, 1, 1], [], []>} : vector<32x27xbf16>, vector<27x14xbf16>, vector<32x14xf32> -> vector<32x14xf32>
      %126 = arith.truncf %125 : vector<32x14xf32> to vector<32x14xbf16>
      %c0_103 = arith.constant 0 : index
      %127 = arith.index_cast %arg18 : i32 to index
      %c0_104 = arith.constant 0 : index
      %c0_105 = arith.constant 0 : index
      %128 = vector.load %arg14[%c0_103, %127, %c0_104, %c0_105] : memref<1x28x32x14xbf16, #tpu.memory_space<vmem>>, vector<1x1x32x14xbf16>
      %129 = vector.shape_cast %128 : vector<1x1x32x14xbf16> to vector<32x14xbf16>
      %130 = vector.shape_cast %126 : vector<32x14xbf16> to vector<1x1x32x14xbf16>
      tpu.vector_store %arg14[%c0_103, %127, %c0_104, %c0_105], %130 {strides = array<i32>} : memref<1x28x32x14xbf16, #tpu.memory_space<vmem>>, vector<1x1x32x14xbf16>,
    }
    %c28_i32_86 = arith.constant 28 : i32
    return
  }
  func.func @transform_0(%arg0: i32) -> (i32, i32, i32) {
    %c0_i32 = arith.constant 0 : i32
    %c0_i32_0 = arith.constant 0 : i32
    %c0_i32_1 = arith.constant 0 : i32
    return %arg0, %c0_i32, %c0_i32_0 : i32, i32, i32
  }
  func.func @transform_1(%arg0: i32) -> (i32, i32, i32) {
    %c0_i32 = arith.constant 0 : i32
    %c0_i32_0 = arith.constant 0 : i32
    %c0_i32_1 = arith.constant 0 : i32
    %c0_i32_2 = arith.constant 0 : i32
    return %c0_i32, %c0_i32_0, %c0_i32_1 : i32, i32, i32
  }
  func.func @transform_2(%arg0: i32) -> (i32, i32, i32) {
    %c0_i32 = arith.constant 0 : i32
    %c0_i32_0 = arith.constant 0 : i32
    %c0_i32_1 = arith.constant 0 : i32
    %c0_i32_2 = arith.constant 0 : i32
    return %c0_i32, %c0_i32_0, %c0_i32_1 : i32, i32, i32
  }
  func.func @transform_3(%arg0: i32) -> (i32, i32, i32) {
    %c0_i32 = arith.constant 0 : i32
    %c0_i32_0 = arith.constant 0 : i32
    %c0_i32_1 = arith.constant 0 : i32
    %c0_i32_2 = arith.constant 0 : i32
    return %c0_i32, %c0_i32_0, %c0_i32_1 : i32, i32, i32
  }
  func.func @transform_4(%arg0: i32) -> (i32, i32, i32) {
    %c0_i32 = arith.constant 0 : i32
    %c0_i32_0 = arith.constant 0 : i32
    %c0_i32_1 = arith.constant 0 : i32
    %c0_i32_2 = arith.constant 0 : i32
    return %c0_i32, %c0_i32_0, %c0_i32_1 : i32, i32, i32
  }
  func.func @transform_5(%arg0: i32) -> (i32, i32, i32) {
    %c0_i32 = arith.constant 0 : i32
    %c0_i32_0 = arith.constant 0 : i32
    %c0_i32_1 = arith.constant 0 : i32
    %c0_i32_2 = arith.constant 0 : i32
    return %c0_i32, %c0_i32_0, %c0_i32_1 : i32, i32, i32
  }
  func.func @transform_6(%arg0: i32) -> (i32, i32, i32) {
    %c0_i32 = arith.constant 0 : i32
    %c0_i32_0 = arith.constant 0 : i32
    %c0_i32_1 = arith.constant 0 : i32
    %c0_i32_2 = arith.constant 0 : i32
    return %c0_i32, %c0_i32_0, %c0_i32_1 : i32, i32, i32
  }
  func.func @transform_7(%arg0: i32) -> (i32, i32, i32) {
    %c0_i32 = arith.constant 0 : i32
    %c0_i32_0 = arith.constant 0 : i32
    %c0_i32_1 = arith.constant 0 : i32
    %c0_i32_2 = arith.constant 0 : i32
    return %c0_i32, %c0_i32_0, %c0_i32_1 : i32, i32, i32
  }
  func.func @transform_8(%arg0: i32) -> (i32, i32, i32) {
    %c0_i32 = arith.constant 0 : i32
    %c0_i32_0 = arith.constant 0 : i32
    %c0_i32_1 = arith.constant 0 : i32
    %c0_i32_2 = arith.constant 0 : i32
    return %c0_i32, %c0_i32_0, %c0_i32_1 : i32, i32, i32
  }
  func.func @transform_9(%arg0: i32) -> (i32, i32) {
    %c0_i32 = arith.constant 0 : i32
    %c0_i32_0 = arith.constant 0 : i32
    %c0_i32_1 = arith.constant 0 : i32
    return %c0_i32, %c0_i32_0 : i32, i32
  }
  func.func @transform_10(%arg0: i32) -> (i32, i32) {
    %c0_i32 = arith.constant 0 : i32
    %c0_i32_0 = arith.constant 0 : i32
    %c0_i32_1 = arith.constant 0 : i32
    return %c0_i32, %c0_i32_0 : i32, i32
  }
  func.func @transform_11(%arg0: i32) -> (i32, i32) {
    %c0_i32 = arith.constant 0 : i32
    %c0_i32_0 = arith.constant 0 : i32
    %c0_i32_1 = arith.constant 0 : i32
    return %c0_i32, %c0_i32_0 : i32, i32
  }
  func.func @transform_12(%arg0: i32) -> (i32, i32) {
    %c0_i32 = arith.constant 0 : i32
    %c0_i32_0 = arith.constant 0 : i32
    %c0_i32_1 = arith.constant 0 : i32
    return %c0_i32, %c0_i32_0 : i32, i32
  }
  func.func @transform_13(%arg0: i32) -> (i32, i32, i32, i32) {
    %c0_i32 = arith.constant 0 : i32
    %c0_i32_0 = arith.constant 0 : i32
    %c0_i32_1 = arith.constant 0 : i32
    %c0_i32_2 = arith.constant 0 : i32
    return %arg0, %c0_i32, %c0_i32_0, %c0_i32_1 : i32, i32, i32, i32
  }
}

module attributes {stable_mosaic.version = 11 : i64} {
  func.func @_mlp_kernel(%arg0: i32, %arg1: memref<2x12544xbf16, #tpu.memory_space<vmem>>, %arg2: memref<12544x100xbf16, #tpu.memory_space<vmem>>, %arg3: memref<1x100xf32, #tpu.memory_space<vmem>>, %arg4: memref<100x2xf32, #tpu.memory_space<vmem>>, %arg5: memref<1x2xf32, #tpu.memory_space<vmem>>, %arg6: memref<2x2xf32, #tpu.memory_space<vmem>>) attributes {dimension_semantics = [#tpu.dimension_semantics<arbitrary>], iteration_bounds = array<i64: 1>, scalar_prefetch = 0 : i64, scratch_operands = 0 : i64, tpu.core_type = #tpu.core_type<tc>, window_params = [{pipeline_mode = #tpu.pipeline_mode<synchronous>, transform_indices = @transform_0, window_bounds = array<i64: 2, 12544>}, {pipeline_mode = #tpu.pipeline_mode<synchronous>, transform_indices = @transform_1, window_bounds = array<i64: 12544, 100>}, {pipeline_mode = #tpu.pipeline_mode<synchronous>, transform_indices = @transform_2, window_bounds = array<i64: 1, 100>}, {pipeline_mode = #tpu.pipeline_mode<synchronous>, transform_indices = @transform_3, window_bounds = array<i64: 100, 2>}, {pipeline_mode = #tpu.pipeline_mode<synchronous>, transform_indices = @transform_4, window_bounds = array<i64: 1, 2>}, {pipeline_mode = #tpu.pipeline_mode<synchronous>, transform_indices = @transform_5, window_bounds = array<i64: 2, 2>}]} {
    %c0 = arith.constant 0 : index
    %c0_0 = arith.constant 0 : index
    %0 = vector.load %arg1[%c0, %c0_0] : memref<2x12544xbf16, #tpu.memory_space<vmem>>, vector<2x12544xbf16>
    %c0_1 = arith.constant 0 : index
    %c0_2 = arith.constant 0 : index
    %1 = vector.load %arg2[%c0_1, %c0_2] : memref<12544x100xbf16, #tpu.memory_space<vmem>>, vector<12544x100xbf16>
    %cst = arith.constant dense<0.000000e+00> : vector<2x100xf32>
    %2 = tpu.matmul %0, %1, %cst {dimension_numbers = #tpu.dot_dimension_numbers<[1], [0], [0], [1], [0, 0, 1, 1], [], []>} : vector<2x12544xbf16>, vector<12544x100xbf16>, vector<2x100xf32> -> vector<2x100xf32>
    %c0_3 = arith.constant 0 : index
    %c0_4 = arith.constant 0 : index
    %3 = vector.load %arg3[%c0_3, %c0_4] : memref<1x100xf32, #tpu.memory_space<vmem>>, vector<1x100xf32>
    %4 = vector.broadcast %3 : vector<1x100xf32> to vector<2x100xf32>
    %5 = arith.addf %2, %4 : vector<2x100xf32>
    %c0_5 = arith.constant 0 : index
    %c0_6 = arith.constant 0 : index
    %6 = vector.load %arg4[%c0_5, %c0_6] : memref<100x2xf32, #tpu.memory_space<vmem>>, vector<100x2xf32>
    %cst_7 = arith.constant dense<0.000000e+00> : vector<2x2xf32>
    %7 = tpu.matmul %5, %6, %cst_7 {dimension_numbers = #tpu.dot_dimension_numbers<[1], [0], [0], [1], [0, 0, 1, 1], [], []>} : vector<2x100xf32>, vector<100x2xf32>, vector<2x2xf32> -> vector<2x2xf32>
    %c0_8 = arith.constant 0 : index
    %c0_9 = arith.constant 0 : index
    %8 = vector.load %arg5[%c0_8, %c0_9] : memref<1x2xf32, #tpu.memory_space<vmem>>, vector<1x2xf32>
    %9 = vector.broadcast %8 : vector<1x2xf32> to vector<2x2xf32>
    %10 = arith.addf %7, %9 : vector<2x2xf32>
    %c0_10 = arith.constant 0 : index
    %c0_11 = arith.constant 0 : index
    %11 = vector.load %arg6[%c0_10, %c0_11] : memref<2x2xf32, #tpu.memory_space<vmem>>, vector<2x2xf32>
    tpu.vector_store %arg6[%c0_10, %c0_11], %10 {strides = array<i32>} : memref<2x2xf32, #tpu.memory_space<vmem>>, vector<2x2xf32>,
    return
  }
  func.func @transform_0(%arg0: i32) -> (i32, i32) {
    %c0_i32 = arith.constant 0 : i32
    %c0_i32_0 = arith.constant 0 : i32
    %c0_i32_1 = arith.constant 0 : i32
    return %c0_i32, %c0_i32_0 : i32, i32
  }
  func.func @transform_1(%arg0: i32) -> (i32, i32) {
    %c0_i32 = arith.constant 0 : i32
    %c0_i32_0 = arith.constant 0 : i32
    %c0_i32_1 = arith.constant 0 : i32
    return %c0_i32, %c0_i32_0 : i32, i32
  }
  func.func @transform_2(%arg0: i32) -> (i32, i32) {
    %c0_i32 = arith.constant 0 : i32
    %c0_i32_0 = arith.constant 0 : i32
    %c0_i32_1 = arith.constant 0 : i32
    return %c0_i32, %c0_i32_0 : i32, i32
  }
  func.func @transform_3(%arg0: i32) -> (i32, i32) {
    %c0_i32 = arith.constant 0 : i32
    %c0_i32_0 = arith.constant 0 : i32
    %c0_i32_1 = arith.constant 0 : i32
    return %c0_i32, %c0_i32_0 : i32, i32
  }
  func.func @transform_4(%arg0: i32) -> (i32, i32) {
    %c0_i32 = arith.constant 0 : i32
    %c0_i32_0 = arith.constant 0 : i32
    %c0_i32_1 = arith.constant 0 : i32
    return %c0_i32, %c0_i32_0 : i32, i32
  }
  func.func @transform_5(%arg0: i32) -> (i32, i32) {
    %c0_i32 = arith.constant 0 : i32
    %c0_i32_0 = arith.constant 0 : i32
    %c0_i32_1 = arith.constant 0 : i32
    return %c0_i32, %c0_i32_0 : i32, i32
  }
}

</mosaic_0001>

<llo_original>
// kernel: cnn_forward.2
$region0: #{cnn_forward.2}
  #allocation0 [shape = 'u32[]', space=smem, size = 0x4, offset = 0x4, fixed_abs, tag = 'smem constant byte address 0x4 - core index']
  #allocation1 [shape = 'u32[144,128]{1,0:T(1,128)}', space=vmem, size = 0x12000, scoped, tag = 'internal scratch']
  #allocation2 [shape = 'bf16[1808,114]{1,0:T(8,128)(2,1)}', space=vmem, size = 0x71000, scoped, tag = 'scratch operand']
  #allocation3 [shape = 'bf16[912,58]{1,0:T(8,128)(2,1)}', space=vmem, size = 0x39000, scoped, tag = 'scratch operand']
  #allocation4 [shape = 'bf16[928,30]{1,0:T(8,128)(2,1)}', space=vmem, size = 0x3a000, scoped, tag = 'scratch operand']
  %s0 = inlined_call_operand.vmem [shape: bf16[2,3600,226], index: 0, kind: input, shape index: {}]
  %s1 = inlined_call_operand.vmem [shape: bf16[3,4,24], index: 1, kind: input, shape index: {}]
  %s2 = inlined_call_operand.vmem [shape: bf16[3,8,24], index: 2, kind: input, shape index: {}]
  %s3 = inlined_call_operand.vmem [shape: bf16[3,16,24], index: 3, kind: input, shape index: {}]
  %s4 = inlined_call_operand.vmem [shape: bf16[3,32,48], index: 4, kind: input, shape index: {}]
  %s5 = inlined_call_operand.vmem [shape: f32[3,4,1], index: 5, kind: input, shape index: {}]
  %s6 = inlined_call_operand.vmem [shape: f32[3,8,1], index: 6, kind: input, shape index: {}]
  %s7 = inlined_call_operand.vmem [shape: f32[3,16,1], index: 7, kind: input, shape index: {}]
  %s8 = inlined_call_operand.vmem [shape: f32[3,32,1], index: 8, kind: input, shape index: {}]
  %s9 = inlined_call_operand.vmem [shape: bf16[223,112], index: 9, kind: input, shape index: {}]
  %s10 = inlined_call_operand.vmem [shape: bf16[111,56], index: 10, kind: input, shape index: {}]
  %s11 = inlined_call_operand.vmem [shape: bf16[55,28], index: 11, kind: input, shape index: {}]
  %s12 = inlined_call_operand.vmem [shape: bf16[27,14], index: 12, kind: input, shape index: {}]
  %s13 = inlined_call_operand.vmem [shape: bf16[2,28,32,14], index: 13, kind: output, shape index: {}]
  %s14 = sld [smem:[#allocation0]]
  $region113: #{cnn_forward.2} parent=0
    _
  %s16 = ssub.s32 1, %s14
  %s17 = scalar_select 0, %s16, %s14
  loop: start=0, step=1, limit=4
  $region2: #{cnn_forward.2} parent=0 // loop_pre_header
    _
  $region3: #{cnn_forward.2} parent=0 // loop_header
    %s19 = sphi 0, %s23
    %p20 = scmp.ge.s32.totalorder %s19, 4
    %s29 = sphi 0, %s31
    %s32 = sphi 0, %s29
    %s33 = sphi 0, %s32
    %s49 = sphi 0, %s33
    %s53 = sphi 0, %s53
    %s55 = sphi 0, %s53
    %s56 = sphi 0, %s55
    %s70 = sphi 0, %s56
    %s74 = sphi 0, %s74
    %s76 = sphi 0, %s74
    %s77 = sphi 0, %s76
    %s91 = sphi 0, %s77
    %s95 = sphi 0, %s95
    %s97 = sphi 0, %s95
    %s98 = sphi 0, %s97
    %s112 = sphi 0, %s98
    %s116 = sphi 0, %s116
    %s118 = sphi 0, %s116
    %s119 = sphi 0, %s118
    %s133 = sphi 0, %s119
    %s137 = sphi 0, %s137
    %s139 = sphi 0, %s137
    %s140 = sphi 0, %s139
    %s154 = sphi 0, %s140
    %s158 = sphi 0, %s158
    %s160 = sphi 0, %s158
    %s161 = sphi 0, %s160
    %s175 = sphi 0, %s161
    %s179 = sphi 0, %s179
    %s181 = sphi 0, %s179
    %s182 = sphi 0, %s181
    %s196 = sphi 0, %s182
    %s200 = sphi 0, %s200
    %s202 = sphi 0, %s200
    %s203 = sphi 0, %s202
    %s217 = sphi 0, %s203
    %s221 = sphi 0, %s221
    %s223 = sphi 0, %s221
    %s224 = sphi 0, %s223
    %s238 = sphi 0, %s224
    %s242 = sphi 0, %s242
    %s244 = sphi 0, %s242
    %s245 = sphi 0, %s244
    %s259 = sphi 0, %s245
    %s263 = sphi 0, %s263
    %s265 = sphi 0, %s263
    %s266 = sphi 0, %s265
    %s280 = sphi 0, %s266
    %s284 = sphi 0, %s284
    %s286 = sphi 0, %s284
    %s287 = sphi 0, %s286
    %s301 = sphi 0, %s287
    %s307 = sphi 0, %s309
    %s310 = sphi 0, %s307
    %s311 = sphi 0, %s310
    %s327 = sphi 0, %s311
  $region4: #{cnn_forward.2} parent=0 // loop_header_branch
    %22 = sbr.rel (%p20) target = $region8
  $region5: #{cnn_forward.2} parent=0 // loop_body
    %s24 = ssub.s32 %s19, 1
    %s25 = ssub.s32 %s19, 2
    %s26 = sadd.s32 %s19, 1
    %s27 = ssub.s32 %s19, %s26
    %p28 = scmp.eq.s32.totalorder %s27, 0
    %s30 = sadd.s32 %s29, 1
    %s31 = scalar_select %p28, %s29, %s30
    %p34 = pneg %p28
    %p35 = scmp.eq.s32.totalorder %s19, 1
    %p36 = por %p34, %p35
    %p37 = scmp.ne.s32.totalorder %s29, %s32
    %p38 = scmp.eq.s32.totalorder %s19, 0
    %p39 = por %p37, %p38
    %p40 = scmp.ne.s32.totalorder %s29, %s32
    %p41 = scmp.eq.s32.totalorder %s24, 1
    %p42 = por %p40, %p41
    %p43 = scmp.ne.s32.totalorder %s32, %s33
    %p44 = scmp.eq.s32.totalorder %s24, 0
    %p45 = por %p43, %p44
    %p46 = scmp.ne.s32.totalorder %s32, %s33
    %p47 = scmp.eq.s32.totalorder %s25, 1
    %p48 = por %p46, %p47
    %p50 = scmp.ne.s32.totalorder %s33, %s49
    %p51 = scmp.eq.s32.totalorder %s25, 0
    %p52 = por %p50, %p51
    %s54 = sadd.s32 %s53, 1
    %p57 = scmp.eq.s32.totalorder %s19, 1
    %p58 = scmp.ne.s32.totalorder %s53, %s55
    %p59 = scmp.eq.s32.totalorder %s19, 0
    %p60 = por %p58, %p59
    %p61 = scmp.ne.s32.totalorder %s53, %s55
    %p62 = scmp.eq.s32.totalorder %s24, 1
    %p63 = por %p61, %p62
    %p64 = scmp.ne.s32.totalorder %s55, %s56
    %p65 = scmp.eq.s32.totalorder %s24, 0
    %p66 = por %p64, %p65
    %p67 = scmp.ne.s32.totalorder %s55, %s56
    %p68 = scmp.eq.s32.totalorder %s25, 1
    %p69 = por %p67, %p68
    %p71 = scmp.ne.s32.totalorder %s56, %s70
    %p72 = scmp.eq.s32.totalorder %s25, 0
    %p73 = por %p71, %p72
    %s75 = sadd.s32 %s74, 1
    %p78 = scmp.eq.s32.totalorder %s19, 1
    %p79 = scmp.ne.s32.totalorder %s74, %s76
    %p80 = scmp.eq.s32.totalorder %s19, 0
    %p81 = por %p79, %p80
    %p82 = scmp.ne.s32.totalorder %s74, %s76
    %p83 = scmp.eq.s32.totalorder %s24, 1
    %p84 = por %p82, %p83
    %p85 = scmp.ne.s32.totalorder %s76, %s77
    %p86 = scmp.eq.s32.totalorder %s24, 0
    %p87 = por %p85, %p86
    %p88 = scmp.ne.s32.totalorder %s76, %s77
    %p89 = scmp.eq.s32.totalorder %s25, 1
    %p90 = por %p88, %p89
    %p92 = scmp.ne.s32.totalorder %s77, %s91
    %p93 = scmp.eq.s32.totalorder %s25, 0
    %p94 = por %p92, %p93
    %s96 = sadd.s32 %s95, 1
    %p99 = scmp.eq.s32.totalorder %s19, 1
    %p100 = scmp.ne.s32.totalorder %s95, %s97
    %p101 = scmp.eq.s32.totalorder %s19, 0
    %p102 = por %p100, %p101
    %p103 = scmp.ne.s32.totalorder %s95, %s97
    %p104 = scmp.eq.s32.totalorder %s24, 1
    %p105 = por %p103, %p104
    %p106 = scmp.ne.s32.totalorder %s97, %s98
    %p107 = scmp.eq.s32.totalorder %s24, 0
    %p108 = por %p106, %p107
    %p109 = scmp.ne.s32.totalorder %s97, %s98
    %p110 = scmp.eq.s32.totalorder %s25, 1
    %p111 = por %p109, %p110
    %p113 = scmp.ne.s32.totalorder %s98, %s112
    %p114 = scmp.eq.s32.totalorder %s25, 0
    %p115 = por %p113, %p114
    %s117 = sadd.s32 %s116, 1
    %p120 = scmp.eq.s32.totalorder %s19, 1
    %p121 = scmp.ne.s32.totalorder %s116, %s118
    %p122 = scmp.eq.s32.totalorder %s19, 0
    %p123 = por %p121, %p122
    %p124 = scmp.ne.s32.totalorder %s116, %s118
    %p125 = scmp.eq.s32.totalorder %s24, 1
    %p126 = por %p124, %p125
    %p127 = scmp.ne.s32.totalorder %s118, %s119
    %p128 = scmp.eq.s32.totalorder %s24, 0
    %p129 = por %p127, %p128
    %p130 = scmp.ne.s32.totalorder %s118, %s119
    %p131 = scmp.eq.s32.totalorder %s25, 1
    %p132 = por %p130, %p131
    %p134 = scmp.ne.s32.totalorder %s119, %s133
    %p135 = scmp.eq.s32.totalorder %s25, 0
    %p136 = por %p134, %p135
    %s138 = sadd.s32 %s137, 1
    %p141 = scmp.eq.s32.totalorder %s19, 1
    %p142 = scmp.ne.s32.totalorder %s137, %s139
    %p143 = scmp.eq.s32.totalorder %s19, 0
    %p144 = por %p142, %p143
    %p145 = scmp.ne.s32.totalorder %s137, %s139
    %p146 = scmp.eq.s32.totalorder %s24, 1
    %p147 = por %p145, %p146
    %p148 = scmp.ne.s32.totalorder %s139, %s140
    %p149 = scmp.eq.s32.totalorder %s24, 0
    %p150 = por %p148, %p149
    %p151 = scmp.ne.s32.totalorder %s139, %s140
    %p152 = scmp.eq.s32.totalorder %s25, 1
    %p153 = por %p151, %p152
    %p155 = scmp.ne.s32.totalorder %s140, %s154
    %p156 = scmp.eq.s32.totalorder %s25, 0
    %p157 = por %p155, %p156
    %s159 = sadd.s32 %s158, 1
    %p162 = scmp.eq.s32.totalorder %s19, 1
    %p163 = scmp.ne.s32.totalorder %s158, %s160
    %p164 = scmp.eq.s32.totalorder %s19, 0
    %p165 = por %p163, %p164
    %p166 = scmp.ne.s32.totalorder %s158, %s160
    %p167 = scmp.eq.s32.totalorder %s24, 1
    %p168 = por %p166, %p167
    %p169 = scmp.ne.s32.totalorder %s160, %s161
    %p170 = scmp.eq.s32.totalorder %s24, 0
    %p171 = por %p169, %p170
    %p172 = scmp.ne.s32.totalorder %s160, %s161
    %p173 = scmp.eq.s32.totalorder %s25, 1
    %p174 = por %p172, %p173
    %p176 = scmp.ne.s32.totalorder %s161, %s175
    %p177 = scmp.eq.s32.totalorder %s25, 0
    %p178 = por %p176, %p177
    %s180 = sadd.s32 %s179, 1
    %p183 = scmp.eq.s32.totalorder %s19, 1
    %p184 = scmp.ne.s32.totalorder %s179, %s181
    %p185 = scmp.eq.s32.totalorder %s19, 0
    %p186 = por %p184, %p185
    %p187 = scmp.ne.s32.totalorder %s179, %s181
    %p188 = scmp.eq.s32.totalorder %s24, 1
    %p189 = por %p187, %p188
    %p190 = scmp.ne.s32.totalorder %s181, %s182
    %p191 = scmp.eq.s32.totalorder %s24, 0
    %p192 = por %p190, %p191
    %p193 = scmp.ne.s32.totalorder %s181, %s182
    %p194 = scmp.eq.s32.totalorder %s25, 1
    %p195 = por %p193, %p194
    %p197 = scmp.ne.s32.totalorder %s182, %s196
    %p198 = scmp.eq.s32.totalorder %s25, 0
    %p199 = por %p197, %p198
    %s201 = sadd.s32 %s200, 1
    %p204 = scmp.eq.s32.totalorder %s19, 1
    %p205 = scmp.ne.s32.totalorder %s200, %s202
    %p206 = scmp.eq.s32.totalorder %s19, 0
    %p207 = por %p205, %p206
    %p208 = scmp.ne.s32.totalorder %s200, %s202
    %p209 = scmp.eq.s32.totalorder %s24, 1
    %p210 = por %p208, %p209
    %p211 = scmp.ne.s32.totalorder %s202, %s203
    %p212 = scmp.eq.s32.totalorder %s24, 0
    %p213 = por %p211, %p212
    %p214 = scmp.ne.s32.totalorder %s202, %s203
    %p215 = scmp.eq.s32.totalorder %s25, 1
    %p216 = por %p214, %p215
    %p218 = scmp.ne.s32.totalorder %s203, %s217
    %p219 = scmp.eq.s32.totalorder %s25, 0
    %p220 = por %p218, %p219
    %s222 = sadd.s32 %s221, 1
    %p225 = scmp.eq.s32.totalorder %s19, 1
    %p226 = scmp.ne.s32.totalorder %s221, %s223
    %p227 = scmp.eq.s32.totalorder %s19, 0
    %p228 = por %p226, %p227
    %p229 = scmp.ne.s32.totalorder %s221, %s223
    %p230 = scmp.eq.s32.totalorder %s24, 1
    %p231 = por %p229, %p230
    %p232 = scmp.ne.s32.totalorder %s223, %s224
    %p233 = scmp.eq.s32.totalorder %s24, 0
    %p234 = por %p232, %p233
    %p235 = scmp.ne.s32.totalorder %s223, %s224
    %p236 = scmp.eq.s32.totalorder %s25, 1
    %p237 = por %p235, %p236
    %p239 = scmp.ne.s32.totalorder %s224, %s238
    %p240 = scmp.eq.s32.totalorder %s25, 0
    %p241 = por %p239, %p240
    %s243 = sadd.s32 %s242, 1
    %p246 = scmp.eq.s32.totalorder %s19, 1
    %p247 = scmp.ne.s32.totalorder %s242, %s244
    %p248 = scmp.eq.s32.totalorder %s19, 0
    %p249 = por %p247, %p248
    %p250 = scmp.ne.s32.totalorder %s242, %s244
    %p251 = scmp.eq.s32.totalorder %s24, 1
    %p252 = por %p250, %p251
    %p253 = scmp.ne.s32.totalorder %s244, %s245
    %p254 = scmp.eq.s32.totalorder %s24, 0
    %p255 = por %p253, %p254
    %p256 = scmp.ne.s32.totalorder %s244, %s245
    %p257 = scmp.eq.s32.totalorder %s25, 1
    %p258 = por %p256, %p257
    %p260 = scmp.ne.s32.totalorder %s245, %s259
    %p261 = scmp.eq.s32.totalorder %s25, 0
    %p262 = por %p260, %p261
    %s264 = sadd.s32 %s263, 1
    %p267 = scmp.eq.s32.totalorder %s19, 1
    %p268 = scmp.ne.s32.totalorder %s263, %s265
    %p269 = scmp.eq.s32.totalorder %s19, 0
    %p270 = por %p268, %p269
    %p271 = scmp.ne.s32.totalorder %s263, %s265
    %p272 = scmp.eq.s32.totalorder %s24, 1
    %p273 = por %p271, %p272
    %p274 = scmp.ne.s32.totalorder %s265, %s266
    %p275 = scmp.eq.s32.totalorder %s24, 0
    %p276 = por %p274, %p275
    %p277 = scmp.ne.s32.totalorder %s265, %s266
    %p278 = scmp.eq.s32.totalorder %s25, 1
    %p279 = por %p277, %p278
    %p281 = scmp.ne.s32.totalorder %s266, %s280
    %p282 = scmp.eq.s32.totalorder %s25, 0
    %p283 = por %p281, %p282
    %s285 = sadd.s32 %s284, 1
    %p288 = scmp.eq.s32.totalorder %s19, 1
    %p289 = scmp.ne.s32.totalorder %s284, %s286
    %p290 = scmp.eq.s32.totalorder %s19, 0
    %p291 = por %p289, %p290
    %p292 = scmp.ne.s32.totalorder %s284, %s286
    %p293 = scmp.eq.s32.totalorder %s24, 1
    %p294 = por %p292, %p293
    %p295 = scmp.ne.s32.totalorder %s286, %s287
    %p296 = scmp.eq.s32.totalorder %s24, 0
    %p297 = por %p295, %p296
    %p298 = scmp.ne.s32.totalorder %s286, %s287
    %p299 = scmp.eq.s32.totalorder %s25, 1
    %p300 = por %p298, %p299
    %p302 = scmp.ne.s32.totalorder %s287, %s301
    %p303 = scmp.eq.s32.totalorder %s25, 0
    %p304 = por %p302, %p303
    %s305 = ssub.s32 %s19, %s26
    %p306 = scmp.eq.s32.totalorder %s305, 0
    %s308 = sadd.s32 %s307, 1
    %s309 = scalar_select %p306, %s307, %s308
    %p312 = pneg %p306
    %p313 = scmp.eq.s32.totalorder %s19, 1
    %p314 = por %p312, %p313
    %p315 = scmp.ne.s32.totalorder %s307, %s310
    %p316 = scmp.eq.s32.totalorder %s19, 0
    %p317 = por %p315, %p316
    %p318 = scmp.ne.s32.totalorder %s307, %s310
    %p319 = scmp.eq.s32.totalorder %s24, 1
    %p320 = por %p318, %p319
    %p321 = scmp.ne.s32.totalorder %s310, %s311
    %p322 = scmp.eq.s32.totalorder %s24, 0
    %p323 = por %p321, %p322
    %p324 = scmp.ne.s32.totalorder %s310, %s311
    %p325 = scmp.eq.s32.totalorder %s25, 1
    %p326 = por %p324, %p325
    %p328 = scmp.ne.s32.totalorder %s311, %s327
    %p329 = scmp.eq.s32.totalorder %s25, 0
    %p330 = por %p328, %p329
    %p331 = scmp.le.s32.totalorder 1, %s19
    %p332 = scmp.lt.s32.totalorder %s19, 3
    %p333 = pnand %p331, %p332
    %p334 = pneg %p333
    // Predicated region
    $region9: #{cnn_forward.2} parent=5 // pred_check
      _
    $region10: #{cnn_forward.2} parent=5 // pred_check_branch
      %336 = sbr.rel (%p333) target = $region12
    $region11: #{cnn_forward.2} parent=5 // pred_region
      %s337 = ssub.s32 %s19, 1
      // Predicated region
      $region13: #{cnn_forward.2} parent=11 // pred_check
        %p338 = pneg %p66
      $region14: #{cnn_forward.2} parent=11 // pred_check_branch
        %340 = sbr.rel (%p338) target = $region16
      $region15: #{cnn_forward.2} parent=11 // pred_region
        _
      $region16: #{cnn_forward.2} parent=11 // pred_fallthru
        _
      // Predicated region
      $region17: #{cnn_forward.2} parent=11 // pred_check
        %p341 = pneg %p87
      $region18: #{cnn_forward.2} parent=11 // pred_check_branch
        %343 = sbr.rel (%p341) target = $region20
      $region19: #{cnn_forward.2} parent=11 // pred_region
        _
      $region20: #{cnn_forward.2} parent=11 // pred_fallthru
        _
      // Predicated region
      $region21: #{cnn_forward.2} parent=11 // pred_check
        %p344 = pneg %p108
      $region22: #{cnn_forward.2} parent=11 // pred_check_branch
        %346 = sbr.rel (%p344) target = $region24
      $region23: #{cnn_forward.2} parent=11 // pred_region
        _
      $region24: #{cnn_forward.2} parent=11 // pred_fallthru
        _
      // Predicated region
      $region25: #{cnn_forward.2} parent=11 // pred_check
        %p347 = pneg %p129
      $region26: #{cnn_forward.2} parent=11 // pred_check_branch
        %349 = sbr.rel (%p347) target = $region28
      $region27: #{cnn_forward.2} parent=11 // pred_region
        _
      $region28: #{cnn_forward.2} parent=11 // pred_fallthru
        _
      // Predicated region
      $region29: #{cnn_forward.2} parent=11 // pred_check
        %p350 = pneg %p150
      $region30: #{cnn_forward.2} parent=11 // pred_check_branch
        %352 = sbr.rel (%p350) target = $region32
      $region31: #{cnn_forward.2} parent=11 // pred_region
        _
      $region32: #{cnn_forward.2} parent=11 // pred_fallthru
        _
      // Predicated region
      $region33: #{cnn_forward.2} parent=11 // pred_check
        %p353 = pneg %p171
      $region34: #{cnn_forward.2} parent=11 // pred_check_branch
        %355 = sbr.rel (%p353) target = $region36
      $region35: #{cnn_forward.2} parent=11 // pred_region
        _
      $region36: #{cnn_forward.2} parent=11 // pred_fallthru
        _
      // Predicated region
      $region37: #{cnn_forward.2} parent=11 // pred_check
        %p356 = pneg %p192
      $region38: #{cnn_forward.2} parent=11 // pred_check_branch
        %358 = sbr.rel (%p356) target = $region40
      $region39: #{cnn_forward.2} parent=11 // pred_region
        _
      $region40: #{cnn_forward.2} parent=11 // pred_fallthru
        _
      // Predicated region
      $region41: #{cnn_forward.2} parent=11 // pred_check
        %p359 = pneg %p213
      $region42: #{cnn_forward.2} parent=11 // pred_check_branch
        %361 = sbr.rel (%p359) target = $region44
      $region43: #{cnn_forward.2} parent=11 // pred_region
        _
      $region44: #{cnn_forward.2} parent=11 // pred_fallthru
        _
      // Predicated region
      $region45: #{cnn_forward.2} parent=11 // pred_check
        %p362 = pneg %p234
      $region46: #{cnn_forward.2} parent=11 // pred_check_branch
        %364 = sbr.rel (%p362) target = $region48
      $region47: #{cnn_forward.2} parent=11 // pred_region
        _
      $region48: #{cnn_forward.2} parent=11 // pred_fallthru
        _
      // Predicated region
      $region49: #{cnn_forward.2} parent=11 // pred_check
        %p365 = pneg %p255
      $region50: #{cnn_forward.2} parent=11 // pred_check_branch
        %367 = sbr.rel (%p365) target = $region52
      $region51: #{cnn_forward.2} parent=11 // pred_region
        _
      $region52: #{cnn_forward.2} parent=11 // pred_fallthru
        _
      // Predicated region
      $region53: #{cnn_forward.2} parent=11 // pred_check
        %p368 = pneg %p276
      $region54: #{cnn_forward.2} parent=11 // pred_check_branch
        %370 = sbr.rel (%p368) target = $region56
      $region55: #{cnn_forward.2} parent=11 // pred_region
        _
      $region56: #{cnn_forward.2} parent=11 // pred_fallthru
        _
      // Predicated region
      $region57: #{cnn_forward.2} parent=11 // pred_check
        %p371 = pneg %p297
      $region58: #{cnn_forward.2} parent=11 // pred_check_branch
        %373 = sbr.rel (%p371) target = $region60
      $region59: #{cnn_forward.2} parent=11 // pred_region
        _
      $region60: #{cnn_forward.2} parent=11 // pred_fallthru
        _
    $region12: #{cnn_forward.2} parent=5 // pred_fallthru
      _
    %p374 = scmp.lt.s32.totalorder %s19, 2
    // Predicated region
    $region61: #{cnn_forward.2} parent=5 // pred_check
      %p375 = pneg %p374
    $region62: #{cnn_forward.2} parent=5 // pred_check_branch
      %377 = sbr.rel (%p375) target = $region64
    $region63: #{cnn_forward.2} parent=5 // pred_region
      // Predicated region
      $region65: #{cnn_forward.2} parent=63 // pred_check
        %p378 = pneg %p39
      $region66: #{cnn_forward.2} parent=63 // pred_check_branch
        %380 = sbr.rel (%p378) target = $region68
      $region67: #{cnn_forward.2} parent=63 // pred_region
        %p381 = scmp.lt.s32.totalorder %s19, 1
        %s382 = scalar_select %p381, %s19, 1
        %s383 = smul.addr %s382, 900
        %s384 = smul.addr %s383, 4
        %s385 = scalar_lea.vmem %s0, %s384
      $region68: #{cnn_forward.2} parent=63 // pred_fallthru
        _
    $region64: #{cnn_forward.2} parent=5 // pred_fallthru
      _
    %p386 = scmp.le.s32.totalorder 1, %s19
    %p387 = scmp.lt.s32.totalorder %s19, 3
    %p388 = pnand %p386, %p387
    %p389 = pneg %p388
    // Predicated region
    $region69: #{cnn_forward.2} parent=5 // pred_check
      _
    $region70: #{cnn_forward.2} parent=5 // pred_check_branch
      %391 = sbr.rel (%p388) target = $region72
    $region71: #{cnn_forward.2} parent=5 // pred_region
      %s392 = ssub.s32 %s19, 1
      %p393 = scmp.lt.s32.totalorder %s24, 1
      %s394 = scalar_select %p393, %s24, 1
      %s395 = smul.addr %s394, 900
      %s396 = smul.addr %s395, 4
      %s397 = scalar_lea.vmem %s0, %s396
      %p398 = pneg %p45
      %p399 = pneg %p42
      %p400 = pneg %p66
      %p401 = pneg %p63
      %p402 = pneg %p87
      %p403 = pneg %p84
      %p404 = pneg %p108
      %p405 = pneg %p105
      %p406 = pneg %p129
      %p407 = pneg %p126
      %p408 = pneg %p150
      %p409 = pneg %p147
      %p410 = pneg %p171
      %p411 = pneg %p168
      %p412 = pneg %p192
      %p413 = pneg %p189
      %p414 = pneg %p213
      %p415 = pneg %p210
      %p416 = pneg %p234
      %p417 = pneg %p231
      %p418 = pneg %p255
      %p419 = pneg %p252
      %p420 = pneg %p276
      %p421 = pneg %p273
      %p422 = pneg %p297
      %p423 = pneg %p294
      %p424 = pneg %p323
      %p425 = pneg %p320
      %p426 = scmp.lt.s32.totalorder %s24, 1
      %s427 = scalar_select %p426, %s24, 1
      %s428 = smul.addr %s427, 112
      %s429 = smul.addr %s428, 4
      %s430 = scalar_lea.vmem %s13, %s429
      %p431 = scmp.lt.s32.totalorder %s24, 1
      %s432 = scalar_select %p431, %s24, 1
      %s433 = smul.addr %s432, 900
      %s434 = smul.addr %s433, 4
      %s435 = scalar_lea.vmem %s0, %s434
      %p436 = scmp.lt.s32.totalorder %s24, 1
      %s437 = scalar_select %p436, %s24, 1
      %s438 = smul.addr %s437, 112
      %s439 = smul.addr %s438, 4
      %s440 = scalar_lea.vmem %s13, %s439
      %vm442 = vcmask 928768
      %443 = vst.msk [vmem:[#allocation2] sm:$0xf] %vm442, 0
      %444 = vst.msk [vmem:[#allocation2 + $0x4] sm:$0xf] %vm442, 0
      %445 = vst.msk [vmem:[#allocation2 + $0x8] sm:$0xf] %vm442, 0
      %446 = vst.msk [vmem:[#allocation2 + $0xc] sm:$0xf] %vm442, 0
      %447 = vst.msk [vmem:[#allocation2 + $0x10] sm:$0xf] %vm442, 0
      %448 = vst.msk [vmem:[#allocation2 + $0x14] sm:$0xf] %vm442, 0
      %449 = vst.msk [vmem:[#allocation2 + $0x18] sm:$0xf] %vm442, 0
      %450 = vst.msk [vmem:[#allocation2 + $0x1c] sm:$0xf] %vm442, 0
      %451 = vst.msk [vmem:[#allocation2 + $0x20] sm:$0xf] %vm442, 0
      %452 = vst.msk [vmem:[#allocation2 + $0x24] sm:$0xf] %vm442, 0
      %453 = vst.msk [vmem:[#allocation2 + $0x28] sm:$0xf] %vm442, 0
      %454 = vst.msk [vmem:[#allocation2 + $0x2c] sm:$0xf] %vm442, 0
      %455 = vst.msk [vmem:[#allocation2 + $0x30] sm:$0xf] %vm442, 0
      %456 = vst.msk [vmem:[#allocation2 + $0x34] sm:$0xf] %vm442, 0
      %457 = vst.msk [vmem:[#allocation2 + $0x38] sm:$0xf] %vm442, 0
      %458 = vst.msk [vmem:[#allocation2 + $0x3c] sm:$0xf] %vm442, 0
      %459 = vst.msk [vmem:[#allocation2 + $0x40] sm:$0xf] %vm442, 0
      %460 = vst.msk [vmem:[#allocation2 + $0x44] sm:$0xf] %vm442, 0
      %461 = vst.msk [vmem:[#allocation2 + $0x48] sm:$0xf] %vm442, 0
      %462 = vst.msk [vmem:[#allocation2 + $0x4c] sm:$0xf] %vm442, 0
      %463 = vst.msk [vmem:[#allocation2 + $0x50] sm:$0xf] %vm442, 0
      %464 = vst.msk [vmem:[#allocation2 + $0x54] sm:$0xf] %vm442, 0
      %465 = vst.msk [vmem:[#allocation2 + $0x58] sm:$0xf] %vm442, 0
      %466 = vst.msk [vmem:[#allocation2 + $0x5c] sm:$0xf] %vm442, 0
      %467 = vst.msk [vmem:[#allocation2 + $0x60] sm:$0xf] %vm442, 0
      %468 = vst.msk [vmem:[#allocation2 + $0x64] sm:$0xf] %vm442, 0
      %469 = vst.msk [vmem:[#allocation2 + $0x68] sm:$0xf] %vm442, 0
      %470 = vst.msk [vmem:[#allocation2 + $0x6c] sm:$0xf] %vm442, 0
      %471 = vst.msk [vmem:[#allocation2 + $0x70] sm:$0xf] %vm442, 0
      %472 = vst.msk [vmem:[#allocation2 + $0x74] sm:$0xf] %vm442, 0
      %473 = vst.msk [vmem:[#allocation2 + $0x78] sm:$0xf] %vm442, 0
      %474 = vst.msk [vmem:[#allocation2 + $0x7c] sm:$0xf] %vm442, 0
      %475 = vst.msk [vmem:[#allocation2 + $0x80] sm:$0xf] %vm442, 0
      %476 = vst.msk [vmem:[#allocation2 + $0x84] sm:$0xf] %vm442, 0
      %477 = vst.msk [vmem:[#allocation2 + $0x88] sm:$0xf] %vm442, 0
      %478 = vst.msk [vmem:[#allocation2 + $0x8c] sm:$0xf] %vm442, 0
      %479 = vst.msk [vmem:[#allocation2 + $0x90] sm:$0xf] %vm442, 0
      %480 = vst.msk [vmem:[#allocation2 + $0x94] sm:$0xf] %vm442, 0
      %481 = vst.msk [vmem:[#allocation2 + $0x98] sm:$0xf] %vm442, 0
      %482 = vst.msk [vmem:[#allocation2 + $0x9c] sm:$0xf] %vm442, 0
      %483 = vst.msk [vmem:[#allocation2 + $0xa0] sm:$0xf] %vm442, 0
      %484 = vst.msk [vmem:[#allocation2 + $0xa4] sm:$0xf] %vm442, 0
      %485 = vst.msk [vmem:[#allocation2 + $0xa8] sm:$0xf] %vm442, 0
      %486 = vst.msk [vmem:[#allocation2 + $0xac] sm:$0xf] %vm442, 0
      %487 = vst.msk [vmem:[#allocation2 + $0xb0] sm:$0xf] %vm442, 0
      %488 = vst.msk [vmem:[#allocation2 + $0xb4] sm:$0xf] %vm442, 0
      %489 = vst.msk [vmem:[#allocation2 + $0xb8] sm:$0xf] %vm442, 0
      %490 = vst.msk [vmem:[#allocation2 + $0xbc] sm:$0xf] %vm442, 0
      %491 = vst.msk [vmem:[#allocation2 + $0xc0] sm:$0xf] %vm442, 0
      %492 = vst.msk [vmem:[#allocation2 + $0xc4] sm:$0xf] %vm442, 0
      %493 = vst.msk [vmem:[#allocation2 + $0xc8] sm:$0xf] %vm442, 0
      %494 = vst.msk [vmem:[#allocation2 + $0xcc] sm:$0xf] %vm442, 0
      %495 = vst.msk [vmem:[#allocation2 + $0xd0] sm:$0xf] %vm442, 0
      %496 = vst.msk [vmem:[#allocation2 + $0xd4] sm:$0xf] %vm442, 0
      %497 = vst.msk [vmem:[#allocation2 + $0xd8] sm:$0xf] %vm442, 0
      %498 = vst.msk [vmem:[#allocation2 + $0xdc] sm:$0xf] %vm442, 0
      %499 = vst.msk [vmem:[#allocation2 + $0xe0] sm:$0xf] %vm442, 0
      %500 = vst.msk [vmem:[#allocation2 + $0xe4] sm:$0xf] %vm442, 0
      %501 = vst.msk [vmem:[#allocation2 + $0xe8] sm:$0xf] %vm442, 0
      %502 = vst.msk [vmem:[#allocation2 + $0xec] sm:$0xf] %vm442, 0
      %503 = vst.msk [vmem:[#allocation2 + $0xf0] sm:$0xf] %vm442, 0
      %504 = vst.msk [vmem:[#allocation2 + $0xf4] sm:$0xf] %vm442, 0
      %505 = vst.msk [vmem:[#allocation2 + $0xf8] sm:$0xf] %vm442, 0
      %506 = vst.msk [vmem:[#allocation2 + $0xfc] sm:$0xf] %vm442, 0
      %507 = vst.msk [vmem:[#allocation2 + $0x100] sm:$0xf] %vm442, 0
      %508 = vst.msk [vmem:[#allocation2 + $0x104] sm:$0xf] %vm442, 0
      %509 = vst.msk [vmem:[#allocation2 + $0x108] sm:$0xf] %vm442, 0
      %510 = vst.msk [vmem:[#allocation2 + $0x10c] sm:$0xf] %vm442, 0
      %511 = vst.msk [vmem:[#allocation2 + $0x110] sm:$0xf] %vm442, 0
      %512 = vst.msk [vmem:[#allocation2 + $0x114] sm:$0xf] %vm442, 0
      %513 = vst.msk [vmem:[#allocation2 + $0x118] sm:$0xf] %vm442, 0
      %514 = vst.msk [vmem:[#allocation2 + $0x11c] sm:$0xf] %vm442, 0
      %515 = vst.msk [vmem:[#allocation2 + $0x120] sm:$0xf] %vm442, 0
      %516 = vst.msk [vmem:[#allocation2 + $0x124] sm:$0xf] %vm442, 0
      %517 = vst.msk [vmem:[#allocation2 + $0x128] sm:$0xf] %vm442, 0
      %518 = vst.msk [vmem:[#allocation2 + $0x12c] sm:$0xf] %vm442, 0
      %519 = vst.msk [vmem:[#allocation2 + $0x130] sm:$0xf] %vm442, 0
      %520 = vst.msk [vmem:[#allocation2 + $0x134] sm:$0xf] %vm442, 0
      %521 = vst.msk [vmem:[#allocation2 + $0x138] sm:$0xf] %vm442, 0
      %522 = vst.msk [vmem:[#allocation2 + $0x13c] sm:$0xf] %vm442, 0
      %523 = vst.msk [vmem:[#allocation2 + $0x140] sm:$0xf] %vm442, 0
      %524 = vst.msk [vmem:[#allocation2 + $0x144] sm:$0xf] %vm442, 0
      %525 = vst.msk [vmem:[#allocation2 + $0x148] sm:$0xf] %vm442, 0
      %526 = vst.msk [vmem:[#allocation2 + $0x14c] sm:$0xf] %vm442, 0
      %527 = vst.msk [vmem:[#allocation2 + $0x150] sm:$0xf] %vm442, 0
      %528 = vst.msk [vmem:[#allocation2 + $0x154] sm:$0xf] %vm442, 0
      %529 = vst.msk [vmem:[#allocation2 + $0x158] sm:$0xf] %vm442, 0
      %530 = vst.msk [vmem:[#allocation2 + $0x15c] sm:$0xf] %vm442, 0
      %531 = vst.msk [vmem:[#allocation2 + $0x160] sm:$0xf] %vm442, 0
      %532 = vst.msk [vmem:[#allocation2 + $0x164] sm:$0xf] %vm442, 0
      %533 = vst.msk [vmem:[#allocation2 + $0x168] sm:$0xf] %vm442, 0
      %534 = vst.msk [vmem:[#allocation2 + $0x16c] sm:$0xf] %vm442, 0
      %535 = vst.msk [vmem:[#allocation2 + $0x170] sm:$0xf] %vm442, 0
      %536 = vst.msk [vmem:[#allocation2 + $0x174] sm:$0xf] %vm442, 0
      %537 = vst.msk [vmem:[#allocation2 + $0x178] sm:$0xf] %vm442, 0
      %538 = vst.msk [vmem:[#allocation2 + $0x17c] sm:$0xf] %vm442, 0
      %539 = vst.msk [vmem:[#allocation2 + $0x180] sm:$0xf] %vm442, 0
      %540 = vst.msk [vmem:[#allocation2 + $0x184] sm:$0xf] %vm442, 0
      %541 = vst.msk [vmem:[#allocation2 + $0x188] sm:$0xf] %vm442, 0
      %542 = vst.msk [vmem:[#allocation2 + $0x18c] sm:$0xf] %vm442, 0
      %543 = vst.msk [vmem:[#allocation2 + $0x190] sm:$0xf] %vm442, 0
      %544 = vst.msk [vmem:[#allocation2 + $0x194] sm:$0xf] %vm442, 0
      %545 = vst.msk [vmem:[#allocation2 + $0x198] sm:$0xf] %vm442, 0
      %546 = vst.msk [vmem:[#allocation2 + $0x19c] sm:$0xf] %vm442, 0
      %547 = vst.msk [vmem:[#allocation2 + $0x1a0] sm:$0xf] %vm442, 0
      %548 = vst.msk [vmem:[#allocation2 + $0x1a4] sm:$0xf] %vm442, 0
      %549 = vst.msk [vmem:[#allocation2 + $0x1a8] sm:$0xf] %vm442, 0
      %550 = vst.msk [vmem:[#allocation2 + $0x1ac] sm:$0xf] %vm442, 0
      %551 = vst.msk [vmem:[#allocation2 + $0x1b0] sm:$0xf] %vm442, 0
      %552 = vst.msk [vmem:[#allocation2 + $0x1b4] sm:$0xf] %vm442, 0
      %553 = vst.msk [vmem:[#allocation2 + $0x1b8] sm:$0xf] %vm442, 0
      %554 = vst.msk [vmem:[#allocation2 + $0x1bc] sm:$0xf] %vm442, 0
      %555 = vst.msk [vmem:[#allocation2 + $0x1c0] sm:$0xf] %vm442, 0
      %556 = vst.msk [vmem:[#allocation2 + $0x1c4] sm:$0xf] %vm442, 0
      %557 = vst.msk [vmem:[#allocation2 + $0x1c8] sm:$0xf] %vm442, 0
      %558 = vst.msk [vmem:[#allocation2 + $0x1cc] sm:$0xf] %vm442, 0
      %559 = vst.msk [vmem:[#allocation2 + $0x1d0] sm:$0xf] %vm442, 0
      %560 = vst.msk [vmem:[#allocation2 + $0x1d4] sm:$0xf] %vm442, 0
      %561 = vst.msk [vmem:[#allocation2 + $0x1d8] sm:$0xf] %vm442, 0
      %562 = vst.msk [vmem:[#allocation2 + $0x1dc] sm:$0xf] %vm442, 0
      %563 = vst.msk [vmem:[#allocation2 + $0x1e0] sm:$0xf] %vm442, 0
      %564 = vst.msk [vmem:[#allocation2 + $0x1e4] sm:$0xf] %vm442, 0
      %565 = vst.msk [vmem:[#allocation2 + $0x1e8] sm:$0xf] %vm442, 0
      %566 = vst.msk [vmem:[#allocation2 + $0x1ec] sm:$0xf] %vm442, 0
      %567 = vst.msk [vmem:[#allocation2 + $0x1f0] sm:$0xf] %vm442, 0
      %568 = vst.msk [vmem:[#allocation2 + $0x1f4] sm:$0xf] %vm442, 0
      %569 = vst.msk [vmem:[#allocation2 + $0x1f8] sm:$0xf] %vm442, 0
      %570 = vst.msk [vmem:[#allocation2 + $0x1fc] sm:$0xf] %vm442, 0
      %571 = vst.msk [vmem:[#allocation2 + $0x200] sm:$0xf] %vm442, 0
      %572 = vst.msk [vmem:[#allocation2 + $0x204] sm:$0xf] %vm442, 0
      %573 = vst.msk [vmem:[#allocation2 + $0x208] sm:$0xf] %vm442, 0
      %574 = vst.msk [vmem:[#allocation2 + $0x20c] sm:$0xf] %vm442, 0
      %575 = vst.msk [vmem:[#allocation2 + $0x210] sm:$0xf] %vm442, 0
      %576 = vst.msk [vmem:[#allocation2 + $0x214] sm:$0xf] %vm442, 0
      %577 = vst.msk [vmem:[#allocation2 + $0x218] sm:$0xf] %vm442, 0
      %578 = vst.msk [vmem:[#allocation2 + $0x21c] sm:$0xf] %vm442, 0
      %579 = vst.msk [vmem:[#allocation2 + $0x220] sm:$0xf] %vm442, 0
      %580 = vst.msk [vmem:[#allocation2 + $0x224] sm:$0xf] %vm442, 0
      %581 = vst.msk [vmem:[#allocation2 + $0x228] sm:$0xf] %vm442, 0
      %582 = vst.msk [vmem:[#allocation2 + $0x22c] sm:$0xf] %vm442, 0
      %583 = vst.msk [vmem:[#allocation2 + $0x230] sm:$0xf] %vm442, 0
      %584 = vst.msk [vmem:[#allocation2 + $0x234] sm:$0xf] %vm442, 0
      %585 = vst.msk [vmem:[#allocation2 + $0x238] sm:$0xf] %vm442, 0
      %586 = vst.msk [vmem:[#allocation2 + $0x23c] sm:$0xf] %vm442, 0
      %587 = vst.msk [vmem:[#allocation2 + $0x240] sm:$0xf] %vm442, 0
      %588 = vst.msk [vmem:[#allocation2 + $0x244] sm:$0xf] %vm442, 0
      %589 = vst.msk [vmem:[#allocation2 + $0x248] sm:$0xf] %vm442, 0
      %590 = vst.msk [vmem:[#allocation2 + $0x24c] sm:$0xf] %vm442, 0
      %591 = vst.msk [vmem:[#allocation2 + $0x250] sm:$0xf] %vm442, 0
      %592 = vst.msk [vmem:[#allocation2 + $0x254] sm:$0xf] %vm442, 0
      %593 = vst.msk [vmem:[#allocation2 + $0x258] sm:$0xf] %vm442, 0
      %594 = vst.msk [vmem:[#allocation2 + $0x25c] sm:$0xf] %vm442, 0
      %595 = vst.msk [vmem:[#allocation2 + $0x260] sm:$0xf] %vm442, 0
      %596 = vst.msk [vmem:[#allocation2 + $0x264] sm:$0xf] %vm442, 0
      %597 = vst.msk [vmem:[#allocation2 + $0x268] sm:$0xf] %vm442, 0
      %598 = vst.msk [vmem:[#allocation2 + $0x26c] sm:$0xf] %vm442, 0
      %599 = vst.msk [vmem:[#allocation2 + $0x270] sm:$0xf] %vm442, 0
      %600 = vst.msk [vmem:[#allocation2 + $0x274] sm:$0xf] %vm442, 0
      %601 = vst.msk [vmem:[#allocation2 + $0x278] sm:$0xf] %vm442, 0
      %602 = vst.msk [vmem:[#allocation2 + $0x27c] sm:$0xf] %vm442, 0
      %603 = vst.msk [vmem:[#allocation2 + $0x280] sm:$0xf] %vm442, 0
      %604 = vst.msk [vmem:[#allocation2 + $0x284] sm:$0xf] %vm442, 0
      %605 = vst.msk [vmem:[#allocation2 + $0x288] sm:$0xf] %vm442, 0
      %606 = vst.msk [vmem:[#allocation2 + $0x28c] sm:$0xf] %vm442, 0
      %607 = vst.msk [vmem:[#allocation2 + $0x290] sm:$0xf] %vm442, 0
      %608 = vst.msk [vmem:[#allocation2 + $0x294] sm:$0xf] %vm442, 0
      %609 = vst.msk [vmem:[#allocation2 + $0x298] sm:$0xf] %vm442, 0
      %610 = vst.msk [vmem:[#allocation2 + $0x29c] sm:$0xf] %vm442, 0
      %611 = vst.msk [vmem:[#allocation2 + $0x2a0] sm:$0xf] %vm442, 0
      %612 = vst.msk [vmem:[#allocation2 + $0x2a4] sm:$0xf] %vm442, 0
      %613 = vst.msk [vmem:[#allocation2 + $0x2a8] sm:$0xf] %vm442, 0
      %614 = vst.msk [vmem:[#allocation2 + $0x2ac] sm:$0xf] %vm442, 0
      %615 = vst.msk [vmem:[#allocation2 + $0x2b0] sm:$0xf] %vm442, 0
      %616 = vst.msk [vmem:[#allocation2 + $0x2b4] sm:$0xf] %vm442, 0
      %617 = vst.msk [vmem:[#allocation2 + $0x2b8] sm:$0xf] %vm442, 0
      %618 = vst.msk [vmem:[#allocation2 + $0x2bc] sm:$0xf] %vm442, 0
      %619 = vst.msk [vmem:[#allocation2 + $0x2c0] sm:$0xf] %vm442, 0
      %620 = vst.msk [vmem:[#allocation2 + $0x2c4] sm:$0xf] %vm442, 0
      %621 = vst.msk [vmem:[#allocation2 + $0x2c8] sm:$0xf] %vm442, 0
      %622 = vst.msk [vmem:[#allocation2 + $0x2cc] sm:$0xf] %vm442, 0
      %623 = vst.msk [vmem:[#allocation2 + $0x2d0] sm:$0xf] %vm442, 0
      %624 = vst.msk [vmem:[#allocation2 + $0x2d4] sm:$0xf] %vm442, 0
      %625 = vst.msk [vmem:[#allocation2 + $0x2d8] sm:$0xf] %vm442, 0
      %626 = vst.msk [vmem:[#allocation2 + $0x2dc] sm:$0xf] %vm442, 0
      %627 = vst.msk [vmem:[#allocation2 + $0x2e0] sm:$0xf] %vm442, 0
      %628 = vst.msk [vmem:[#allocation2 + $0x2e4] sm:$0xf] %vm442, 0
      %629 = vst.msk [vmem:[#allocation2 + $0x2e8] sm:$0xf] %vm442, 0
      %630 = vst.msk [vmem:[#allocation2 + $0x2ec] sm:$0xf] %vm442, 0
      %631 = vst.msk [vmem:[#allocation2 + $0x2f0] sm:$0xf] %vm442, 0
      %632 = vst.msk [vmem:[#allocation2 + $0x2f4] sm:$0xf] %vm442, 0
      %633 = vst.msk [vmem:[#allocation2 + $0x2f8] sm:$0xf] %vm442, 0
      %634 = vst.msk [vmem:[#allocation2 + $0x2fc] sm:$0xf] %vm442, 0
      %635 = vst.msk [vmem:[#allocation2 + $0x300] sm:$0xf] %vm442, 0
      %636 = vst.msk [vmem:[#allocation2 + $0x304] sm:$0xf] %vm442, 0
      %637 = vst.msk [vmem:[#allocation2 + $0x308] sm:$0xf] %vm442, 0
      %638 = vst.msk [vmem:[#allocation2 + $0x30c] sm:$0xf] %vm442, 0
      %639 = vst.msk [vmem:[#allocation2 + $0x310] sm:$0xf] %vm442, 0
      %640 = vst.msk [vmem:[#allocation2 + $0x314] sm:$0xf] %vm442, 0
      %641 = vst.msk [vmem:[#allocation2 + $0x318] sm:$0xf] %vm442, 0
      %642 = vst.msk [vmem:[#allocation2 + $0x31c] sm:$0xf] %vm442, 0
      %643 = vst.msk [vmem:[#allocation2 + $0x320] sm:$0xf] %vm442, 0
      %644 = vst.msk [vmem:[#allocation2 + $0x324] sm:$0xf] %vm442, 0
      %645 = vst.msk [vmem:[#allocation2 + $0x328] sm:$0xf] %vm442, 0
      %646 = vst.msk [vmem:[#allocation2 + $0x32c] sm:$0xf] %vm442, 0
      %647 = vst.msk [vmem:[#allocation2 + $0x330] sm:$0xf] %vm442, 0
      %648 = vst.msk [vmem:[#allocation2 + $0x334] sm:$0xf] %vm442, 0
      %649 = vst.msk [vmem:[#allocation2 + $0x338] sm:$0xf] %vm442, 0
      %650 = vst.msk [vmem:[#allocation2 + $0x33c] sm:$0xf] %vm442, 0
      %651 = vst.msk [vmem:[#allocation2 + $0x340] sm:$0xf] %vm442, 0
      %652 = vst.msk [vmem:[#allocation2 + $0x344] sm:$0xf] %vm442, 0
      %653 = vst.msk [vmem:[#allocation2 + $0x348] sm:$0xf] %vm442, 0
      %654 = vst.msk [vmem:[#allocation2 + $0x34c] sm:$0xf] %vm442, 0
      %655 = vst.msk [vmem:[#allocation2 + $0x350] sm:$0xf] %vm442, 0
      %656 = vst.msk [vmem:[#allocation2 + $0x354] sm:$0xf] %vm442, 0
      %657 = vst.msk [vmem:[#allocation2 + $0x358] sm:$0xf] %vm442, 0
      %658 = vst.msk [vmem:[#allocation2 + $0x35c] sm:$0xf] %vm442, 0
      %659 = vst.msk [vmem:[#allocation2 + $0x360] sm:$0xf] %vm442, 0
      %660 = vst.msk [vmem:[#allocation2 + $0x364] sm:$0xf] %vm442, 0
      %661 = vst.msk [vmem:[#allocation2 + $0x368] sm:$0xf] %vm442, 0
      %662 = vst.msk [vmem:[#allocation2 + $0x36c] sm:$0xf] %vm442, 0
      %663 = vst.msk [vmem:[#allocation2 + $0x370] sm:$0xf] %vm442, 0
      %664 = vst.msk [vmem:[#allocation2 + $0x374] sm:$0xf] %vm442, 0
      %665 = vst.msk [vmem:[#allocation2 + $0x378] sm:$0xf] %vm442, 0
      %666 = vst.msk [vmem:[#allocation2 + $0x37c] sm:$0xf] %vm442, 0
      %667 = vst.msk [vmem:[#allocation2 + $0x380] sm:$0xf] %vm442, 0
      %668 = vst.msk [vmem:[#allocation2 + $0x384] sm:$0xf] %vm442, 0
      %vm669 = vcmask 470016
      %670 = vst.msk [vmem:[#allocation3] sm:$0xf] %vm669, 0
      %671 = vst.msk [vmem:[#allocation3 + $0x4] sm:$0xf] %vm669, 0
      %672 = vst.msk [vmem:[#allocation3 + $0x8] sm:$0xf] %vm669, 0
      %673 = vst.msk [vmem:[#allocation3 + $0xc] sm:$0xf] %vm669, 0
      %674 = vst.msk [vmem:[#allocation3 + $0x10] sm:$0xf] %vm669, 0
      %675 = vst.msk [vmem:[#allocation3 + $0x14] sm:$0xf] %vm669, 0
      %676 = vst.msk [vmem:[#allocation3 + $0x18] sm:$0xf] %vm669, 0
      %677 = vst.msk [vmem:[#allocation3 + $0x1c] sm:$0xf] %vm669, 0
      %678 = vst.msk [vmem:[#allocation3 + $0x20] sm:$0xf] %vm669, 0
      %679 = vst.msk [vmem:[#allocation3 + $0x24] sm:$0xf] %vm669, 0
      %680 = vst.msk [vmem:[#allocation3 + $0x28] sm:$0xf] %vm669, 0
      %681 = vst.msk [vmem:[#allocation3 + $0x2c] sm:$0xf] %vm669, 0
      %682 = vst.msk [vmem:[#allocation3 + $0x30] sm:$0xf] %vm669, 0
      %683 = vst.msk [vmem:[#allocation3 + $0x34] sm:$0xf] %vm669, 0
      %684 = vst.msk [vmem:[#allocation3 + $0x38] sm:$0xf] %vm669, 0
      %685 = vst.msk [vmem:[#allocation3 + $0x3c] sm:$0xf] %vm669, 0
      %686 = vst.msk [vmem:[#allocation3 + $0x40] sm:$0xf] %vm669, 0
      %687 = vst.msk [vmem:[#allocation3 + $0x44] sm:$0xf] %vm669, 0
      %688 = vst.msk [vmem:[#allocation3 + $0x48] sm:$0xf] %vm669, 0
      %689 = vst.msk [vmem:[#allocation3 + $0x4c] sm:$0xf] %vm669, 0
      %690 = vst.msk [vmem:[#allocation3 + $0x50] sm:$0xf] %vm669, 0
      %691 = vst.msk [vmem:[#allocation3 + $0x54] sm:$0xf] %vm669, 0
      %692 = vst.msk [vmem:[#allocation3 + $0x58] sm:$0xf] %vm669, 0
      %693 = vst.msk [vmem:[#allocation3 + $0x5c] sm:$0xf] %vm669, 0
      %694 = vst.msk [vmem:[#allocation3 + $0x60] sm:$0xf] %vm669, 0
      %695 = vst.msk [vmem:[#allocation3 + $0x64] sm:$0xf] %vm669, 0
      %696 = vst.msk [vmem:[#allocation3 + $0x68] sm:$0xf] %vm669, 0
      %697 = vst.msk [vmem:[#allocation3 + $0x6c] sm:$0xf] %vm669, 0
      %698 = vst.msk [vmem:[#allocation3 + $0x70] sm:$0xf] %vm669, 0
      %699 = vst.msk [vmem:[#allocation3 + $0x74] sm:$0xf] %vm669, 0
      %700 = vst.msk [vmem:[#allocation3 + $0x78] sm:$0xf] %vm669, 0
      %701 = vst.msk [vmem:[#allocation3 + $0x7c] sm:$0xf] %vm669, 0
      %702 = vst.msk [vmem:[#allocation3 + $0x80] sm:$0xf] %vm669, 0
      %703 = vst.msk [vmem:[#allocation3 + $0x84] sm:$0xf] %vm669, 0
      %704 = vst.msk [vmem:[#allocation3 + $0x88] sm:$0xf] %vm669, 0
      %705 = vst.msk [vmem:[#allocation3 + $0x8c] sm:$0xf] %vm669, 0
      %706 = vst.msk [vmem:[#allocation3 + $0x90] sm:$0xf] %vm669, 0
      %707 = vst.msk [vmem:[#allocation3 + $0x94] sm:$0xf] %vm669, 0
      %708 = vst.msk [vmem:[#allocation3 + $0x98] sm:$0xf] %vm669, 0
      %709 = vst.msk [vmem:[#allocation3 + $0x9c] sm:$0xf] %vm669, 0
      %710 = vst.msk [vmem:[#allocation3 + $0xa0] sm:$0xf] %vm669, 0
      %711 = vst.msk [vmem:[#allocation3 + $0xa4] sm:$0xf] %vm669, 0
      %712 = vst.msk [vmem:[#allocation3 + $0xa8] sm:$0xf] %vm669, 0
      %713 = vst.msk [vmem:[#allocation3 + $0xac] sm:$0xf] %vm669, 0
      %714 = vst.msk [vmem:[#allocation3 + $0xb0] sm:$0xf] %vm669, 0
      %715 = vst.msk [vmem:[#allocation3 + $0xb4] sm:$0xf] %vm669, 0
      %716 = vst.msk [vmem:[#allocation3 + $0xb8] sm:$0xf] %vm669, 0
      %717 = vst.msk [vmem:[#allocation3 + $0xbc] sm:$0xf] %vm669, 0
      %718 = vst.msk [vmem:[#allocation3 + $0xc0] sm:$0xf] %vm669, 0
      %719 = vst.msk [vmem:[#allocation3 + $0xc4] sm:$0xf] %vm669, 0
      %720 = vst.msk [vmem:[#allocation3 + $0xc8] sm:$0xf] %vm669, 0
      %721 = vst.msk [vmem:[#allocation3 + $0xcc] sm:$0xf] %vm669, 0
      %722 = vst.msk [vmem:[#allocation3 + $0xd0] sm:$0xf] %vm669, 0
      %723 = vst.msk [vmem:[#allocation3 + $0xd4] sm:$0xf] %vm669, 0
      %724 = vst.msk [vmem:[#allocation3 + $0xd8] sm:$0xf] %vm669, 0
      %725 = vst.msk [vmem:[#allocation3 + $0xdc] sm:$0xf] %vm669, 0
      %726 = vst.msk [vmem:[#allocation3 + $0xe0] sm:$0xf] %vm669, 0
      %727 = vst.msk [vmem:[#allocation3 + $0xe4] sm:$0xf] %vm669, 0
      %728 = vst.msk [vmem:[#allocation3 + $0xe8] sm:$0xf] %vm669, 0
      %729 = vst.msk [vmem:[#allocation3 + $0xec] sm:$0xf] %vm669, 0
      %730 = vst.msk [vmem:[#allocation3 + $0xf0] sm:$0xf] %vm669, 0
      %731 = vst.msk [vmem:[#allocation3 + $0xf4] sm:$0xf] %vm669, 0
      %732 = vst.msk [vmem:[#allocation3 + $0xf8] sm:$0xf] %vm669, 0
      %733 = vst.msk [vmem:[#allocation3 + $0xfc] sm:$0xf] %vm669, 0
      %734 = vst.msk [vmem:[#allocation3 + $0x100] sm:$0xf] %vm669, 0
      %735 = vst.msk [vmem:[#allocation3 + $0x104] sm:$0xf] %vm669, 0
      %736 = vst.msk [vmem:[#allocation3 + $0x108] sm:$0xf] %vm669, 0
      %737 = vst.msk [vmem:[#allocation3 + $0x10c] sm:$0xf] %vm669, 0
      %738 = vst.msk [vmem:[#allocation3 + $0x110] sm:$0xf] %vm669, 0
      %739 = vst.msk [vmem:[#allocation3 + $0x114] sm:$0xf] %vm669, 0
      %740 = vst.msk [vmem:[#allocation3 + $0x118] sm:$0xf] %vm669, 0
      %741 = vst.msk [vmem:[#allocation3 + $0x11c] sm:$0xf] %vm669, 0
      %742 = vst.msk [vmem:[#allocation3 + $0x120] sm:$0xf] %vm669, 0
      %743 = vst.msk [vmem:[#allocation3 + $0x124] sm:$0xf] %vm669, 0
      %744 = vst.msk [vmem:[#allocation3 + $0x128] sm:$0xf] %vm669, 0
      %745 = vst.msk [vmem:[#allocation3 + $0x12c] sm:$0xf] %vm669, 0
      %746 = vst.msk [vmem:[#allocation3 + $0x130] sm:$0xf] %vm669, 0
      %747 = vst.msk [vmem:[#allocation3 + $0x134] sm:$0xf] %vm669, 0
      %748 = vst.msk [vmem:[#allocation3 + $0x138] sm:$0xf] %vm669, 0
      %749 = vst.msk [vmem:[#allocation3 + $0x13c] sm:$0xf] %vm669, 0
      %750 = vst.msk [vmem:[#allocation3 + $0x140] sm:$0xf] %vm669, 0
      %751 = vst.msk [vmem:[#allocation3 + $0x144] sm:$0xf] %vm669, 0
      %752 = vst.msk [vmem:[#allocation3 + $0x148] sm:$0xf] %vm669, 0
      %753 = vst.msk [vmem:[#allocation3 + $0x14c] sm:$0xf] %vm669, 0
      %754 = vst.msk [vmem:[#allocation3 + $0x150] sm:$0xf] %vm669, 0
      %755 = vst.msk [vmem:[#allocation3 + $0x154] sm:$0xf] %vm669, 0
      %756 = vst.msk [vmem:[#allocation3 + $0x158] sm:$0xf] %vm669, 0
      %757 = vst.msk [vmem:[#allocation3 + $0x15c] sm:$0xf] %vm669, 0
      %758 = vst.msk [vmem:[#allocation3 + $0x160] sm:$0xf] %vm669, 0
      %759 = vst.msk [vmem:[#allocation3 + $0x164] sm:$0xf] %vm669, 0
      %760 = vst.msk [vmem:[#allocation3 + $0x168] sm:$0xf] %vm669, 0
      %761 = vst.msk [vmem:[#allocation3 + $0x16c] sm:$0xf] %vm669, 0
      %762 = vst.msk [vmem:[#allocation3 + $0x170] sm:$0xf] %vm669, 0
      %763 = vst.msk [vmem:[#allocation3 + $0x174] sm:$0xf] %vm669, 0
      %764 = vst.msk [vmem:[#allocation3 + $0x178] sm:$0xf] %vm669, 0
      %765 = vst.msk [vmem:[#allocation3 + $0x17c] sm:$0xf] %vm669, 0
      %766 = vst.msk [vmem:[#allocation3 + $0x180] sm:$0xf] %vm669, 0
      %767 = vst.msk [vmem:[#allocation3 + $0x184] sm:$0xf] %vm669, 0
      %768 = vst.msk [vmem:[#allocation3 + $0x188] sm:$0xf] %vm669, 0
      %769 = vst.msk [vmem:[#allocation3 + $0x18c] sm:$0xf] %vm669, 0
      %770 = vst.msk [vmem:[#allocation3 + $0x190] sm:$0xf] %vm669, 0
      %771 = vst.msk [vmem:[#allocation3 + $0x194] sm:$0xf] %vm669, 0
      %772 = vst.msk [vmem:[#allocation3 + $0x198] sm:$0xf] %vm669, 0
      %773 = vst.msk [vmem:[#allocation3 + $0x19c] sm:$0xf] %vm669, 0
      %774 = vst.msk [vmem:[#allocation3 + $0x1a0] sm:$0xf] %vm669, 0
      %775 = vst.msk [vmem:[#allocation3 + $0x1a4] sm:$0xf] %vm669, 0
      %776 = vst.msk [vmem:[#allocation3 + $0x1a8] sm:$0xf] %vm669, 0
      %777 = vst.msk [vmem:[#allocation3 + $0x1ac] sm:$0xf] %vm669, 0
      %778 = vst.msk [vmem:[#allocation3 + $0x1b0] sm:$0xf] %vm669, 0
      %779 = vst.msk [vmem:[#allocation3 + $0x1b4] sm:$0xf] %vm669, 0
      %780 = vst.msk [vmem:[#allocation3 + $0x1b8] sm:$0xf] %vm669, 0
      %781 = vst.msk [vmem:[#allocation3 + $0x1bc] sm:$0xf] %vm669, 0
      %782 = vst.msk [vmem:[#allocation3 + $0x1c0] sm:$0xf] %vm669, 0
      %783 = vst.msk [vmem:[#allocation3 + $0x1c4] sm:$0xf] %vm669, 0
      %vm784 = vcmask 240640
      %785 = vst.msk [vmem:[#allocation4] sm:$0xf] %vm784, 0
      %786 = vst.msk [vmem:[#allocation4 + $0x4] sm:$0xf] %vm784, 0
      %787 = vst.msk [vmem:[#allocation4 + $0x8] sm:$0xf] %vm784, 0
      %788 = vst.msk [vmem:[#allocation4 + $0xc] sm:$0xf] %vm784, 0
      %789 = vst.msk [vmem:[#allocation4 + $0x10] sm:$0xf] %vm784, 0
      %790 = vst.msk [vmem:[#allocation4 + $0x14] sm:$0xf] %vm784, 0
      %791 = vst.msk [vmem:[#allocation4 + $0x18] sm:$0xf] %vm784, 0
      %792 = vst.msk [vmem:[#allocation4 + $0x1c] sm:$0xf] %vm784, 0
      %793 = vst.msk [vmem:[#allocation4 + $0x20] sm:$0xf] %vm784, 0
      %794 = vst.msk [vmem:[#allocation4 + $0x24] sm:$0xf] %vm784, 0
      %795 = vst.msk [vmem:[#allocation4 + $0x28] sm:$0xf] %vm784, 0
      %796 = vst.msk [vmem:[#allocation4 + $0x2c] sm:$0xf] %vm784, 0
      %797 = vst.msk [vmem:[#allocation4 + $0x30] sm:$0xf] %vm784, 0
      %798 = vst.msk [vmem:[#allocation4 + $0x34] sm:$0xf] %vm784, 0
      %799 = vst.msk [vmem:[#allocation4 + $0x38] sm:$0xf] %vm784, 0
      %800 = vst.msk [vmem:[#allocation4 + $0x3c] sm:$0xf] %vm784, 0
      %801 = vst.msk [vmem:[#allocation4 + $0x40] sm:$0xf] %vm784, 0
      %802 = vst.msk [vmem:[#allocation4 + $0x44] sm:$0xf] %vm784, 0
      %803 = vst.msk [vmem:[#allocation4 + $0x48] sm:$0xf] %vm784, 0
      %804 = vst.msk [vmem:[#allocation4 + $0x4c] sm:$0xf] %vm784, 0
      %805 = vst.msk [vmem:[#allocation4 + $0x50] sm:$0xf] %vm784, 0
      %806 = vst.msk [vmem:[#allocation4 + $0x54] sm:$0xf] %vm784, 0
      %807 = vst.msk [vmem:[#allocation4 + $0x58] sm:$0xf] %vm784, 0
      %808 = vst.msk [vmem:[#allocation4 + $0x5c] sm:$0xf] %vm784, 0
      %809 = vst.msk [vmem:[#allocation4 + $0x60] sm:$0xf] %vm784, 0
      %810 = vst.msk [vmem:[#allocation4 + $0x64] sm:$0xf] %vm784, 0
      %811 = vst.msk [vmem:[#allocation4 + $0x68] sm:$0xf] %vm784, 0
      %812 = vst.msk [vmem:[#allocation4 + $0x6c] sm:$0xf] %vm784, 0
      %813 = vst.msk [vmem:[#allocation4 + $0x70] sm:$0xf] %vm784, 0
      %814 = vst.msk [vmem:[#allocation4 + $0x74] sm:$0xf] %vm784, 0
      %815 = vst.msk [vmem:[#allocation4 + $0x78] sm:$0xf] %vm784, 0
      %816 = vst.msk [vmem:[#allocation4 + $0x7c] sm:$0xf] %vm784, 0
      %817 = vst.msk [vmem:[#allocation4 + $0x80] sm:$0xf] %vm784, 0
      %818 = vst.msk [vmem:[#allocation4 + $0x84] sm:$0xf] %vm784, 0
      %819 = vst.msk [vmem:[#allocation4 + $0x88] sm:$0xf] %vm784, 0
      %820 = vst.msk [vmem:[#allocation4 + $0x8c] sm:$0xf] %vm784, 0
      %821 = vst.msk [vmem:[#allocation4 + $0x90] sm:$0xf] %vm784, 0
      %822 = vst.msk [vmem:[#allocation4 + $0x94] sm:$0xf] %vm784, 0
      %823 = vst.msk [vmem:[#allocation4 + $0x98] sm:$0xf] %vm784, 0
      %824 = vst.msk [vmem:[#allocation4 + $0x9c] sm:$0xf] %vm784, 0
      %825 = vst.msk [vmem:[#allocation4 + $0xa0] sm:$0xf] %vm784, 0
      %826 = vst.msk [vmem:[#allocation4 + $0xa4] sm:$0xf] %vm784, 0
      %827 = vst.msk [vmem:[#allocation4 + $0xa8] sm:$0xf] %vm784, 0
      %828 = vst.msk [vmem:[#allocation4 + $0xac] sm:$0xf] %vm784, 0
      %829 = vst.msk [vmem:[#allocation4 + $0xb0] sm:$0xf] %vm784, 0
      %830 = vst.msk [vmem:[#allocation4 + $0xb4] sm:$0xf] %vm784, 0
      %831 = vst.msk [vmem:[#allocation4 + $0xb8] sm:$0xf] %vm784, 0
      %832 = vst.msk [vmem:[#allocation4 + $0xbc] sm:$0xf] %vm784, 0
      %833 = vst.msk [vmem:[#allocation4 + $0xc0] sm:$0xf] %vm784, 0
      %834 = vst.msk [vmem:[#allocation4 + $0xc4] sm:$0xf] %vm784, 0
      %835 = vst.msk [vmem:[#allocation4 + $0xc8] sm:$0xf] %vm784, 0
      %836 = vst.msk [vmem:[#allocation4 + $0xcc] sm:$0xf] %vm784, 0
      %837 = vst.msk [vmem:[#allocation4 + $0xd0] sm:$0xf] %vm784, 0
      %838 = vst.msk [vmem:[#allocation4 + $0xd4] sm:$0xf] %vm784, 0
      %839 = vst.msk [vmem:[#allocation4 + $0xd8] sm:$0xf] %vm784, 0
      %840 = vst.msk [vmem:[#allocation4 + $0xdc] sm:$0xf] %vm784, 0
      %841 = vst.msk [vmem:[#allocation4 + $0xe0] sm:$0xf] %vm784, 0
      %842 = vst.msk [vmem:[#allocation4 + $0xe4] sm:$0xf] %vm784, 0
      %843 = vst.msk [vmem:[#allocation4 + $0xe8] sm:$0xf] %vm784, 0
      %844 = vst.msk [vmem:[#allocation4 + $0xec] sm:$0xf] %vm784, 0
      %845 = vst.msk [vmem:[#allocation4 + $0xf0] sm:$0xf] %vm784, 0
      %846 = vst.msk [vmem:[#allocation4 + $0xf4] sm:$0xf] %vm784, 0
      %847 = vst.msk [vmem:[#allocation4 + $0xf8] sm:$0xf] %vm784, 0
      %848 = vst.msk [vmem:[#allocation4 + $0xfc] sm:$0xf] %vm784, 0
      %849 = vst.msk [vmem:[#allocation4 + $0x100] sm:$0xf] %vm784, 0
      %850 = vst.msk [vmem:[#allocation4 + $0x104] sm:$0xf] %vm784, 0
      %851 = vst.msk [vmem:[#allocation4 + $0x108] sm:$0xf] %vm784, 0
      %852 = vst.msk [vmem:[#allocation4 + $0x10c] sm:$0xf] %vm784, 0
      %853 = vst.msk [vmem:[#allocation4 + $0x110] sm:$0xf] %vm784, 0
      %854 = vst.msk [vmem:[#allocation4 + $0x114] sm:$0xf] %vm784, 0
      %855 = vst.msk [vmem:[#allocation4 + $0x118] sm:$0xf] %vm784, 0
      %856 = vst.msk [vmem:[#allocation4 + $0x11c] sm:$0xf] %vm784, 0
      %857 = vst.msk [vmem:[#allocation4 + $0x120] sm:$0xf] %vm784, 0
      %858 = vst.msk [vmem:[#allocation4 + $0x124] sm:$0xf] %vm784, 0
      %859 = vst.msk [vmem:[#allocation4 + $0x128] sm:$0xf] %vm784, 0
      %860 = vst.msk [vmem:[#allocation4 + $0x12c] sm:$0xf] %vm784, 0
      %861 = vst.msk [vmem:[#allocation4 + $0x130] sm:$0xf] %vm784, 0
      %862 = vst.msk [vmem:[#allocation4 + $0x134] sm:$0xf] %vm784, 0
      %863 = vst.msk [vmem:[#allocation4 + $0x138] sm:$0xf] %vm784, 0
      %864 = vst.msk [vmem:[#allocation4 + $0x13c] sm:$0xf] %vm784, 0
      %865 = vst.msk [vmem:[#allocation4 + $0x140] sm:$0xf] %vm784, 0
      %866 = vst.msk [vmem:[#allocation4 + $0x144] sm:$0xf] %vm784, 0
      %867 = vst.msk [vmem:[#allocation4 + $0x148] sm:$0xf] %vm784, 0
      %868 = vst.msk [vmem:[#allocation4 + $0x14c] sm:$0xf] %vm784, 0
      %869 = vst.msk [vmem:[#allocation4 + $0x150] sm:$0xf] %vm784, 0
      %870 = vst.msk [vmem:[#allocation4 + $0x154] sm:$0xf] %vm784, 0
      %871 = vst.msk [vmem:[#allocation4 + $0x158] sm:$0xf] %vm784, 0
      %872 = vst.msk [vmem:[#allocation4 + $0x15c] sm:$0xf] %vm784, 0
      %873 = vst.msk [vmem:[#allocation4 + $0x160] sm:$0xf] %vm784, 0
      %874 = vst.msk [vmem:[#allocation4 + $0x164] sm:$0xf] %vm784, 0
      %875 = vst.msk [vmem:[#allocation4 + $0x168] sm:$0xf] %vm784, 0
      %876 = vst.msk [vmem:[#allocation4 + $0x16c] sm:$0xf] %vm784, 0
      %877 = vst.msk [vmem:[#allocation4 + $0x170] sm:$0xf] %vm784, 0
      %878 = vst.msk [vmem:[#allocation4 + $0x174] sm:$0xf] %vm784, 0
      %879 = vst.msk [vmem:[#allocation4 + $0x178] sm:$0xf] %vm784, 0
      %880 = vst.msk [vmem:[#allocation4 + $0x17c] sm:$0xf] %vm784, 0
      %881 = vst.msk [vmem:[#allocation4 + $0x180] sm:$0xf] %vm784, 0
      %882 = vst.msk [vmem:[#allocation4 + $0x184] sm:$0xf] %vm784, 0
      %883 = vst.msk [vmem:[#allocation4 + $0x188] sm:$0xf] %vm784, 0
      %884 = vst.msk [vmem:[#allocation4 + $0x18c] sm:$0xf] %vm784, 0
      %885 = vst.msk [vmem:[#allocation4 + $0x190] sm:$0xf] %vm784, 0
      %886 = vst.msk [vmem:[#allocation4 + $0x194] sm:$0xf] %vm784, 0
      %887 = vst.msk [vmem:[#allocation4 + $0x198] sm:$0xf] %vm784, 0
      %888 = vst.msk [vmem:[#allocation4 + $0x19c] sm:$0xf] %vm784, 0
      %889 = vst.msk [vmem:[#allocation4 + $0x1a0] sm:$0xf] %vm784, 0
      %890 = vst.msk [vmem:[#allocation4 + $0x1a4] sm:$0xf] %vm784, 0
      %891 = vst.msk [vmem:[#allocation4 + $0x1a8] sm:$0xf] %vm784, 0
      %892 = vst.msk [vmem:[#allocation4 + $0x1ac] sm:$0xf] %vm784, 0
      %893 = vst.msk [vmem:[#allocation4 + $0x1b0] sm:$0xf] %vm784, 0
      %894 = vst.msk [vmem:[#allocation4 + $0x1b4] sm:$0xf] %vm784, 0
      %895 = vst.msk [vmem:[#allocation4 + $0x1b8] sm:$0xf] %vm784, 0
      %896 = vst.msk [vmem:[#allocation4 + $0x1bc] sm:$0xf] %vm784, 0
      %897 = vst.msk [vmem:[#allocation4 + $0x1c0] sm:$0xf] %vm784, 0
      %898 = vst.msk [vmem:[#allocation4 + $0x1c4] sm:$0xf] %vm784, 0
      %899 = vst.msk [vmem:[#allocation4 + $0x1c8] sm:$0xf] %vm784, 0
      %900 = vst.msk [vmem:[#allocation4 + $0x1cc] sm:$0xf] %vm784, 0
      %v901 = vld [vmem:[%s1] sm:$0x3]
      %s902 = scalar_lea.vmem %s1, 2
      %v903 = vld [vmem:[%s902] sm:$0x3]
      %s904 = scalar_lea.vmem %s1, 4
      %v905 = vld [vmem:[%s904] sm:$0x3]
      %v906 = vld [vmem:[%s5] sm:$0xf]
      %908 = vset.pattern.permute.xlu0 0
      %909 = vperm.xlu0 %908, %v906
      %v910 = vpop.permute.xlu0 %909
      %s912 = scalar_lea.vmem %s5, 4
      %v913 = vld [vmem:[%s912] sm:$0xf]
      %915 = vset.pattern.permute.xlu0 0
      %916 = vperm.xlu0 %915, %v913
      %v917 = vpop.permute.xlu0 %916
      %s919 = scalar_lea.vmem %s5, 8
      %v920 = vld [vmem:[%s919] sm:$0xf]
      %922 = vset.pattern.permute.xlu0 0
      %923 = vperm.xlu0 %922, %v920
      %v924 = vpop.permute.xlu0 %923
      loop: start=0, step=1, limit=224
      $region73: #{cnn_forward.2} parent=71 // loop_pre_header
        _
      $region74: #{cnn_forward.2} parent=71 // loop_header
        %s927 = sphi 0, %s931
        %p928 = scmp.ge.s32.totalorder %s927, 224
      $region75: #{cnn_forward.2} parent=71 // loop_header_branch
        %930 = sbr.rel (%p928) target = $region79
      $region76: #{cnn_forward.2} parent=71 // loop_body
        %s932 = smul.u32 %s927, 16
        %s933 = sshra.s32 %s932, 3
        %s934 = sand.u32 %s932, 7
        %s935 = smul.u32 %s933, 2
        %s936 = smul.addr %s935, 4
        %s937 = scalar_lea.vmem %s435, %s936
        %v938 = vld [vmem:[%s937] sm:$0xff]
        %v939 = vld [vmem:[%s937 + $0x8] sm:$0xff]
        %v940 = vld [vmem:[%s937 + $0x10] sm:$0xff]
        %v944 = vunpack.c.l.b16 %v938
        %v945 = vunpack.c.h.b16 %v938
        %v946 = vunpack.c.l.b16 %v939
        %v947 = vunpack.c.h.b16 %v939
        %v948 = vunpack.c.l.b16 %v940
        %v949 = vunpack.c.h.b16 %v940
        %v950 = vpack.c.b16 %v946, %v944
        %v951 = vpack.c.b16 %v947, %v945
        %v952 = vpack.c.b16 %v948, %v948
        %v953 = vpack.c.b16 %v949, %v949
        %954 = vrot.lane.b32.xlu0 %v950, 127
        %v955 = vpop.permute.xlu0 %954
        %956 = vrot.lane.b32.xlu0 %v951, 127
        %v957 = vpop.permute.xlu0 %956
        %958 = vrot.lane.b32.xlu0 %v952, 127
        %v959 = vpop.permute.xlu0 %958
        %960 = vrot.lane.b32.xlu0 %v953, 127
        %v961 = vpop.permute.xlu0 %960
        %vm962 = vcmask 1039360
        %v963 = vsel %vm962, %v955, %v957
        %v964 = vsel %vm962, %v959, %v961
        %vm967 = vcmask 195584
        %v969 = vsel %vm967, %v903, 0
        %vm971 = vcmask 1043456
        %v973 = vsel %vm971, %v964, 0
        %v976 = vsel %vm971, %v961, 0
        %978 = vmatprep.subr.bf16.mxu0 0
        %979 = vmatpush1.bf16.msra.mxu0 0
        %980 = vmatprep.subr.bf16.mxu0 0
        %981 = vmatpush1.bf16.msra.mxu0 0
        %982 = vmatprep.subr.bf16.mxu0 0
        %983 = vmatpush1.bf16.msra.mxu0 0
        %984 = vmatprep.subr.bf16.mxu0 0
        %985 = vmatpush1.bf16.msra.mxu0 0
        %986 = vmatprep.subr.bf16.mxu0 0
        %987 = vmatpush1.bf16.msra.mxu0 0
        %988 = vmatprep.subr.bf16.mxu0 0
        %989 = vmatpush1.bf16.msra.mxu0 0
        %990 = vmatprep.subr.bf16.mxu0 %v976
        %991 = vmatpush1.bf16.msra.mxu0 %v973
        %992 = vmatprep.subr.bf16.mxu0 %v957
        %993 = vmatpush1.bf16.msra.mxu0 %v963
        %994 = vmatprep.subr.bf16.mxu0 0
        %995 = vmatpush2.bf16.msra.mxu0 0
        %996 = vmatprep.subr.bf16.mxu0 0
        %997 = vmatpush2.bf16.msra.mxu0 0
        %998 = vmatprep.subr.bf16.mxu0 0
        %999 = vmatpush2.bf16.msra.mxu0 0
        %1000 = vmatprep.subr.bf16.mxu0 0
        %1001 = vmatpush2.bf16.msra.mxu0 0
        %1002 = vmatprep.subr.bf16.mxu0 0
        %1003 = vmatpush2.bf16.msra.mxu0 0
        %1004 = vmatprep.subr.bf16.mxu0 0
        %1005 = vmatpush2.bf16.msra.mxu0 0
        %1006 = vmatprep.subr.bf16.mxu0 0
        %1007 = vmatpush2.bf16.msra.mxu0 0
        %1008 = vmatprep.subr.bf16.mxu0 0
        %1009 = vmatpush2.bf16.msra.mxu0 0
        %1010 = vmatprep.mubr.bf16.mxu0 0
        %1011 = vmatmul.mubr.bf16.gmra.mxu0 %v969
        %v1012 = vpop.f32.mrf.mxu0
        %v1013 = vadd.f32 0.0, %v1012
        %v1014 = vpop.f32.mrf.mxu0
        %v1015 = vadd.f32 0.0, %v1014
        %v1016 = vpop.f32.mrf.mxu0
        %v1017 = vpop.f32.mrf.mxu0
        %1018 = vdwg.mxu0
        %v1022 = vsel %vm967, %v901, 0
        %v1025 = vsel %vm971, %v952, 0
        %v1028 = vsel %vm971, %v953, 0
        %1030 = vmatprep.subr.bf16.mxu0 0
        %1031 = vmatpush1.bf16.msra.mxu0 0
        %1032 = vmatprep.subr.bf16.mxu0 0
        %1033 = vmatpush1.bf16.msra.mxu0 0
        %1034 = vmatprep.subr.bf16.mxu0 0
        %1035 = vmatpush1.bf16.msra.mxu0 0
        %1036 = vmatprep.subr.bf16.mxu0 0
        %1037 = vmatpush1.bf16.msra.mxu0 0
        %1038 = vmatprep.subr.bf16.mxu0 0
        %1039 = vmatpush1.bf16.msra.mxu0 0
        %1040 = vmatprep.subr.bf16.mxu0 0
        %1041 = vmatpush1.bf16.msra.mxu0 0
        %1042 = vmatprep.subr.bf16.mxu0 %v1028
        %1043 = vmatpush1.bf16.msra.mxu0 %v1025
        %1044 = vmatprep.subr.bf16.mxu0 %v951
        %1045 = vmatpush1.bf16.msra.mxu0 %v950
        %1046 = vmatprep.subr.bf16.mxu0 0
        %1047 = vmatpush2.bf16.msra.mxu0 0
        %1048 = vmatprep.subr.bf16.mxu0 0
        %1049 = vmatpush2.bf16.msra.mxu0 0
        %1050 = vmatprep.subr.bf16.mxu0 0
        %1051 = vmatpush2.bf16.msra.mxu0 0
        %1052 = vmatprep.subr.bf16.mxu0 0
        %1053 = vmatpush2.bf16.msra.mxu0 0
        %1054 = vmatprep.subr.bf16.mxu0 0
        %1055 = vmatpush2.bf16.msra.mxu0 0
        %1056 = vmatprep.subr.bf16.mxu0 0
        %1057 = vmatpush2.bf16.msra.mxu0 0
        %1058 = vmatprep.subr.bf16.mxu0 0
        %1059 = vmatpush2.bf16.msra.mxu0 0
        %1060 = vmatprep.subr.bf16.mxu0 0
        %1061 = vmatpush2.bf16.msra.mxu0 0
        %1062 = vmatprep.mubr.bf16.mxu0 0
        %1063 = vmatmul.mubr.bf16.gmra.mxu0 %v1022
        %v1064 = vpop.f32.mrf.mxu0
        %v1065 = vadd.f32 %v1013, %v1064
        %v1066 = vpop.f32.mrf.mxu0
        %v1067 = vadd.f32 %v1015, %v1066
        %v1068 = vpop.f32.mrf.mxu0
        %v1069 = vpop.f32.mrf.mxu0
        %1070 = vdwg.mxu0
        %1071 = vrot.lane.b32.xlu0 %v950, 126
        %v1072 = vpop.permute.xlu0 %1071
        %1073 = vrot.lane.b32.xlu0 %v951, 126
        %v1074 = vpop.permute.xlu0 %1073
        %1075 = vrot.lane.b32.xlu0 %v952, 126
        %v1076 = vpop.permute.xlu0 %1075
        %1077 = vrot.lane.b32.xlu0 %v953, 126
        %v1078 = vpop.permute.xlu0 %1077
        %vm1079 = vcmask 1031168
        %v1080 = vsel %vm1079, %v1072, %v1074
        %v1081 = vsel %vm1079, %v1076, %v1078
        %v1085 = vsel %vm967, %v905, 0
        %v1088 = vsel %vm971, %v1081, 0
        %v1091 = vsel %vm971, %v1078, 0
        %1093 = vmatprep.subr.bf16.mxu0 0
        %1094 = vmatpush1.bf16.msra.mxu0 0
        %1095 = vmatprep.subr.bf16.mxu0 0
        %1096 = vmatpush1.bf16.msra.mxu0 0
        %1097 = vmatprep.subr.bf16.mxu0 0
        %1098 = vmatpush1.bf16.msra.mxu0 0
        %1099 = vmatprep.subr.bf16.mxu0 0
        %1100 = vmatpush1.bf16.msra.mxu0 0
        %1101 = vmatprep.subr.bf16.mxu0 0
        %1102 = vmatpush1.bf16.msra.mxu0 0
        %1103 = vmatprep.subr.bf16.mxu0 0
        %1104 = vmatpush1.bf16.msra.mxu0 0
        %1105 = vmatprep.subr.bf16.mxu0 %v1091
        %1106 = vmatpush1.bf16.msra.mxu0 %v1088
        %1107 = vmatprep.subr.bf16.mxu0 %v1074
        %1108 = vmatpush1.bf16.msra.mxu0 %v1080
        %1109 = vmatprep.subr.bf16.mxu0 0
        %1110 = vmatpush2.bf16.msra.mxu0 0
        %1111 = vmatprep.subr.bf16.mxu0 0
        %1112 = vmatpush2.bf16.msra.mxu0 0
        %1113 = vmatprep.subr.bf16.mxu0 0
        %1114 = vmatpush2.bf16.msra.mxu0 0
        %1115 = vmatprep.subr.bf16.mxu0 0
        %1116 = vmatpush2.bf16.msra.mxu0 0
        %1117 = vmatprep.subr.bf16.mxu0 0
        %1118 = vmatpush2.bf16.msra.mxu0 0
        %1119 = vmatprep.subr.bf16.mxu0 0
        %1120 = vmatpush2.bf16.msra.mxu0 0
        %1121 = vmatprep.subr.bf16.mxu0 0
        %1122 = vmatpush2.bf16.msra.mxu0 0
        %1123 = vmatprep.subr.bf16.mxu0 0
        %1124 = vmatpush2.bf16.msra.mxu0 0
        %1125 = vmatprep.mubr.bf16.mxu0 0
        %1126 = vmatmul.mubr.bf16.gmra.mxu0 %v1085
        %v1127 = vpop.f32.mrf.mxu0
        %v1128 = vadd.f32 0.0, %v1127
        %v1129 = vpop.f32.mrf.mxu0
        %v1130 = vadd.f32 0.0, %v1129
        %v1131 = vpop.f32.mrf.mxu0
        %v1132 = vpop.f32.mrf.mxu0
        %1133 = vdwg.mxu0
        %v1134 = vadd.f32 %v1065, %v1128
        %v1135 = vadd.f32 %v1067, %v1130
        %v1136 = vadd.f32 %v1134, %v910
        %v1137 = vadd.f32 %v1135, %v910
        %v1138 = vmax.f32 %v1136, 0.0
        %v1139 = vmax.f32 %v1137, 0.0
        %v1140 = vmul.f32 %v1138, %v917
        %v1141 = vmul.f32 %v1139, %v917
        %v1142 = vadd.f32 %v1140, %v924
        %v1143 = vadd.f32 %v1141, %v924
        %s1144 = smul.u32 %s927, 2
        %s1145 = sadd.s32 %s1144, 1
        %s1146 = smul.u32 %s1145, 8
        %s1147 = sshra.s32 %s1146, 3
        %s1148 = sand.u32 %s1146, 7
        %s1149 = smul.u32 %s1147, 2
        %s1150 = smul.addr %s1149, 4
        %s1151 = scalar_lea.vmem %s435, %s1150
        %v1152 = vld [vmem:[%s1151] sm:$0xff]
        %v1153 = vld [vmem:[%s1151 + $0x8] sm:$0xff]
        %v1154 = vld [vmem:[%s1151 + $0x10] sm:$0xff]
        %v1158 = vunpack.c.l.b16 %v1152
        %v1159 = vunpack.c.h.b16 %v1152
        %v1160 = vunpack.c.l.b16 %v1153
        %v1161 = vunpack.c.h.b16 %v1153
        %v1162 = vunpack.c.l.b16 %v1154
        %v1163 = vunpack.c.h.b16 %v1154
        %v1164 = vpack.c.b16 %v1160, %v1158
        %v1165 = vpack.c.b16 %v1161, %v1159
        %v1166 = vpack.c.b16 %v1162, %v1162
        %v1167 = vpack.c.b16 %v1163, %v1163
        %1168 = vrot.lane.b32.xlu0 %v1164, 127
        %v1169 = vpop.permute.xlu0 %1168
        %1170 = vrot.lane.b32.xlu0 %v1165, 127
        %v1171 = vpop.permute.xlu0 %1170
        %1172 = vrot.lane.b32.xlu0 %v1166, 127
        %v1173 = vpop.permute.xlu0 %1172
        %1174 = vrot.lane.b32.xlu0 %v1167, 127
        %v1175 = vpop.permute.xlu0 %1174
        %v1176 = vsel %vm962, %v1169, %v1171
        %v1177 = vsel %vm962, %v1173, %v1175
        %v1181 = vsel %vm971, %v1177, 0
        %v1184 = vsel %vm971, %v1175, 0
        %1186 = vmatprep.subr.bf16.mxu0 0
        %1187 = vmatpush1.bf16.msra.mxu0 0
        %1188 = vmatprep.subr.bf16.mxu0 0
        %1189 = vmatpush1.bf16.msra.mxu0 0
        %1190 = vmatprep.subr.bf16.mxu0 0
        %1191 = vmatpush1.bf16.msra.mxu0 0
        %1192 = vmatprep.subr.bf16.mxu0 0
        %1193 = vmatpush1.bf16.msra.mxu0 0
        %1194 = vmatprep.subr.bf16.mxu0 0
        %1195 = vmatpush1.bf16.msra.mxu0 0
        %1196 = vmatprep.subr.bf16.mxu0 0
        %1197 = vmatpush1.bf16.msra.mxu0 0
        %1198 = vmatprep.subr.bf16.mxu0 %v1184
        %1199 = vmatpush1.bf16.msra.mxu0 %v1181
        %1200 = vmatprep.subr.bf16.mxu0 %v1171
        %1201 = vmatpush1.bf16.msra.mxu0 %v1176
        %1202 = vmatprep.subr.bf16.mxu0 0
        %1203 = vmatpush2.bf16.msra.mxu0 0
        %1204 = vmatprep.subr.bf16.mxu0 0
        %1205 = vmatpush2.bf16.msra.mxu0 0
        %1206 = vmatprep.subr.bf16.mxu0 0
        %1207 = vmatpush2.bf16.msra.mxu0 0
        %1208 = vmatprep.subr.bf16.mxu0 0
        %1209 = vmatpush2.bf16.msra.mxu0 0
        %1210 = vmatprep.subr.bf16.mxu0 0
        %1211 = vmatpush2.bf16.msra.mxu0 0
        %1212 = vmatprep.subr.bf16.mxu0 0
        %1213 = vmatpush2.bf16.msra.mxu0 0
        %1214 = vmatprep.subr.bf16.mxu0 0
        %1215 = vmatpush2.bf16.msra.mxu0 0
        %1216 = vmatprep.subr.bf16.mxu0 0
        %1217 = vmatpush2.bf16.msra.mxu0 0
        %1218 = vmatprep.mubr.bf16.mxu0 0
        %1219 = vmatmul.mubr.bf16.gmra.mxu0 %v969
        %v1220 = vpop.f32.mrf.mxu0
        %v1221 = vadd.f32 0.0, %v1220
        %v1222 = vpop.f32.mrf.mxu0
        %v1223 = vadd.f32 0.0, %v1222
        %v1224 = vpop.f32.mrf.mxu0
        %v1225 = vpop.f32.mrf.mxu0
        %1226 = vdwg.mxu0
        %v1230 = vsel %vm971, %v1166, 0
        %v1233 = vsel %vm971, %v1167, 0
        %1235 = vmatprep.subr.bf16.mxu0 0
        %1236 = vmatpush1.bf16.msra.mxu0 0
        %1237 = vmatprep.subr.bf16.mxu0 0
        %1238 = vmatpush1.bf16.msra.mxu0 0
        %1239 = vmatprep.subr.bf16.mxu0 0
        %1240 = vmatpush1.bf16.msra.mxu0 0
        %1241 = vmatprep.subr.bf16.mxu0 0
        %1242 = vmatpush1.bf16.msra.mxu0 0
        %1243 = vmatprep.subr.bf16.mxu0 0
        %1244 = vmatpush1.bf16.msra.mxu0 0
        %1245 = vmatprep.subr.bf16.mxu0 0
        %1246 = vmatpush1.bf16.msra.mxu0 0
        %1247 = vmatprep.subr.bf16.mxu0 %v1233
        %1248 = vmatpush1.bf16.msra.mxu0 %v1230
        %1249 = vmatprep.subr.bf16.mxu0 %v1165
        %1250 = vmatpush1.bf16.msra.mxu0 %v1164
        %1251 = vmatprep.subr.bf16.mxu0 0
        %1252 = vmatpush2.bf16.msra.mxu0 0
        %1253 = vmatprep.subr.bf16.mxu0 0
        %1254 = vmatpush2.bf16.msra.mxu0 0
        %1255 = vmatprep.subr.bf16.mxu0 0
        %1256 = vmatpush2.bf16.msra.mxu0 0
        %1257 = vmatprep.subr.bf16.mxu0 0
        %1258 = vmatpush2.bf16.msra.mxu0 0
        %1259 = vmatprep.subr.bf16.mxu0 0
        %1260 = vmatpush2.bf16.msra.mxu0 0
        %1261 = vmatprep.subr.bf16.mxu0 0
        %1262 = vmatpush2.bf16.msra.mxu0 0
        %1263 = vmatprep.subr.bf16.mxu0 0
        %1264 = vmatpush2.bf16.msra.mxu0 0
        %1265 = vmatprep.subr.bf16.mxu0 0
        %1266 = vmatpush2.bf16.msra.mxu0 0
        %1267 = vmatprep.mubr.bf16.mxu0 0
        %1268 = vmatmul.mubr.bf16.gmra.mxu0 %v1022
        %v1269 = vpop.f32.mrf.mxu0
        %v1270 = vadd.f32 %v1221, %v1269
        %v1271 = vpop.f32.mrf.mxu0
        %v1272 = vadd.f32 %v1223, %v1271
        %v1273 = vpop.f32.mrf.mxu0
        %v1274 = vpop.f32.mrf.mxu0
        %1275 = vdwg.mxu0
        %1276 = vrot.lane.b32.xlu0 %v1164, 126
        %v1277 = vpop.permute.xlu0 %1276
        %1278 = vrot.lane.b32.xlu0 %v1165, 126
        %v1279 = vpop.permute.xlu0 %1278
        %1280 = vrot.lane.b32.xlu0 %v1166, 126
        %v1281 = vpop.permute.xlu0 %1280
        %1282 = vrot.lane.b32.xlu0 %v1167, 126
        %v1283 = vpop.permute.xlu0 %1282
        %v1284 = vsel %vm1079, %v1277, %v1279
        %v1285 = vsel %vm1079, %v1281, %v1283
        %v1289 = vsel %vm971, %v1285, 0
        %v1292 = vsel %vm971, %v1283, 0
        %1294 = vmatprep.subr.bf16.mxu0 0
        %1295 = vmatpush1.bf16.msra.mxu0 0
        %1296 = vmatprep.subr.bf16.mxu0 0
        %1297 = vmatpush1.bf16.msra.mxu0 0
        %1298 = vmatprep.subr.bf16.mxu0 0
        %1299 = vmatpush1.bf16.msra.mxu0 0
        %1300 = vmatprep.subr.bf16.mxu0 0
        %1301 = vmatpush1.bf16.msra.mxu0 0
        %1302 = vmatprep.subr.bf16.mxu0 0
        %1303 = vmatpush1.bf16.msra.mxu0 0
        %1304 = vmatprep.subr.bf16.mxu0 0
        %1305 = vmatpush1.bf16.msra.mxu0 0
        %1306 = vmatprep.subr.bf16.mxu0 %v1292
        %1307 = vmatpush1.bf16.msra.mxu0 %v1289
        %1308 = vmatprep.subr.bf16.mxu0 %v1279
        %1309 = vmatpush1.bf16.msra.mxu0 %v1284
        %1310 = vmatprep.subr.bf16.mxu0 0
        %1311 = vmatpush2.bf16.msra.mxu0 0
        %1312 = vmatprep.subr.bf16.mxu0 0
        %1313 = vmatpush2.bf16.msra.mxu0 0
        %1314 = vmatprep.subr.bf16.mxu0 0
        %1315 = vmatpush2.bf16.msra.mxu0 0
        %1316 = vmatprep.subr.bf16.mxu0 0
        %1317 = vmatpush2.bf16.msra.mxu0 0
        %1318 = vmatprep.subr.bf16.mxu0 0
        %1319 = vmatpush2.bf16.msra.mxu0 0
        %1320 = vmatprep.subr.bf16.mxu0 0
        %1321 = vmatpush2.bf16.msra.mxu0 0
        %1322 = vmatprep.subr.bf16.mxu0 0
        %1323 = vmatpush2.bf16.msra.mxu0 0
        %1324 = vmatprep.subr.bf16.mxu0 0
        %1325 = vmatpush2.bf16.msra.mxu0 0
        %1326 = vmatprep.mubr.bf16.mxu0 0
        %1327 = vmatmul.mubr.bf16.gmra.mxu0 %v1085
        %v1328 = vpop.f32.mrf.mxu0
        %v1329 = vadd.f32 0.0, %v1328
        %v1330 = vpop.f32.mrf.mxu0
        %v1331 = vadd.f32 0.0, %v1330
        %v1332 = vpop.f32.mrf.mxu0
        %v1333 = vpop.f32.mrf.mxu0
        %1334 = vdwg.mxu0
        %v1335 = vadd.f32 %v1270, %v1329
        %v1336 = vadd.f32 %v1272, %v1331
        %v1337 = vadd.f32 %v1335, %v910
        %v1338 = vadd.f32 %v1336, %v910
        %v1339 = vmax.f32 %v1337, 0.0
        %v1340 = vmax.f32 %v1338, 0.0
        %v1341 = vmul.f32 %v1339, %v917
        %v1342 = vmul.f32 %v1340, %v917
        %v1343 = vadd.f32 %v1341, %v924
        %v1344 = vadd.f32 %v1342, %v924
        %v1345 = vmax.f32 %v1142, %v1343
        %v1346 = vmax.f32 %v1143, %v1344
        %1349 = vrot.lane.b32.xlu0 %v1345, 127
        %v1350 = vpop.permute.xlu0 %1349
        %1351 = vrot.lane.b32.xlu0 %v1346, 127
        %v1352 = vpop.permute.xlu0 %1351
        %vm1353 = vcmask 1039360
        %v1354 = vsel %vm1353, %v1350, %v1352
        %v1357 = vmax.f32 %v1345, %v1354
        %v1358 = vmax.f32 %v1346, %v1352
        %v1359 = vpack.c.bf16 %v1357, %v1357
        %v1360 = vpack.c.bf16 %v1358, %v1358
        %v1361 = vld [vmem:[%s9] sm:$0xf]
        %v1362 = vld [vmem:[%s9 + $0x4] sm:$0xf]
        %v1363 = vld [vmem:[%s9 + $0x8] sm:$0xf]
        %v1364 = vld [vmem:[%s9 + $0xc] sm:$0xf]
        %v1365 = vld [vmem:[%s9 + $0x10] sm:$0xf]
        %v1366 = vld [vmem:[%s9 + $0x14] sm:$0xf]
        %v1367 = vld [vmem:[%s9 + $0x18] sm:$0xf]
        %v1368 = vld [vmem:[%s9 + $0x1c] sm:$0xf]
        %v1369 = vld [vmem:[%s9 + $0x20] sm:$0xf]
        %v1370 = vld [vmem:[%s9 + $0x24] sm:$0xf]
        %v1371 = vld [vmem:[%s9 + $0x28] sm:$0xf]
        %v1372 = vld [vmem:[%s9 + $0x2c] sm:$0xf]
        %v1373 = vld [vmem:[%s9 + $0x30] sm:$0xf]
        %v1374 = vld [vmem:[%s9 + $0x34] sm:$0xf]
        %v1375 = vld [vmem:[%s9 + $0x38] sm:$0xf]
        %v1376 = vld [vmem:[%s9 + $0x3c] sm:$0xf]
        %v1377 = vld [vmem:[%s9 + $0x40] sm:$0xf]
        %v1378 = vld [vmem:[%s9 + $0x44] sm:$0xf]
        %v1379 = vld [vmem:[%s9 + $0x48] sm:$0xf]
        %v1380 = vld [vmem:[%s9 + $0x4c] sm:$0xf]
        %v1381 = vld [vmem:[%s9 + $0x50] sm:$0xf]
        %v1382 = vld [vmem:[%s9 + $0x54] sm:$0xf]
        %v1383 = vld [vmem:[%s9 + $0x58] sm:$0xf]
        %v1384 = vld [vmem:[%s9 + $0x5c] sm:$0xf]
        %v1385 = vld [vmem:[%s9 + $0x60] sm:$0xf]
        %v1386 = vld [vmem:[%s9 + $0x64] sm:$0xf]
        %v1387 = vld [vmem:[%s9 + $0x68] sm:$0xf]
        %v1388 = vld [vmem:[%s9 + $0x6c] sm:$0xf]
        %v1417 = vunpack.c.l.b16 %v1361
        %v1418 = vunpack.c.l.b16 %v1362
        %v1419 = vunpack.c.l.b16 %v1363
        %v1420 = vunpack.c.l.b16 %v1364
        %v1421 = vunpack.c.l.b16 %v1365
        %v1422 = vunpack.c.l.b16 %v1366
        %v1423 = vunpack.c.l.b16 %v1367
        %v1424 = vunpack.c.l.b16 %v1368
        %v1425 = vunpack.c.l.b16 %v1369
        %v1426 = vunpack.c.l.b16 %v1370
        %v1427 = vunpack.c.l.b16 %v1371
        %v1428 = vunpack.c.l.b16 %v1372
        %v1429 = vunpack.c.l.b16 %v1373
        %v1430 = vunpack.c.l.b16 %v1374
        %v1431 = vunpack.c.l.b16 %v1375
        %v1432 = vunpack.c.l.b16 %v1376
        %v1433 = vunpack.c.l.b16 %v1377
        %v1434 = vunpack.c.l.b16 %v1378
        %v1435 = vunpack.c.l.b16 %v1379
        %v1436 = vunpack.c.l.b16 %v1380
        %v1437 = vunpack.c.l.b16 %v1381
        %v1438 = vunpack.c.l.b16 %v1382
        %v1439 = vunpack.c.l.b16 %v1383
        %v1440 = vunpack.c.l.b16 %v1384
        %v1441 = vunpack.c.l.b16 %v1385
        %v1442 = vunpack.c.l.b16 %v1386
        %v1443 = vunpack.c.l.b16 %v1387
        %v1444 = vunpack.c.l.b16 %v1388
        %v1445 = vpack.c.b16 %v1418, %v1417
        %v1446 = vpack.c.b16 %v1420, %v1419
        %v1447 = vpack.c.b16 %v1422, %v1421
        %v1448 = vpack.c.b16 %v1424, %v1423
        %v1449 = vpack.c.b16 %v1426, %v1425
        %v1450 = vpack.c.b16 %v1428, %v1427
        %v1451 = vpack.c.b16 %v1430, %v1429
        %v1452 = vpack.c.b16 %v1432, %v1431
        %v1453 = vpack.c.b16 %v1434, %v1433
        %v1454 = vpack.c.b16 %v1436, %v1435
        %v1455 = vpack.c.b16 %v1438, %v1437
        %v1456 = vpack.c.b16 %v1440, %v1439
        %v1457 = vpack.c.b16 %v1442, %v1441
        %v1458 = vpack.c.b16 %v1444, %v1443
        %vm1472 = vcmask 777216
        %v1474 = vsel %vm1472, %v1360, 0
        %vm1476 = vcmask 1046528
        %vm1477 = vcmask 1047552
        %v1478 = vsel %vm1476, 4294967295, 65535
        %v1479 = vsel %vm1477, %v1478, 0
        %v1481 = vand.u32 %v1458, %v1479
        %1483 = vmatprep.subr.bf16.mxu0 0
        %1484 = vmatpush1.bf16.msra.mxu0 %v1452
        %1485 = vmatprep.subr.bf16.mxu0 0
        %1486 = vmatpush1.bf16.msra.mxu0 %v1451
        %1487 = vmatprep.subr.bf16.mxu0 0
        %1488 = vmatpush1.bf16.msra.mxu0 %v1450
        %1489 = vmatprep.subr.bf16.mxu0 0
        %1490 = vmatpush1.bf16.msra.mxu0 %v1449
        %1491 = vmatprep.subr.bf16.mxu0 0
        %1492 = vmatpush1.bf16.msra.mxu0 %v1448
        %1493 = vmatprep.subr.bf16.mxu0 0
        %1494 = vmatpush1.bf16.msra.mxu0 %v1447
        %1495 = vmatprep.subr.bf16.mxu0 0
        %1496 = vmatpush1.bf16.msra.mxu0 %v1446
        %1497 = vmatprep.subr.bf16.mxu0 0
        %1498 = vmatpush1.bf16.msra.mxu0 %v1445
        %1499 = vmatprep.subr.bf16.mxu0 0
        %1500 = vmatpush2.bf16.msra.mxu0 0
        %1501 = vmatprep.subr.bf16.mxu0 0
        %1502 = vmatpush2.bf16.msra.mxu0 0
        %1503 = vmatprep.subr.bf16.mxu0 0
        %1504 = vmatpush2.bf16.msra.mxu0 %v1481
        %1505 = vmatprep.subr.bf16.mxu0 0
        %1506 = vmatpush2.bf16.msra.mxu0 %v1457
        %1507 = vmatprep.subr.bf16.mxu0 0
        %1508 = vmatpush2.bf16.msra.mxu0 %v1456
        %1509 = vmatprep.subr.bf16.mxu0 0
        %1510 = vmatpush2.bf16.msra.mxu0 %v1455
        %1511 = vmatprep.subr.bf16.mxu0 0
        %1512 = vmatpush2.bf16.msra.mxu0 %v1454
        %1513 = vmatprep.subr.bf16.mxu0 0
        %1514 = vmatpush2.bf16.msra.mxu0 %v1453
        %1515 = vmatprep.mubr.bf16.mxu0 %v1474
        %1516 = vmatmul.mubr.bf16.gmra.mxu0 %v1359
        %v1517 = vpop.f32.mrf.mxu0
        %v1518 = vadd.f32 0.0, %v1517
        %v1519 = vpop.f32.mrf.mxu0
        %v1520 = vpop.f32.mrf.mxu0
        %v1521 = vpop.f32.mrf.mxu0
        %1522 = vdwg.mxu0
        %v1523 = vpack.c.bf16 %v1518, %v1518
        %s1524 = sadd.s32 %s927, 1
        %s1525 = smul.u32 %s1524, 8
        %v1527 = vunpack.c.l.b16 %v1523
        %v1528 = vpack.c.b16 %v1527, %v1527
        %1529 = vrot.lane.b32.xlu0 %v1528, 1
        %v1530 = vpop.permute.xlu0 %1529
        %s1532 = sshra.s32 %s1525, 3
        %s1533 = sand.u32 %s1525, 7
        %s1534 = smul.addr %s1532, 4
        %s1535 = scalar_lea.vmem [#allocation2], %s1534
        %vm1536 = vcmask 918536
        %1537 = vst.msk [vmem:[%s1535] sm:$0x3] %vm1536, %v1530
      $region77: #{cnn_forward.2} parent=71 // loop_footer
        %s931 = sadd.s32 1, %s927
      $region78: #{cnn_forward.2} parent=71 // loop_footer_branch
        %926 = sbr.rel target = $region74
      $region79: #{cnn_forward.2} parent=71 // loop_exit
        _
      %v1538 = vld [vmem:[%s2] sm:$0xf]
      %s1539 = scalar_lea.vmem %s2, 4
      %v1540 = vld [vmem:[%s1539] sm:$0xf]
      %s1541 = scalar_lea.vmem %s2, 8
      %v1542 = vld [vmem:[%s1541] sm:$0xf]
      %v1543 = vld [vmem:[%s6] sm:$0xff]
      %1545 = vset.pattern.permute.xlu0 0
      %1546 = vperm.xlu0 %1545, %v1543
      %v1547 = vpop.permute.xlu0 %1546
      %s1549 = scalar_lea.vmem %s6, 8
      %v1550 = vld [vmem:[%s1549] sm:$0xff]
      %1552 = vset.pattern.permute.xlu0 0
      %1553 = vperm.xlu0 %1552, %v1550
      %v1554 = vpop.permute.xlu0 %1553
      %s1556 = scalar_lea.vmem %s6, 16
      %v1557 = vld [vmem:[%s1556] sm:$0xff]
      %1559 = vset.pattern.permute.xlu0 0
      %1560 = vperm.xlu0 %1559, %v1557
      %v1561 = vpop.permute.xlu0 %1560
      loop: start=0, step=1, limit=112
      $region80: #{cnn_forward.2} parent=71 // loop_pre_header
        _
      $region81: #{cnn_forward.2} parent=71 // loop_header
        %s1564 = sphi 0, %s1568
        %p1565 = scmp.ge.s32.totalorder %s1564, 112
      $region82: #{cnn_forward.2} parent=71 // loop_header_branch
        %1567 = sbr.rel (%p1565) target = $region86
      $region83: #{cnn_forward.2} parent=71 // loop_body
        %s1569 = smul.u32 %s1564, 16
        %s1570 = sshra.s32 %s1569, 3
        %s1571 = sand.u32 %s1569, 7
        %s1572 = smul.addr %s1570, 4
        %s1573 = scalar_lea.vmem [#allocation2], %s1572
        %v1574 = vld [vmem:[%s1573] sm:$0xf]
        %v1575 = vld [vmem:[%s1573 + $0x4] sm:$0xf]
        %v1576 = vld [vmem:[%s1573 + $0x8] sm:$0xf]
        %v1580 = vunpack.c.l.b16 %v1574
        %v1581 = vunpack.c.l.b16 %v1575
        %v1582 = vunpack.c.l.b16 %v1576
        %v1583 = vpack.c.b16 %v1581, %v1580
        %v1584 = vpack.c.b16 %v1582, %v1582
        %1585 = vrot.lane.b32.xlu0 %v1583, 127
        %v1586 = vpop.permute.xlu0 %1585
        %1587 = vrot.lane.b32.xlu0 %v1584, 127
        %v1588 = vpop.permute.xlu0 %1587
        %vm1590 = vcmask 195584
        %v1592 = vsel %vm1590, %v1540, 0
        %vm1594 = vcmask 1043456
        %v1596 = vsel %vm1594, %v1588, 0
        %1598 = vmatprep.subr.bf16.mxu0 0
        %1599 = vmatpush1.bf16.msra.mxu0 0
        %1600 = vmatprep.subr.bf16.mxu0 0
        %1601 = vmatpush1.bf16.msra.mxu0 0
        %1602 = vmatprep.subr.bf16.mxu0 0
        %1603 = vmatpush1.bf16.msra.mxu0 0
        %1604 = vmatprep.subr.bf16.mxu0 0
        %1605 = vmatpush1.bf16.msra.mxu0 0
        %1606 = vmatprep.subr.bf16.mxu0 0
        %1607 = vmatpush1.bf16.msra.mxu0 0
        %1608 = vmatprep.subr.bf16.mxu0 0
        %1609 = vmatpush1.bf16.msra.mxu0 0
        %1610 = vmatprep.subr.bf16.mxu0 0
        %1611 = vmatpush1.bf16.msra.mxu0 %v1596
        %1612 = vmatprep.subr.bf16.mxu0 0
        %1613 = vmatpush1.bf16.msra.mxu0 %v1586
        %1614 = vmatprep.subr.bf16.mxu0 0
        %1615 = vmatpush2.bf16.msra.mxu0 0
        %1616 = vmatprep.subr.bf16.mxu0 0
        %1617 = vmatpush2.bf16.msra.mxu0 0
        %1618 = vmatprep.subr.bf16.mxu0 0
        %1619 = vmatpush2.bf16.msra.mxu0 0
        %1620 = vmatprep.subr.bf16.mxu0 0
        %1621 = vmatpush2.bf16.msra.mxu0 0
        %1622 = vmatprep.subr.bf16.mxu0 0
        %1623 = vmatpush2.bf16.msra.mxu0 0
        %1624 = vmatprep.subr.bf16.mxu0 0
        %1625 = vmatpush2.bf16.msra.mxu0 0
        %1626 = vmatprep.subr.bf16.mxu0 0
        %1627 = vmatpush2.bf16.msra.mxu0 0
        %1628 = vmatprep.subr.bf16.mxu0 0
        %1629 = vmatpush2.bf16.msra.mxu0 0
        %1630 = vmatprep.mubr.bf16.mxu0 0
        %1631 = vmatmul.mubr.bf16.gmra.mxu0 %v1592
        %v1632 = vpop.f32.mrf.mxu0
        %v1633 = vadd.f32 0.0, %v1632
        %v1634 = vpop.f32.mrf.mxu0
        %v1635 = vpop.f32.mrf.mxu0
        %v1636 = vpop.f32.mrf.mxu0
        %1637 = vdwg.mxu0
        %v1640 = vsel %vm1590, %v1538, 0
        %v1643 = vsel %vm1594, %v1584, 0
        %1645 = vmatprep.subr.bf16.mxu0 0
        %1646 = vmatpush1.bf16.msra.mxu0 0
        %1647 = vmatprep.subr.bf16.mxu0 0
        %1648 = vmatpush1.bf16.msra.mxu0 0
        %1649 = vmatprep.subr.bf16.mxu0 0
        %1650 = vmatpush1.bf16.msra.mxu0 0
        %1651 = vmatprep.subr.bf16.mxu0 0
        %1652 = vmatpush1.bf16.msra.mxu0 0
        %1653 = vmatprep.subr.bf16.mxu0 0
        %1654 = vmatpush1.bf16.msra.mxu0 0
        %1655 = vmatprep.subr.bf16.mxu0 0
        %1656 = vmatpush1.bf16.msra.mxu0 0
        %1657 = vmatprep.subr.bf16.mxu0 0
        %1658 = vmatpush1.bf16.msra.mxu0 %v1643
        %1659 = vmatprep.subr.bf16.mxu0 0
        %1660 = vmatpush1.bf16.msra.mxu0 %v1583
        %1661 = vmatprep.subr.bf16.mxu0 0
        %1662 = vmatpush2.bf16.msra.mxu0 0
        %1663 = vmatprep.subr.bf16.mxu0 0
        %1664 = vmatpush2.bf16.msra.mxu0 0
        %1665 = vmatprep.subr.bf16.mxu0 0
        %1666 = vmatpush2.bf16.msra.mxu0 0
        %1667 = vmatprep.subr.bf16.mxu0 0
        %1668 = vmatpush2.bf16.msra.mxu0 0
        %1669 = vmatprep.subr.bf16.mxu0 0
        %1670 = vmatpush2.bf16.msra.mxu0 0
        %1671 = vmatprep.subr.bf16.mxu0 0
        %1672 = vmatpush2.bf16.msra.mxu0 0
        %1673 = vmatprep.subr.bf16.mxu0 0
        %1674 = vmatpush2.bf16.msra.mxu0 0
        %1675 = vmatprep.subr.bf16.mxu0 0
        %1676 = vmatpush2.bf16.msra.mxu0 0
        %1677 = vmatprep.mubr.bf16.mxu0 0
        %1678 = vmatmul.mubr.bf16.gmra.mxu0 %v1640
        %v1679 = vpop.f32.mrf.mxu0
        %v1680 = vadd.f32 %v1633, %v1679
        %v1681 = vpop.f32.mrf.mxu0
        %v1682 = vpop.f32.mrf.mxu0
        %v1683 = vpop.f32.mrf.mxu0
        %1684 = vdwg.mxu0
        %1685 = vrot.lane.b32.xlu0 %v1583, 126
        %v1686 = vpop.permute.xlu0 %1685
        %1687 = vrot.lane.b32.xlu0 %v1584, 126
        %v1688 = vpop.permute.xlu0 %1687
        %v1691 = vsel %vm1590, %v1542, 0
        %v1694 = vsel %vm1594, %v1688, 0
        %1696 = vmatprep.subr.bf16.mxu0 0
        %1697 = vmatpush1.bf16.msra.mxu0 0
        %1698 = vmatprep.subr.bf16.mxu0 0
        %1699 = vmatpush1.bf16.msra.mxu0 0
        %1700 = vmatprep.subr.bf16.mxu0 0
        %1701 = vmatpush1.bf16.msra.mxu0 0
        %1702 = vmatprep.subr.bf16.mxu0 0
        %1703 = vmatpush1.bf16.msra.mxu0 0
        %1704 = vmatprep.subr.bf16.mxu0 0
        %1705 = vmatpush1.bf16.msra.mxu0 0
        %1706 = vmatprep.subr.bf16.mxu0 0
        %1707 = vmatpush1.bf16.msra.mxu0 0
        %1708 = vmatprep.subr.bf16.mxu0 0
        %1709 = vmatpush1.bf16.msra.mxu0 %v1694
        %1710 = vmatprep.subr.bf16.mxu0 0
        %1711 = vmatpush1.bf16.msra.mxu0 %v1686
        %1712 = vmatprep.subr.bf16.mxu0 0
        %1713 = vmatpush2.bf16.msra.mxu0 0
        %1714 = vmatprep.subr.bf16.mxu0 0
        %1715 = vmatpush2.bf16.msra.mxu0 0
        %1716 = vmatprep.subr.bf16.mxu0 0
        %1717 = vmatpush2.bf16.msra.mxu0 0
        %1718 = vmatprep.subr.bf16.mxu0 0
        %1719 = vmatpush2.bf16.msra.mxu0 0
        %1720 = vmatprep.subr.bf16.mxu0 0
        %1721 = vmatpush2.bf16.msra.mxu0 0
        %1722 = vmatprep.subr.bf16.mxu0 0
        %1723 = vmatpush2.bf16.msra.mxu0 0
        %1724 = vmatprep.subr.bf16.mxu0 0
        %1725 = vmatpush2.bf16.msra.mxu0 0
        %1726 = vmatprep.subr.bf16.mxu0 0
        %1727 = vmatpush2.bf16.msra.mxu0 0
        %1728 = vmatprep.mubr.bf16.mxu0 0
        %1729 = vmatmul.mubr.bf16.gmra.mxu0 %v1691
        %v1730 = vpop.f32.mrf.mxu0
        %v1731 = vadd.f32 0.0, %v1730
        %v1732 = vpop.f32.mrf.mxu0
        %v1733 = vpop.f32.mrf.mxu0
        %v1734 = vpop.f32.mrf.mxu0
        %1735 = vdwg.mxu0
        %v1736 = vadd.f32 %v1680, %v1731
        %v1737 = vadd.f32 %v1736, %v1547
        %v1738 = vmax.f32 %v1737, 0.0
        %v1739 = vmul.f32 %v1738, %v1554
        %v1740 = vadd.f32 %v1739, %v1561
        %s1741 = smul.u32 %s1564, 2
        %s1742 = sadd.s32 %s1741, 1
        %s1743 = smul.u32 %s1742, 8
        %s1744 = sshra.s32 %s1743, 3
        %s1745 = sand.u32 %s1743, 7
        %s1746 = smul.addr %s1744, 4
        %s1747 = scalar_lea.vmem [#allocation2], %s1746
        %v1748 = vld [vmem:[%s1747] sm:$0xf]
        %v1749 = vld [vmem:[%s1747 + $0x4] sm:$0xf]
        %v1750 = vld [vmem:[%s1747 + $0x8] sm:$0xf]
        %v1754 = vunpack.c.l.b16 %v1748
        %v1755 = vunpack.c.l.b16 %v1749
        %v1756 = vunpack.c.l.b16 %v1750
        %v1757 = vpack.c.b16 %v1755, %v1754
        %v1758 = vpack.c.b16 %v1756, %v1756
        %1759 = vrot.lane.b32.xlu0 %v1757, 127
        %v1760 = vpop.permute.xlu0 %1759
        %1761 = vrot.lane.b32.xlu0 %v1758, 127
        %v1762 = vpop.permute.xlu0 %1761
        %v1765 = vsel %vm1594, %v1762, 0
        %1767 = vmatprep.subr.bf16.mxu0 0
        %1768 = vmatpush1.bf16.msra.mxu0 0
        %1769 = vmatprep.subr.bf16.mxu0 0
        %1770 = vmatpush1.bf16.msra.mxu0 0
        %1771 = vmatprep.subr.bf16.mxu0 0
        %1772 = vmatpush1.bf16.msra.mxu0 0
        %1773 = vmatprep.subr.bf16.mxu0 0
        %1774 = vmatpush1.bf16.msra.mxu0 0
        %1775 = vmatprep.subr.bf16.mxu0 0
        %1776 = vmatpush1.bf16.msra.mxu0 0
        %1777 = vmatprep.subr.bf16.mxu0 0
        %1778 = vmatpush1.bf16.msra.mxu0 0
        %1779 = vmatprep.subr.bf16.mxu0 0
        %1780 = vmatpush1.bf16.msra.mxu0 %v1765
        %1781 = vmatprep.subr.bf16.mxu0 0
        %1782 = vmatpush1.bf16.msra.mxu0 %v1760
        %1783 = vmatprep.subr.bf16.mxu0 0
        %1784 = vmatpush2.bf16.msra.mxu0 0
        %1785 = vmatprep.subr.bf16.mxu0 0
        %1786 = vmatpush2.bf16.msra.mxu0 0
        %1787 = vmatprep.subr.bf16.mxu0 0
        %1788 = vmatpush2.bf16.msra.mxu0 0
        %1789 = vmatprep.subr.bf16.mxu0 0
        %1790 = vmatpush2.bf16.msra.mxu0 0
        %1791 = vmatprep.subr.bf16.mxu0 0
        %1792 = vmatpush2.bf16.msra.mxu0 0
        %1793 = vmatprep.subr.bf16.mxu0 0
        %1794 = vmatpush2.bf16.msra.mxu0 0
        %1795 = vmatprep.subr.bf16.mxu0 0
        %1796 = vmatpush2.bf16.msra.mxu0 0
        %1797 = vmatprep.subr.bf16.mxu0 0
        %1798 = vmatpush2.bf16.msra.mxu0 0
        %1799 = vmatprep.mubr.bf16.mxu0 0
        %1800 = vmatmul.mubr.bf16.gmra.mxu0 %v1592
        %v1801 = vpop.f32.mrf.mxu0
        %v1802 = vadd.f32 0.0, %v1801
        %v1803 = vpop.f32.mrf.mxu0
        %v1804 = vpop.f32.mrf.mxu0
        %v1805 = vpop.f32.mrf.mxu0
        %1806 = vdwg.mxu0
        %v1809 = vsel %vm1594, %v1758, 0
        %1811 = vmatprep.subr.bf16.mxu0 0
        %1812 = vmatpush1.bf16.msra.mxu0 0
        %1813 = vmatprep.subr.bf16.mxu0 0
        %1814 = vmatpush1.bf16.msra.mxu0 0
        %1815 = vmatprep.subr.bf16.mxu0 0
        %1816 = vmatpush1.bf16.msra.mxu0 0
        %1817 = vmatprep.subr.bf16.mxu0 0
        %1818 = vmatpush1.bf16.msra.mxu0 0
        %1819 = vmatprep.subr.bf16.mxu0 0
        %1820 = vmatpush1.bf16.msra.mxu0 0
        %1821 = vmatprep.subr.bf16.mxu0 0
        %1822 = vmatpush1.bf16.msra.mxu0 0
        %1823 = vmatprep.subr.bf16.mxu0 0
        %1824 = vmatpush1.bf16.msra.mxu0 %v1809
        %1825 = vmatprep.subr.bf16.mxu0 0
        %1826 = vmatpush1.bf16.msra.mxu0 %v1757
        %1827 = vmatprep.subr.bf16.mxu0 0
        %1828 = vmatpush2.bf16.msra.mxu0 0
        %1829 = vmatprep.subr.bf16.mxu0 0
        %1830 = vmatpush2.bf16.msra.mxu0 0
        %1831 = vmatprep.subr.bf16.mxu0 0
        %1832 = vmatpush2.bf16.msra.mxu0 0
        %1833 = vmatprep.subr.bf16.mxu0 0
        %1834 = vmatpush2.bf16.msra.mxu0 0
        %1835 = vmatprep.subr.bf16.mxu0 0
        %1836 = vmatpush2.bf16.msra.mxu0 0
        %1837 = vmatprep.subr.bf16.mxu0 0
        %1838 = vmatpush2.bf16.msra.mxu0 0
        %1839 = vmatprep.subr.bf16.mxu0 0
        %1840 = vmatpush2.bf16.msra.mxu0 0
        %1841 = vmatprep.subr.bf16.mxu0 0
        %1842 = vmatpush2.bf16.msra.mxu0 0
        %1843 = vmatprep.mubr.bf16.mxu0 0
        %1844 = vmatmul.mubr.bf16.gmra.mxu0 %v1640
        %v1845 = vpop.f32.mrf.mxu0
        %v1846 = vadd.f32 %v1802, %v1845
        %v1847 = vpop.f32.mrf.mxu0
        %v1848 = vpop.f32.mrf.mxu0
        %v1849 = vpop.f32.mrf.mxu0
        %1850 = vdwg.mxu0
        %1851 = vrot.lane.b32.xlu0 %v1757, 126
        %v1852 = vpop.permute.xlu0 %1851
        %1853 = vrot.lane.b32.xlu0 %v1758, 126
        %v1854 = vpop.permute.xlu0 %1853
        %v1857 = vsel %vm1594, %v1854, 0
        %1859 = vmatprep.subr.bf16.mxu0 0
        %1860 = vmatpush1.bf16.msra.mxu0 0
        %1861 = vmatprep.subr.bf16.mxu0 0
        %1862 = vmatpush1.bf16.msra.mxu0 0
        %1863 = vmatprep.subr.bf16.mxu0 0
        %1864 = vmatpush1.bf16.msra.mxu0 0
        %1865 = vmatprep.subr.bf16.mxu0 0
        %1866 = vmatpush1.bf16.msra.mxu0 0
        %1867 = vmatprep.subr.bf16.mxu0 0
        %1868 = vmatpush1.bf16.msra.mxu0 0
        %1869 = vmatprep.subr.bf16.mxu0 0
        %1870 = vmatpush1.bf16.msra.mxu0 0
        %1871 = vmatprep.subr.bf16.mxu0 0
        %1872 = vmatpush1.bf16.msra.mxu0 %v1857
        %1873 = vmatprep.subr.bf16.mxu0 0
        %1874 = vmatpush1.bf16.msra.mxu0 %v1852
        %1875 = vmatprep.subr.bf16.mxu0 0
        %1876 = vmatpush2.bf16.msra.mxu0 0
        %1877 = vmatprep.subr.bf16.mxu0 0
        %1878 = vmatpush2.bf16.msra.mxu0 0
        %1879 = vmatprep.subr.bf16.mxu0 0
        %1880 = vmatpush2.bf16.msra.mxu0 0
        %1881 = vmatprep.subr.bf16.mxu0 0
        %1882 = vmatpush2.bf16.msra.mxu0 0
        %1883 = vmatprep.subr.bf16.mxu0 0
        %1884 = vmatpush2.bf16.msra.mxu0 0
        %1885 = vmatprep.subr.bf16.mxu0 0
        %1886 = vmatpush2.bf16.msra.mxu0 0
        %1887 = vmatprep.subr.bf16.mxu0 0
        %1888 = vmatpush2.bf16.msra.mxu0 0
        %1889 = vmatprep.subr.bf16.mxu0 0
        %1890 = vmatpush2.bf16.msra.mxu0 0
        %1891 = vmatprep.mubr.bf16.mxu0 0
        %1892 = vmatmul.mubr.bf16.gmra.mxu0 %v1691
        %v1893 = vpop.f32.mrf.mxu0
        %v1894 = vadd.f32 0.0, %v1893
        %v1895 = vpop.f32.mrf.mxu0
        %v1896 = vpop.f32.mrf.mxu0
        %v1897 = vpop.f32.mrf.mxu0
        %1898 = vdwg.mxu0
        %v1899 = vadd.f32 %v1846, %v1894
        %v1900 = vadd.f32 %v1899, %v1547
        %v1901 = vmax.f32 %v1900, 0.0
        %v1902 = vmul.f32 %v1901, %v1554
        %v1903 = vadd.f32 %v1902, %v1561
        %v1904 = vmax.f32 %v1740, %v1903
        %1906 = vrot.lane.b32.xlu0 %v1904, 127
        %v1907 = vpop.permute.xlu0 %1906
        %v1909 = vmax.f32 %v1904, %v1907
        %v1910 = vpack.c.bf16 %v1909, %v1909
        %v1911 = vld [vmem:[%s10] sm:$0xf]
        %v1912 = vld [vmem:[%s10 + $0x4] sm:$0xf]
        %v1913 = vld [vmem:[%s10 + $0x8] sm:$0xf]
        %v1914 = vld [vmem:[%s10 + $0xc] sm:$0xf]
        %v1915 = vld [vmem:[%s10 + $0x10] sm:$0xf]
        %v1916 = vld [vmem:[%s10 + $0x14] sm:$0xf]
        %v1917 = vld [vmem:[%s10 + $0x18] sm:$0xf]
        %v1918 = vld [vmem:[%s10 + $0x1c] sm:$0xf]
        %v1919 = vld [vmem:[%s10 + $0x20] sm:$0xf]
        %v1920 = vld [vmem:[%s10 + $0x24] sm:$0xf]
        %v1921 = vld [vmem:[%s10 + $0x28] sm:$0xf]
        %v1922 = vld [vmem:[%s10 + $0x2c] sm:$0xf]
        %v1923 = vld [vmem:[%s10 + $0x30] sm:$0xf]
        %v1924 = vld [vmem:[%s10 + $0x34] sm:$0xf]
        %v1939 = vunpack.c.l.b16 %v1911
        %v1940 = vunpack.c.l.b16 %v1912
        %v1941 = vunpack.c.l.b16 %v1913
        %v1942 = vunpack.c.l.b16 %v1914
        %v1943 = vunpack.c.l.b16 %v1915
        %v1944 = vunpack.c.l.b16 %v1916
        %v1945 = vunpack.c.l.b16 %v1917
        %v1946 = vunpack.c.l.b16 %v1918
        %v1947 = vunpack.c.l.b16 %v1919
        %v1948 = vunpack.c.l.b16 %v1920
        %v1949 = vunpack.c.l.b16 %v1921
        %v1950 = vunpack.c.l.b16 %v1922
        %v1951 = vunpack.c.l.b16 %v1923
        %v1952 = vunpack.c.l.b16 %v1924
        %v1953 = vpack.c.b16 %v1940, %v1939
        %v1954 = vpack.c.b16 %v1942, %v1941
        %v1955 = vpack.c.b16 %v1944, %v1943
        %v1956 = vpack.c.b16 %v1946, %v1945
        %v1957 = vpack.c.b16 %v1948, %v1947
        %v1958 = vpack.c.b16 %v1950, %v1949
        %v1959 = vpack.c.b16 %v1952, %v1951
        %vm1966 = vcmask 908288
        %v1968 = vsel %vm1966, %v1910, 0
        %vm1970 = vcmask 1046528
        %vm1971 = vcmask 1047552
        %v1972 = vsel %vm1970, 4294967295, 65535
        %v1973 = vsel %vm1971, %v1972, 0
        %v1975 = vand.u32 %v1959, %v1973
        %1977 = vmatprep.subr.bf16.mxu0 0
        %1978 = vmatpush1.bf16.msra.mxu0 0
        %1979 = vmatprep.subr.bf16.mxu0 0
        %1980 = vmatpush1.bf16.msra.mxu0 %v1975
        %1981 = vmatprep.subr.bf16.mxu0 0
        %1982 = vmatpush1.bf16.msra.mxu0 %v1958
        %1983 = vmatprep.subr.bf16.mxu0 0
        %1984 = vmatpush1.bf16.msra.mxu0 %v1957
        %1985 = vmatprep.subr.bf16.mxu0 0
        %1986 = vmatpush1.bf16.msra.mxu0 %v1956
        %1987 = vmatprep.subr.bf16.mxu0 0
        %1988 = vmatpush1.bf16.msra.mxu0 %v1955
        %1989 = vmatprep.subr.bf16.mxu0 0
        %1990 = vmatpush1.bf16.msra.mxu0 %v1954
        %1991 = vmatprep.subr.bf16.mxu0 0
        %1992 = vmatpush1.bf16.msra.mxu0 %v1953
        %1993 = vmatprep.subr.bf16.mxu0 0
        %1994 = vmatpush2.bf16.msra.mxu0 0
        %1995 = vmatprep.subr.bf16.mxu0 0
        %1996 = vmatpush2.bf16.msra.mxu0 0
        %1997 = vmatprep.subr.bf16.mxu0 0
        %1998 = vmatpush2.bf16.msra.mxu0 0
        %1999 = vmatprep.subr.bf16.mxu0 0
        %2000 = vmatpush2.bf16.msra.mxu0 0
        %2001 = vmatprep.subr.bf16.mxu0 0
        %2002 = vmatpush2.bf16.msra.mxu0 0
        %2003 = vmatprep.subr.bf16.mxu0 0
        %2004 = vmatpush2.bf16.msra.mxu0 0
        %2005 = vmatprep.subr.bf16.mxu0 0
        %2006 = vmatpush2.bf16.msra.mxu0 0
        %2007 = vmatprep.subr.bf16.mxu0 0
        %2008 = vmatpush2.bf16.msra.mxu0 0
        %2009 = vmatprep.mubr.bf16.mxu0 0
        %2010 = vmatmul.mubr.bf16.gmra.mxu0 %v1968
        %v2011 = vpop.f32.mrf.mxu0
        %v2012 = vadd.f32 0.0, %v2011
        %v2013 = vpop.f32.mrf.mxu0
        %v2014 = vpop.f32.mrf.mxu0
        %v2015 = vpop.f32.mrf.mxu0
        %2016 = vdwg.mxu0
        %v2017 = vpack.c.bf16 %v2012, %v2012
        %s2018 = sadd.s32 %s1564, 1
        %s2019 = smul.u32 %s2018, 8
        %v2021 = vunpack.c.l.b16 %v2017
        %v2022 = vpack.c.b16 %v2021, %v2021
        %2023 = vrot.lane.b32.xlu0 %v2022, 1
        %v2024 = vpop.permute.xlu0 %2023
        %s2026 = sshra.s32 %s2019, 3
        %s2027 = sand.u32 %s2019, 7
        %s2028 = smul.addr %s2026, 4
        %s2029 = scalar_lea.vmem [#allocation3], %s2028
        %vm2030 = vcmask 461832
        %2031 = vst.msk [vmem:[%s2029] sm:$0xf] %vm2030, %v2024
      $region84: #{cnn_forward.2} parent=71 // loop_footer
        %s1568 = sadd.s32 1, %s1564
      $region85: #{cnn_forward.2} parent=71 // loop_footer_branch
        %1563 = sbr.rel target = $region81
      $region86: #{cnn_forward.2} parent=71 // loop_exit
        _
      %v2032 = vld [vmem:[%s3] sm:$0xf]
      %v2033 = vld [vmem:[%s3 + $0x4] sm:$0xf]
      %s2034 = scalar_lea.vmem %s3, 8
      %v2035 = vld [vmem:[%s2034] sm:$0xf]
      %v2036 = vld [vmem:[%s2034 + $0x4] sm:$0xf]
      %s2037 = scalar_lea.vmem %s3, 16
      %v2038 = vld [vmem:[%s2037] sm:$0xf]
      %v2039 = vld [vmem:[%s2037 + $0x4] sm:$0xf]
      %v2040 = vld [vmem:[%s7] sm:$0xff]
      %v2041 = vld [vmem:[%s7 + $0x8] sm:$0xff]
      %2043 = vset.pattern.permute.xlu0 0
      %2044 = vperm.xlu0 %2043, %v2040
      %v2045 = vpop.permute.xlu0 %2044
      %2048 = vset.pattern.permute.xlu0 0
      %2049 = vperm.xlu0 %2048, %v2041
      %v2050 = vpop.permute.xlu0 %2049
      %s2052 = scalar_lea.vmem %s7, 16
      %v2053 = vld [vmem:[%s2052] sm:$0xff]
      %v2054 = vld [vmem:[%s2052 + $0x8] sm:$0xff]
      %2056 = vset.pattern.permute.xlu0 0
      %2057 = vperm.xlu0 %2056, %v2053
      %v2058 = vpop.permute.xlu0 %2057
      %2061 = vset.pattern.permute.xlu0 0
      %2062 = vperm.xlu0 %2061, %v2054
      %v2063 = vpop.permute.xlu0 %2062
      %s2065 = scalar_lea.vmem %s7, 32
      %v2066 = vld [vmem:[%s2065] sm:$0xff]
      %v2067 = vld [vmem:[%s2065 + $0x8] sm:$0xff]
      %2069 = vset.pattern.permute.xlu0 0
      %2070 = vperm.xlu0 %2069, %v2066
      %v2071 = vpop.permute.xlu0 %2070
      %2074 = vset.pattern.permute.xlu0 0
      %2075 = vperm.xlu0 %2074, %v2067
      %v2076 = vpop.permute.xlu0 %2075
      loop: start=0, step=1, limit=56
      $region87: #{cnn_forward.2} parent=71 // loop_pre_header
        _
      $region88: #{cnn_forward.2} parent=71 // loop_header
        %s2079 = sphi 0, %s2083
        %p2080 = scmp.ge.s32.totalorder %s2079, 56
      $region89: #{cnn_forward.2} parent=71 // loop_header_branch
        %2082 = sbr.rel (%p2080) target = $region93
      $region90: #{cnn_forward.2} parent=71 // loop_body
        %s2084 = smul.u32 %s2079, 16
        %s2085 = sshra.s32 %s2084, 3
        %s2086 = sand.u32 %s2084, 7
        %s2087 = smul.addr %s2085, 4
        %s2088 = scalar_lea.vmem [#allocation3], %s2087
        %v2089 = vld [vmem:[%s2088] sm:$0xf]
        %v2090 = vld [vmem:[%s2088 + $0x4] sm:$0xf]
        %v2091 = vld [vmem:[%s2088 + $0x8] sm:$0xf]
        %v2094 = vunpack.c.l.b16 %v2035
        %v2095 = vunpack.c.l.b16 %v2036
        %v2096 = vpack.c.b16 %v2095, %v2094
        %v2100 = vunpack.c.l.b16 %v2089
        %v2101 = vunpack.c.l.b16 %v2090
        %v2102 = vunpack.c.l.b16 %v2091
        %v2103 = vpack.c.b16 %v2101, %v2100
        %v2104 = vpack.c.b16 %v2102, %v2102
        %2105 = vrot.lane.b32.xlu0 %v2103, 127
        %v2106 = vpop.permute.xlu0 %2105
        %2107 = vrot.lane.b32.xlu0 %v2104, 127
        %v2108 = vpop.permute.xlu0 %2107
        %vm2110 = vcmask 195584
        %v2112 = vsel %vm2110, %v2096, 0
        %vm2114 = vcmask 1043456
        %v2116 = vsel %vm2114, %v2108, 0
        %2118 = vmatprep.subr.bf16.mxu0 0
        %2119 = vmatpush1.bf16.msra.mxu0 0
        %2120 = vmatprep.subr.bf16.mxu0 0
        %2121 = vmatpush1.bf16.msra.mxu0 0
        %2122 = vmatprep.subr.bf16.mxu0 0
        %2123 = vmatpush1.bf16.msra.mxu0 0
        %2124 = vmatprep.subr.bf16.mxu0 0
        %2125 = vmatpush1.bf16.msra.mxu0 0
        %2126 = vmatprep.subr.bf16.mxu0 0
        %2127 = vmatpush1.bf16.msra.mxu0 0
        %2128 = vmatprep.subr.bf16.mxu0 0
        %2129 = vmatpush1.bf16.msra.mxu0 0
        %2130 = vmatprep.subr.bf16.mxu0 0
        %2131 = vmatpush1.bf16.msra.mxu0 %v2116
        %2132 = vmatprep.subr.bf16.mxu0 0
        %2133 = vmatpush1.bf16.msra.mxu0 %v2106
        %2134 = vmatprep.subr.bf16.mxu0 0
        %2135 = vmatpush2.bf16.msra.mxu0 0
        %2136 = vmatprep.subr.bf16.mxu0 0
        %2137 = vmatpush2.bf16.msra.mxu0 0
        %2138 = vmatprep.subr.bf16.mxu0 0
        %2139 = vmatpush2.bf16.msra.mxu0 0
        %2140 = vmatprep.subr.bf16.mxu0 0
        %2141 = vmatpush2.bf16.msra.mxu0 0
        %2142 = vmatprep.subr.bf16.mxu0 0
        %2143 = vmatpush2.bf16.msra.mxu0 0
        %2144 = vmatprep.subr.bf16.mxu0 0
        %2145 = vmatpush2.bf16.msra.mxu0 0
        %2146 = vmatprep.subr.bf16.mxu0 0
        %2147 = vmatpush2.bf16.msra.mxu0 0
        %2148 = vmatprep.subr.bf16.mxu0 0
        %2149 = vmatpush2.bf16.msra.mxu0 0
        %2150 = vmatprep.mubr.bf16.mxu0 0
        %2151 = vmatmul.mubr.bf16.gmra.mxu0 %v2112
        %v2152 = vpop.f32.mrf.mxu0
        %v2153 = vadd.f32 0.0, %v2152
        %v2154 = vpop.f32.mrf.mxu0
        %v2155 = vpop.f32.mrf.mxu0
        %v2156 = vadd.f32 0.0, %v2155
        %v2157 = vpop.f32.mrf.mxu0
        %2158 = vdwg.mxu0
        %v2161 = vunpack.c.l.b16 %v2032
        %v2162 = vunpack.c.l.b16 %v2033
        %v2163 = vpack.c.b16 %v2162, %v2161
        %v2166 = vsel %vm2110, %v2163, 0
        %v2169 = vsel %vm2114, %v2104, 0
        %2171 = vmatprep.subr.bf16.mxu0 0
        %2172 = vmatpush1.bf16.msra.mxu0 0
        %2173 = vmatprep.subr.bf16.mxu0 0
        %2174 = vmatpush1.bf16.msra.mxu0 0
        %2175 = vmatprep.subr.bf16.mxu0 0
        %2176 = vmatpush1.bf16.msra.mxu0 0
        %2177 = vmatprep.subr.bf16.mxu0 0
        %2178 = vmatpush1.bf16.msra.mxu0 0
        %2179 = vmatprep.subr.bf16.mxu0 0
        %2180 = vmatpush1.bf16.msra.mxu0 0
        %2181 = vmatprep.subr.bf16.mxu0 0
        %2182 = vmatpush1.bf16.msra.mxu0 0
        %2183 = vmatprep.subr.bf16.mxu0 0
        %2184 = vmatpush1.bf16.msra.mxu0 %v2169
        %2185 = vmatprep.subr.bf16.mxu0 0
        %2186 = vmatpush1.bf16.msra.mxu0 %v2103
        %2187 = vmatprep.subr.bf16.mxu0 0
        %2188 = vmatpush2.bf16.msra.mxu0 0
        %2189 = vmatprep.subr.bf16.mxu0 0
        %2190 = vmatpush2.bf16.msra.mxu0 0
        %2191 = vmatprep.subr.bf16.mxu0 0
        %2192 = vmatpush2.bf16.msra.mxu0 0
        %2193 = vmatprep.subr.bf16.mxu0 0
        %2194 = vmatpush2.bf16.msra.mxu0 0
        %2195 = vmatprep.subr.bf16.mxu0 0
        %2196 = vmatpush2.bf16.msra.mxu0 0
        %2197 = vmatprep.subr.bf16.mxu0 0
        %2198 = vmatpush2.bf16.msra.mxu0 0
        %2199 = vmatprep.subr.bf16.mxu0 0
        %2200 = vmatpush2.bf16.msra.mxu0 0
        %2201 = vmatprep.subr.bf16.mxu0 0
        %2202 = vmatpush2.bf16.msra.mxu0 0
        %2203 = vmatprep.mubr.bf16.mxu0 0
        %2204 = vmatmul.mubr.bf16.gmra.mxu0 %v2166
        %v2205 = vpop.f32.mrf.mxu0
        %v2206 = vadd.f32 %v2153, %v2205
        %v2207 = vpop.f32.mrf.mxu0
        %v2208 = vpop.f32.mrf.mxu0
        %v2209 = vadd.f32 %v2156, %v2208
        %v2210 = vpop.f32.mrf.mxu0
        %2211 = vdwg.mxu0
        %v2214 = vunpack.c.l.b16 %v2038
        %v2215 = vunpack.c.l.b16 %v2039
        %v2216 = vpack.c.b16 %v2215, %v2214
        %2217 = vrot.lane.b32.xlu0 %v2103, 126
        %v2218 = vpop.permute.xlu0 %2217
        %2219 = vrot.lane.b32.xlu0 %v2104, 126
        %v2220 = vpop.permute.xlu0 %2219
        %v2223 = vsel %vm2110, %v2216, 0
        %v2226 = vsel %vm2114, %v2220, 0
        %2228 = vmatprep.subr.bf16.mxu0 0
        %2229 = vmatpush1.bf16.msra.mxu0 0
        %2230 = vmatprep.subr.bf16.mxu0 0
        %2231 = vmatpush1.bf16.msra.mxu0 0
        %2232 = vmatprep.subr.bf16.mxu0 0
        %2233 = vmatpush1.bf16.msra.mxu0 0
        %2234 = vmatprep.subr.bf16.mxu0 0
        %2235 = vmatpush1.bf16.msra.mxu0 0
        %2236 = vmatprep.subr.bf16.mxu0 0
        %2237 = vmatpush1.bf16.msra.mxu0 0
        %2238 = vmatprep.subr.bf16.mxu0 0
        %2239 = vmatpush1.bf16.msra.mxu0 0
        %2240 = vmatprep.subr.bf16.mxu0 0
        %2241 = vmatpush1.bf16.msra.mxu0 %v2226
        %2242 = vmatprep.subr.bf16.mxu0 0
        %2243 = vmatpush1.bf16.msra.mxu0 %v2218
        %2244 = vmatprep.subr.bf16.mxu0 0
        %2245 = vmatpush2.bf16.msra.mxu0 0
        %2246 = vmatprep.subr.bf16.mxu0 0
        %2247 = vmatpush2.bf16.msra.mxu0 0
        %2248 = vmatprep.subr.bf16.mxu0 0
        %2249 = vmatpush2.bf16.msra.mxu0 0
        %2250 = vmatprep.subr.bf16.mxu0 0
        %2251 = vmatpush2.bf16.msra.mxu0 0
        %2252 = vmatprep.subr.bf16.mxu0 0
        %2253 = vmatpush2.bf16.msra.mxu0 0
        %2254 = vmatprep.subr.bf16.mxu0 0
        %2255 = vmatpush2.bf16.msra.mxu0 0
        %2256 = vmatprep.subr.bf16.mxu0 0
        %2257 = vmatpush2.bf16.msra.mxu0 0
        %2258 = vmatprep.subr.bf16.mxu0 0
        %2259 = vmatpush2.bf16.msra.mxu0 0
        %2260 = vmatprep.mubr.bf16.mxu0 0
        %2261 = vmatmul.mubr.bf16.gmra.mxu0 %v2223
        %v2262 = vpop.f32.mrf.mxu0
        %v2263 = vadd.f32 0.0, %v2262
        %v2264 = vpop.f32.mrf.mxu0
        %v2265 = vpop.f32.mrf.mxu0
        %v2266 = vadd.f32 0.0, %v2265
        %v2267 = vpop.f32.mrf.mxu0
        %2268 = vdwg.mxu0
        %v2269 = vadd.f32 %v2206, %v2263
        %v2270 = vadd.f32 %v2209, %v2266
        %v2271 = vadd.f32 %v2269, %v2045
        %v2272 = vadd.f32 %v2270, %v2050
        %v2273 = vmax.f32 %v2271, 0.0
        %v2274 = vmax.f32 %v2272, 0.0
        %v2275 = vmul.f32 %v2273, %v2058
        %v2276 = vmul.f32 %v2274, %v2063
        %v2277 = vadd.f32 %v2275, %v2071
        %v2278 = vadd.f32 %v2276, %v2076
        %s2279 = smul.u32 %s2079, 2
        %s2280 = sadd.s32 %s2279, 1
        %s2281 = smul.u32 %s2280, 8
        %s2282 = sshra.s32 %s2281, 3
        %s2283 = sand.u32 %s2281, 7
        %s2284 = smul.addr %s2282, 4
        %s2285 = scalar_lea.vmem [#allocation3], %s2284
        %v2286 = vld [vmem:[%s2285] sm:$0xf]
        %v2287 = vld [vmem:[%s2285 + $0x4] sm:$0xf]
        %v2288 = vld [vmem:[%s2285 + $0x8] sm:$0xf]
        %v2292 = vunpack.c.l.b16 %v2286
        %v2293 = vunpack.c.l.b16 %v2287
        %v2294 = vunpack.c.l.b16 %v2288
        %v2295 = vpack.c.b16 %v2293, %v2292
        %v2296 = vpack.c.b16 %v2294, %v2294
        %2297 = vrot.lane.b32.xlu0 %v2295, 127
        %v2298 = vpop.permute.xlu0 %2297
        %2299 = vrot.lane.b32.xlu0 %v2296, 127
        %v2300 = vpop.permute.xlu0 %2299
        %v2303 = vsel %vm2114, %v2300, 0
        %2305 = vmatprep.subr.bf16.mxu0 0
        %2306 = vmatpush1.bf16.msra.mxu0 0
        %2307 = vmatprep.subr.bf16.mxu0 0
        %2308 = vmatpush1.bf16.msra.mxu0 0
        %2309 = vmatprep.subr.bf16.mxu0 0
        %2310 = vmatpush1.bf16.msra.mxu0 0
        %2311 = vmatprep.subr.bf16.mxu0 0
        %2312 = vmatpush1.bf16.msra.mxu0 0
        %2313 = vmatprep.subr.bf16.mxu0 0
        %2314 = vmatpush1.bf16.msra.mxu0 0
        %2315 = vmatprep.subr.bf16.mxu0 0
        %2316 = vmatpush1.bf16.msra.mxu0 0
        %2317 = vmatprep.subr.bf16.mxu0 0
        %2318 = vmatpush1.bf16.msra.mxu0 %v2303
        %2319 = vmatprep.subr.bf16.mxu0 0
        %2320 = vmatpush1.bf16.msra.mxu0 %v2298
        %2321 = vmatprep.subr.bf16.mxu0 0
        %2322 = vmatpush2.bf16.msra.mxu0 0
        %2323 = vmatprep.subr.bf16.mxu0 0
        %2324 = vmatpush2.bf16.msra.mxu0 0
        %2325 = vmatprep.subr.bf16.mxu0 0
        %2326 = vmatpush2.bf16.msra.mxu0 0
        %2327 = vmatprep.subr.bf16.mxu0 0
        %2328 = vmatpush2.bf16.msra.mxu0 0
        %2329 = vmatprep.subr.bf16.mxu0 0
        %2330 = vmatpush2.bf16.msra.mxu0 0
        %2331 = vmatprep.subr.bf16.mxu0 0
        %2332 = vmatpush2.bf16.msra.mxu0 0
        %2333 = vmatprep.subr.bf16.mxu0 0
        %2334 = vmatpush2.bf16.msra.mxu0 0
        %2335 = vmatprep.subr.bf16.mxu0 0
        %2336 = vmatpush2.bf16.msra.mxu0 0
        %2337 = vmatprep.mubr.bf16.mxu0 0
        %2338 = vmatmul.mubr.bf16.gmra.mxu0 %v2112
        %v2339 = vpop.f32.mrf.mxu0
        %v2340 = vadd.f32 0.0, %v2339
        %v2341 = vpop.f32.mrf.mxu0
        %v2342 = vpop.f32.mrf.mxu0
        %v2343 = vadd.f32 0.0, %v2342
        %v2344 = vpop.f32.mrf.mxu0
        %2345 = vdwg.mxu0
        %v2348 = vsel %vm2114, %v2296, 0
        %2350 = vmatprep.subr.bf16.mxu0 0
        %2351 = vmatpush1.bf16.msra.mxu0 0
        %2352 = vmatprep.subr.bf16.mxu0 0
        %2353 = vmatpush1.bf16.msra.mxu0 0
        %2354 = vmatprep.subr.bf16.mxu0 0
        %2355 = vmatpush1.bf16.msra.mxu0 0
        %2356 = vmatprep.subr.bf16.mxu0 0
        %2357 = vmatpush1.bf16.msra.mxu0 0
        %2358 = vmatprep.subr.bf16.mxu0 0
        %2359 = vmatpush1.bf16.msra.mxu0 0
        %2360 = vmatprep.subr.bf16.mxu0 0
        %2361 = vmatpush1.bf16.msra.mxu0 0
        %2362 = vmatprep.subr.bf16.mxu0 0
        %2363 = vmatpush1.bf16.msra.mxu0 %v2348
        %2364 = vmatprep.subr.bf16.mxu0 0
        %2365 = vmatpush1.bf16.msra.mxu0 %v2295
        %2366 = vmatprep.subr.bf16.mxu0 0
        %2367 = vmatpush2.bf16.msra.mxu0 0
        %2368 = vmatprep.subr.bf16.mxu0 0
        %2369 = vmatpush2.bf16.msra.mxu0 0
        %2370 = vmatprep.subr.bf16.mxu0 0
        %2371 = vmatpush2.bf16.msra.mxu0 0
        %2372 = vmatprep.subr.bf16.mxu0 0
        %2373 = vmatpush2.bf16.msra.mxu0 0
        %2374 = vmatprep.subr.bf16.mxu0 0
        %2375 = vmatpush2.bf16.msra.mxu0 0
        %2376 = vmatprep.subr.bf16.mxu0 0
        %2377 = vmatpush2.bf16.msra.mxu0 0
        %2378 = vmatprep.subr.bf16.mxu0 0
        %2379 = vmatpush2.bf16.msra.mxu0 0
        %2380 = vmatprep.subr.bf16.mxu0 0
        %2381 = vmatpush2.bf16.msra.mxu0 0
        %2382 = vmatprep.mubr.bf16.mxu0 0
        %2383 = vmatmul.mubr.bf16.gmra.mxu0 %v2166
        %v2384 = vpop.f32.mrf.mxu0
        %v2385 = vadd.f32 %v2340, %v2384
        %v2386 = vpop.f32.mrf.mxu0
        %v2387 = vpop.f32.mrf.mxu0
        %v2388 = vadd.f32 %v2343, %v2387
        %v2389 = vpop.f32.mrf.mxu0
        %2390 = vdwg.mxu0
        %2391 = vrot.lane.b32.xlu0 %v2295, 126
        %v2392 = vpop.permute.xlu0 %2391
        %2393 = vrot.lane.b32.xlu0 %v2296, 126
        %v2394 = vpop.permute.xlu0 %2393
        %v2397 = vsel %vm2114, %v2394, 0
        %2399 = vmatprep.subr.bf16.mxu0 0
        %2400 = vmatpush1.bf16.msra.mxu0 0
        %2401 = vmatprep.subr.bf16.mxu0 0
        %2402 = vmatpush1.bf16.msra.mxu0 0
        %2403 = vmatprep.subr.bf16.mxu0 0
        %2404 = vmatpush1.bf16.msra.mxu0 0
        %2405 = vmatprep.subr.bf16.mxu0 0
        %2406 = vmatpush1.bf16.msra.mxu0 0
        %2407 = vmatprep.subr.bf16.mxu0 0
        %2408 = vmatpush1.bf16.msra.mxu0 0
        %2409 = vmatprep.subr.bf16.mxu0 0
        %2410 = vmatpush1.bf16.msra.mxu0 0
        %2411 = vmatprep.subr.bf16.mxu0 0
        %2412 = vmatpush1.bf16.msra.mxu0 %v2397
        %2413 = vmatprep.subr.bf16.mxu0 0
        %2414 = vmatpush1.bf16.msra.mxu0 %v2392
        %2415 = vmatprep.subr.bf16.mxu0 0
        %2416 = vmatpush2.bf16.msra.mxu0 0
        %2417 = vmatprep.subr.bf16.mxu0 0
        %2418 = vmatpush2.bf16.msra.mxu0 0
        %2419 = vmatprep.subr.bf16.mxu0 0
        %2420 = vmatpush2.bf16.msra.mxu0 0
        %2421 = vmatprep.subr.bf16.mxu0 0
        %2422 = vmatpush2.bf16.msra.mxu0 0
        %2423 = vmatprep.subr.bf16.mxu0 0
        %2424 = vmatpush2.bf16.msra.mxu0 0
        %2425 = vmatprep.subr.bf16.mxu0 0
        %2426 = vmatpush2.bf16.msra.mxu0 0
        %2427 = vmatprep.subr.bf16.mxu0 0
        %2428 = vmatpush2.bf16.msra.mxu0 0
        %2429 = vmatprep.subr.bf16.mxu0 0
        %2430 = vmatpush2.bf16.msra.mxu0 0
        %2431 = vmatprep.mubr.bf16.mxu0 0
        %2432 = vmatmul.mubr.bf16.gmra.mxu0 %v2223
        %v2433 = vpop.f32.mrf.mxu0
        %v2434 = vadd.f32 0.0, %v2433
        %v2435 = vpop.f32.mrf.mxu0
        %v2436 = vpop.f32.mrf.mxu0
        %v2437 = vadd.f32 0.0, %v2436
        %v2438 = vpop.f32.mrf.mxu0
        %2439 = vdwg.mxu0
        %v2440 = vadd.f32 %v2385, %v2434
        %v2441 = vadd.f32 %v2388, %v2437
        %v2442 = vadd.f32 %v2440, %v2045
        %v2443 = vadd.f32 %v2441, %v2050
        %v2444 = vmax.f32 %v2442, 0.0
        %v2445 = vmax.f32 %v2443, 0.0
        %v2446 = vmul.f32 %v2444, %v2058
        %v2447 = vmul.f32 %v2445, %v2063
        %v2448 = vadd.f32 %v2446, %v2071
        %v2449 = vadd.f32 %v2447, %v2076
        %v2450 = vmax.f32 %v2277, %v2448
        %v2451 = vmax.f32 %v2278, %v2449
        %2454 = vrot.lane.b32.xlu0 %v2450, 127
        %v2455 = vpop.permute.xlu0 %2454
        %2456 = vrot.lane.b32.xlu0 %v2451, 127
        %v2457 = vpop.permute.xlu0 %2456
        %v2460 = vmax.f32 %v2450, %v2455
        %v2461 = vmax.f32 %v2451, %v2457
        %v2462 = vpack.c.bf16 %v2461, %v2460
        %v2463 = vld [vmem:[%s11] sm:$0xf]
        %v2464 = vld [vmem:[%s11 + $0x4] sm:$0xf]
        %v2465 = vld [vmem:[%s11 + $0x8] sm:$0xf]
        %v2466 = vld [vmem:[%s11 + $0xc] sm:$0xf]
        %v2467 = vld [vmem:[%s11 + $0x10] sm:$0xf]
        %v2468 = vld [vmem:[%s11 + $0x14] sm:$0xf]
        %v2469 = vld [vmem:[%s11 + $0x18] sm:$0xf]
        %v2477 = vunpack.c.l.b16 %v2463
        %v2478 = vunpack.c.l.b16 %v2464
        %v2479 = vunpack.c.l.b16 %v2465
        %v2480 = vunpack.c.l.b16 %v2466
        %v2481 = vunpack.c.l.b16 %v2467
        %v2482 = vunpack.c.l.b16 %v2468
        %v2483 = vunpack.c.l.b16 %v2469
        %v2484 = vpack.c.b16 %v2478, %v2477
        %v2485 = vpack.c.b16 %v2480, %v2479
        %v2486 = vpack.c.b16 %v2482, %v2481
        %v2487 = vpack.c.b16 %v2483, %v2483
        %vm2491 = vcmask 449536
        %v2493 = vsel %vm2491, %v2462, 0
        %vm2495 = vcmask 1042432
        %v2496 = vsel %vm2495, 4294967295, 65535
        %v2497 = vsel %vm2114, %v2496, 0
        %v2499 = vand.u32 %v2487, %v2497
        %2501 = vmatprep.subr.bf16.mxu0 0
        %2502 = vmatpush1.bf16.msra.mxu0 0
        %2503 = vmatprep.subr.bf16.mxu0 0
        %2504 = vmatpush1.bf16.msra.mxu0 0
        %2505 = vmatprep.subr.bf16.mxu0 0
        %2506 = vmatpush1.bf16.msra.mxu0 0
        %2507 = vmatprep.subr.bf16.mxu0 0
        %2508 = vmatpush1.bf16.msra.mxu0 0
        %2509 = vmatprep.subr.bf16.mxu0 0
        %2510 = vmatpush1.bf16.msra.mxu0 %v2499
        %2511 = vmatprep.subr.bf16.mxu0 0
        %2512 = vmatpush1.bf16.msra.mxu0 %v2486
        %2513 = vmatprep.subr.bf16.mxu0 0
        %2514 = vmatpush1.bf16.msra.mxu0 %v2485
        %2515 = vmatprep.subr.bf16.mxu0 0
        %2516 = vmatpush1.bf16.msra.mxu0 %v2484
        %2517 = vmatprep.subr.bf16.mxu0 0
        %2518 = vmatpush2.bf16.msra.mxu0 0
        %2519 = vmatprep.subr.bf16.mxu0 0
        %2520 = vmatpush2.bf16.msra.mxu0 0
        %2521 = vmatprep.subr.bf16.mxu0 0
        %2522 = vmatpush2.bf16.msra.mxu0 0
        %2523 = vmatprep.subr.bf16.mxu0 0
        %2524 = vmatpush2.bf16.msra.mxu0 0
        %2525 = vmatprep.subr.bf16.mxu0 0
        %2526 = vmatpush2.bf16.msra.mxu0 0
        %2527 = vmatprep.subr.bf16.mxu0 0
        %2528 = vmatpush2.bf16.msra.mxu0 0
        %2529 = vmatprep.subr.bf16.mxu0 0
        %2530 = vmatpush2.bf16.msra.mxu0 0
        %2531 = vmatprep.subr.bf16.mxu0 0
        %2532 = vmatpush2.bf16.msra.mxu0 0
        %2533 = vmatprep.mubr.bf16.mxu0 0
        %2534 = vmatmul.mubr.bf16.gmra.mxu0 %v2493
        %v2535 = vpop.f32.mrf.mxu0
        %v2536 = vadd.f32 0.0, %v2535
        %v2537 = vpop.f32.mrf.mxu0
        %v2538 = vpop.f32.mrf.mxu0
        %v2539 = vadd.f32 0.0, %v2538
        %v2540 = vpop.f32.mrf.mxu0
        %2541 = vdwg.mxu0
        %v2542 = vpack.c.bf16 %v2539, %v2536
        %s2543 = sadd.s32 %s2079, 1
        %s2544 = smul.u32 %s2543, 16
        %v2546 = vunpack.c.l.b16 %v2542
        %v2547 = vunpack.c.h.b16 %v2542
        %v2548 = vpack.c.b16 %v2546, %v2546
        %v2549 = vpack.c.b16 %v2547, %v2547
        %2550 = vrot.lane.b32.xlu0 %v2548, 1
        %v2551 = vpop.permute.xlu0 %2550
        %2552 = vrot.lane.b32.xlu0 %v2549, 1
        %v2553 = vpop.permute.xlu0 %2552
        %s2556 = sshra.s32 %s2544, 3
        %s2557 = sand.u32 %s2544, 7
        %s2558 = smul.addr %s2556, 4
        %s2559 = scalar_lea.vmem [#allocation4], %s2558
        %vm2560 = vcmask 232456
        %2561 = vst.msk [vmem:[%s2559] sm:$0xf] %vm2560, %v2551
        %2562 = vst.msk [vmem:[%s2559 + $0x4] sm:$0xf] %vm2560, %v2553
      $region91: #{cnn_forward.2} parent=71 // loop_footer
        %s2083 = sadd.s32 1, %s2079
      $region92: #{cnn_forward.2} parent=71 // loop_footer_branch
        %2078 = sbr.rel target = $region88
      $region93: #{cnn_forward.2} parent=71 // loop_exit
        _
      %v2563 = vld [vmem:[%s4] sm:$0xf]
      %v2564 = vld [vmem:[%s4 + $0x4] sm:$0xf]
      %v2565 = vld [vmem:[%s4 + $0x8] sm:$0xf]
      %v2566 = vld [vmem:[%s4 + $0xc] sm:$0xf]
      %s2567 = scalar_lea.vmem %s4, 16
      %v2568 = vld [vmem:[%s2567] sm:$0xf]
      %v2569 = vld [vmem:[%s2567 + $0x4] sm:$0xf]
      %v2570 = vld [vmem:[%s2567 + $0x8] sm:$0xf]
      %v2571 = vld [vmem:[%s2567 + $0xc] sm:$0xf]
      %s2572 = scalar_lea.vmem %s4, 32
      %v2573 = vld [vmem:[%s2572] sm:$0xf]
      %v2574 = vld [vmem:[%s2572 + $0x4] sm:$0xf]
      %v2575 = vld [vmem:[%s2572 + $0x8] sm:$0xf]
      %v2576 = vld [vmem:[%s2572 + $0xc] sm:$0xf]
      %v2577 = vld [vmem:[%s8] sm:$0xff]
      %v2578 = vld [vmem:[%s8 + $0x8] sm:$0xff]
      %v2579 = vld [vmem:[%s8 + $0x10] sm:$0xff]
      %v2580 = vld [vmem:[%s8 + $0x18] sm:$0xff]
      %2582 = vset.pattern.permute.xlu0 0
      %2583 = vperm.xlu0 %2582, %v2577
      %v2584 = vpop.permute.xlu0 %2583
      %2587 = vset.pattern.permute.xlu0 0
      %2588 = vperm.xlu0 %2587, %v2578
      %v2589 = vpop.permute.xlu0 %2588
      %2592 = vset.pattern.permute.xlu0 0
      %2593 = vperm.xlu0 %2592, %v2579
      %v2594 = vpop.permute.xlu0 %2593
      %2597 = vset.pattern.permute.xlu0 0
      %2598 = vperm.xlu0 %2597, %v2580
      %v2599 = vpop.permute.xlu0 %2598
      %s2601 = scalar_lea.vmem %s8, 32
      %v2602 = vld [vmem:[%s2601] sm:$0xff]
      %v2603 = vld [vmem:[%s2601 + $0x8] sm:$0xff]
      %v2604 = vld [vmem:[%s2601 + $0x10] sm:$0xff]
      %v2605 = vld [vmem:[%s2601 + $0x18] sm:$0xff]
      %2607 = vset.pattern.permute.xlu0 0
      %2608 = vperm.xlu0 %2607, %v2602
      %v2609 = vpop.permute.xlu0 %2608
      %2612 = vset.pattern.permute.xlu0 0
      %2613 = vperm.xlu0 %2612, %v2603
      %v2614 = vpop.permute.xlu0 %2613
      %2617 = vset.pattern.permute.xlu0 0
      %2618 = vperm.xlu0 %2617, %v2604
      %v2619 = vpop.permute.xlu0 %2618
      %2622 = vset.pattern.permute.xlu0 0
      %2623 = vperm.xlu0 %2622, %v2605
      %v2624 = vpop.permute.xlu0 %2623
      %s2626 = scalar_lea.vmem %s8, 64
      %v2627 = vld [vmem:[%s2626] sm:$0xff]
      %v2628 = vld [vmem:[%s2626 + $0x8] sm:$0xff]
      %v2629 = vld [vmem:[%s2626 + $0x10] sm:$0xff]
      %v2630 = vld [vmem:[%s2626 + $0x18] sm:$0xff]
      %2632 = vset.pattern.permute.xlu0 0
      %2633 = vperm.xlu0 %2632, %v2627
      %v2634 = vpop.permute.xlu0 %2633
      %2637 = vset.pattern.permute.xlu0 0
      %2638 = vperm.xlu0 %2637, %v2628
      %v2639 = vpop.permute.xlu0 %2638
      %2642 = vset.pattern.permute.xlu0 0
      %2643 = vperm.xlu0 %2642, %v2629
      %v2644 = vpop.permute.xlu0 %2643
      %2647 = vset.pattern.permute.xlu0 0
      %2648 = vperm.xlu0 %2647, %v2630
      %v2649 = vpop.permute.xlu0 %2648
      loop: start=0, step=1, limit=28
      $region94: #{cnn_forward.2} parent=71 // loop_pre_header
        _
      $region95: #{cnn_forward.2} parent=71 // loop_header
        %s2652 = sphi 0, %s2656
        %p2653 = scmp.ge.s32.totalorder %s2652, 28
      $region96: #{cnn_forward.2} parent=71 // loop_header_branch
        %2655 = sbr.rel (%p2653) target = $region100
      $region97: #{cnn_forward.2} parent=71 // loop_body
        %s2657 = smul.u32 %s2652, 32
        %s2658 = sshra.s32 %s2657, 3
        %s2659 = sand.u32 %s2657, 7
        %s2660 = smul.addr %s2658, 4
        %s2661 = scalar_lea.vmem [#allocation4], %s2660
        %v2662 = vld [vmem:[%s2661] sm:$0xf]
        %v2663 = vld [vmem:[%s2661 + $0x4] sm:$0xf]
        %v2664 = vld [vmem:[%s2661 + $0x8] sm:$0xf]
        %v2665 = vld [vmem:[%s2661 + $0xc] sm:$0xf]
        %v2666 = vld [vmem:[%s2661 + $0x10] sm:$0xf]
        %v2667 = vld [vmem:[%s2661 + $0x14] sm:$0xf]
        %v2672 = vunpack.c.l.b16 %v2568
        %v2673 = vunpack.c.l.b16 %v2569
        %v2674 = vunpack.c.l.b16 %v2570
        %v2675 = vunpack.c.l.b16 %v2571
        %v2676 = vpack.c.b16 %v2673, %v2672
        %v2677 = vpack.c.b16 %v2675, %v2674
        %v2684 = vunpack.c.l.b16 %v2662
        %v2685 = vunpack.c.l.b16 %v2663
        %v2686 = vunpack.c.l.b16 %v2664
        %v2687 = vunpack.c.l.b16 %v2665
        %v2688 = vunpack.c.l.b16 %v2666
        %v2689 = vunpack.c.l.b16 %v2667
        %v2690 = vpack.c.b16 %v2685, %v2684
        %v2691 = vpack.c.b16 %v2687, %v2686
        %v2692 = vpack.c.b16 %v2689, %v2688
        %2693 = vrot.lane.b32.xlu0 %v2690, 127
        %v2694 = vpop.permute.xlu0 %2693
        %2695 = vrot.lane.b32.xlu0 %v2691, 127
        %v2696 = vpop.permute.xlu0 %2695
        %2697 = vrot.lane.b32.xlu0 %v2692, 127
        %v2698 = vpop.permute.xlu0 %2697
        %vm2702 = vcmask 392192
        %v2704 = vsel %vm2702, %v2676, 0
        %v2707 = vsel %vm2702, %v2677, 0
        %2709 = vmatprep.subr.bf16.mxu0 0
        %2710 = vmatpush1.bf16.msra.mxu0 0
        %2711 = vmatprep.subr.bf16.mxu0 0
        %2712 = vmatpush1.bf16.msra.mxu0 0
        %2713 = vmatprep.subr.bf16.mxu0 0
        %2714 = vmatpush1.bf16.msra.mxu0 0
        %2715 = vmatprep.subr.bf16.mxu0 0
        %2716 = vmatpush1.bf16.msra.mxu0 0
        %2717 = vmatprep.subr.bf16.mxu0 0
        %2718 = vmatpush1.bf16.msra.mxu0 0
        %2719 = vmatprep.subr.bf16.mxu0 0
        %2720 = vmatpush1.bf16.msra.mxu0 %v2698
        %2721 = vmatprep.subr.bf16.mxu0 0
        %2722 = vmatpush1.bf16.msra.mxu0 %v2696
        %2723 = vmatprep.subr.bf16.mxu0 0
        %2724 = vmatpush1.bf16.msra.mxu0 %v2694
        %2725 = vmatprep.subr.bf16.mxu0 0
        %2726 = vmatpush2.bf16.msra.mxu0 0
        %2727 = vmatprep.subr.bf16.mxu0 0
        %2728 = vmatpush2.bf16.msra.mxu0 0
        %2729 = vmatprep.subr.bf16.mxu0 0
        %2730 = vmatpush2.bf16.msra.mxu0 0
        %2731 = vmatprep.subr.bf16.mxu0 0
        %2732 = vmatpush2.bf16.msra.mxu0 0
        %2733 = vmatprep.subr.bf16.mxu0 0
        %2734 = vmatpush2.bf16.msra.mxu0 0
        %2735 = vmatprep.subr.bf16.mxu0 0
        %2736 = vmatpush2.bf16.msra.mxu0 0
        %2737 = vmatprep.subr.bf16.mxu0 0
        %2738 = vmatpush2.bf16.msra.mxu0 0
        %2739 = vmatprep.subr.bf16.mxu0 0
        %2740 = vmatpush2.bf16.msra.mxu0 0
        %2741 = vmatprep.mubr.bf16.mxu0 0
        %2742 = vmatmul.mubr.bf16.gmra.mxu0 %v2704
        %v2743 = vpop.f32.mrf.mxu0
        %v2744 = vadd.f32 0.0, %v2743
        %v2745 = vpop.f32.mrf.mxu0
        %v2746 = vpop.f32.mrf.mxu0
        %v2747 = vadd.f32 0.0, %v2746
        %v2748 = vpop.f32.mrf.mxu0
        %2749 = vmatprep.mubr.bf16.mxu0 0
        %2750 = vmatmul.mubr.bf16.gmra.mxu0 %v2707
        %v2751 = vpop.f32.mrf.mxu0
        %v2752 = vadd.f32 0.0, %v2751
        %v2753 = vpop.f32.mrf.mxu0
        %v2754 = vpop.f32.mrf.mxu0
        %v2755 = vadd.f32 0.0, %v2754
        %v2756 = vpop.f32.mrf.mxu0
        %2757 = vdwg.mxu0
        %v2762 = vunpack.c.l.b16 %v2563
        %v2763 = vunpack.c.l.b16 %v2564
        %v2764 = vunpack.c.l.b16 %v2565
        %v2765 = vunpack.c.l.b16 %v2566
        %v2766 = vpack.c.b16 %v2763, %v2762
        %v2767 = vpack.c.b16 %v2765, %v2764
        %v2772 = vsel %vm2702, %v2766, 0
        %v2775 = vsel %vm2702, %v2767, 0
        %2777 = vmatprep.subr.bf16.mxu0 0
        %2778 = vmatpush1.bf16.msra.mxu0 0
        %2779 = vmatprep.subr.bf16.mxu0 0
        %2780 = vmatpush1.bf16.msra.mxu0 0
        %2781 = vmatprep.subr.bf16.mxu0 0
        %2782 = vmatpush1.bf16.msra.mxu0 0
        %2783 = vmatprep.subr.bf16.mxu0 0
        %2784 = vmatpush1.bf16.msra.mxu0 0
        %2785 = vmatprep.subr.bf16.mxu0 0
        %2786 = vmatpush1.bf16.msra.mxu0 0
        %2787 = vmatprep.subr.bf16.mxu0 0
        %2788 = vmatpush1.bf16.msra.mxu0 %v2692
        %2789 = vmatprep.subr.bf16.mxu0 0
        %2790 = vmatpush1.bf16.msra.mxu0 %v2691
        %2791 = vmatprep.subr.bf16.mxu0 0
        %2792 = vmatpush1.bf16.msra.mxu0 %v2690
        %2793 = vmatprep.subr.bf16.mxu0 0
        %2794 = vmatpush2.bf16.msra.mxu0 0
        %2795 = vmatprep.subr.bf16.mxu0 0
        %2796 = vmatpush2.bf16.msra.mxu0 0
        %2797 = vmatprep.subr.bf16.mxu0 0
        %2798 = vmatpush2.bf16.msra.mxu0 0
        %2799 = vmatprep.subr.bf16.mxu0 0
        %2800 = vmatpush2.bf16.msra.mxu0 0
        %2801 = vmatprep.subr.bf16.mxu0 0
        %2802 = vmatpush2.bf16.msra.mxu0 0
        %2803 = vmatprep.subr.bf16.mxu0 0
        %2804 = vmatpush2.bf16.msra.mxu0 0
        %2805 = vmatprep.subr.bf16.mxu0 0
        %2806 = vmatpush2.bf16.msra.mxu0 0
        %2807 = vmatprep.subr.bf16.mxu0 0
        %2808 = vmatpush2.bf16.msra.mxu0 0
        %2809 = vmatprep.mubr.bf16.mxu0 0
        %2810 = vmatmul.mubr.bf16.gmra.mxu0 %v2772
        %v2811 = vpop.f32.mrf.mxu0
        %v2812 = vadd.f32 %v2744, %v2811
        %v2813 = vpop.f32.mrf.mxu0
        %v2814 = vpop.f32.mrf.mxu0
        %v2815 = vadd.f32 %v2747, %v2814
        %v2816 = vpop.f32.mrf.mxu0
        %2817 = vmatprep.mubr.bf16.mxu0 0
        %2818 = vmatmul.mubr.bf16.gmra.mxu0 %v2775
        %v2819 = vpop.f32.mrf.mxu0
        %v2820 = vadd.f32 %v2752, %v2819
        %v2821 = vpop.f32.mrf.mxu0
        %v2822 = vpop.f32.mrf.mxu0
        %v2823 = vadd.f32 %v2755, %v2822
        %v2824 = vpop.f32.mrf.mxu0
        %2825 = vdwg.mxu0
        %v2830 = vunpack.c.l.b16 %v2573
        %v2831 = vunpack.c.l.b16 %v2574
        %v2832 = vunpack.c.l.b16 %v2575
        %v2833 = vunpack.c.l.b16 %v2576
        %v2834 = vpack.c.b16 %v2831, %v2830
        %v2835 = vpack.c.b16 %v2833, %v2832
        %2836 = vrot.lane.b32.xlu0 %v2690, 126
        %v2837 = vpop.permute.xlu0 %2836
        %2838 = vrot.lane.b32.xlu0 %v2691, 126
        %v2839 = vpop.permute.xlu0 %2838
        %2840 = vrot.lane.b32.xlu0 %v2692, 126
        %v2841 = vpop.permute.xlu0 %2840
        %v2846 = vsel %vm2702, %v2834, 0
        %v2849 = vsel %vm2702, %v2835, 0
        %2851 = vmatprep.subr.bf16.mxu0 0
        %2852 = vmatpush1.bf16.msra.mxu0 0
        %2853 = vmatprep.subr.bf16.mxu0 0
        %2854 = vmatpush1.bf16.msra.mxu0 0
        %2855 = vmatprep.subr.bf16.mxu0 0
        %2856 = vmatpush1.bf16.msra.mxu0 0
        %2857 = vmatprep.subr.bf16.mxu0 0
        %2858 = vmatpush1.bf16.msra.mxu0 0
        %2859 = vmatprep.subr.bf16.mxu0 0
        %2860 = vmatpush1.bf16.msra.mxu0 0
        %2861 = vmatprep.subr.bf16.mxu0 0
        %2862 = vmatpush1.bf16.msra.mxu0 %v2841
        %2863 = vmatprep.subr.bf16.mxu0 0
        %2864 = vmatpush1.bf16.msra.mxu0 %v2839
        %2865 = vmatprep.subr.bf16.mxu0 0
        %2866 = vmatpush1.bf16.msra.mxu0 %v2837
        %2867 = vmatprep.subr.bf16.mxu0 0
        %2868 = vmatpush2.bf16.msra.mxu0 0
        %2869 = vmatprep.subr.bf16.mxu0 0
        %2870 = vmatpush2.bf16.msra.mxu0 0
        %2871 = vmatprep.subr.bf16.mxu0 0
        %2872 = vmatpush2.bf16.msra.mxu0 0
        %2873 = vmatprep.subr.bf16.mxu0 0
        %2874 = vmatpush2.bf16.msra.mxu0 0
        %2875 = vmatprep.subr.bf16.mxu0 0
        %2876 = vmatpush2.bf16.msra.mxu0 0
        %2877 = vmatprep.subr.bf16.mxu0 0
        %2878 = vmatpush2.bf16.msra.mxu0 0
        %2879 = vmatprep.subr.bf16.mxu0 0
        %2880 = vmatpush2.bf16.msra.mxu0 0
        %2881 = vmatprep.subr.bf16.mxu0 0
        %2882 = vmatpush2.bf16.msra.mxu0 0
        %2883 = vmatprep.mubr.bf16.mxu0 0
        %2884 = vmatmul.mubr.bf16.gmra.mxu0 %v2846
        %v2885 = vpop.f32.mrf.mxu0
        %v2886 = vadd.f32 0.0, %v2885
        %v2887 = vpop.f32.mrf.mxu0
        %v2888 = vpop.f32.mrf.mxu0
        %v2889 = vadd.f32 0.0, %v2888
        %v2890 = vpop.f32.mrf.mxu0
        %2891 = vmatprep.mubr.bf16.mxu0 0
        %2892 = vmatmul.mubr.bf16.gmra.mxu0 %v2849
        %v2893 = vpop.f32.mrf.mxu0
        %v2894 = vadd.f32 0.0, %v2893
        %v2895 = vpop.f32.mrf.mxu0
        %v2896 = vpop.f32.mrf.mxu0
        %v2897 = vadd.f32 0.0, %v2896
        %v2898 = vpop.f32.mrf.mxu0
        %2899 = vdwg.mxu0
        %v2900 = vadd.f32 %v2812, %v2886
        %v2901 = vadd.f32 %v2815, %v2889
        %v2902 = vadd.f32 %v2820, %v2894
        %v2903 = vadd.f32 %v2823, %v2897
        %v2904 = vadd.f32 %v2900, %v2584
        %v2905 = vadd.f32 %v2901, %v2589
        %v2906 = vadd.f32 %v2902, %v2594
        %v2907 = vadd.f32 %v2903, %v2599
        %v2908 = vmax.f32 %v2904, 0.0
        %v2909 = vmax.f32 %v2905, 0.0
        %v2910 = vmax.f32 %v2906, 0.0
        %v2911 = vmax.f32 %v2907, 0.0
        %v2912 = vmul.f32 %v2908, %v2609
        %v2913 = vmul.f32 %v2909, %v2614
        %v2914 = vmul.f32 %v2910, %v2619
        %v2915 = vmul.f32 %v2911, %v2624
        %v2916 = vadd.f32 %v2912, %v2634
        %v2917 = vadd.f32 %v2913, %v2639
        %v2918 = vadd.f32 %v2914, %v2644
        %v2919 = vadd.f32 %v2915, %v2649
        %s2920 = smul.u32 %s2652, 2
        %s2921 = sadd.s32 %s2920, 1
        %s2922 = smul.u32 %s2921, 16
        %s2923 = sshra.s32 %s2922, 3
        %s2924 = sand.u32 %s2922, 7
        %s2925 = smul.addr %s2923, 4
        %s2926 = scalar_lea.vmem [#allocation4], %s2925
        %v2927 = vld [vmem:[%s2926] sm:$0xf]
        %v2928 = vld [vmem:[%s2926 + $0x4] sm:$0xf]
        %v2929 = vld [vmem:[%s2926 + $0x8] sm:$0xf]
        %v2930 = vld [vmem:[%s2926 + $0xc] sm:$0xf]
        %v2931 = vld [vmem:[%s2926 + $0x10] sm:$0xf]
        %v2932 = vld [vmem:[%s2926 + $0x14] sm:$0xf]
        %v2939 = vunpack.c.l.b16 %v2927
        %v2940 = vunpack.c.l.b16 %v2928
        %v2941 = vunpack.c.l.b16 %v2929
        %v2942 = vunpack.c.l.b16 %v2930
        %v2943 = vunpack.c.l.b16 %v2931
        %v2944 = vunpack.c.l.b16 %v2932
        %v2945 = vpack.c.b16 %v2940, %v2939
        %v2946 = vpack.c.b16 %v2942, %v2941
        %v2947 = vpack.c.b16 %v2944, %v2943
        %2948 = vrot.lane.b32.xlu0 %v2945, 127
        %v2949 = vpop.permute.xlu0 %2948
        %2950 = vrot.lane.b32.xlu0 %v2946, 127
        %v2951 = vpop.permute.xlu0 %2950
        %2952 = vrot.lane.b32.xlu0 %v2947, 127
        %v2953 = vpop.permute.xlu0 %2952
        %2957 = vmatprep.subr.bf16.mxu0 0
        %2958 = vmatpush1.bf16.msra.mxu0 0
        %2959 = vmatprep.subr.bf16.mxu0 0
        %2960 = vmatpush1.bf16.msra.mxu0 0
        %2961 = vmatprep.subr.bf16.mxu0 0
        %2962 = vmatpush1.bf16.msra.mxu0 0
        %2963 = vmatprep.subr.bf16.mxu0 0
        %2964 = vmatpush1.bf16.msra.mxu0 0
        %2965 = vmatprep.subr.bf16.mxu0 0
        %2966 = vmatpush1.bf16.msra.mxu0 0
        %2967 = vmatprep.subr.bf16.mxu0 0
        %2968 = vmatpush1.bf16.msra.mxu0 %v2953
        %2969 = vmatprep.subr.bf16.mxu0 0
        %2970 = vmatpush1.bf16.msra.mxu0 %v2951
        %2971 = vmatprep.subr.bf16.mxu0 0
        %2972 = vmatpush1.bf16.msra.mxu0 %v2949
        %2973 = vmatprep.subr.bf16.mxu0 0
        %2974 = vmatpush2.bf16.msra.mxu0 0
        %2975 = vmatprep.subr.bf16.mxu0 0
        %2976 = vmatpush2.bf16.msra.mxu0 0
        %2977 = vmatprep.subr.bf16.mxu0 0
        %2978 = vmatpush2.bf16.msra.mxu0 0
        %2979 = vmatprep.subr.bf16.mxu0 0
        %2980 = vmatpush2.bf16.msra.mxu0 0
        %2981 = vmatprep.subr.bf16.mxu0 0
        %2982 = vmatpush2.bf16.msra.mxu0 0
        %2983 = vmatprep.subr.bf16.mxu0 0
        %2984 = vmatpush2.bf16.msra.mxu0 0
        %2985 = vmatprep.subr.bf16.mxu0 0
        %2986 = vmatpush2.bf16.msra.mxu0 0
        %2987 = vmatprep.subr.bf16.mxu0 0
        %2988 = vmatpush2.bf16.msra.mxu0 0
        %2989 = vmatprep.mubr.bf16.mxu0 0
        %2990 = vmatmul.mubr.bf16.gmra.mxu0 %v2704
        %v2991 = vpop.f32.mrf.mxu0
        %v2992 = vadd.f32 0.0, %v2991
        %v2993 = vpop.f32.mrf.mxu0
        %v2994 = vpop.f32.mrf.mxu0
        %v2995 = vadd.f32 0.0, %v2994
        %v2996 = vpop.f32.mrf.mxu0
        %2997 = vmatprep.mubr.bf16.mxu0 0
        %2998 = vmatmul.mubr.bf16.gmra.mxu0 %v2707
        %v2999 = vpop.f32.mrf.mxu0
        %v3000 = vadd.f32 0.0, %v2999
        %v3001 = vpop.f32.mrf.mxu0
        %v3002 = vpop.f32.mrf.mxu0
        %v3003 = vadd.f32 0.0, %v3002
        %v3004 = vpop.f32.mrf.mxu0
        %3005 = vdwg.mxu0
        %3009 = vmatprep.subr.bf16.mxu0 0
        %3010 = vmatpush1.bf16.msra.mxu0 0
        %3011 = vmatprep.subr.bf16.mxu0 0
        %3012 = vmatpush1.bf16.msra.mxu0 0
        %3013 = vmatprep.subr.bf16.mxu0 0
        %3014 = vmatpush1.bf16.msra.mxu0 0
        %3015 = vmatprep.subr.bf16.mxu0 0
        %3016 = vmatpush1.bf16.msra.mxu0 0
        %3017 = vmatprep.subr.bf16.mxu0 0
        %3018 = vmatpush1.bf16.msra.mxu0 0
        %3019 = vmatprep.subr.bf16.mxu0 0
        %3020 = vmatpush1.bf16.msra.mxu0 %v2947
        %3021 = vmatprep.subr.bf16.mxu0 0
        %3022 = vmatpush1.bf16.msra.mxu0 %v2946
        %3023 = vmatprep.subr.bf16.mxu0 0
        %3024 = vmatpush1.bf16.msra.mxu0 %v2945
        %3025 = vmatprep.subr.bf16.mxu0 0
        %3026 = vmatpush2.bf16.msra.mxu0 0
        %3027 = vmatprep.subr.bf16.mxu0 0
        %3028 = vmatpush2.bf16.msra.mxu0 0
        %3029 = vmatprep.subr.bf16.mxu0 0
        %3030 = vmatpush2.bf16.msra.mxu0 0
        %3031 = vmatprep.subr.bf16.mxu0 0
        %3032 = vmatpush2.bf16.msra.mxu0 0
        %3033 = vmatprep.subr.bf16.mxu0 0
        %3034 = vmatpush2.bf16.msra.mxu0 0
        %3035 = vmatprep.subr.bf16.mxu0 0
        %3036 = vmatpush2.bf16.msra.mxu0 0
        %3037 = vmatprep.subr.bf16.mxu0 0
        %3038 = vmatpush2.bf16.msra.mxu0 0
        %3039 = vmatprep.subr.bf16.mxu0 0
        %3040 = vmatpush2.bf16.msra.mxu0 0
        %3041 = vmatprep.mubr.bf16.mxu0 0
        %3042 = vmatmul.mubr.bf16.gmra.mxu0 %v2772
        %v3043 = vpop.f32.mrf.mxu0
        %v3044 = vadd.f32 %v2992, %v3043
        %v3045 = vpop.f32.mrf.mxu0
        %v3046 = vpop.f32.mrf.mxu0
        %v3047 = vadd.f32 %v2995, %v3046
        %v3048 = vpop.f32.mrf.mxu0
        %3049 = vmatprep.mubr.bf16.mxu0 0
        %3050 = vmatmul.mubr.bf16.gmra.mxu0 %v2775
        %v3051 = vpop.f32.mrf.mxu0
        %v3052 = vadd.f32 %v3000, %v3051
        %v3053 = vpop.f32.mrf.mxu0
        %v3054 = vpop.f32.mrf.mxu0
        %v3055 = vadd.f32 %v3003, %v3054
        %v3056 = vpop.f32.mrf.mxu0
        %3057 = vdwg.mxu0
        %3058 = vrot.lane.b32.xlu0 %v2945, 126
        %v3059 = vpop.permute.xlu0 %3058
        %3060 = vrot.lane.b32.xlu0 %v2946, 126
        %v3061 = vpop.permute.xlu0 %3060
        %3062 = vrot.lane.b32.xlu0 %v2947, 126
        %v3063 = vpop.permute.xlu0 %3062
        %3067 = vmatprep.subr.bf16.mxu0 0
        %3068 = vmatpush1.bf16.msra.mxu0 0
        %3069 = vmatprep.subr.bf16.mxu0 0
        %3070 = vmatpush1.bf16.msra.mxu0 0
        %3071 = vmatprep.subr.bf16.mxu0 0
        %3072 = vmatpush1.bf16.msra.mxu0 0
        %3073 = vmatprep.subr.bf16.mxu0 0
        %3074 = vmatpush1.bf16.msra.mxu0 0
        %3075 = vmatprep.subr.bf16.mxu0 0
        %3076 = vmatpush1.bf16.msra.mxu0 0
        %3077 = vmatprep.subr.bf16.mxu0 0
        %3078 = vmatpush1.bf16.msra.mxu0 %v3063
        %3079 = vmatprep.subr.bf16.mxu0 0
        %3080 = vmatpush1.bf16.msra.mxu0 %v3061
        %3081 = vmatprep.subr.bf16.mxu0 0
        %3082 = vmatpush1.bf16.msra.mxu0 %v3059
        %3083 = vmatprep.subr.bf16.mxu0 0
        %3084 = vmatpush2.bf16.msra.mxu0 0
        %3085 = vmatprep.subr.bf16.mxu0 0
        %3086 = vmatpush2.bf16.msra.mxu0 0
        %3087 = vmatprep.subr.bf16.mxu0 0
        %3088 = vmatpush2.bf16.msra.mxu0 0
        %3089 = vmatprep.subr.bf16.mxu0 0
        %3090 = vmatpush2.bf16.msra.mxu0 0
        %3091 = vmatprep.subr.bf16.mxu0 0
        %3092 = vmatpush2.bf16.msra.mxu0 0
        %3093 = vmatprep.subr.bf16.mxu0 0
        %3094 = vmatpush2.bf16.msra.mxu0 0
        %3095 = vmatprep.subr.bf16.mxu0 0
        %3096 = vmatpush2.bf16.msra.mxu0 0
        %3097 = vmatprep.subr.bf16.mxu0 0
        %3098 = vmatpush2.bf16.msra.mxu0 0
        %3099 = vmatprep.mubr.bf16.mxu0 0
        %3100 = vmatmul.mubr.bf16.gmra.mxu0 %v2846
        %v3101 = vpop.f32.mrf.mxu0
        %v3102 = vadd.f32 0.0, %v3101
        %v3103 = vpop.f32.mrf.mxu0
        %v3104 = vpop.f32.mrf.mxu0
        %v3105 = vadd.f32 0.0, %v3104
        %v3106 = vpop.f32.mrf.mxu0
        %3107 = vmatprep.mubr.bf16.mxu0 0
        %3108 = vmatmul.mubr.bf16.gmra.mxu0 %v2849
        %v3109 = vpop.f32.mrf.mxu0
        %v3110 = vadd.f32 0.0, %v3109
        %v3111 = vpop.f32.mrf.mxu0
        %v3112 = vpop.f32.mrf.mxu0
        %v3113 = vadd.f32 0.0, %v3112
        %v3114 = vpop.f32.mrf.mxu0
        %3115 = vdwg.mxu0
        %v3116 = vadd.f32 %v3044, %v3102
        %v3117 = vadd.f32 %v3047, %v3105
        %v3118 = vadd.f32 %v3052, %v3110
        %v3119 = vadd.f32 %v3055, %v3113
        %v3120 = vadd.f32 %v3116, %v2584
        %v3121 = vadd.f32 %v3117, %v2589
        %v3122 = vadd.f32 %v3118, %v2594
        %v3123 = vadd.f32 %v3119, %v2599
        %v3124 = vmax.f32 %v3120, 0.0
        %v3125 = vmax.f32 %v3121, 0.0
        %v3126 = vmax.f32 %v3122, 0.0
        %v3127 = vmax.f32 %v3123, 0.0
        %v3128 = vmul.f32 %v3124, %v2609
        %v3129 = vmul.f32 %v3125, %v2614
        %v3130 = vmul.f32 %v3126, %v2619
        %v3131 = vmul.f32 %v3127, %v2624
        %v3132 = vadd.f32 %v3128, %v2634
        %v3133 = vadd.f32 %v3129, %v2639
        %v3134 = vadd.f32 %v3130, %v2644
        %v3135 = vadd.f32 %v3131, %v2649
        %v3136 = vmax.f32 %v2916, %v3132
        %v3137 = vmax.f32 %v2917, %v3133
        %v3138 = vmax.f32 %v2918, %v3134
        %v3139 = vmax.f32 %v2919, %v3135
        %3144 = vrot.lane.b32.xlu0 %v3136, 127
        %v3145 = vpop.permute.xlu0 %3144
        %3146 = vrot.lane.b32.xlu0 %v3137, 127
        %v3147 = vpop.permute.xlu0 %3146
        %3148 = vrot.lane.b32.xlu0 %v3138, 127
        %v3149 = vpop.permute.xlu0 %3148
        %3150 = vrot.lane.b32.xlu0 %v3139, 127
        %v3151 = vpop.permute.xlu0 %3150
        %v3156 = vmax.f32 %v3136, %v3145
        %v3157 = vmax.f32 %v3137, %v3147
        %v3158 = vmax.f32 %v3138, %v3149
        %v3159 = vmax.f32 %v3139, %v3151
        %v3160 = vpack.c.bf16 %v3157, %v3156
        %v3161 = vpack.c.bf16 %v3159, %v3158
        %v3162 = vld [vmem:[%s12] sm:$0xf]
        %v3163 = vld [vmem:[%s12 + $0x4] sm:$0xf]
        %v3164 = vld [vmem:[%s12 + $0x8] sm:$0xf]
        %v3165 = vld [vmem:[%s12 + $0xc] sm:$0x3]
        %v3170 = vunpack.c.l.b16 %v3162
        %v3171 = vunpack.c.l.b16 %v3163
        %v3172 = vunpack.c.l.b16 %v3164
        %v3173 = vunpack.c.l.b16 %v3165
        %v3174 = vpack.c.b16 %v3171, %v3170
        %v3175 = vpack.c.b16 %v3173, %v3172
        %vm3177 = vcmask 220160
        %v3179 = vsel %vm3177, %v3160, 0
        %v3182 = vsel %vm3177, %v3161, 0
        %vm3184 = vcmask 1044480
        %vm3185 = vcmask 1045504
        %v3186 = vsel %vm3184, 4294967295, 65535
        %v3187 = vsel %vm3185, %v3186, 0
        %v3189 = vand.u32 %v3175, %v3187
        %3191 = vmatprep.subr.bf16.mxu0 0
        %3192 = vmatpush1.bf16.msra.mxu0 0
        %3193 = vmatprep.subr.bf16.mxu0 0
        %3194 = vmatpush1.bf16.msra.mxu0 0
        %3195 = vmatprep.subr.bf16.mxu0 0
        %3196 = vmatpush1.bf16.msra.mxu0 0
        %3197 = vmatprep.subr.bf16.mxu0 0
        %3198 = vmatpush1.bf16.msra.mxu0 0
        %3199 = vmatprep.subr.bf16.mxu0 0
        %3200 = vmatpush1.bf16.msra.mxu0 0
        %3201 = vmatprep.subr.bf16.mxu0 0
        %3202 = vmatpush1.bf16.msra.mxu0 0
        %3203 = vmatprep.subr.bf16.mxu0 0
        %3204 = vmatpush1.bf16.msra.mxu0 %v3189
        %3205 = vmatprep.subr.bf16.mxu0 0
        %3206 = vmatpush1.bf16.msra.mxu0 %v3174
        %3207 = vmatprep.subr.bf16.mxu0 0
        %3208 = vmatpush2.bf16.msra.mxu0 0
        %3209 = vmatprep.subr.bf16.mxu0 0
        %3210 = vmatpush2.bf16.msra.mxu0 0
        %3211 = vmatprep.subr.bf16.mxu0 0
        %3212 = vmatpush2.bf16.msra.mxu0 0
        %3213 = vmatprep.subr.bf16.mxu0 0
        %3214 = vmatpush2.bf16.msra.mxu0 0
        %3215 = vmatprep.subr.bf16.mxu0 0
        %3216 = vmatpush2.bf16.msra.mxu0 0
        %3217 = vmatprep.subr.bf16.mxu0 0
        %3218 = vmatpush2.bf16.msra.mxu0 0
        %3219 = vmatprep.subr.bf16.mxu0 0
        %3220 = vmatpush2.bf16.msra.mxu0 0
        %3221 = vmatprep.subr.bf16.mxu0 0
        %3222 = vmatpush2.bf16.msra.mxu0 0
        %3223 = vmatprep.mubr.bf16.mxu0 0
        %3224 = vmatmul.mubr.bf16.gmra.mxu0 %v3179
        %v3225 = vpop.f32.mrf.mxu0
        %v3226 = vadd.f32 0.0, %v3225
        %v3227 = vpop.f32.mrf.mxu0
        %v3228 = vpop.f32.mrf.mxu0
        %v3229 = vadd.f32 0.0, %v3228
        %v3230 = vpop.f32.mrf.mxu0
        %3231 = vmatprep.mubr.bf16.mxu0 0
        %3232 = vmatmul.mubr.bf16.gmra.mxu0 %v3182
        %v3233 = vpop.f32.mrf.mxu0
        %v3234 = vadd.f32 0.0, %v3233
        %v3235 = vpop.f32.mrf.mxu0
        %v3236 = vpop.f32.mrf.mxu0
        %v3237 = vadd.f32 0.0, %v3236
        %v3238 = vpop.f32.mrf.mxu0
        %3239 = vdwg.mxu0
        %v3240 = vpack.c.bf16 %v3229, %v3226
        %v3241 = vpack.c.bf16 %v3237, %v3234
        %v3244 = vunpack.c.l.b16 %v3240
        %v3245 = vunpack.c.h.b16 %v3240
        %v3246 = vunpack.c.l.b16 %v3241
        %v3247 = vunpack.c.h.b16 %v3241
        %v3248 = vpack.c.b16 %v3244, %v3244
        %v3249 = vpack.c.b16 %v3245, %v3245
        %v3250 = vpack.c.b16 %v3246, %v3246
        %v3251 = vpack.c.b16 %v3247, %v3247
        %s3256 = smul.u32 %s2652, 4
        %s3257 = smul.addr %s3256, 4
        %s3258 = scalar_lea.vmem %s440, %s3257
        %vm3259 = vcmask 109568
        %3260 = vst.msk [vmem:[%s3258] sm:$0xf] %vm3259, %v3248
        %3261 = vst.msk [vmem:[%s3258 + $0x4] sm:$0xf] %vm3259, %v3249
        %3262 = vst.msk [vmem:[%s3258 + $0x8] sm:$0xf] %vm3259, %v3250
        %3263 = vst.msk [vmem:[%s3258 + $0xc] sm:$0xf] %vm3259, %v3251
      $region98: #{cnn_forward.2} parent=71 // loop_footer
        %s2656 = sadd.s32 1, %s2652
      $region99: #{cnn_forward.2} parent=71 // loop_footer_branch
        %2651 = sbr.rel target = $region95
      $region100: #{cnn_forward.2} parent=71 // loop_exit
        _
      %p3264 = scmp.lt.s32.totalorder %s24, 1
      %s3265 = scalar_select %p3264, %s24, 1
      %s3266 = smul.addr %s3265, 112
      %s3267 = smul.addr %s3266, 4
      %s3268 = scalar_lea.vmem %s13, %s3267
      // Predicated region
      $region101: #{cnn_forward.2} parent=71 // pred_check
        %p3269 = pneg %p320
      $region102: #{cnn_forward.2} parent=71 // pred_check_branch
        %3271 = sbr.rel (%p3269) target = $region104
      $region103: #{cnn_forward.2} parent=71 // pred_region
        _
      $region104: #{cnn_forward.2} parent=71 // pred_fallthru
        _
    $region72: #{cnn_forward.2} parent=5 // pred_fallthru
      _
    %p3272 = scmp.le.s32.totalorder 2, %s19
    // Predicated region
    $region105: #{cnn_forward.2} parent=5 // pred_check
      %p3273 = pneg %p3272
    $region106: #{cnn_forward.2} parent=5 // pred_check_branch
      %3275 = sbr.rel (%p3273) target = $region108
    $region107: #{cnn_forward.2} parent=5 // pred_region
      %s3276 = ssub.s32 %s19, 2
      // Predicated region
      $region109: #{cnn_forward.2} parent=107 // pred_check
        %p3277 = pneg %p326
      $region110: #{cnn_forward.2} parent=107 // pred_check_branch
        %3279 = sbr.rel (%p3277) target = $region112
      $region111: #{cnn_forward.2} parent=107 // pred_region
        %p3280 = scmp.lt.s32.totalorder %s25, 1
        %s3281 = scalar_select %p3280, %s25, 1
        %s3282 = smul.addr %s3281, 112
        %s3283 = smul.addr %s3282, 4
        %s3284 = scalar_lea.vmem %s13, %s3283
      $region112: #{cnn_forward.2} parent=107 // pred_fallthru
        _
    $region108: #{cnn_forward.2} parent=5 // pred_fallthru
      _
  $region6: #{cnn_forward.2} parent=0 // loop_footer
    %s23 = sadd.s32 1, %s19
  $region7: #{cnn_forward.2} parent=0 // loop_footer_branch
    %18 = sbr.rel target = $region3
  $region8: #{cnn_forward.2} parent=0 // loop_exit
    _

// kernel: cnn_forward.3
$region0: #{cnn_forward.3}
  #allocation0 [shape = 'u32[]', space=smem, size = 0x4, offset = 0x4, fixed_abs, tag = 'smem constant byte address 0x4 - core index']
  #allocation1 [shape = 'u32[144,128]{1,0:T(1,128)}', space=vmem, size = 0x12000, scoped, tag = 'internal scratch']
  %s0 = inlined_call_operand.vmem [shape: bf16[2,12544], index: 0, kind: input, shape index: {}]
  %s1 = inlined_call_operand.vmem [shape: bf16[12544,100], index: 1, kind: input, shape index: {}]
  %s2 = inlined_call_operand.vmem [shape: f32[1,100], index: 2, kind: input, shape index: {}]
  %s3 = inlined_call_operand.vmem [shape: f32[100,2], index: 3, kind: input, shape index: {}]
  %s4 = inlined_call_operand.vmem [shape: f32[1,2], index: 4, kind: input, shape index: {}]
  %s5 = inlined_call_operand.hbm [shape: f32[2,2], index: 5, kind: output, shape index: {}]
  %s6 = sld [smem:[#allocation0]]
  $region30: #{cnn_forward.3} parent=0
    _
  %s8 = ssub.s32 1, %s6
  %s9 = scalar_select 0, %s8, %s6
  $region1: #{cnn_forward.3} parent=0
    #allocation2 [shape = 'u8[1024]{0}', space=vmem, size = 0x400, scoped, tag = 'output window, operand 0, single buffered']
    #allocation3 [shape = 's32[1]{0}', space=sflag, size = 0x4, scoped, tag = 'scoped memory for cnn_forward.3']
    %10 = vsyncpa [#allocation3], 0
    // Predicated region
    $region2: #{cnn_forward.3} parent=1 // pred_check
      _
    $region3: #{cnn_forward.3} parent=1 // pred_check_branch
      %12 = sbr.rel (0) target = $region5
    $region4: #{cnn_forward.3} parent=1 // pred_region
      _
    $region5: #{cnn_forward.3} parent=1 // pred_fallthru
      _
    // Predicated region
    $region6: #{cnn_forward.3} parent=1 // pred_check
      _
    $region7: #{cnn_forward.3} parent=1 // pred_check_branch
      %14 = sbr.rel (0) target = $region9
    $region8: #{cnn_forward.3} parent=1 // pred_region
      _
    $region9: #{cnn_forward.3} parent=1 // pred_fallthru
      _
    // Predicated region
    $region10: #{cnn_forward.3} parent=1 // pred_check
      _
    $region11: #{cnn_forward.3} parent=1 // pred_check_branch
      %16 = sbr.rel (0) target = $region13
    $region12: #{cnn_forward.3} parent=1 // pred_region
      _
    $region13: #{cnn_forward.3} parent=1 // pred_fallthru
      _
    // Predicated region
    $region14: #{cnn_forward.3} parent=1 // pred_check
      _
    $region15: #{cnn_forward.3} parent=1 // pred_check_branch
      %18 = sbr.rel (0) target = $region17
    $region16: #{cnn_forward.3} parent=1 // pred_region
      _
    $region17: #{cnn_forward.3} parent=1 // pred_fallthru
      _
    // Predicated region
    $region18: #{cnn_forward.3} parent=1 // pred_check
      _
    $region19: #{cnn_forward.3} parent=1 // pred_check_branch
      %20 = sbr.rel (0) target = $region21
    $region20: #{cnn_forward.3} parent=1 // pred_region
      _
    $region21: #{cnn_forward.3} parent=1 // pred_fallthru
      _
    %v22 = vld [vmem:[%s0] sm:$0xff]
    %v23 = vld [vmem:[%s0 + $0x8] sm:$0xff]
    %v24 = vld [vmem:[%s0 + $0x10] sm:$0xff]
    %v25 = vld [vmem:[%s0 + $0x18] sm:$0xff]
    %v26 = vld [vmem:[%s0 + $0x20] sm:$0xff]
    %v27 = vld [vmem:[%s0 + $0x28] sm:$0xff]
    %v28 = vld [vmem:[%s0 + $0x30] sm:$0xff]
    %v29 = vld [vmem:[%s0 + $0x38] sm:$0xff]
    %v30 = vld [vmem:[%s0 + $0x40] sm:$0xff]
    %v31 = vld [vmem:[%s0 + $0x48] sm:$0xff]
    %v32 = vld [vmem:[%s0 + $0x50] sm:$0xff]
    %v33 = vld [vmem:[%s0 + $0x58] sm:$0xff]
    %v34 = vld [vmem:[%s0 + $0x60] sm:$0x3]
    %v35 = vld [vmem:[%s1] sm:$0xf]
    %v36 = vld [vmem:[%s1 + $0x4] sm:$0xf]
    %v37 = vld [vmem:[%s1 + $0x8] sm:$0xf]
    %v38 = vld [vmem:[%s1 + $0xc] sm:$0xf]
    %v39 = vld [vmem:[%s1 + $0x10] sm:$0xf]
    %v40 = vld [vmem:[%s1 + $0x14] sm:$0xf]
    %v41 = vld [vmem:[%s1 + $0x18] sm:$0xf]
    %v42 = vld [vmem:[%s1 + $0x1c] sm:$0xf]
    %v43 = vld [vmem:[%s1 + $0x20] sm:$0xf]
    %v44 = vld [vmem:[%s1 + $0x24] sm:$0xf]
    %v45 = vld [vmem:[%s1 + $0x28] sm:$0xf]
    %v46 = vld [vmem:[%s1 + $0x2c] sm:$0xf]
    %v47 = vld [vmem:[%s1 + $0x30] sm:$0xf]
    %v48 = vld [vmem:[%s1 + $0x34] sm:$0xf]
    %v49 = vld [vmem:[%s1 + $0x38] sm:$0xf]
    %v50 = vld [vmem:[%s1 + $0x3c] sm:$0xf]
    %v51 = vld [vmem:[%s1 + $0x40] sm:$0xf]
    %v52 = vld [vmem:[%s1 + $0x44] sm:$0xf]
    %v53 = vld [vmem:[%s1 + $0x48] sm:$0xf]
    %v54 = vld [vmem:[%s1 + $0x4c] sm:$0xf]
    %v55 = vld [vmem:[%s1 + $0x50] sm:$0xf]
    %v56 = vld [vmem:[%s1 + $0x54] sm:$0xf]
    %v57 = vld [vmem:[%s1 + $0x58] sm:$0xf]
    %v58 = vld [vmem:[%s1 + $0x5c] sm:$0xf]
    %v59 = vld [vmem:[%s1 + $0x60] sm:$0xf]
    %v60 = vld [vmem:[%s1 + $0x64] sm:$0xf]
    %v61 = vld [vmem:[%s1 + $0x68] sm:$0xf]
    %v62 = vld [vmem:[%s1 + $0x6c] sm:$0xf]
    %v63 = vld [vmem:[%s1 + $0x70] sm:$0xf]
    %v64 = vld [vmem:[%s1 + $0x74] sm:$0xf]
    %v65 = vld [vmem:[%s1 + $0x78] sm:$0xf]
    %v66 = vld [vmem:[%s1 + $0x7c] sm:$0xf]
    %v67 = vld [vmem:[%s1 + $0x80] sm:$0xf]
    %v68 = vld [vmem:[%s1 + $0x84] sm:$0xf]
    %v69 = vld [vmem:[%s1 + $0x88] sm:$0xf]
    %v70 = vld [vmem:[%s1 + $0x8c] sm:$0xf]
    %v71 = vld [vmem:[%s1 + $0x90] sm:$0xf]
    %v72 = vld [vmem:[%s1 + $0x94] sm:$0xf]
    %v73 = vld [vmem:[%s1 + $0x98] sm:$0xf]
    %v74 = vld [vmem:[%s1 + $0x9c] sm:$0xf]
    %v75 = vld [vmem:[%s1 + $0xa0] sm:$0xf]
    %v76 = vld [vmem:[%s1 + $0xa4] sm:$0xf]
    %v77 = vld [vmem:[%s1 + $0xa8] sm:$0xf]
    %v78 = vld [vmem:[%s1 + $0xac] sm:$0xf]
    %v79 = vld [vmem:[%s1 + $0xb0] sm:$0xf]
    %v80 = vld [vmem:[%s1 + $0xb4] sm:$0xf]
    %v81 = vld [vmem:[%s1 + $0xb8] sm:$0xf]
    %v82 = vld [vmem:[%s1 + $0xbc] sm:$0xf]
    %v83 = vld [vmem:[%s1 + $0xc0] sm:$0xf]
    %v84 = vld [vmem:[%s1 + $0xc4] sm:$0xf]
    %v85 = vld [vmem:[%s1 + $0xc8] sm:$0xf]
    %v86 = vld [vmem:[%s1 + $0xcc] sm:$0xf]
    %v87 = vld [vmem:[%s1 + $0xd0] sm:$0xf]
    %v88 = vld [vmem:[%s1 + $0xd4] sm:$0xf]
    %v89 = vld [vmem:[%s1 + $0xd8] sm:$0xf]
    %v90 = vld [vmem:[%s1 + $0xdc] sm:$0xf]
    %v91 = vld [vmem:[%s1 + $0xe0] sm:$0xf]
    %v92 = vld [vmem:[%s1 + $0xe4] sm:$0xf]
    %v93 = vld [vmem:[%s1 + $0xe8] sm:$0xf]
    %v94 = vld [vmem:[%s1 + $0xec] sm:$0xf]
    %v95 = vld [vmem:[%s1 + $0xf0] sm:$0xf]
    %v96 = vld [vmem:[%s1 + $0xf4] sm:$0xf]
    %v97 = vld [vmem:[%s1 + $0xf8] sm:$0xf]
    %v98 = vld [vmem:[%s1 + $0xfc] sm:$0xf]
    %v99 = vld [vmem:[%s1 + $0x100] sm:$0xf]
    %v100 = vld [vmem:[%s1 + $0x104] sm:$0xf]
    %v101 = vld [vmem:[%s1 + $0x108] sm:$0xf]
    %v102 = vld [vmem:[%s1 + $0x10c] sm:$0xf]
    %v103 = vld [vmem:[%s1 + $0x110] sm:$0xf]
    %v104 = vld [vmem:[%s1 + $0x114] sm:$0xf]
    %v105 = vld [vmem:[%s1 + $0x118] sm:$0xf]
    %v106 = vld [vmem:[%s1 + $0x11c] sm:$0xf]
    %v107 = vld [vmem:[%s1 + $0x120] sm:$0xf]
    %v108 = vld [vmem:[%s1 + $0x124] sm:$0xf]
    %v109 = vld [vmem:[%s1 + $0x128] sm:$0xf]
    %v110 = vld [vmem:[%s1 + $0x12c] sm:$0xf]
    %v111 = vld [vmem:[%s1 + $0x130] sm:$0xf]
    %v112 = vld [vmem:[%s1 + $0x134] sm:$0xf]
    %v113 = vld [vmem:[%s1 + $0x138] sm:$0xf]
    %v114 = vld [vmem:[%s1 + $0x13c] sm:$0xf]
    %v115 = vld [vmem:[%s1 + $0x140] sm:$0xf]
    %v116 = vld [vmem:[%s1 + $0x144] sm:$0xf]
    %v117 = vld [vmem:[%s1 + $0x148] sm:$0xf]
    %v118 = vld [vmem:[%s1 + $0x14c] sm:$0xf]
    %v119 = vld [vmem:[%s1 + $0x150] sm:$0xf]
    %v120 = vld [vmem:[%s1 + $0x154] sm:$0xf]
    %v121 = vld [vmem:[%s1 + $0x158] sm:$0xf]
    %v122 = vld [vmem:[%s1 + $0x15c] sm:$0xf]
    %v123 = vld [vmem:[%s1 + $0x160] sm:$0xf]
    %v124 = vld [vmem:[%s1 + $0x164] sm:$0xf]
    %v125 = vld [vmem:[%s1 + $0x168] sm:$0xf]
    %v126 = vld [vmem:[%s1 + $0x16c] sm:$0xf]
    %v127 = vld [vmem:[%s1 + $0x170] sm:$0xf]
    %v128 = vld [vmem:[%s1 + $0x174] sm:$0xf]
    %v129 = vld [vmem:[%s1 + $0x178] sm:$0xf]
    %v130 = vld [vmem:[%s1 + $0x17c] sm:$0xf]
    %v131 = vld [vmem:[%s1 + $0x180] sm:$0xf]
    %v132 = vld [vmem:[%s1 + $0x184] sm:$0xf]
    %v133 = vld [vmem:[%s1 + $0x188] sm:$0xf]
    %v134 = vld [vmem:[%s1 + $0x18c] sm:$0xf]
    %v135 = vld [vmem:[%s1 + $0x190] sm:$0xf]
    %v136 = vld [vmem:[%s1 + $0x194] sm:$0xf]
    %v137 = vld [vmem:[%s1 + $0x198] sm:$0xf]
    %v138 = vld [vmem:[%s1 + $0x19c] sm:$0xf]
    %v139 = vld [vmem:[%s1 + $0x1a0] sm:$0xf]
    %v140 = vld [vmem:[%s1 + $0x1a4] sm:$0xf]
    %v141 = vld [vmem:[%s1 + $0x1a8] sm:$0xf]
    %v142 = vld [vmem:[%s1 + $0x1ac] sm:$0xf]
    %v143 = vld [vmem:[%s1 + $0x1b0] sm:$0xf]
    %v144 = vld [vmem:[%s1 + $0x1b4] sm:$0xf]
    %v145 = vld [vmem:[%s1 + $0x1b8] sm:$0xf]
    %v146 = vld [vmem:[%s1 + $0x1bc] sm:$0xf]
    %v147 = vld [vmem:[%s1 + $0x1c0] sm:$0xf]
    %v148 = vld [vmem:[%s1 + $0x1c4] sm:$0xf]
    %v149 = vld [vmem:[%s1 + $0x1c8] sm:$0xf]
    %v150 = vld [vmem:[%s1 + $0x1cc] sm:$0xf]
    %v151 = vld [vmem:[%s1 + $0x1d0] sm:$0xf]
    %v152 = vld [vmem:[%s1 + $0x1d4] sm:$0xf]
    %v153 = vld [vmem:[%s1 + $0x1d8] sm:$0xf]
    %v154 = vld [vmem:[%s1 + $0x1dc] sm:$0xf]
    %v155 = vld [vmem:[%s1 + $0x1e0] sm:$0xf]
    %v156 = vld [vmem:[%s1 + $0x1e4] sm:$0xf]
    %v157 = vld [vmem:[%s1 + $0x1e8] sm:$0xf]
    %v158 = vld [vmem:[%s1 + $0x1ec] sm:$0xf]
    %v159 = vld [vmem:[%s1 + $0x1f0] sm:$0xf]
    %v160 = vld [vmem:[%s1 + $0x1f4] sm:$0xf]
    %v161 = vld [vmem:[%s1 + $0x1f8] sm:$0xf]
    %v162 = vld [vmem:[%s1 + $0x1fc] sm:$0xf]
    %v163 = vld [vmem:[%s1 + $0x200] sm:$0xf]
    %v164 = vld [vmem:[%s1 + $0x204] sm:$0xf]
    %v165 = vld [vmem:[%s1 + $0x208] sm:$0xf]
    %v166 = vld [vmem:[%s1 + $0x20c] sm:$0xf]
    %v167 = vld [vmem:[%s1 + $0x210] sm:$0xf]
    %v168 = vld [vmem:[%s1 + $0x214] sm:$0xf]
    %v169 = vld [vmem:[%s1 + $0x218] sm:$0xf]
    %v170 = vld [vmem:[%s1 + $0x21c] sm:$0xf]
    %v171 = vld [vmem:[%s1 + $0x220] sm:$0xf]
    %v172 = vld [vmem:[%s1 + $0x224] sm:$0xf]
    %v173 = vld [vmem:[%s1 + $0x228] sm:$0xf]
    %v174 = vld [vmem:[%s1 + $0x22c] sm:$0xf]
    %v175 = vld [vmem:[%s1 + $0x230] sm:$0xf]
    %v176 = vld [vmem:[%s1 + $0x234] sm:$0xf]
    %v177 = vld [vmem:[%s1 + $0x238] sm:$0xf]
    %v178 = vld [vmem:[%s1 + $0x23c] sm:$0xf]
    %v179 = vld [vmem:[%s1 + $0x240] sm:$0xf]
    %v180 = vld [vmem:[%s1 + $0x244] sm:$0xf]
    %v181 = vld [vmem:[%s1 + $0x248] sm:$0xf]
    %v182 = vld [vmem:[%s1 + $0x24c] sm:$0xf]
    %v183 = vld [vmem:[%s1 + $0x250] sm:$0xf]
    %v184 = vld [vmem:[%s1 + $0x254] sm:$0xf]
    %v185 = vld [vmem:[%s1 + $0x258] sm:$0xf]
    %v186 = vld [vmem:[%s1 + $0x25c] sm:$0xf]
    %v187 = vld [vmem:[%s1 + $0x260] sm:$0xf]
    %v188 = vld [vmem:[%s1 + $0x264] sm:$0xf]
    %v189 = vld [vmem:[%s1 + $0x268] sm:$0xf]
    %v190 = vld [vmem:[%s1 + $0x26c] sm:$0xf]
    %v191 = vld [vmem:[%s1 + $0x270] sm:$0xf]
    %v192 = vld [vmem:[%s1 + $0x274] sm:$0xf]
    %v193 = vld [vmem:[%s1 + $0x278] sm:$0xf]
    %v194 = vld [vmem:[%s1 + $0x27c] sm:$0xf]
    %v195 = vld [vmem:[%s1 + $0x280] sm:$0xf]
    %v196 = vld [vmem:[%s1 + $0x284] sm:$0xf]
    %v197 = vld [vmem:[%s1 + $0x288] sm:$0xf]
    %v198 = vld [vmem:[%s1 + $0x28c] sm:$0xf]
    %v199 = vld [vmem:[%s1 + $0x290] sm:$0xf]
    %v200 = vld [vmem:[%s1 + $0x294] sm:$0xf]
    %v201 = vld [vmem:[%s1 + $0x298] sm:$0xf]
    %v202 = vld [vmem:[%s1 + $0x29c] sm:$0xf]
    %v203 = vld [vmem:[%s1 + $0x2a0] sm:$0xf]
    %v204 = vld [vmem:[%s1 + $0x2a4] sm:$0xf]
    %v205 = vld [vmem:[%s1 + $0x2a8] sm:$0xf]
    %v206 = vld [vmem:[%s1 + $0x2ac] sm:$0xf]
    %v207 = vld [vmem:[%s1 + $0x2b0] sm:$0xf]
    %v208 = vld [vmem:[%s1 + $0x2b4] sm:$0xf]
    %v209 = vld [vmem:[%s1 + $0x2b8] sm:$0xf]
    %v210 = vld [vmem:[%s1 + $0x2bc] sm:$0xf]
    %v211 = vld [vmem:[%s1 + $0x2c0] sm:$0xf]
    %v212 = vld [vmem:[%s1 + $0x2c4] sm:$0xf]
    %v213 = vld [vmem:[%s1 + $0x2c8] sm:$0xf]
    %v214 = vld [vmem:[%s1 + $0x2cc] sm:$0xf]
    %v215 = vld [vmem:[%s1 + $0x2d0] sm:$0xf]
    %v216 = vld [vmem:[%s1 + $0x2d4] sm:$0xf]
    %v217 = vld [vmem:[%s1 + $0x2d8] sm:$0xf]
    %v218 = vld [vmem:[%s1 + $0x2dc] sm:$0xf]
    %v219 = vld [vmem:[%s1 + $0x2e0] sm:$0xf]
    %v220 = vld [vmem:[%s1 + $0x2e4] sm:$0xf]
    %v221 = vld [vmem:[%s1 + $0x2e8] sm:$0xf]
    %v222 = vld [vmem:[%s1 + $0x2ec] sm:$0xf]
    %v223 = vld [vmem:[%s1 + $0x2f0] sm:$0xf]
    %v224 = vld [vmem:[%s1 + $0x2f4] sm:$0xf]
    %v225 = vld [vmem:[%s1 + $0x2f8] sm:$0xf]
    %v226 = vld [vmem:[%s1 + $0x2fc] sm:$0xf]
    %v227 = vld [vmem:[%s1 + $0x300] sm:$0xf]
    %v228 = vld [vmem:[%s1 + $0x304] sm:$0xf]
    %v229 = vld [vmem:[%s1 + $0x308] sm:$0xf]
    %v230 = vld [vmem:[%s1 + $0x30c] sm:$0xf]
    %v231 = vld [vmem:[%s1 + $0x310] sm:$0xf]
    %v232 = vld [vmem:[%s1 + $0x314] sm:$0xf]
    %v233 = vld [vmem:[%s1 + $0x318] sm:$0xf]
    %v234 = vld [vmem:[%s1 + $0x31c] sm:$0xf]
    %v235 = vld [vmem:[%s1 + $0x320] sm:$0xf]
    %v236 = vld [vmem:[%s1 + $0x324] sm:$0xf]
    %v237 = vld [vmem:[%s1 + $0x328] sm:$0xf]
    %v238 = vld [vmem:[%s1 + $0x32c] sm:$0xf]
    %v239 = vld [vmem:[%s1 + $0x330] sm:$0xf]
    %v240 = vld [vmem:[%s1 + $0x334] sm:$0xf]
    %v241 = vld [vmem:[%s1 + $0x338] sm:$0xf]
    %v242 = vld [vmem:[%s1 + $0x33c] sm:$0xf]
    %v243 = vld [vmem:[%s1 + $0x340] sm:$0xf]
    %v244 = vld [vmem:[%s1 + $0x344] sm:$0xf]
    %v245 = vld [vmem:[%s1 + $0x348] sm:$0xf]
    %v246 = vld [vmem:[%s1 + $0x34c] sm:$0xf]
    %v247 = vld [vmem:[%s1 + $0x350] sm:$0xf]
    %v248 = vld [vmem:[%s1 + $0x354] sm:$0xf]
    %v249 = vld [vmem:[%s1 + $0x358] sm:$0xf]
    %v250 = vld [vmem:[%s1 + $0x35c] sm:$0xf]
    %v251 = vld [vmem:[%s1 + $0x360] sm:$0xf]
    %v252 = vld [vmem:[%s1 + $0x364] sm:$0xf]
    %v253 = vld [vmem:[%s1 + $0x368] sm:$0xf]
    %v254 = vld [vmem:[%s1 + $0x36c] sm:$0xf]
    %v255 = vld [vmem:[%s1 + $0x370] sm:$0xf]
    %v256 = vld [vmem:[%s1 + $0x374] sm:$0xf]
    %v257 = vld [vmem:[%s1 + $0x378] sm:$0xf]
    %v258 = vld [vmem:[%s1 + $0x37c] sm:$0xf]
    %v259 = vld [vmem:[%s1 + $0x380] sm:$0xf]
    %v260 = vld [vmem:[%s1 + $0x384] sm:$0xf]
    %v261 = vld [vmem:[%s1 + $0x388] sm:$0xf]
    %v262 = vld [vmem:[%s1 + $0x38c] sm:$0xf]
    %v263 = vld [vmem:[%s1 + $0x390] sm:$0xf]
    %v264 = vld [vmem:[%s1 + $0x394] sm:$0xf]
    %v265 = vld [vmem:[%s1 + $0x398] sm:$0xf]
    %v266 = vld [vmem:[%s1 + $0x39c] sm:$0xf]
    %v267 = vld [vmem:[%s1 + $0x3a0] sm:$0xf]
    %v268 = vld [vmem:[%s1 + $0x3a4] sm:$0xf]
    %v269 = vld [vmem:[%s1 + $0x3a8] sm:$0xf]
    %v270 = vld [vmem:[%s1 + $0x3ac] sm:$0xf]
    %v271 = vld [vmem:[%s1 + $0x3b0] sm:$0xf]
    %v272 = vld [vmem:[%s1 + $0x3b4] sm:$0xf]
    %v273 = vld [vmem:[%s1 + $0x3b8] sm:$0xf]
    %v274 = vld [vmem:[%s1 + $0x3bc] sm:$0xf]
    %v275 = vld [vmem:[%s1 + $0x3c0] sm:$0xf]
    %v276 = vld [vmem:[%s1 + $0x3c4] sm:$0xf]
    %v277 = vld [vmem:[%s1 + $0x3c8] sm:$0xf]
    %v278 = vld [vmem:[%s1 + $0x3cc] sm:$0xf]
    %v279 = vld [vmem:[%s1 + $0x3d0] sm:$0xf]
    %v280 = vld [vmem:[%s1 + $0x3d4] sm:$0xf]
    %v281 = vld [vmem:[%s1 + $0x3d8] sm:$0xf]
    %v282 = vld [vmem:[%s1 + $0x3dc] sm:$0xf]
    %v283 = vld [vmem:[%s1 + $0x3e0] sm:$0xf]
    %v284 = vld [vmem:[%s1 + $0x3e4] sm:$0xf]
    %v285 = vld [vmem:[%s1 + $0x3e8] sm:$0xf]
    %v286 = vld [vmem:[%s1 + $0x3ec] sm:$0xf]
    %v287 = vld [vmem:[%s1 + $0x3f0] sm:$0xf]
    %v288 = vld [vmem:[%s1 + $0x3f4] sm:$0xf]
    %v289 = vld [vmem:[%s1 + $0x3f8] sm:$0xf]
    %v290 = vld [vmem:[%s1 + $0x3fc] sm:$0xf]
    %v291 = vld [vmem:[%s1 + $0x400] sm:$0xf]
    %v292 = vld [vmem:[%s1 + $0x404] sm:$0xf]
    %v293 = vld [vmem:[%s1 + $0x408] sm:$0xf]
    %v294 = vld [vmem:[%s1 + $0x40c] sm:$0xf]
    %v295 = vld [vmem:[%s1 + $0x410] sm:$0xf]
    %v296 = vld [vmem:[%s1 + $0x414] sm:$0xf]
    %v297 = vld [vmem:[%s1 + $0x418] sm:$0xf]
    %v298 = vld [vmem:[%s1 + $0x41c] sm:$0xf]
    %v299 = vld [vmem:[%s1 + $0x420] sm:$0xf]
    %v300 = vld [vmem:[%s1 + $0x424] sm:$0xf]
    %v301 = vld [vmem:[%s1 + $0x428] sm:$0xf]
    %v302 = vld [vmem:[%s1 + $0x42c] sm:$0xf]
    %v303 = vld [vmem:[%s1 + $0x430] sm:$0xf]
    %v304 = vld [vmem:[%s1 + $0x434] sm:$0xf]
    %v305 = vld [vmem:[%s1 + $0x438] sm:$0xf]
    %v306 = vld [vmem:[%s1 + $0x43c] sm:$0xf]
    %v307 = vld [vmem:[%s1 + $0x440] sm:$0xf]
    %v308 = vld [vmem:[%s1 + $0x444] sm:$0xf]
    %v309 = vld [vmem:[%s1 + $0x448] sm:$0xf]
    %v310 = vld [vmem:[%s1 + $0x44c] sm:$0xf]
    %v311 = vld [vmem:[%s1 + $0x450] sm:$0xf]
    %v312 = vld [vmem:[%s1 + $0x454] sm:$0xf]
    %v313 = vld [vmem:[%s1 + $0x458] sm:$0xf]
    %v314 = vld [vmem:[%s1 + $0x45c] sm:$0xf]
    %v315 = vld [vmem:[%s1 + $0x460] sm:$0xf]
    %v316 = vld [vmem:[%s1 + $0x464] sm:$0xf]
    %v317 = vld [vmem:[%s1 + $0x468] sm:$0xf]
    %v318 = vld [vmem:[%s1 + $0x46c] sm:$0xf]
    %v319 = vld [vmem:[%s1 + $0x470] sm:$0xf]
    %v320 = vld [vmem:[%s1 + $0x474] sm:$0xf]
    %v321 = vld [vmem:[%s1 + $0x478] sm:$0xf]
    %v322 = vld [vmem:[%s1 + $0x47c] sm:$0xf]
    %v323 = vld [vmem:[%s1 + $0x480] sm:$0xf]
    %v324 = vld [vmem:[%s1 + $0x484] sm:$0xf]
    %v325 = vld [vmem:[%s1 + $0x488] sm:$0xf]
    %v326 = vld [vmem:[%s1 + $0x48c] sm:$0xf]
    %v327 = vld [vmem:[%s1 + $0x490] sm:$0xf]
    %v328 = vld [vmem:[%s1 + $0x494] sm:$0xf]
    %v329 = vld [vmem:[%s1 + $0x498] sm:$0xf]
    %v330 = vld [vmem:[%s1 + $0x49c] sm:$0xf]
    %v331 = vld [vmem:[%s1 + $0x4a0] sm:$0xf]
    %v332 = vld [vmem:[%s1 + $0x4a4] sm:$0xf]
    %v333 = vld [vmem:[%s1 + $0x4a8] sm:$0xf]
    %v334 = vld [vmem:[%s1 + $0x4ac] sm:$0xf]
    %v335 = vld [vmem:[%s1 + $0x4b0] sm:$0xf]
    %v336 = vld [vmem:[%s1 + $0x4b4] sm:$0xf]
    %v337 = vld [vmem:[%s1 + $0x4b8] sm:$0xf]
    %v338 = vld [vmem:[%s1 + $0x4bc] sm:$0xf]
    %v339 = vld [vmem:[%s1 + $0x4c0] sm:$0xf]
    %v340 = vld [vmem:[%s1 + $0x4c4] sm:$0xf]
    %v341 = vld [vmem:[%s1 + $0x4c8] sm:$0xf]
    %v342 = vld [vmem:[%s1 + $0x4cc] sm:$0xf]
    %v343 = vld [vmem:[%s1 + $0x4d0] sm:$0xf]
    %v344 = vld [vmem:[%s1 + $0x4d4] sm:$0xf]
    %v345 = vld [vmem:[%s1 + $0x4d8] sm:$0xf]
    %v346 = vld [vmem:[%s1 + $0x4dc] sm:$0xf]
    %v347 = vld [vmem:[%s1 + $0x4e0] sm:$0xf]
    %v348 = vld [vmem:[%s1 + $0x4e4] sm:$0xf]
    %v349 = vld [vmem:[%s1 + $0x4e8] sm:$0xf]
    %v350 = vld [vmem:[%s1 + $0x4ec] sm:$0xf]
    %v351 = vld [vmem:[%s1 + $0x4f0] sm:$0xf]
    %v352 = vld [vmem:[%s1 + $0x4f4] sm:$0xf]
    %v353 = vld [vmem:[%s1 + $0x4f8] sm:$0xf]
    %v354 = vld [vmem:[%s1 + $0x4fc] sm:$0xf]
    %v355 = vld [vmem:[%s1 + $0x500] sm:$0xf]
    %v356 = vld [vmem:[%s1 + $0x504] sm:$0xf]
    %v357 = vld [vmem:[%s1 + $0x508] sm:$0xf]
    %v358 = vld [vmem:[%s1 + $0x50c] sm:$0xf]
    %v359 = vld [vmem:[%s1 + $0x510] sm:$0xf]
    %v360 = vld [vmem:[%s1 + $0x514] sm:$0xf]
    %v361 = vld [vmem:[%s1 + $0x518] sm:$0xf]
    %v362 = vld [vmem:[%s1 + $0x51c] sm:$0xf]
    %v363 = vld [vmem:[%s1 + $0x520] sm:$0xf]
    %v364 = vld [vmem:[%s1 + $0x524] sm:$0xf]
    %v365 = vld [vmem:[%s1 + $0x528] sm:$0xf]
    %v366 = vld [vmem:[%s1 + $0x52c] sm:$0xf]
    %v367 = vld [vmem:[%s1 + $0x530] sm:$0xf]
    %v368 = vld [vmem:[%s1 + $0x534] sm:$0xf]
    %v369 = vld [vmem:[%s1 + $0x538] sm:$0xf]
    %v370 = vld [vmem:[%s1 + $0x53c] sm:$0xf]
    %v371 = vld [vmem:[%s1 + $0x540] sm:$0xf]
    %v372 = vld [vmem:[%s1 + $0x544] sm:$0xf]
    %v373 = vld [vmem:[%s1 + $0x548] sm:$0xf]
    %v374 = vld [vmem:[%s1 + $0x54c] sm:$0xf]
    %v375 = vld [vmem:[%s1 + $0x550] sm:$0xf]
    %v376 = vld [vmem:[%s1 + $0x554] sm:$0xf]
    %v377 = vld [vmem:[%s1 + $0x558] sm:$0xf]
    %v378 = vld [vmem:[%s1 + $0x55c] sm:$0xf]
    %v379 = vld [vmem:[%s1 + $0x560] sm:$0xf]
    %v380 = vld [vmem:[%s1 + $0x564] sm:$0xf]
    %v381 = vld [vmem:[%s1 + $0x568] sm:$0xf]
    %v382 = vld [vmem:[%s1 + $0x56c] sm:$0xf]
    %v383 = vld [vmem:[%s1 + $0x570] sm:$0xf]
    %v384 = vld [vmem:[%s1 + $0x574] sm:$0xf]
    %v385 = vld [vmem:[%s1 + $0x578] sm:$0xf]
    %v386 = vld [vmem:[%s1 + $0x57c] sm:$0xf]
    %v387 = vld [vmem:[%s1 + $0x580] sm:$0xf]
    %v388 = vld [vmem:[%s1 + $0x584] sm:$0xf]
    %v389 = vld [vmem:[%s1 + $0x588] sm:$0xf]
    %v390 = vld [vmem:[%s1 + $0x58c] sm:$0xf]
    %v391 = vld [vmem:[%s1 + $0x590] sm:$0xf]
    %v392 = vld [vmem:[%s1 + $0x594] sm:$0xf]
    %v393 = vld [vmem:[%s1 + $0x598] sm:$0xf]
    %v394 = vld [vmem:[%s1 + $0x59c] sm:$0xf]
    %v395 = vld [vmem:[%s1 + $0x5a0] sm:$0xf]
    %v396 = vld [vmem:[%s1 + $0x5a4] sm:$0xf]
    %v397 = vld [vmem:[%s1 + $0x5a8] sm:$0xf]
    %v398 = vld [vmem:[%s1 + $0x5ac] sm:$0xf]
    %v399 = vld [vmem:[%s1 + $0x5b0] sm:$0xf]
    %v400 = vld [vmem:[%s1 + $0x5b4] sm:$0xf]
    %v401 = vld [vmem:[%s1 + $0x5b8] sm:$0xf]
    %v402 = vld [vmem:[%s1 + $0x5bc] sm:$0xf]
    %v403 = vld [vmem:[%s1 + $0x5c0] sm:$0xf]
    %v404 = vld [vmem:[%s1 + $0x5c4] sm:$0xf]
    %v405 = vld [vmem:[%s1 + $0x5c8] sm:$0xf]
    %v406 = vld [vmem:[%s1 + $0x5cc] sm:$0xf]
    %v407 = vld [vmem:[%s1 + $0x5d0] sm:$0xf]
    %v408 = vld [vmem:[%s1 + $0x5d4] sm:$0xf]
    %v409 = vld [vmem:[%s1 + $0x5d8] sm:$0xf]
    %v410 = vld [vmem:[%s1 + $0x5dc] sm:$0xf]
    %v411 = vld [vmem:[%s1 + $0x5e0] sm:$0xf]
    %v412 = vld [vmem:[%s1 + $0x5e4] sm:$0xf]
    %v413 = vld [vmem:[%s1 + $0x5e8] sm:$0xf]
    %v414 = vld [vmem:[%s1 + $0x5ec] sm:$0xf]
    %v415 = vld [vmem:[%s1 + $0x5f0] sm:$0xf]
    %v416 = vld [vmem:[%s1 + $0x5f4] sm:$0xf]
    %v417 = vld [vmem:[%s1 + $0x5f8] sm:$0xf]
    %v418 = vld [vmem:[%s1 + $0x5fc] sm:$0xf]
    %v419 = vld [vmem:[%s1 + $0x600] sm:$0xf]
    %v420 = vld [vmem:[%s1 + $0x604] sm:$0xf]
    %v421 = vld [vmem:[%s1 + $0x608] sm:$0xf]
    %v422 = vld [vmem:[%s1 + $0x60c] sm:$0xf]
    %v423 = vld [vmem:[%s1 + $0x610] sm:$0xf]
    %v424 = vld [vmem:[%s1 + $0x614] sm:$0xf]
    %v425 = vld [vmem:[%s1 + $0x618] sm:$0xf]
    %v426 = vld [vmem:[%s1 + $0x61c] sm:$0xf]
    %v427 = vld [vmem:[%s1 + $0x620] sm:$0xf]
    %v428 = vld [vmem:[%s1 + $0x624] sm:$0xf]
    %v429 = vld [vmem:[%s1 + $0x628] sm:$0xf]
    %v430 = vld [vmem:[%s1 + $0x62c] sm:$0xf]
    %v431 = vld [vmem:[%s1 + $0x630] sm:$0xf]
    %v432 = vld [vmem:[%s1 + $0x634] sm:$0xf]
    %v433 = vld [vmem:[%s1 + $0x638] sm:$0xf]
    %v434 = vld [vmem:[%s1 + $0x63c] sm:$0xf]
    %v435 = vld [vmem:[%s1 + $0x640] sm:$0xf]
    %v436 = vld [vmem:[%s1 + $0x644] sm:$0xf]
    %v437 = vld [vmem:[%s1 + $0x648] sm:$0xf]
    %v438 = vld [vmem:[%s1 + $0x64c] sm:$0xf]
    %v439 = vld [vmem:[%s1 + $0x650] sm:$0xf]
    %v440 = vld [vmem:[%s1 + $0x654] sm:$0xf]
    %v441 = vld [vmem:[%s1 + $0x658] sm:$0xf]
    %v442 = vld [vmem:[%s1 + $0x65c] sm:$0xf]
    %v443 = vld [vmem:[%s1 + $0x660] sm:$0xf]
    %v444 = vld [vmem:[%s1 + $0x664] sm:$0xf]
    %v445 = vld [vmem:[%s1 + $0x668] sm:$0xf]
    %v446 = vld [vmem:[%s1 + $0x66c] sm:$0xf]
    %v447 = vld [vmem:[%s1 + $0x670] sm:$0xf]
    %v448 = vld [vmem:[%s1 + $0x674] sm:$0xf]
    %v449 = vld [vmem:[%s1 + $0x678] sm:$0xf]
    %v450 = vld [vmem:[%s1 + $0x67c] sm:$0xf]
    %v451 = vld [vmem:[%s1 + $0x680] sm:$0xf]
    %v452 = vld [vmem:[%s1 + $0x684] sm:$0xf]
    %v453 = vld [vmem:[%s1 + $0x688] sm:$0xf]
    %v454 = vld [vmem:[%s1 + $0x68c] sm:$0xf]
    %v455 = vld [vmem:[%s1 + $0x690] sm:$0xf]
    %v456 = vld [vmem:[%s1 + $0x694] sm:$0xf]
    %v457 = vld [vmem:[%s1 + $0x698] sm:$0xf]
    %v458 = vld [vmem:[%s1 + $0x69c] sm:$0xf]
    %v459 = vld [vmem:[%s1 + $0x6a0] sm:$0xf]
    %v460 = vld [vmem:[%s1 + $0x6a4] sm:$0xf]
    %v461 = vld [vmem:[%s1 + $0x6a8] sm:$0xf]
    %v462 = vld [vmem:[%s1 + $0x6ac] sm:$0xf]
    %v463 = vld [vmem:[%s1 + $0x6b0] sm:$0xf]
    %v464 = vld [vmem:[%s1 + $0x6b4] sm:$0xf]
    %v465 = vld [vmem:[%s1 + $0x6b8] sm:$0xf]
    %v466 = vld [vmem:[%s1 + $0x6bc] sm:$0xf]
    %v467 = vld [vmem:[%s1 + $0x6c0] sm:$0xf]
    %v468 = vld [vmem:[%s1 + $0x6c4] sm:$0xf]
    %v469 = vld [vmem:[%s1 + $0x6c8] sm:$0xf]
    %v470 = vld [vmem:[%s1 + $0x6cc] sm:$0xf]
    %v471 = vld [vmem:[%s1 + $0x6d0] sm:$0xf]
    %v472 = vld [vmem:[%s1 + $0x6d4] sm:$0xf]
    %v473 = vld [vmem:[%s1 + $0x6d8] sm:$0xf]
    %v474 = vld [vmem:[%s1 + $0x6dc] sm:$0xf]
    %v475 = vld [vmem:[%s1 + $0x6e0] sm:$0xf]
    %v476 = vld [vmem:[%s1 + $0x6e4] sm:$0xf]
    %v477 = vld [vmem:[%s1 + $0x6e8] sm:$0xf]
    %v478 = vld [vmem:[%s1 + $0x6ec] sm:$0xf]
    %v479 = vld [vmem:[%s1 + $0x6f0] sm:$0xf]
    %v480 = vld [vmem:[%s1 + $0x6f4] sm:$0xf]
    %v481 = vld [vmem:[%s1 + $0x6f8] sm:$0xf]
    %v482 = vld [vmem:[%s1 + $0x6fc] sm:$0xf]
    %v483 = vld [vmem:[%s1 + $0x700] sm:$0xf]
    %v484 = vld [vmem:[%s1 + $0x704] sm:$0xf]
    %v485 = vld [vmem:[%s1 + $0x708] sm:$0xf]
    %v486 = vld [vmem:[%s1 + $0x70c] sm:$0xf]
    %v487 = vld [vmem:[%s1 + $0x710] sm:$0xf]
    %v488 = vld [vmem:[%s1 + $0x714] sm:$0xf]
    %v489 = vld [vmem:[%s1 + $0x718] sm:$0xf]
    %v490 = vld [vmem:[%s1 + $0x71c] sm:$0xf]
    %v491 = vld [vmem:[%s1 + $0x720] sm:$0xf]
    %v492 = vld [vmem:[%s1 + $0x724] sm:$0xf]
    %v493 = vld [vmem:[%s1 + $0x728] sm:$0xf]
    %v494 = vld [vmem:[%s1 + $0x72c] sm:$0xf]
    %v495 = vld [vmem:[%s1 + $0x730] sm:$0xf]
    %v496 = vld [vmem:[%s1 + $0x734] sm:$0xf]
    %v497 = vld [vmem:[%s1 + $0x738] sm:$0xf]
    %v498 = vld [vmem:[%s1 + $0x73c] sm:$0xf]
    %v499 = vld [vmem:[%s1 + $0x740] sm:$0xf]
    %v500 = vld [vmem:[%s1 + $0x744] sm:$0xf]
    %v501 = vld [vmem:[%s1 + $0x748] sm:$0xf]
    %v502 = vld [vmem:[%s1 + $0x74c] sm:$0xf]
    %v503 = vld [vmem:[%s1 + $0x750] sm:$0xf]
    %v504 = vld [vmem:[%s1 + $0x754] sm:$0xf]
    %v505 = vld [vmem:[%s1 + $0x758] sm:$0xf]
    %v506 = vld [vmem:[%s1 + $0x75c] sm:$0xf]
    %v507 = vld [vmem:[%s1 + $0x760] sm:$0xf]
    %v508 = vld [vmem:[%s1 + $0x764] sm:$0xf]
    %v509 = vld [vmem:[%s1 + $0x768] sm:$0xf]
    %v510 = vld [vmem:[%s1 + $0x76c] sm:$0xf]
    %v511 = vld [vmem:[%s1 + $0x770] sm:$0xf]
    %v512 = vld [vmem:[%s1 + $0x774] sm:$0xf]
    %v513 = vld [vmem:[%s1 + $0x778] sm:$0xf]
    %v514 = vld [vmem:[%s1 + $0x77c] sm:$0xf]
    %v515 = vld [vmem:[%s1 + $0x780] sm:$0xf]
    %v516 = vld [vmem:[%s1 + $0x784] sm:$0xf]
    %v517 = vld [vmem:[%s1 + $0x788] sm:$0xf]
    %v518 = vld [vmem:[%s1 + $0x78c] sm:$0xf]
    %v519 = vld [vmem:[%s1 + $0x790] sm:$0xf]
    %v520 = vld [vmem:[%s1 + $0x794] sm:$0xf]
    %v521 = vld [vmem:[%s1 + $0x798] sm:$0xf]
    %v522 = vld [vmem:[%s1 + $0x79c] sm:$0xf]
    %v523 = vld [vmem:[%s1 + $0x7a0] sm:$0xf]
    %v524 = vld [vmem:[%s1 + $0x7a4] sm:$0xf]
    %v525 = vld [vmem:[%s1 + $0x7a8] sm:$0xf]
    %v526 = vld [vmem:[%s1 + $0x7ac] sm:$0xf]
    %v527 = vld [vmem:[%s1 + $0x7b0] sm:$0xf]
    %v528 = vld [vmem:[%s1 + $0x7b4] sm:$0xf]
    %v529 = vld [vmem:[%s1 + $0x7b8] sm:$0xf]
    %v530 = vld [vmem:[%s1 + $0x7bc] sm:$0xf]
    %v531 = vld [vmem:[%s1 + $0x7c0] sm:$0xf]
    %v532 = vld [vmem:[%s1 + $0x7c4] sm:$0xf]
    %v533 = vld [vmem:[%s1 + $0x7c8] sm:$0xf]
    %v534 = vld [vmem:[%s1 + $0x7cc] sm:$0xf]
    %v535 = vld [vmem:[%s1 + $0x7d0] sm:$0xf]
    %v536 = vld [vmem:[%s1 + $0x7d4] sm:$0xf]
    %v537 = vld [vmem:[%s1 + $0x7d8] sm:$0xf]
    %v538 = vld [vmem:[%s1 + $0x7dc] sm:$0xf]
    %v539 = vld [vmem:[%s1 + $0x7e0] sm:$0xf]
    %v540 = vld [vmem:[%s1 + $0x7e4] sm:$0xf]
    %v541 = vld [vmem:[%s1 + $0x7e8] sm:$0xf]
    %v542 = vld [vmem:[%s1 + $0x7ec] sm:$0xf]
    %v543 = vld [vmem:[%s1 + $0x7f0] sm:$0xf]
    %v544 = vld [vmem:[%s1 + $0x7f4] sm:$0xf]
    %v545 = vld [vmem:[%s1 + $0x7f8] sm:$0xf]
    %v546 = vld [vmem:[%s1 + $0x7fc] sm:$0xf]
    %v547 = vld [vmem:[%s1 + $0x800] sm:$0xf]
    %v548 = vld [vmem:[%s1 + $0x804] sm:$0xf]
    %v549 = vld [vmem:[%s1 + $0x808] sm:$0xf]
    %v550 = vld [vmem:[%s1 + $0x80c] sm:$0xf]
    %v551 = vld [vmem:[%s1 + $0x810] sm:$0xf]
    %v552 = vld [vmem:[%s1 + $0x814] sm:$0xf]
    %v553 = vld [vmem:[%s1 + $0x818] sm:$0xf]
    %v554 = vld [vmem:[%s1 + $0x81c] sm:$0xf]
    %v555 = vld [vmem:[%s1 + $0x820] sm:$0xf]
    %v556 = vld [vmem:[%s1 + $0x824] sm:$0xf]
    %v557 = vld [vmem:[%s1 + $0x828] sm:$0xf]
    %v558 = vld [vmem:[%s1 + $0x82c] sm:$0xf]
    %v559 = vld [vmem:[%s1 + $0x830] sm:$0xf]
    %v560 = vld [vmem:[%s1 + $0x834] sm:$0xf]
    %v561 = vld [vmem:[%s1 + $0x838] sm:$0xf]
    %v562 = vld [vmem:[%s1 + $0x83c] sm:$0xf]
    %v563 = vld [vmem:[%s1 + $0x840] sm:$0xf]
    %v564 = vld [vmem:[%s1 + $0x844] sm:$0xf]
    %v565 = vld [vmem:[%s1 + $0x848] sm:$0xf]
    %v566 = vld [vmem:[%s1 + $0x84c] sm:$0xf]
    %v567 = vld [vmem:[%s1 + $0x850] sm:$0xf]
    %v568 = vld [vmem:[%s1 + $0x854] sm:$0xf]
    %v569 = vld [vmem:[%s1 + $0x858] sm:$0xf]
    %v570 = vld [vmem:[%s1 + $0x85c] sm:$0xf]
    %v571 = vld [vmem:[%s1 + $0x860] sm:$0xf]
    %v572 = vld [vmem:[%s1 + $0x864] sm:$0xf]
    %v573 = vld [vmem:[%s1 + $0x868] sm:$0xf]
    %v574 = vld [vmem:[%s1 + $0x86c] sm:$0xf]
    %v575 = vld [vmem:[%s1 + $0x870] sm:$0xf]
    %v576 = vld [vmem:[%s1 + $0x874] sm:$0xf]
    %v577 = vld [vmem:[%s1 + $0x878] sm:$0xf]
    %v578 = vld [vmem:[%s1 + $0x87c] sm:$0xf]
    %v579 = vld [vmem:[%s1 + $0x880] sm:$0xf]
    %v580 = vld [vmem:[%s1 + $0x884] sm:$0xf]
    %v581 = vld [vmem:[%s1 + $0x888] sm:$0xf]
    %v582 = vld [vmem:[%s1 + $0x88c] sm:$0xf]
    %v583 = vld [vmem:[%s1 + $0x890] sm:$0xf]
    %v584 = vld [vmem:[%s1 + $0x894] sm:$0xf]
    %v585 = vld [vmem:[%s1 + $0x898] sm:$0xf]
    %v586 = vld [vmem:[%s1 + $0x89c] sm:$0xf]
    %v587 = vld [vmem:[%s1 + $0x8a0] sm:$0xf]
    %v588 = vld [vmem:[%s1 + $0x8a4] sm:$0xf]
    %v589 = vld [vmem:[%s1 + $0x8a8] sm:$0xf]
    %v590 = vld [vmem:[%s1 + $0x8ac] sm:$0xf]
    %v591 = vld [vmem:[%s1 + $0x8b0] sm:$0xf]
    %v592 = vld [vmem:[%s1 + $0x8b4] sm:$0xf]
    %v593 = vld [vmem:[%s1 + $0x8b8] sm:$0xf]
    %v594 = vld [vmem:[%s1 + $0x8bc] sm:$0xf]
    %v595 = vld [vmem:[%s1 + $0x8c0] sm:$0xf]
    %v596 = vld [vmem:[%s1 + $0x8c4] sm:$0xf]
    %v597 = vld [vmem:[%s1 + $0x8c8] sm:$0xf]
    %v598 = vld [vmem:[%s1 + $0x8cc] sm:$0xf]
    %v599 = vld [vmem:[%s1 + $0x8d0] sm:$0xf]
    %v600 = vld [vmem:[%s1 + $0x8d4] sm:$0xf]
    %v601 = vld [vmem:[%s1 + $0x8d8] sm:$0xf]
    %v602 = vld [vmem:[%s1 + $0x8dc] sm:$0xf]
    %v603 = vld [vmem:[%s1 + $0x8e0] sm:$0xf]
    %v604 = vld [vmem:[%s1 + $0x8e4] sm:$0xf]
    %v605 = vld [vmem:[%s1 + $0x8e8] sm:$0xf]
    %v606 = vld [vmem:[%s1 + $0x8ec] sm:$0xf]
    %v607 = vld [vmem:[%s1 + $0x8f0] sm:$0xf]
    %v608 = vld [vmem:[%s1 + $0x8f4] sm:$0xf]
    %v609 = vld [vmem:[%s1 + $0x8f8] sm:$0xf]
    %v610 = vld [vmem:[%s1 + $0x8fc] sm:$0xf]
    %v611 = vld [vmem:[%s1 + $0x900] sm:$0xf]
    %v612 = vld [vmem:[%s1 + $0x904] sm:$0xf]
    %v613 = vld [vmem:[%s1 + $0x908] sm:$0xf]
    %v614 = vld [vmem:[%s1 + $0x90c] sm:$0xf]
    %v615 = vld [vmem:[%s1 + $0x910] sm:$0xf]
    %v616 = vld [vmem:[%s1 + $0x914] sm:$0xf]
    %v617 = vld [vmem:[%s1 + $0x918] sm:$0xf]
    %v618 = vld [vmem:[%s1 + $0x91c] sm:$0xf]
    %v619 = vld [vmem:[%s1 + $0x920] sm:$0xf]
    %v620 = vld [vmem:[%s1 + $0x924] sm:$0xf]
    %v621 = vld [vmem:[%s1 + $0x928] sm:$0xf]
    %v622 = vld [vmem:[%s1 + $0x92c] sm:$0xf]
    %v623 = vld [vmem:[%s1 + $0x930] sm:$0xf]
    %v624 = vld [vmem:[%s1 + $0x934] sm:$0xf]
    %v625 = vld [vmem:[%s1 + $0x938] sm:$0xf]
    %v626 = vld [vmem:[%s1 + $0x93c] sm:$0xf]
    %v627 = vld [vmem:[%s1 + $0x940] sm:$0xf]
    %v628 = vld [vmem:[%s1 + $0x944] sm:$0xf]
    %v629 = vld [vmem:[%s1 + $0x948] sm:$0xf]
    %v630 = vld [vmem:[%s1 + $0x94c] sm:$0xf]
    %v631 = vld [vmem:[%s1 + $0x950] sm:$0xf]
    %v632 = vld [vmem:[%s1 + $0x954] sm:$0xf]
    %v633 = vld [vmem:[%s1 + $0x958] sm:$0xf]
    %v634 = vld [vmem:[%s1 + $0x95c] sm:$0xf]
    %v635 = vld [vmem:[%s1 + $0x960] sm:$0xf]
    %v636 = vld [vmem:[%s1 + $0x964] sm:$0xf]
    %v637 = vld [vmem:[%s1 + $0x968] sm:$0xf]
    %v638 = vld [vmem:[%s1 + $0x96c] sm:$0xf]
    %v639 = vld [vmem:[%s1 + $0x970] sm:$0xf]
    %v640 = vld [vmem:[%s1 + $0x974] sm:$0xf]
    %v641 = vld [vmem:[%s1 + $0x978] sm:$0xf]
    %v642 = vld [vmem:[%s1 + $0x97c] sm:$0xf]
    %v643 = vld [vmem:[%s1 + $0x980] sm:$0xf]
    %v644 = vld [vmem:[%s1 + $0x984] sm:$0xf]
    %v645 = vld [vmem:[%s1 + $0x988] sm:$0xf]
    %v646 = vld [vmem:[%s1 + $0x98c] sm:$0xf]
    %v647 = vld [vmem:[%s1 + $0x990] sm:$0xf]
    %v648 = vld [vmem:[%s1 + $0x994] sm:$0xf]
    %v649 = vld [vmem:[%s1 + $0x998] sm:$0xf]
    %v650 = vld [vmem:[%s1 + $0x99c] sm:$0xf]
    %v651 = vld [vmem:[%s1 + $0x9a0] sm:$0xf]
    %v652 = vld [vmem:[%s1 + $0x9a4] sm:$0xf]
    %v653 = vld [vmem:[%s1 + $0x9a8] sm:$0xf]
    %v654 = vld [vmem:[%s1 + $0x9ac] sm:$0xf]
    %v655 = vld [vmem:[%s1 + $0x9b0] sm:$0xf]
    %v656 = vld [vmem:[%s1 + $0x9b4] sm:$0xf]
    %v657 = vld [vmem:[%s1 + $0x9b8] sm:$0xf]
    %v658 = vld [vmem:[%s1 + $0x9bc] sm:$0xf]
    %v659 = vld [vmem:[%s1 + $0x9c0] sm:$0xf]
    %v660 = vld [vmem:[%s1 + $0x9c4] sm:$0xf]
    %v661 = vld [vmem:[%s1 + $0x9c8] sm:$0xf]
    %v662 = vld [vmem:[%s1 + $0x9cc] sm:$0xf]
    %v663 = vld [vmem:[%s1 + $0x9d0] sm:$0xf]
    %v664 = vld [vmem:[%s1 + $0x9d4] sm:$0xf]
    %v665 = vld [vmem:[%s1 + $0x9d8] sm:$0xf]
    %v666 = vld [vmem:[%s1 + $0x9dc] sm:$0xf]
    %v667 = vld [vmem:[%s1 + $0x9e0] sm:$0xf]
    %v668 = vld [vmem:[%s1 + $0x9e4] sm:$0xf]
    %v669 = vld [vmem:[%s1 + $0x9e8] sm:$0xf]
    %v670 = vld [vmem:[%s1 + $0x9ec] sm:$0xf]
    %v671 = vld [vmem:[%s1 + $0x9f0] sm:$0xf]
    %v672 = vld [vmem:[%s1 + $0x9f4] sm:$0xf]
    %v673 = vld [vmem:[%s1 + $0x9f8] sm:$0xf]
    %v674 = vld [vmem:[%s1 + $0x9fc] sm:$0xf]
    %v675 = vld [vmem:[%s1 + $0xa00] sm:$0xf]
    %v676 = vld [vmem:[%s1 + $0xa04] sm:$0xf]
    %v677 = vld [vmem:[%s1 + $0xa08] sm:$0xf]
    %v678 = vld [vmem:[%s1 + $0xa0c] sm:$0xf]
    %v679 = vld [vmem:[%s1 + $0xa10] sm:$0xf]
    %v680 = vld [vmem:[%s1 + $0xa14] sm:$0xf]
    %v681 = vld [vmem:[%s1 + $0xa18] sm:$0xf]
    %v682 = vld [vmem:[%s1 + $0xa1c] sm:$0xf]
    %v683 = vld [vmem:[%s1 + $0xa20] sm:$0xf]
    %v684 = vld [vmem:[%s1 + $0xa24] sm:$0xf]
    %v685 = vld [vmem:[%s1 + $0xa28] sm:$0xf]
    %v686 = vld [vmem:[%s1 + $0xa2c] sm:$0xf]
    %v687 = vld [vmem:[%s1 + $0xa30] sm:$0xf]
    %v688 = vld [vmem:[%s1 + $0xa34] sm:$0xf]
    %v689 = vld [vmem:[%s1 + $0xa38] sm:$0xf]
    %v690 = vld [vmem:[%s1 + $0xa3c] sm:$0xf]
    %v691 = vld [vmem:[%s1 + $0xa40] sm:$0xf]
    %v692 = vld [vmem:[%s1 + $0xa44] sm:$0xf]
    %v693 = vld [vmem:[%s1 + $0xa48] sm:$0xf]
    %v694 = vld [vmem:[%s1 + $0xa4c] sm:$0xf]
    %v695 = vld [vmem:[%s1 + $0xa50] sm:$0xf]
    %v696 = vld [vmem:[%s1 + $0xa54] sm:$0xf]
    %v697 = vld [vmem:[%s1 + $0xa58] sm:$0xf]
    %v698 = vld [vmem:[%s1 + $0xa5c] sm:$0xf]
    %v699 = vld [vmem:[%s1 + $0xa60] sm:$0xf]
    %v700 = vld [vmem:[%s1 + $0xa64] sm:$0xf]
    %v701 = vld [vmem:[%s1 + $0xa68] sm:$0xf]
    %v702 = vld [vmem:[%s1 + $0xa6c] sm:$0xf]
    %v703 = vld [vmem:[%s1 + $0xa70] sm:$0xf]
    %v704 = vld [vmem:[%s1 + $0xa74] sm:$0xf]
    %v705 = vld [vmem:[%s1 + $0xa78] sm:$0xf]
    %v706 = vld [vmem:[%s1 + $0xa7c] sm:$0xf]
    %v707 = vld [vmem:[%s1 + $0xa80] sm:$0xf]
    %v708 = vld [vmem:[%s1 + $0xa84] sm:$0xf]
    %v709 = vld [vmem:[%s1 + $0xa88] sm:$0xf]
    %v710 = vld [vmem:[%s1 + $0xa8c] sm:$0xf]
    %v711 = vld [vmem:[%s1 + $0xa90] sm:$0xf]
    %v712 = vld [vmem:[%s1 + $0xa94] sm:$0xf]
    %v713 = vld [vmem:[%s1 + $0xa98] sm:$0xf]
    %v714 = vld [vmem:[%s1 + $0xa9c] sm:$0xf]
    %v715 = vld [vmem:[%s1 + $0xaa0] sm:$0xf]
    %v716 = vld [vmem:[%s1 + $0xaa4] sm:$0xf]
    %v717 = vld [vmem:[%s1 + $0xaa8] sm:$0xf]
    %v718 = vld [vmem:[%s1 + $0xaac] sm:$0xf]
    %v719 = vld [vmem:[%s1 + $0xab0] sm:$0xf]
    %v720 = vld [vmem:[%s1 + $0xab4] sm:$0xf]
    %v721 = vld [vmem:[%s1 + $0xab8] sm:$0xf]
    %v722 = vld [vmem:[%s1 + $0xabc] sm:$0xf]
    %v723 = vld [vmem:[%s1 + $0xac0] sm:$0xf]
    %v724 = vld [vmem:[%s1 + $0xac4] sm:$0xf]
    %v725 = vld [vmem:[%s1 + $0xac8] sm:$0xf]
    %v726 = vld [vmem:[%s1 + $0xacc] sm:$0xf]
    %v727 = vld [vmem:[%s1 + $0xad0] sm:$0xf]
    %v728 = vld [vmem:[%s1 + $0xad4] sm:$0xf]
    %v729 = vld [vmem:[%s1 + $0xad8] sm:$0xf]
    %v730 = vld [vmem:[%s1 + $0xadc] sm:$0xf]
    %v731 = vld [vmem:[%s1 + $0xae0] sm:$0xf]
    %v732 = vld [vmem:[%s1 + $0xae4] sm:$0xf]
    %v733 = vld [vmem:[%s1 + $0xae8] sm:$0xf]
    %v734 = vld [vmem:[%s1 + $0xaec] sm:$0xf]
    %v735 = vld [vmem:[%s1 + $0xaf0] sm:$0xf]
    %v736 = vld [vmem:[%s1 + $0xaf4] sm:$0xf]
    %v737 = vld [vmem:[%s1 + $0xaf8] sm:$0xf]
    %v738 = vld [vmem:[%s1 + $0xafc] sm:$0xf]
    %v739 = vld [vmem:[%s1 + $0xb00] sm:$0xf]
    %v740 = vld [vmem:[%s1 + $0xb04] sm:$0xf]
    %v741 = vld [vmem:[%s1 + $0xb08] sm:$0xf]
    %v742 = vld [vmem:[%s1 + $0xb0c] sm:$0xf]
    %v743 = vld [vmem:[%s1 + $0xb10] sm:$0xf]
    %v744 = vld [vmem:[%s1 + $0xb14] sm:$0xf]
    %v745 = vld [vmem:[%s1 + $0xb18] sm:$0xf]
    %v746 = vld [vmem:[%s1 + $0xb1c] sm:$0xf]
    %v747 = vld [vmem:[%s1 + $0xb20] sm:$0xf]
    %v748 = vld [vmem:[%s1 + $0xb24] sm:$0xf]
    %v749 = vld [vmem:[%s1 + $0xb28] sm:$0xf]
    %v750 = vld [vmem:[%s1 + $0xb2c] sm:$0xf]
    %v751 = vld [vmem:[%s1 + $0xb30] sm:$0xf]
    %v752 = vld [vmem:[%s1 + $0xb34] sm:$0xf]
    %v753 = vld [vmem:[%s1 + $0xb38] sm:$0xf]
    %v754 = vld [vmem:[%s1 + $0xb3c] sm:$0xf]
    %v755 = vld [vmem:[%s1 + $0xb40] sm:$0xf]
    %v756 = vld [vmem:[%s1 + $0xb44] sm:$0xf]
    %v757 = vld [vmem:[%s1 + $0xb48] sm:$0xf]
    %v758 = vld [vmem:[%s1 + $0xb4c] sm:$0xf]
    %v759 = vld [vmem:[%s1 + $0xb50] sm:$0xf]
    %v760 = vld [vmem:[%s1 + $0xb54] sm:$0xf]
    %v761 = vld [vmem:[%s1 + $0xb58] sm:$0xf]
    %v762 = vld [vmem:[%s1 + $0xb5c] sm:$0xf]
    %v763 = vld [vmem:[%s1 + $0xb60] sm:$0xf]
    %v764 = vld [vmem:[%s1 + $0xb64] sm:$0xf]
    %v765 = vld [vmem:[%s1 + $0xb68] sm:$0xf]
    %v766 = vld [vmem:[%s1 + $0xb6c] sm:$0xf]
    %v767 = vld [vmem:[%s1 + $0xb70] sm:$0xf]
    %v768 = vld [vmem:[%s1 + $0xb74] sm:$0xf]
    %v769 = vld [vmem:[%s1 + $0xb78] sm:$0xf]
    %v770 = vld [vmem:[%s1 + $0xb7c] sm:$0xf]
    %v771 = vld [vmem:[%s1 + $0xb80] sm:$0xf]
    %v772 = vld [vmem:[%s1 + $0xb84] sm:$0xf]
    %v773 = vld [vmem:[%s1 + $0xb88] sm:$0xf]
    %v774 = vld [vmem:[%s1 + $0xb8c] sm:$0xf]
    %v775 = vld [vmem:[%s1 + $0xb90] sm:$0xf]
    %v776 = vld [vmem:[%s1 + $0xb94] sm:$0xf]
    %v777 = vld [vmem:[%s1 + $0xb98] sm:$0xf]
    %v778 = vld [vmem:[%s1 + $0xb9c] sm:$0xf]
    %v779 = vld [vmem:[%s1 + $0xba0] sm:$0xf]
    %v780 = vld [vmem:[%s1 + $0xba4] sm:$0xf]
    %v781 = vld [vmem:[%s1 + $0xba8] sm:$0xf]
    %v782 = vld [vmem:[%s1 + $0xbac] sm:$0xf]
    %v783 = vld [vmem:[%s1 + $0xbb0] sm:$0xf]
    %v784 = vld [vmem:[%s1 + $0xbb4] sm:$0xf]
    %v785 = vld [vmem:[%s1 + $0xbb8] sm:$0xf]
    %v786 = vld [vmem:[%s1 + $0xbbc] sm:$0xf]
    %v787 = vld [vmem:[%s1 + $0xbc0] sm:$0xf]
    %v788 = vld [vmem:[%s1 + $0xbc4] sm:$0xf]
    %v789 = vld [vmem:[%s1 + $0xbc8] sm:$0xf]
    %v790 = vld [vmem:[%s1 + $0xbcc] sm:$0xf]
    %v791 = vld [vmem:[%s1 + $0xbd0] sm:$0xf]
    %v792 = vld [vmem:[%s1 + $0xbd4] sm:$0xf]
    %v793 = vld [vmem:[%s1 + $0xbd8] sm:$0xf]
    %v794 = vld [vmem:[%s1 + $0xbdc] sm:$0xf]
    %v795 = vld [vmem:[%s1 + $0xbe0] sm:$0xf]
    %v796 = vld [vmem:[%s1 + $0xbe4] sm:$0xf]
    %v797 = vld [vmem:[%s1 + $0xbe8] sm:$0xf]
    %v798 = vld [vmem:[%s1 + $0xbec] sm:$0xf]
    %v799 = vld [vmem:[%s1 + $0xbf0] sm:$0xf]
    %v800 = vld [vmem:[%s1 + $0xbf4] sm:$0xf]
    %v801 = vld [vmem:[%s1 + $0xbf8] sm:$0xf]
    %v802 = vld [vmem:[%s1 + $0xbfc] sm:$0xf]
    %v803 = vld [vmem:[%s1 + $0xc00] sm:$0xf]
    %v804 = vld [vmem:[%s1 + $0xc04] sm:$0xf]
    %v805 = vld [vmem:[%s1 + $0xc08] sm:$0xf]
    %v806 = vld [vmem:[%s1 + $0xc0c] sm:$0xf]
    %v807 = vld [vmem:[%s1 + $0xc10] sm:$0xf]
    %v808 = vld [vmem:[%s1 + $0xc14] sm:$0xf]
    %v809 = vld [vmem:[%s1 + $0xc18] sm:$0xf]
    %v810 = vld [vmem:[%s1 + $0xc1c] sm:$0xf]
    %v811 = vld [vmem:[%s1 + $0xc20] sm:$0xf]
    %v812 = vld [vmem:[%s1 + $0xc24] sm:$0xf]
    %v813 = vld [vmem:[%s1 + $0xc28] sm:$0xf]
    %v814 = vld [vmem:[%s1 + $0xc2c] sm:$0xf]
    %v815 = vld [vmem:[%s1 + $0xc30] sm:$0xf]
    %v816 = vld [vmem:[%s1 + $0xc34] sm:$0xf]
    %v817 = vld [vmem:[%s1 + $0xc38] sm:$0xf]
    %v818 = vld [vmem:[%s1 + $0xc3c] sm:$0xf]
    %v819 = vld [vmem:[%s1 + $0xc40] sm:$0xf]
    %v820 = vld [vmem:[%s1 + $0xc44] sm:$0xf]
    %v821 = vld [vmem:[%s1 + $0xc48] sm:$0xf]
    %v822 = vld [vmem:[%s1 + $0xc4c] sm:$0xf]
    %v823 = vld [vmem:[%s1 + $0xc50] sm:$0xf]
    %v824 = vld [vmem:[%s1 + $0xc54] sm:$0xf]
    %v825 = vld [vmem:[%s1 + $0xc58] sm:$0xf]
    %v826 = vld [vmem:[%s1 + $0xc5c] sm:$0xf]
    %v827 = vld [vmem:[%s1 + $0xc60] sm:$0xf]
    %v828 = vld [vmem:[%s1 + $0xc64] sm:$0xf]
    %v829 = vld [vmem:[%s1 + $0xc68] sm:$0xf]
    %v830 = vld [vmem:[%s1 + $0xc6c] sm:$0xf]
    %v831 = vld [vmem:[%s1 + $0xc70] sm:$0xf]
    %v832 = vld [vmem:[%s1 + $0xc74] sm:$0xf]
    %v833 = vld [vmem:[%s1 + $0xc78] sm:$0xf]
    %v834 = vld [vmem:[%s1 + $0xc7c] sm:$0xf]
    %v835 = vld [vmem:[%s1 + $0xc80] sm:$0xf]
    %v836 = vld [vmem:[%s1 + $0xc84] sm:$0xf]
    %v837 = vld [vmem:[%s1 + $0xc88] sm:$0xf]
    %v838 = vld [vmem:[%s1 + $0xc8c] sm:$0xf]
    %v839 = vld [vmem:[%s1 + $0xc90] sm:$0xf]
    %v840 = vld [vmem:[%s1 + $0xc94] sm:$0xf]
    %v841 = vld [vmem:[%s1 + $0xc98] sm:$0xf]
    %v842 = vld [vmem:[%s1 + $0xc9c] sm:$0xf]
    %v843 = vld [vmem:[%s1 + $0xca0] sm:$0xf]
    %v844 = vld [vmem:[%s1 + $0xca4] sm:$0xf]
    %v845 = vld [vmem:[%s1 + $0xca8] sm:$0xf]
    %v846 = vld [vmem:[%s1 + $0xcac] sm:$0xf]
    %v847 = vld [vmem:[%s1 + $0xcb0] sm:$0xf]
    %v848 = vld [vmem:[%s1 + $0xcb4] sm:$0xf]
    %v849 = vld [vmem:[%s1 + $0xcb8] sm:$0xf]
    %v850 = vld [vmem:[%s1 + $0xcbc] sm:$0xf]
    %v851 = vld [vmem:[%s1 + $0xcc0] sm:$0xf]
    %v852 = vld [vmem:[%s1 + $0xcc4] sm:$0xf]
    %v853 = vld [vmem:[%s1 + $0xcc8] sm:$0xf]
    %v854 = vld [vmem:[%s1 + $0xccc] sm:$0xf]
    %v855 = vld [vmem:[%s1 + $0xcd0] sm:$0xf]
    %v856 = vld [vmem:[%s1 + $0xcd4] sm:$0xf]
    %v857 = vld [vmem:[%s1 + $0xcd8] sm:$0xf]
    %v858 = vld [vmem:[%s1 + $0xcdc] sm:$0xf]
    %v859 = vld [vmem:[%s1 + $0xce0] sm:$0xf]
    %v860 = vld [vmem:[%s1 + $0xce4] sm:$0xf]
    %v861 = vld [vmem:[%s1 + $0xce8] sm:$0xf]
    %v862 = vld [vmem:[%s1 + $0xcec] sm:$0xf]
    %v863 = vld [vmem:[%s1 + $0xcf0] sm:$0xf]
    %v864 = vld [vmem:[%s1 + $0xcf4] sm:$0xf]
    %v865 = vld [vmem:[%s1 + $0xcf8] sm:$0xf]
    %v866 = vld [vmem:[%s1 + $0xcfc] sm:$0xf]
    %v867 = vld [vmem:[%s1 + $0xd00] sm:$0xf]
    %v868 = vld [vmem:[%s1 + $0xd04] sm:$0xf]
    %v869 = vld [vmem:[%s1 + $0xd08] sm:$0xf]
    %v870 = vld [vmem:[%s1 + $0xd0c] sm:$0xf]
    %v871 = vld [vmem:[%s1 + $0xd10] sm:$0xf]
    %v872 = vld [vmem:[%s1 + $0xd14] sm:$0xf]
    %v873 = vld [vmem:[%s1 + $0xd18] sm:$0xf]
    %v874 = vld [vmem:[%s1 + $0xd1c] sm:$0xf]
    %v875 = vld [vmem:[%s1 + $0xd20] sm:$0xf]
    %v876 = vld [vmem:[%s1 + $0xd24] sm:$0xf]
    %v877 = vld [vmem:[%s1 + $0xd28] sm:$0xf]
    %v878 = vld [vmem:[%s1 + $0xd2c] sm:$0xf]
    %v879 = vld [vmem:[%s1 + $0xd30] sm:$0xf]
    %v880 = vld [vmem:[%s1 + $0xd34] sm:$0xf]
    %v881 = vld [vmem:[%s1 + $0xd38] sm:$0xf]
    %v882 = vld [vmem:[%s1 + $0xd3c] sm:$0xf]
    %v883 = vld [vmem:[%s1 + $0xd40] sm:$0xf]
    %v884 = vld [vmem:[%s1 + $0xd44] sm:$0xf]
    %v885 = vld [vmem:[%s1 + $0xd48] sm:$0xf]
    %v886 = vld [vmem:[%s1 + $0xd4c] sm:$0xf]
    %v887 = vld [vmem:[%s1 + $0xd50] sm:$0xf]
    %v888 = vld [vmem:[%s1 + $0xd54] sm:$0xf]
    %v889 = vld [vmem:[%s1 + $0xd58] sm:$0xf]
    %v890 = vld [vmem:[%s1 + $0xd5c] sm:$0xf]
    %v891 = vld [vmem:[%s1 + $0xd60] sm:$0xf]
    %v892 = vld [vmem:[%s1 + $0xd64] sm:$0xf]
    %v893 = vld [vmem:[%s1 + $0xd68] sm:$0xf]
    %v894 = vld [vmem:[%s1 + $0xd6c] sm:$0xf]
    %v895 = vld [vmem:[%s1 + $0xd70] sm:$0xf]
    %v896 = vld [vmem:[%s1 + $0xd74] sm:$0xf]
    %v897 = vld [vmem:[%s1 + $0xd78] sm:$0xf]
    %v898 = vld [vmem:[%s1 + $0xd7c] sm:$0xf]
    %v899 = vld [vmem:[%s1 + $0xd80] sm:$0xf]
    %v900 = vld [vmem:[%s1 + $0xd84] sm:$0xf]
    %v901 = vld [vmem:[%s1 + $0xd88] sm:$0xf]
    %v902 = vld [vmem:[%s1 + $0xd8c] sm:$0xf]
    %v903 = vld [vmem:[%s1 + $0xd90] sm:$0xf]
    %v904 = vld [vmem:[%s1 + $0xd94] sm:$0xf]
    %v905 = vld [vmem:[%s1 + $0xd98] sm:$0xf]
    %v906 = vld [vmem:[%s1 + $0xd9c] sm:$0xf]
    %v907 = vld [vmem:[%s1 + $0xda0] sm:$0xf]
    %v908 = vld [vmem:[%s1 + $0xda4] sm:$0xf]
    %v909 = vld [vmem:[%s1 + $0xda8] sm:$0xf]
    %v910 = vld [vmem:[%s1 + $0xdac] sm:$0xf]
    %v911 = vld [vmem:[%s1 + $0xdb0] sm:$0xf]
    %v912 = vld [vmem:[%s1 + $0xdb4] sm:$0xf]
    %v913 = vld [vmem:[%s1 + $0xdb8] sm:$0xf]
    %v914 = vld [vmem:[%s1 + $0xdbc] sm:$0xf]
    %v915 = vld [vmem:[%s1 + $0xdc0] sm:$0xf]
    %v916 = vld [vmem:[%s1 + $0xdc4] sm:$0xf]
    %v917 = vld [vmem:[%s1 + $0xdc8] sm:$0xf]
    %v918 = vld [vmem:[%s1 + $0xdcc] sm:$0xf]
    %v919 = vld [vmem:[%s1 + $0xdd0] sm:$0xf]
    %v920 = vld [vmem:[%s1 + $0xdd4] sm:$0xf]
    %v921 = vld [vmem:[%s1 + $0xdd8] sm:$0xf]
    %v922 = vld [vmem:[%s1 + $0xddc] sm:$0xf]
    %v923 = vld [vmem:[%s1 + $0xde0] sm:$0xf]
    %v924 = vld [vmem:[%s1 + $0xde4] sm:$0xf]
    %v925 = vld [vmem:[%s1 + $0xde8] sm:$0xf]
    %v926 = vld [vmem:[%s1 + $0xdec] sm:$0xf]
    %v927 = vld [vmem:[%s1 + $0xdf0] sm:$0xf]
    %v928 = vld [vmem:[%s1 + $0xdf4] sm:$0xf]
    %v929 = vld [vmem:[%s1 + $0xdf8] sm:$0xf]
    %v930 = vld [vmem:[%s1 + $0xdfc] sm:$0xf]
    %v931 = vld [vmem:[%s1 + $0xe00] sm:$0xf]
    %v932 = vld [vmem:[%s1 + $0xe04] sm:$0xf]
    %v933 = vld [vmem:[%s1 + $0xe08] sm:$0xf]
    %v934 = vld [vmem:[%s1 + $0xe0c] sm:$0xf]
    %v935 = vld [vmem:[%s1 + $0xe10] sm:$0xf]
    %v936 = vld [vmem:[%s1 + $0xe14] sm:$0xf]
    %v937 = vld [vmem:[%s1 + $0xe18] sm:$0xf]
    %v938 = vld [vmem:[%s1 + $0xe1c] sm:$0xf]
    %v939 = vld [vmem:[%s1 + $0xe20] sm:$0xf]
    %v940 = vld [vmem:[%s1 + $0xe24] sm:$0xf]
    %v941 = vld [vmem:[%s1 + $0xe28] sm:$0xf]
    %v942 = vld [vmem:[%s1 + $0xe2c] sm:$0xf]
    %v943 = vld [vmem:[%s1 + $0xe30] sm:$0xf]
    %v944 = vld [vmem:[%s1 + $0xe34] sm:$0xf]
    %v945 = vld [vmem:[%s1 + $0xe38] sm:$0xf]
    %v946 = vld [vmem:[%s1 + $0xe3c] sm:$0xf]
    %v947 = vld [vmem:[%s1 + $0xe40] sm:$0xf]
    %v948 = vld [vmem:[%s1 + $0xe44] sm:$0xf]
    %v949 = vld [vmem:[%s1 + $0xe48] sm:$0xf]
    %v950 = vld [vmem:[%s1 + $0xe4c] sm:$0xf]
    %v951 = vld [vmem:[%s1 + $0xe50] sm:$0xf]
    %v952 = vld [vmem:[%s1 + $0xe54] sm:$0xf]
    %v953 = vld [vmem:[%s1 + $0xe58] sm:$0xf]
    %v954 = vld [vmem:[%s1 + $0xe5c] sm:$0xf]
    %v955 = vld [vmem:[%s1 + $0xe60] sm:$0xf]
    %v956 = vld [vmem:[%s1 + $0xe64] sm:$0xf]
    %v957 = vld [vmem:[%s1 + $0xe68] sm:$0xf]
    %v958 = vld [vmem:[%s1 + $0xe6c] sm:$0xf]
    %v959 = vld [vmem:[%s1 + $0xe70] sm:$0xf]
    %v960 = vld [vmem:[%s1 + $0xe74] sm:$0xf]
    %v961 = vld [vmem:[%s1 + $0xe78] sm:$0xf]
    %v962 = vld [vmem:[%s1 + $0xe7c] sm:$0xf]
    %v963 = vld [vmem:[%s1 + $0xe80] sm:$0xf]
    %v964 = vld [vmem:[%s1 + $0xe84] sm:$0xf]
    %v965 = vld [vmem:[%s1 + $0xe88] sm:$0xf]
    %v966 = vld [vmem:[%s1 + $0xe8c] sm:$0xf]
    %v967 = vld [vmem:[%s1 + $0xe90] sm:$0xf]
    %v968 = vld [vmem:[%s1 + $0xe94] sm:$0xf]
    %v969 = vld [vmem:[%s1 + $0xe98] sm:$0xf]
    %v970 = vld [vmem:[%s1 + $0xe9c] sm:$0xf]
    %v971 = vld [vmem:[%s1 + $0xea0] sm:$0xf]
    %v972 = vld [vmem:[%s1 + $0xea4] sm:$0xf]
    %v973 = vld [vmem:[%s1 + $0xea8] sm:$0xf]
    %v974 = vld [vmem:[%s1 + $0xeac] sm:$0xf]
    %v975 = vld [vmem:[%s1 + $0xeb0] sm:$0xf]
    %v976 = vld [vmem:[%s1 + $0xeb4] sm:$0xf]
    %v977 = vld [vmem:[%s1 + $0xeb8] sm:$0xf]
    %v978 = vld [vmem:[%s1 + $0xebc] sm:$0xf]
    %v979 = vld [vmem:[%s1 + $0xec0] sm:$0xf]
    %v980 = vld [vmem:[%s1 + $0xec4] sm:$0xf]
    %v981 = vld [vmem:[%s1 + $0xec8] sm:$0xf]
    %v982 = vld [vmem:[%s1 + $0xecc] sm:$0xf]
    %v983 = vld [vmem:[%s1 + $0xed0] sm:$0xf]
    %v984 = vld [vmem:[%s1 + $0xed4] sm:$0xf]
    %v985 = vld [vmem:[%s1 + $0xed8] sm:$0xf]
    %v986 = vld [vmem:[%s1 + $0xedc] sm:$0xf]
    %v987 = vld [vmem:[%s1 + $0xee0] sm:$0xf]
    %v988 = vld [vmem:[%s1 + $0xee4] sm:$0xf]
    %v989 = vld [vmem:[%s1 + $0xee8] sm:$0xf]
    %v990 = vld [vmem:[%s1 + $0xeec] sm:$0xf]
    %v991 = vld [vmem:[%s1 + $0xef0] sm:$0xf]
    %v992 = vld [vmem:[%s1 + $0xef4] sm:$0xf]
    %v993 = vld [vmem:[%s1 + $0xef8] sm:$0xf]
    %v994 = vld [vmem:[%s1 + $0xefc] sm:$0xf]
    %v995 = vld [vmem:[%s1 + $0xf00] sm:$0xf]
    %v996 = vld [vmem:[%s1 + $0xf04] sm:$0xf]
    %v997 = vld [vmem:[%s1 + $0xf08] sm:$0xf]
    %v998 = vld [vmem:[%s1 + $0xf0c] sm:$0xf]
    %v999 = vld [vmem:[%s1 + $0xf10] sm:$0xf]
    %v1000 = vld [vmem:[%s1 + $0xf14] sm:$0xf]
    %v1001 = vld [vmem:[%s1 + $0xf18] sm:$0xf]
    %v1002 = vld [vmem:[%s1 + $0xf1c] sm:$0xf]
    %v1003 = vld [vmem:[%s1 + $0xf20] sm:$0xf]
    %v1004 = vld [vmem:[%s1 + $0xf24] sm:$0xf]
    %v1005 = vld [vmem:[%s1 + $0xf28] sm:$0xf]
    %v1006 = vld [vmem:[%s1 + $0xf2c] sm:$0xf]
    %v1007 = vld [vmem:[%s1 + $0xf30] sm:$0xf]
    %v1008 = vld [vmem:[%s1 + $0xf34] sm:$0xf]
    %v1009 = vld [vmem:[%s1 + $0xf38] sm:$0xf]
    %v1010 = vld [vmem:[%s1 + $0xf3c] sm:$0xf]
    %v1011 = vld [vmem:[%s1 + $0xf40] sm:$0xf]
    %v1012 = vld [vmem:[%s1 + $0xf44] sm:$0xf]
    %v1013 = vld [vmem:[%s1 + $0xf48] sm:$0xf]
    %v1014 = vld [vmem:[%s1 + $0xf4c] sm:$0xf]
    %v1015 = vld [vmem:[%s1 + $0xf50] sm:$0xf]
    %v1016 = vld [vmem:[%s1 + $0xf54] sm:$0xf]
    %v1017 = vld [vmem:[%s1 + $0xf58] sm:$0xf]
    %v1018 = vld [vmem:[%s1 + $0xf5c] sm:$0xf]
    %v1019 = vld [vmem:[%s1 + $0xf60] sm:$0xf]
    %v1020 = vld [vmem:[%s1 + $0xf64] sm:$0xf]
    %v1021 = vld [vmem:[%s1 + $0xf68] sm:$0xf]
    %v1022 = vld [vmem:[%s1 + $0xf6c] sm:$0xf]
    %v1023 = vld [vmem:[%s1 + $0xf70] sm:$0xf]
    %v1024 = vld [vmem:[%s1 + $0xf74] sm:$0xf]
    %v1025 = vld [vmem:[%s1 + $0xf78] sm:$0xf]
    %v1026 = vld [vmem:[%s1 + $0xf7c] sm:$0xf]
    %v1027 = vld [vmem:[%s1 + $0xf80] sm:$0xf]
    %v1028 = vld [vmem:[%s1 + $0xf84] sm:$0xf]
    %v1029 = vld [vmem:[%s1 + $0xf88] sm:$0xf]
    %v1030 = vld [vmem:[%s1 + $0xf8c] sm:$0xf]
    %v1031 = vld [vmem:[%s1 + $0xf90] sm:$0xf]
    %v1032 = vld [vmem:[%s1 + $0xf94] sm:$0xf]
    %v1033 = vld [vmem:[%s1 + $0xf98] sm:$0xf]
    %v1034 = vld [vmem:[%s1 + $0xf9c] sm:$0xf]
    %v1035 = vld [vmem:[%s1 + $0xfa0] sm:$0xf]
    %v1036 = vld [vmem:[%s1 + $0xfa4] sm:$0xf]
    %v1037 = vld [vmem:[%s1 + $0xfa8] sm:$0xf]
    %v1038 = vld [vmem:[%s1 + $0xfac] sm:$0xf]
    %v1039 = vld [vmem:[%s1 + $0xfb0] sm:$0xf]
    %v1040 = vld [vmem:[%s1 + $0xfb4] sm:$0xf]
    %v1041 = vld [vmem:[%s1 + $0xfb8] sm:$0xf]
    %v1042 = vld [vmem:[%s1 + $0xfbc] sm:$0xf]
    %v1043 = vld [vmem:[%s1 + $0xfc0] sm:$0xf]
    %v1044 = vld [vmem:[%s1 + $0xfc4] sm:$0xf]
    %v1045 = vld [vmem:[%s1 + $0xfc8] sm:$0xf]
    %v1046 = vld [vmem:[%s1 + $0xfcc] sm:$0xf]
    %v1047 = vld [vmem:[%s1 + $0xfd0] sm:$0xf]
    %v1048 = vld [vmem:[%s1 + $0xfd4] sm:$0xf]
    %v1049 = vld [vmem:[%s1 + $0xfd8] sm:$0xf]
    %v1050 = vld [vmem:[%s1 + $0xfdc] sm:$0xf]
    %v1051 = vld [vmem:[%s1 + $0xfe0] sm:$0xf]
    %v1052 = vld [vmem:[%s1 + $0xfe4] sm:$0xf]
    %v1053 = vld [vmem:[%s1 + $0xfe8] sm:$0xf]
    %v1054 = vld [vmem:[%s1 + $0xfec] sm:$0xf]
    %v1055 = vld [vmem:[%s1 + $0xff0] sm:$0xf]
    %v1056 = vld [vmem:[%s1 + $0xff4] sm:$0xf]
    %v1057 = vld [vmem:[%s1 + $0xff8] sm:$0xf]
    %v1058 = vld [vmem:[%s1 + $0xffc] sm:$0xf]
    %v1059 = vld [vmem:[%s1 + $0x1000] sm:$0xf]
    %v1060 = vld [vmem:[%s1 + $0x1004] sm:$0xf]
    %v1061 = vld [vmem:[%s1 + $0x1008] sm:$0xf]
    %v1062 = vld [vmem:[%s1 + $0x100c] sm:$0xf]
    %v1063 = vld [vmem:[%s1 + $0x1010] sm:$0xf]
    %v1064 = vld [vmem:[%s1 + $0x1014] sm:$0xf]
    %v1065 = vld [vmem:[%s1 + $0x1018] sm:$0xf]
    %v1066 = vld [vmem:[%s1 + $0x101c] sm:$0xf]
    %v1067 = vld [vmem:[%s1 + $0x1020] sm:$0xf]
    %v1068 = vld [vmem:[%s1 + $0x1024] sm:$0xf]
    %v1069 = vld [vmem:[%s1 + $0x1028] sm:$0xf]
    %v1070 = vld [vmem:[%s1 + $0x102c] sm:$0xf]
    %v1071 = vld [vmem:[%s1 + $0x1030] sm:$0xf]
    %v1072 = vld [vmem:[%s1 + $0x1034] sm:$0xf]
    %v1073 = vld [vmem:[%s1 + $0x1038] sm:$0xf]
    %v1074 = vld [vmem:[%s1 + $0x103c] sm:$0xf]
    %v1075 = vld [vmem:[%s1 + $0x1040] sm:$0xf]
    %v1076 = vld [vmem:[%s1 + $0x1044] sm:$0xf]
    %v1077 = vld [vmem:[%s1 + $0x1048] sm:$0xf]
    %v1078 = vld [vmem:[%s1 + $0x104c] sm:$0xf]
    %v1079 = vld [vmem:[%s1 + $0x1050] sm:$0xf]
    %v1080 = vld [vmem:[%s1 + $0x1054] sm:$0xf]
    %v1081 = vld [vmem:[%s1 + $0x1058] sm:$0xf]
    %v1082 = vld [vmem:[%s1 + $0x105c] sm:$0xf]
    %v1083 = vld [vmem:[%s1 + $0x1060] sm:$0xf]
    %v1084 = vld [vmem:[%s1 + $0x1064] sm:$0xf]
    %v1085 = vld [vmem:[%s1 + $0x1068] sm:$0xf]
    %v1086 = vld [vmem:[%s1 + $0x106c] sm:$0xf]
    %v1087 = vld [vmem:[%s1 + $0x1070] sm:$0xf]
    %v1088 = vld [vmem:[%s1 + $0x1074] sm:$0xf]
    %v1089 = vld [vmem:[%s1 + $0x1078] sm:$0xf]
    %v1090 = vld [vmem:[%s1 + $0x107c] sm:$0xf]
    %v1091 = vld [vmem:[%s1 + $0x1080] sm:$0xf]
    %v1092 = vld [vmem:[%s1 + $0x1084] sm:$0xf]
    %v1093 = vld [vmem:[%s1 + $0x1088] sm:$0xf]
    %v1094 = vld [vmem:[%s1 + $0x108c] sm:$0xf]
    %v1095 = vld [vmem:[%s1 + $0x1090] sm:$0xf]
    %v1096 = vld [vmem:[%s1 + $0x1094] sm:$0xf]
    %v1097 = vld [vmem:[%s1 + $0x1098] sm:$0xf]
    %v1098 = vld [vmem:[%s1 + $0x109c] sm:$0xf]
    %v1099 = vld [vmem:[%s1 + $0x10a0] sm:$0xf]
    %v1100 = vld [vmem:[%s1 + $0x10a4] sm:$0xf]
    %v1101 = vld [vmem:[%s1 + $0x10a8] sm:$0xf]
    %v1102 = vld [vmem:[%s1 + $0x10ac] sm:$0xf]
    %v1103 = vld [vmem:[%s1 + $0x10b0] sm:$0xf]
    %v1104 = vld [vmem:[%s1 + $0x10b4] sm:$0xf]
    %v1105 = vld [vmem:[%s1 + $0x10b8] sm:$0xf]
    %v1106 = vld [vmem:[%s1 + $0x10bc] sm:$0xf]
    %v1107 = vld [vmem:[%s1 + $0x10c0] sm:$0xf]
    %v1108 = vld [vmem:[%s1 + $0x10c4] sm:$0xf]
    %v1109 = vld [vmem:[%s1 + $0x10c8] sm:$0xf]
    %v1110 = vld [vmem:[%s1 + $0x10cc] sm:$0xf]
    %v1111 = vld [vmem:[%s1 + $0x10d0] sm:$0xf]
    %v1112 = vld [vmem:[%s1 + $0x10d4] sm:$0xf]
    %v1113 = vld [vmem:[%s1 + $0x10d8] sm:$0xf]
    %v1114 = vld [vmem:[%s1 + $0x10dc] sm:$0xf]
    %v1115 = vld [vmem:[%s1 + $0x10e0] sm:$0xf]
    %v1116 = vld [vmem:[%s1 + $0x10e4] sm:$0xf]
    %v1117 = vld [vmem:[%s1 + $0x10e8] sm:$0xf]
    %v1118 = vld [vmem:[%s1 + $0x10ec] sm:$0xf]
    %v1119 = vld [vmem:[%s1 + $0x10f0] sm:$0xf]
    %v1120 = vld [vmem:[%s1 + $0x10f4] sm:$0xf]
    %v1121 = vld [vmem:[%s1 + $0x10f8] sm:$0xf]
    %v1122 = vld [vmem:[%s1 + $0x10fc] sm:$0xf]
    %v1123 = vld [vmem:[%s1 + $0x1100] sm:$0xf]
    %v1124 = vld [vmem:[%s1 + $0x1104] sm:$0xf]
    %v1125 = vld [vmem:[%s1 + $0x1108] sm:$0xf]
    %v1126 = vld [vmem:[%s1 + $0x110c] sm:$0xf]
    %v1127 = vld [vmem:[%s1 + $0x1110] sm:$0xf]
    %v1128 = vld [vmem:[%s1 + $0x1114] sm:$0xf]
    %v1129 = vld [vmem:[%s1 + $0x1118] sm:$0xf]
    %v1130 = vld [vmem:[%s1 + $0x111c] sm:$0xf]
    %v1131 = vld [vmem:[%s1 + $0x1120] sm:$0xf]
    %v1132 = vld [vmem:[%s1 + $0x1124] sm:$0xf]
    %v1133 = vld [vmem:[%s1 + $0x1128] sm:$0xf]
    %v1134 = vld [vmem:[%s1 + $0x112c] sm:$0xf]
    %v1135 = vld [vmem:[%s1 + $0x1130] sm:$0xf]
    %v1136 = vld [vmem:[%s1 + $0x1134] sm:$0xf]
    %v1137 = vld [vmem:[%s1 + $0x1138] sm:$0xf]
    %v1138 = vld [vmem:[%s1 + $0x113c] sm:$0xf]
    %v1139 = vld [vmem:[%s1 + $0x1140] sm:$0xf]
    %v1140 = vld [vmem:[%s1 + $0x1144] sm:$0xf]
    %v1141 = vld [vmem:[%s1 + $0x1148] sm:$0xf]
    %v1142 = vld [vmem:[%s1 + $0x114c] sm:$0xf]
    %v1143 = vld [vmem:[%s1 + $0x1150] sm:$0xf]
    %v1144 = vld [vmem:[%s1 + $0x1154] sm:$0xf]
    %v1145 = vld [vmem:[%s1 + $0x1158] sm:$0xf]
    %v1146 = vld [vmem:[%s1 + $0x115c] sm:$0xf]
    %v1147 = vld [vmem:[%s1 + $0x1160] sm:$0xf]
    %v1148 = vld [vmem:[%s1 + $0x1164] sm:$0xf]
    %v1149 = vld [vmem:[%s1 + $0x1168] sm:$0xf]
    %v1150 = vld [vmem:[%s1 + $0x116c] sm:$0xf]
    %v1151 = vld [vmem:[%s1 + $0x1170] sm:$0xf]
    %v1152 = vld [vmem:[%s1 + $0x1174] sm:$0xf]
    %v1153 = vld [vmem:[%s1 + $0x1178] sm:$0xf]
    %v1154 = vld [vmem:[%s1 + $0x117c] sm:$0xf]
    %v1155 = vld [vmem:[%s1 + $0x1180] sm:$0xf]
    %v1156 = vld [vmem:[%s1 + $0x1184] sm:$0xf]
    %v1157 = vld [vmem:[%s1 + $0x1188] sm:$0xf]
    %v1158 = vld [vmem:[%s1 + $0x118c] sm:$0xf]
    %v1159 = vld [vmem:[%s1 + $0x1190] sm:$0xf]
    %v1160 = vld [vmem:[%s1 + $0x1194] sm:$0xf]
    %v1161 = vld [vmem:[%s1 + $0x1198] sm:$0xf]
    %v1162 = vld [vmem:[%s1 + $0x119c] sm:$0xf]
    %v1163 = vld [vmem:[%s1 + $0x11a0] sm:$0xf]
    %v1164 = vld [vmem:[%s1 + $0x11a4] sm:$0xf]
    %v1165 = vld [vmem:[%s1 + $0x11a8] sm:$0xf]
    %v1166 = vld [vmem:[%s1 + $0x11ac] sm:$0xf]
    %v1167 = vld [vmem:[%s1 + $0x11b0] sm:$0xf]
    %v1168 = vld [vmem:[%s1 + $0x11b4] sm:$0xf]
    %v1169 = vld [vmem:[%s1 + $0x11b8] sm:$0xf]
    %v1170 = vld [vmem:[%s1 + $0x11bc] sm:$0xf]
    %v1171 = vld [vmem:[%s1 + $0x11c0] sm:$0xf]
    %v1172 = vld [vmem:[%s1 + $0x11c4] sm:$0xf]
    %v1173 = vld [vmem:[%s1 + $0x11c8] sm:$0xf]
    %v1174 = vld [vmem:[%s1 + $0x11cc] sm:$0xf]
    %v1175 = vld [vmem:[%s1 + $0x11d0] sm:$0xf]
    %v1176 = vld [vmem:[%s1 + $0x11d4] sm:$0xf]
    %v1177 = vld [vmem:[%s1 + $0x11d8] sm:$0xf]
    %v1178 = vld [vmem:[%s1 + $0x11dc] sm:$0xf]
    %v1179 = vld [vmem:[%s1 + $0x11e0] sm:$0xf]
    %v1180 = vld [vmem:[%s1 + $0x11e4] sm:$0xf]
    %v1181 = vld [vmem:[%s1 + $0x11e8] sm:$0xf]
    %v1182 = vld [vmem:[%s1 + $0x11ec] sm:$0xf]
    %v1183 = vld [vmem:[%s1 + $0x11f0] sm:$0xf]
    %v1184 = vld [vmem:[%s1 + $0x11f4] sm:$0xf]
    %v1185 = vld [vmem:[%s1 + $0x11f8] sm:$0xf]
    %v1186 = vld [vmem:[%s1 + $0x11fc] sm:$0xf]
    %v1187 = vld [vmem:[%s1 + $0x1200] sm:$0xf]
    %v1188 = vld [vmem:[%s1 + $0x1204] sm:$0xf]
    %v1189 = vld [vmem:[%s1 + $0x1208] sm:$0xf]
    %v1190 = vld [vmem:[%s1 + $0x120c] sm:$0xf]
    %v1191 = vld [vmem:[%s1 + $0x1210] sm:$0xf]
    %v1192 = vld [vmem:[%s1 + $0x1214] sm:$0xf]
    %v1193 = vld [vmem:[%s1 + $0x1218] sm:$0xf]
    %v1194 = vld [vmem:[%s1 + $0x121c] sm:$0xf]
    %v1195 = vld [vmem:[%s1 + $0x1220] sm:$0xf]
    %v1196 = vld [vmem:[%s1 + $0x1224] sm:$0xf]
    %v1197 = vld [vmem:[%s1 + $0x1228] sm:$0xf]
    %v1198 = vld [vmem:[%s1 + $0x122c] sm:$0xf]
    %v1199 = vld [vmem:[%s1 + $0x1230] sm:$0xf]
    %v1200 = vld [vmem:[%s1 + $0x1234] sm:$0xf]
    %v1201 = vld [vmem:[%s1 + $0x1238] sm:$0xf]
    %v1202 = vld [vmem:[%s1 + $0x123c] sm:$0xf]
    %v1203 = vld [vmem:[%s1 + $0x1240] sm:$0xf]
    %v1204 = vld [vmem:[%s1 + $0x1244] sm:$0xf]
    %v1205 = vld [vmem:[%s1 + $0x1248] sm:$0xf]
    %v1206 = vld [vmem:[%s1 + $0x124c] sm:$0xf]
    %v1207 = vld [vmem:[%s1 + $0x1250] sm:$0xf]
    %v1208 = vld [vmem:[%s1 + $0x1254] sm:$0xf]
    %v1209 = vld [vmem:[%s1 + $0x1258] sm:$0xf]
    %v1210 = vld [vmem:[%s1 + $0x125c] sm:$0xf]
    %v1211 = vld [vmem:[%s1 + $0x1260] sm:$0xf]
    %v1212 = vld [vmem:[%s1 + $0x1264] sm:$0xf]
    %v1213 = vld [vmem:[%s1 + $0x1268] sm:$0xf]
    %v1214 = vld [vmem:[%s1 + $0x126c] sm:$0xf]
    %v1215 = vld [vmem:[%s1 + $0x1270] sm:$0xf]
    %v1216 = vld [vmem:[%s1 + $0x1274] sm:$0xf]
    %v1217 = vld [vmem:[%s1 + $0x1278] sm:$0xf]
    %v1218 = vld [vmem:[%s1 + $0x127c] sm:$0xf]
    %v1219 = vld [vmem:[%s1 + $0x1280] sm:$0xf]
    %v1220 = vld [vmem:[%s1 + $0x1284] sm:$0xf]
    %v1221 = vld [vmem:[%s1 + $0x1288] sm:$0xf]
    %v1222 = vld [vmem:[%s1 + $0x128c] sm:$0xf]
    %v1223 = vld [vmem:[%s1 + $0x1290] sm:$0xf]
    %v1224 = vld [vmem:[%s1 + $0x1294] sm:$0xf]
    %v1225 = vld [vmem:[%s1 + $0x1298] sm:$0xf]
    %v1226 = vld [vmem:[%s1 + $0x129c] sm:$0xf]
    %v1227 = vld [vmem:[%s1 + $0x12a0] sm:$0xf]
    %v1228 = vld [vmem:[%s1 + $0x12a4] sm:$0xf]
    %v1229 = vld [vmem:[%s1 + $0x12a8] sm:$0xf]
    %v1230 = vld [vmem:[%s1 + $0x12ac] sm:$0xf]
    %v1231 = vld [vmem:[%s1 + $0x12b0] sm:$0xf]
    %v1232 = vld [vmem:[%s1 + $0x12b4] sm:$0xf]
    %v1233 = vld [vmem:[%s1 + $0x12b8] sm:$0xf]
    %v1234 = vld [vmem:[%s1 + $0x12bc] sm:$0xf]
    %v1235 = vld [vmem:[%s1 + $0x12c0] sm:$0xf]
    %v1236 = vld [vmem:[%s1 + $0x12c4] sm:$0xf]
    %v1237 = vld [vmem:[%s1 + $0x12c8] sm:$0xf]
    %v1238 = vld [vmem:[%s1 + $0x12cc] sm:$0xf]
    %v1239 = vld [vmem:[%s1 + $0x12d0] sm:$0xf]
    %v1240 = vld [vmem:[%s1 + $0x12d4] sm:$0xf]
    %v1241 = vld [vmem:[%s1 + $0x12d8] sm:$0xf]
    %v1242 = vld [vmem:[%s1 + $0x12dc] sm:$0xf]
    %v1243 = vld [vmem:[%s1 + $0x12e0] sm:$0xf]
    %v1244 = vld [vmem:[%s1 + $0x12e4] sm:$0xf]
    %v1245 = vld [vmem:[%s1 + $0x12e8] sm:$0xf]
    %v1246 = vld [vmem:[%s1 + $0x12ec] sm:$0xf]
    %v1247 = vld [vmem:[%s1 + $0x12f0] sm:$0xf]
    %v1248 = vld [vmem:[%s1 + $0x12f4] sm:$0xf]
    %v1249 = vld [vmem:[%s1 + $0x12f8] sm:$0xf]
    %v1250 = vld [vmem:[%s1 + $0x12fc] sm:$0xf]
    %v1251 = vld [vmem:[%s1 + $0x1300] sm:$0xf]
    %v1252 = vld [vmem:[%s1 + $0x1304] sm:$0xf]
    %v1253 = vld [vmem:[%s1 + $0x1308] sm:$0xf]
    %v1254 = vld [vmem:[%s1 + $0x130c] sm:$0xf]
    %v1255 = vld [vmem:[%s1 + $0x1310] sm:$0xf]
    %v1256 = vld [vmem:[%s1 + $0x1314] sm:$0xf]
    %v1257 = vld [vmem:[%s1 + $0x1318] sm:$0xf]
    %v1258 = vld [vmem:[%s1 + $0x131c] sm:$0xf]
    %v1259 = vld [vmem:[%s1 + $0x1320] sm:$0xf]
    %v1260 = vld [vmem:[%s1 + $0x1324] sm:$0xf]
    %v1261 = vld [vmem:[%s1 + $0x1328] sm:$0xf]
    %v1262 = vld [vmem:[%s1 + $0x132c] sm:$0xf]
    %v1263 = vld [vmem:[%s1 + $0x1330] sm:$0xf]
    %v1264 = vld [vmem:[%s1 + $0x1334] sm:$0xf]
    %v1265 = vld [vmem:[%s1 + $0x1338] sm:$0xf]
    %v1266 = vld [vmem:[%s1 + $0x133c] sm:$0xf]
    %v1267 = vld [vmem:[%s1 + $0x1340] sm:$0xf]
    %v1268 = vld [vmem:[%s1 + $0x1344] sm:$0xf]
    %v1269 = vld [vmem:[%s1 + $0x1348] sm:$0xf]
    %v1270 = vld [vmem:[%s1 + $0x134c] sm:$0xf]
    %v1271 = vld [vmem:[%s1 + $0x1350] sm:$0xf]
    %v1272 = vld [vmem:[%s1 + $0x1354] sm:$0xf]
    %v1273 = vld [vmem:[%s1 + $0x1358] sm:$0xf]
    %v1274 = vld [vmem:[%s1 + $0x135c] sm:$0xf]
    %v1275 = vld [vmem:[%s1 + $0x1360] sm:$0xf]
    %v1276 = vld [vmem:[%s1 + $0x1364] sm:$0xf]
    %v1277 = vld [vmem:[%s1 + $0x1368] sm:$0xf]
    %v1278 = vld [vmem:[%s1 + $0x136c] sm:$0xf]
    %v1279 = vld [vmem:[%s1 + $0x1370] sm:$0xf]
    %v1280 = vld [vmem:[%s1 + $0x1374] sm:$0xf]
    %v1281 = vld [vmem:[%s1 + $0x1378] sm:$0xf]
    %v1282 = vld [vmem:[%s1 + $0x137c] sm:$0xf]
    %v1283 = vld [vmem:[%s1 + $0x1380] sm:$0xf]
    %v1284 = vld [vmem:[%s1 + $0x1384] sm:$0xf]
    %v1285 = vld [vmem:[%s1 + $0x1388] sm:$0xf]
    %v1286 = vld [vmem:[%s1 + $0x138c] sm:$0xf]
    %v1287 = vld [vmem:[%s1 + $0x1390] sm:$0xf]
    %v1288 = vld [vmem:[%s1 + $0x1394] sm:$0xf]
    %v1289 = vld [vmem:[%s1 + $0x1398] sm:$0xf]
    %v1290 = vld [vmem:[%s1 + $0x139c] sm:$0xf]
    %v1291 = vld [vmem:[%s1 + $0x13a0] sm:$0xf]
    %v1292 = vld [vmem:[%s1 + $0x13a4] sm:$0xf]
    %v1293 = vld [vmem:[%s1 + $0x13a8] sm:$0xf]
    %v1294 = vld [vmem:[%s1 + $0x13ac] sm:$0xf]
    %v1295 = vld [vmem:[%s1 + $0x13b0] sm:$0xf]
    %v1296 = vld [vmem:[%s1 + $0x13b4] sm:$0xf]
    %v1297 = vld [vmem:[%s1 + $0x13b8] sm:$0xf]
    %v1298 = vld [vmem:[%s1 + $0x13bc] sm:$0xf]
    %v1299 = vld [vmem:[%s1 + $0x13c0] sm:$0xf]
    %v1300 = vld [vmem:[%s1 + $0x13c4] sm:$0xf]
    %v1301 = vld [vmem:[%s1 + $0x13c8] sm:$0xf]
    %v1302 = vld [vmem:[%s1 + $0x13cc] sm:$0xf]
    %v1303 = vld [vmem:[%s1 + $0x13d0] sm:$0xf]
    %v1304 = vld [vmem:[%s1 + $0x13d4] sm:$0xf]
    %v1305 = vld [vmem:[%s1 + $0x13d8] sm:$0xf]
    %v1306 = vld [vmem:[%s1 + $0x13dc] sm:$0xf]
    %v1307 = vld [vmem:[%s1 + $0x13e0] sm:$0xf]
    %v1308 = vld [vmem:[%s1 + $0x13e4] sm:$0xf]
    %v1309 = vld [vmem:[%s1 + $0x13e8] sm:$0xf]
    %v1310 = vld [vmem:[%s1 + $0x13ec] sm:$0xf]
    %v1311 = vld [vmem:[%s1 + $0x13f0] sm:$0xf]
    %v1312 = vld [vmem:[%s1 + $0x13f4] sm:$0xf]
    %v1313 = vld [vmem:[%s1 + $0x13f8] sm:$0xf]
    %v1314 = vld [vmem:[%s1 + $0x13fc] sm:$0xf]
    %v1315 = vld [vmem:[%s1 + $0x1400] sm:$0xf]
    %v1316 = vld [vmem:[%s1 + $0x1404] sm:$0xf]
    %v1317 = vld [vmem:[%s1 + $0x1408] sm:$0xf]
    %v1318 = vld [vmem:[%s1 + $0x140c] sm:$0xf]
    %v1319 = vld [vmem:[%s1 + $0x1410] sm:$0xf]
    %v1320 = vld [vmem:[%s1 + $0x1414] sm:$0xf]
    %v1321 = vld [vmem:[%s1 + $0x1418] sm:$0xf]
    %v1322 = vld [vmem:[%s1 + $0x141c] sm:$0xf]
    %v1323 = vld [vmem:[%s1 + $0x1420] sm:$0xf]
    %v1324 = vld [vmem:[%s1 + $0x1424] sm:$0xf]
    %v1325 = vld [vmem:[%s1 + $0x1428] sm:$0xf]
    %v1326 = vld [vmem:[%s1 + $0x142c] sm:$0xf]
    %v1327 = vld [vmem:[%s1 + $0x1430] sm:$0xf]
    %v1328 = vld [vmem:[%s1 + $0x1434] sm:$0xf]
    %v1329 = vld [vmem:[%s1 + $0x1438] sm:$0xf]
    %v1330 = vld [vmem:[%s1 + $0x143c] sm:$0xf]
    %v1331 = vld [vmem:[%s1 + $0x1440] sm:$0xf]
    %v1332 = vld [vmem:[%s1 + $0x1444] sm:$0xf]
    %v1333 = vld [vmem:[%s1 + $0x1448] sm:$0xf]
    %v1334 = vld [vmem:[%s1 + $0x144c] sm:$0xf]
    %v1335 = vld [vmem:[%s1 + $0x1450] sm:$0xf]
    %v1336 = vld [vmem:[%s1 + $0x1454] sm:$0xf]
    %v1337 = vld [vmem:[%s1 + $0x1458] sm:$0xf]
    %v1338 = vld [vmem:[%s1 + $0x145c] sm:$0xf]
    %v1339 = vld [vmem:[%s1 + $0x1460] sm:$0xf]
    %v1340 = vld [vmem:[%s1 + $0x1464] sm:$0xf]
    %v1341 = vld [vmem:[%s1 + $0x1468] sm:$0xf]
    %v1342 = vld [vmem:[%s1 + $0x146c] sm:$0xf]
    %v1343 = vld [vmem:[%s1 + $0x1470] sm:$0xf]
    %v1344 = vld [vmem:[%s1 + $0x1474] sm:$0xf]
    %v1345 = vld [vmem:[%s1 + $0x1478] sm:$0xf]
    %v1346 = vld [vmem:[%s1 + $0x147c] sm:$0xf]
    %v1347 = vld [vmem:[%s1 + $0x1480] sm:$0xf]
    %v1348 = vld [vmem:[%s1 + $0x1484] sm:$0xf]
    %v1349 = vld [vmem:[%s1 + $0x1488] sm:$0xf]
    %v1350 = vld [vmem:[%s1 + $0x148c] sm:$0xf]
    %v1351 = vld [vmem:[%s1 + $0x1490] sm:$0xf]
    %v1352 = vld [vmem:[%s1 + $0x1494] sm:$0xf]
    %v1353 = vld [vmem:[%s1 + $0x1498] sm:$0xf]
    %v1354 = vld [vmem:[%s1 + $0x149c] sm:$0xf]
    %v1355 = vld [vmem:[%s1 + $0x14a0] sm:$0xf]
    %v1356 = vld [vmem:[%s1 + $0x14a4] sm:$0xf]
    %v1357 = vld [vmem:[%s1 + $0x14a8] sm:$0xf]
    %v1358 = vld [vmem:[%s1 + $0x14ac] sm:$0xf]
    %v1359 = vld [vmem:[%s1 + $0x14b0] sm:$0xf]
    %v1360 = vld [vmem:[%s1 + $0x14b4] sm:$0xf]
    %v1361 = vld [vmem:[%s1 + $0x14b8] sm:$0xf]
    %v1362 = vld [vmem:[%s1 + $0x14bc] sm:$0xf]
    %v1363 = vld [vmem:[%s1 + $0x14c0] sm:$0xf]
    %v1364 = vld [vmem:[%s1 + $0x14c4] sm:$0xf]
    %v1365 = vld [vmem:[%s1 + $0x14c8] sm:$0xf]
    %v1366 = vld [vmem:[%s1 + $0x14cc] sm:$0xf]
    %v1367 = vld [vmem:[%s1 + $0x14d0] sm:$0xf]
    %v1368 = vld [vmem:[%s1 + $0x14d4] sm:$0xf]
    %v1369 = vld [vmem:[%s1 + $0x14d8] sm:$0xf]
    %v1370 = vld [vmem:[%s1 + $0x14dc] sm:$0xf]
    %v1371 = vld [vmem:[%s1 + $0x14e0] sm:$0xf]
    %v1372 = vld [vmem:[%s1 + $0x14e4] sm:$0xf]
    %v1373 = vld [vmem:[%s1 + $0x14e8] sm:$0xf]
    %v1374 = vld [vmem:[%s1 + $0x14ec] sm:$0xf]
    %v1375 = vld [vmem:[%s1 + $0x14f0] sm:$0xf]
    %v1376 = vld [vmem:[%s1 + $0x14f4] sm:$0xf]
    %v1377 = vld [vmem:[%s1 + $0x14f8] sm:$0xf]
    %v1378 = vld [vmem:[%s1 + $0x14fc] sm:$0xf]
    %v1379 = vld [vmem:[%s1 + $0x1500] sm:$0xf]
    %v1380 = vld [vmem:[%s1 + $0x1504] sm:$0xf]
    %v1381 = vld [vmem:[%s1 + $0x1508] sm:$0xf]
    %v1382 = vld [vmem:[%s1 + $0x150c] sm:$0xf]
    %v1383 = vld [vmem:[%s1 + $0x1510] sm:$0xf]
    %v1384 = vld [vmem:[%s1 + $0x1514] sm:$0xf]
    %v1385 = vld [vmem:[%s1 + $0x1518] sm:$0xf]
    %v1386 = vld [vmem:[%s1 + $0x151c] sm:$0xf]
    %v1387 = vld [vmem:[%s1 + $0x1520] sm:$0xf]
    %v1388 = vld [vmem:[%s1 + $0x1524] sm:$0xf]
    %v1389 = vld [vmem:[%s1 + $0x1528] sm:$0xf]
    %v1390 = vld [vmem:[%s1 + $0x152c] sm:$0xf]
    %v1391 = vld [vmem:[%s1 + $0x1530] sm:$0xf]
    %v1392 = vld [vmem:[%s1 + $0x1534] sm:$0xf]
    %v1393 = vld [vmem:[%s1 + $0x1538] sm:$0xf]
    %v1394 = vld [vmem:[%s1 + $0x153c] sm:$0xf]
    %v1395 = vld [vmem:[%s1 + $0x1540] sm:$0xf]
    %v1396 = vld [vmem:[%s1 + $0x1544] sm:$0xf]
    %v1397 = vld [vmem:[%s1 + $0x1548] sm:$0xf]
    %v1398 = vld [vmem:[%s1 + $0x154c] sm:$0xf]
    %v1399 = vld [vmem:[%s1 + $0x1550] sm:$0xf]
    %v1400 = vld [vmem:[%s1 + $0x1554] sm:$0xf]
    %v1401 = vld [vmem:[%s1 + $0x1558] sm:$0xf]
    %v1402 = vld [vmem:[%s1 + $0x155c] sm:$0xf]
    %v1403 = vld [vmem:[%s1 + $0x1560] sm:$0xf]
    %v1404 = vld [vmem:[%s1 + $0x1564] sm:$0xf]
    %v1405 = vld [vmem:[%s1 + $0x1568] sm:$0xf]
    %v1406 = vld [vmem:[%s1 + $0x156c] sm:$0xf]
    %v1407 = vld [vmem:[%s1 + $0x1570] sm:$0xf]
    %v1408 = vld [vmem:[%s1 + $0x1574] sm:$0xf]
    %v1409 = vld [vmem:[%s1 + $0x1578] sm:$0xf]
    %v1410 = vld [vmem:[%s1 + $0x157c] sm:$0xf]
    %v1411 = vld [vmem:[%s1 + $0x1580] sm:$0xf]
    %v1412 = vld [vmem:[%s1 + $0x1584] sm:$0xf]
    %v1413 = vld [vmem:[%s1 + $0x1588] sm:$0xf]
    %v1414 = vld [vmem:[%s1 + $0x158c] sm:$0xf]
    %v1415 = vld [vmem:[%s1 + $0x1590] sm:$0xf]
    %v1416 = vld [vmem:[%s1 + $0x1594] sm:$0xf]
    %v1417 = vld [vmem:[%s1 + $0x1598] sm:$0xf]
    %v1418 = vld [vmem:[%s1 + $0x159c] sm:$0xf]
    %v1419 = vld [vmem:[%s1 + $0x15a0] sm:$0xf]
    %v1420 = vld [vmem:[%s1 + $0x15a4] sm:$0xf]
    %v1421 = vld [vmem:[%s1 + $0x15a8] sm:$0xf]
    %v1422 = vld [vmem:[%s1 + $0x15ac] sm:$0xf]
    %v1423 = vld [vmem:[%s1 + $0x15b0] sm:$0xf]
    %v1424 = vld [vmem:[%s1 + $0x15b4] sm:$0xf]
    %v1425 = vld [vmem:[%s1 + $0x15b8] sm:$0xf]
    %v1426 = vld [vmem:[%s1 + $0x15bc] sm:$0xf]
    %v1427 = vld [vmem:[%s1 + $0x15c0] sm:$0xf]
    %v1428 = vld [vmem:[%s1 + $0x15c4] sm:$0xf]
    %v1429 = vld [vmem:[%s1 + $0x15c8] sm:$0xf]
    %v1430 = vld [vmem:[%s1 + $0x15cc] sm:$0xf]
    %v1431 = vld [vmem:[%s1 + $0x15d0] sm:$0xf]
    %v1432 = vld [vmem:[%s1 + $0x15d4] sm:$0xf]
    %v1433 = vld [vmem:[%s1 + $0x15d8] sm:$0xf]
    %v1434 = vld [vmem:[%s1 + $0x15dc] sm:$0xf]
    %v1435 = vld [vmem:[%s1 + $0x15e0] sm:$0xf]
    %v1436 = vld [vmem:[%s1 + $0x15e4] sm:$0xf]
    %v1437 = vld [vmem:[%s1 + $0x15e8] sm:$0xf]
    %v1438 = vld [vmem:[%s1 + $0x15ec] sm:$0xf]
    %v1439 = vld [vmem:[%s1 + $0x15f0] sm:$0xf]
    %v1440 = vld [vmem:[%s1 + $0x15f4] sm:$0xf]
    %v1441 = vld [vmem:[%s1 + $0x15f8] sm:$0xf]
    %v1442 = vld [vmem:[%s1 + $0x15fc] sm:$0xf]
    %v1443 = vld [vmem:[%s1 + $0x1600] sm:$0xf]
    %v1444 = vld [vmem:[%s1 + $0x1604] sm:$0xf]
    %v1445 = vld [vmem:[%s1 + $0x1608] sm:$0xf]
    %v1446 = vld [vmem:[%s1 + $0x160c] sm:$0xf]
    %v1447 = vld [vmem:[%s1 + $0x1610] sm:$0xf]
    %v1448 = vld [vmem:[%s1 + $0x1614] sm:$0xf]
    %v1449 = vld [vmem:[%s1 + $0x1618] sm:$0xf]
    %v1450 = vld [vmem:[%s1 + $0x161c] sm:$0xf]
    %v1451 = vld [vmem:[%s1 + $0x1620] sm:$0xf]
    %v1452 = vld [vmem:[%s1 + $0x1624] sm:$0xf]
    %v1453 = vld [vmem:[%s1 + $0x1628] sm:$0xf]
    %v1454 = vld [vmem:[%s1 + $0x162c] sm:$0xf]
    %v1455 = vld [vmem:[%s1 + $0x1630] sm:$0xf]
    %v1456 = vld [vmem:[%s1 + $0x1634] sm:$0xf]
    %v1457 = vld [vmem:[%s1 + $0x1638] sm:$0xf]
    %v1458 = vld [vmem:[%s1 + $0x163c] sm:$0xf]
    %v1459 = vld [vmem:[%s1 + $0x1640] sm:$0xf]
    %v1460 = vld [vmem:[%s1 + $0x1644] sm:$0xf]
    %v1461 = vld [vmem:[%s1 + $0x1648] sm:$0xf]
    %v1462 = vld [vmem:[%s1 + $0x164c] sm:$0xf]
    %v1463 = vld [vmem:[%s1 + $0x1650] sm:$0xf]
    %v1464 = vld [vmem:[%s1 + $0x1654] sm:$0xf]
    %v1465 = vld [vmem:[%s1 + $0x1658] sm:$0xf]
    %v1466 = vld [vmem:[%s1 + $0x165c] sm:$0xf]
    %v1467 = vld [vmem:[%s1 + $0x1660] sm:$0xf]
    %v1468 = vld [vmem:[%s1 + $0x1664] sm:$0xf]
    %v1469 = vld [vmem:[%s1 + $0x1668] sm:$0xf]
    %v1470 = vld [vmem:[%s1 + $0x166c] sm:$0xf]
    %v1471 = vld [vmem:[%s1 + $0x1670] sm:$0xf]
    %v1472 = vld [vmem:[%s1 + $0x1674] sm:$0xf]
    %v1473 = vld [vmem:[%s1 + $0x1678] sm:$0xf]
    %v1474 = vld [vmem:[%s1 + $0x167c] sm:$0xf]
    %v1475 = vld [vmem:[%s1 + $0x1680] sm:$0xf]
    %v1476 = vld [vmem:[%s1 + $0x1684] sm:$0xf]
    %v1477 = vld [vmem:[%s1 + $0x1688] sm:$0xf]
    %v1478 = vld [vmem:[%s1 + $0x168c] sm:$0xf]
    %v1479 = vld [vmem:[%s1 + $0x1690] sm:$0xf]
    %v1480 = vld [vmem:[%s1 + $0x1694] sm:$0xf]
    %v1481 = vld [vmem:[%s1 + $0x1698] sm:$0xf]
    %v1482 = vld [vmem:[%s1 + $0x169c] sm:$0xf]
    %v1483 = vld [vmem:[%s1 + $0x16a0] sm:$0xf]
    %v1484 = vld [vmem:[%s1 + $0x16a4] sm:$0xf]
    %v1485 = vld [vmem:[%s1 + $0x16a8] sm:$0xf]
    %v1486 = vld [vmem:[%s1 + $0x16ac] sm:$0xf]
    %v1487 = vld [vmem:[%s1 + $0x16b0] sm:$0xf]
    %v1488 = vld [vmem:[%s1 + $0x16b4] sm:$0xf]
    %v1489 = vld [vmem:[%s1 + $0x16b8] sm:$0xf]
    %v1490 = vld [vmem:[%s1 + $0x16bc] sm:$0xf]
    %v1491 = vld [vmem:[%s1 + $0x16c0] sm:$0xf]
    %v1492 = vld [vmem:[%s1 + $0x16c4] sm:$0xf]
    %v1493 = vld [vmem:[%s1 + $0x16c8] sm:$0xf]
    %v1494 = vld [vmem:[%s1 + $0x16cc] sm:$0xf]
    %v1495 = vld [vmem:[%s1 + $0x16d0] sm:$0xf]
    %v1496 = vld [vmem:[%s1 + $0x16d4] sm:$0xf]
    %v1497 = vld [vmem:[%s1 + $0x16d8] sm:$0xf]
    %v1498 = vld [vmem:[%s1 + $0x16dc] sm:$0xf]
    %v1499 = vld [vmem:[%s1 + $0x16e0] sm:$0xf]
    %v1500 = vld [vmem:[%s1 + $0x16e4] sm:$0xf]
    %v1501 = vld [vmem:[%s1 + $0x16e8] sm:$0xf]
    %v1502 = vld [vmem:[%s1 + $0x16ec] sm:$0xf]
    %v1503 = vld [vmem:[%s1 + $0x16f0] sm:$0xf]
    %v1504 = vld [vmem:[%s1 + $0x16f4] sm:$0xf]
    %v1505 = vld [vmem:[%s1 + $0x16f8] sm:$0xf]
    %v1506 = vld [vmem:[%s1 + $0x16fc] sm:$0xf]
    %v1507 = vld [vmem:[%s1 + $0x1700] sm:$0xf]
    %v1508 = vld [vmem:[%s1 + $0x1704] sm:$0xf]
    %v1509 = vld [vmem:[%s1 + $0x1708] sm:$0xf]
    %v1510 = vld [vmem:[%s1 + $0x170c] sm:$0xf]
    %v1511 = vld [vmem:[%s1 + $0x1710] sm:$0xf]
    %v1512 = vld [vmem:[%s1 + $0x1714] sm:$0xf]
    %v1513 = vld [vmem:[%s1 + $0x1718] sm:$0xf]
    %v1514 = vld [vmem:[%s1 + $0x171c] sm:$0xf]
    %v1515 = vld [vmem:[%s1 + $0x1720] sm:$0xf]
    %v1516 = vld [vmem:[%s1 + $0x1724] sm:$0xf]
    %v1517 = vld [vmem:[%s1 + $0x1728] sm:$0xf]
    %v1518 = vld [vmem:[%s1 + $0x172c] sm:$0xf]
    %v1519 = vld [vmem:[%s1 + $0x1730] sm:$0xf]
    %v1520 = vld [vmem:[%s1 + $0x1734] sm:$0xf]
    %v1521 = vld [vmem:[%s1 + $0x1738] sm:$0xf]
    %v1522 = vld [vmem:[%s1 + $0x173c] sm:$0xf]
    %v1523 = vld [vmem:[%s1 + $0x1740] sm:$0xf]
    %v1524 = vld [vmem:[%s1 + $0x1744] sm:$0xf]
    %v1525 = vld [vmem:[%s1 + $0x1748] sm:$0xf]
    %v1526 = vld [vmem:[%s1 + $0x174c] sm:$0xf]
    %v1527 = vld [vmem:[%s1 + $0x1750] sm:$0xf]
    %v1528 = vld [vmem:[%s1 + $0x1754] sm:$0xf]
    %v1529 = vld [vmem:[%s1 + $0x1758] sm:$0xf]
    %v1530 = vld [vmem:[%s1 + $0x175c] sm:$0xf]
    %v1531 = vld [vmem:[%s1 + $0x1760] sm:$0xf]
    %v1532 = vld [vmem:[%s1 + $0x1764] sm:$0xf]
    %v1533 = vld [vmem:[%s1 + $0x1768] sm:$0xf]
    %v1534 = vld [vmem:[%s1 + $0x176c] sm:$0xf]
    %v1535 = vld [vmem:[%s1 + $0x1770] sm:$0xf]
    %v1536 = vld [vmem:[%s1 + $0x1774] sm:$0xf]
    %v1537 = vld [vmem:[%s1 + $0x1778] sm:$0xf]
    %v1538 = vld [vmem:[%s1 + $0x177c] sm:$0xf]
    %v1539 = vld [vmem:[%s1 + $0x1780] sm:$0xf]
    %v1540 = vld [vmem:[%s1 + $0x1784] sm:$0xf]
    %v1541 = vld [vmem:[%s1 + $0x1788] sm:$0xf]
    %v1542 = vld [vmem:[%s1 + $0x178c] sm:$0xf]
    %v1543 = vld [vmem:[%s1 + $0x1790] sm:$0xf]
    %v1544 = vld [vmem:[%s1 + $0x1794] sm:$0xf]
    %v1545 = vld [vmem:[%s1 + $0x1798] sm:$0xf]
    %v1546 = vld [vmem:[%s1 + $0x179c] sm:$0xf]
    %v1547 = vld [vmem:[%s1 + $0x17a0] sm:$0xf]
    %v1548 = vld [vmem:[%s1 + $0x17a4] sm:$0xf]
    %v1549 = vld [vmem:[%s1 + $0x17a8] sm:$0xf]
    %v1550 = vld [vmem:[%s1 + $0x17ac] sm:$0xf]
    %v1551 = vld [vmem:[%s1 + $0x17b0] sm:$0xf]
    %v1552 = vld [vmem:[%s1 + $0x17b4] sm:$0xf]
    %v1553 = vld [vmem:[%s1 + $0x17b8] sm:$0xf]
    %v1554 = vld [vmem:[%s1 + $0x17bc] sm:$0xf]
    %v1555 = vld [vmem:[%s1 + $0x17c0] sm:$0xf]
    %v1556 = vld [vmem:[%s1 + $0x17c4] sm:$0xf]
    %v1557 = vld [vmem:[%s1 + $0x17c8] sm:$0xf]
    %v1558 = vld [vmem:[%s1 + $0x17cc] sm:$0xf]
    %v1559 = vld [vmem:[%s1 + $0x17d0] sm:$0xf]
    %v1560 = vld [vmem:[%s1 + $0x17d4] sm:$0xf]
    %v1561 = vld [vmem:[%s1 + $0x17d8] sm:$0xf]
    %v1562 = vld [vmem:[%s1 + $0x17dc] sm:$0xf]
    %v1563 = vld [vmem:[%s1 + $0x17e0] sm:$0xf]
    %v1564 = vld [vmem:[%s1 + $0x17e4] sm:$0xf]
    %v1565 = vld [vmem:[%s1 + $0x17e8] sm:$0xf]
    %v1566 = vld [vmem:[%s1 + $0x17ec] sm:$0xf]
    %v1567 = vld [vmem:[%s1 + $0x17f0] sm:$0xf]
    %v1568 = vld [vmem:[%s1 + $0x17f4] sm:$0xf]
    %v1569 = vld [vmem:[%s1 + $0x17f8] sm:$0xf]
    %v1570 = vld [vmem:[%s1 + $0x17fc] sm:$0xf]
    %v1571 = vld [vmem:[%s1 + $0x1800] sm:$0xf]
    %v1572 = vld [vmem:[%s1 + $0x1804] sm:$0xf]
    %v1573 = vld [vmem:[%s1 + $0x1808] sm:$0xf]
    %v1574 = vld [vmem:[%s1 + $0x180c] sm:$0xf]
    %v1575 = vld [vmem:[%s1 + $0x1810] sm:$0xf]
    %v1576 = vld [vmem:[%s1 + $0x1814] sm:$0xf]
    %v1577 = vld [vmem:[%s1 + $0x1818] sm:$0xf]
    %v1578 = vld [vmem:[%s1 + $0x181c] sm:$0xf]
    %v1579 = vld [vmem:[%s1 + $0x1820] sm:$0xf]
    %v1580 = vld [vmem:[%s1 + $0x1824] sm:$0xf]
    %v1581 = vld [vmem:[%s1 + $0x1828] sm:$0xf]
    %v1582 = vld [vmem:[%s1 + $0x182c] sm:$0xf]
    %v1583 = vld [vmem:[%s1 + $0x1830] sm:$0xf]
    %v1584 = vld [vmem:[%s1 + $0x1834] sm:$0xf]
    %v1585 = vld [vmem:[%s1 + $0x1838] sm:$0xf]
    %v1586 = vld [vmem:[%s1 + $0x183c] sm:$0xf]
    %v1587 = vld [vmem:[%s1 + $0x1840] sm:$0xf]
    %v1588 = vld [vmem:[%s1 + $0x1844] sm:$0xf]
    %v1589 = vld [vmem:[%s1 + $0x1848] sm:$0xf]
    %v1590 = vld [vmem:[%s1 + $0x184c] sm:$0xf]
    %v1591 = vld [vmem:[%s1 + $0x1850] sm:$0xf]
    %v1592 = vld [vmem:[%s1 + $0x1854] sm:$0xf]
    %v1593 = vld [vmem:[%s1 + $0x1858] sm:$0xf]
    %v1594 = vld [vmem:[%s1 + $0x185c] sm:$0xf]
    %v1595 = vld [vmem:[%s1 + $0x1860] sm:$0xf]
    %v1596 = vld [vmem:[%s1 + $0x1864] sm:$0xf]
    %v1597 = vld [vmem:[%s1 + $0x1868] sm:$0xf]
    %v1598 = vld [vmem:[%s1 + $0x186c] sm:$0xf]
    %v1599 = vld [vmem:[%s1 + $0x1870] sm:$0xf]
    %v1600 = vld [vmem:[%s1 + $0x1874] sm:$0xf]
    %v1601 = vld [vmem:[%s1 + $0x1878] sm:$0xf]
    %v1602 = vld [vmem:[%s1 + $0x187c] sm:$0xf]
    %v1603 = vld [vmem:[%s2] sm:$0x1]
    %v1605 = vlaneseq
    %v1606 = vshrl.u32 %v1605, 7
    %v1607 = vsub.s32 0, %v1606
    %v1608 = vrot.slane %v1603, %v1607
    %v1623 = vcombine.high %v22, %v22
    %v1625 = vunpack.c.l.s4 1966171168
    %v1626 = vunpack.c.0.s8 %v1625
    %v1627 = vlaneseq
    %v1628 = vshrl.u32 %v1627, 7
    %v1629 = vsub.s32 %v1626, %v1628
    %v1630 = vrot.slane %v22, %v1629
    %v1632 = vunpack.c.l.s4 1966171168
    %v1633 = vunpack.c.0.s8 %v1632
    %v1634 = vlaneseq
    %v1635 = vshrl.u32 %v1634, 7
    %v1636 = vsub.s32 %v1633, %v1635
    %v1637 = vrot.slane %v1623, %v1636
    %v1638 = vcombine.high %v1630, %v1630
    %v1639 = vcombine.high %v1637, %v1637
    %v1641 = vunpack.c.l.s4 1966171168
    %v1642 = vunpack.c.0.s8 %v1641
    %v1643 = vlaneseq
    %v1644 = vshrl.u32 %v1643, 7
    %v1645 = vsub.s32 %v1642, %v1644
    %v1646 = vrot.slane %v1630, %v1645
    %v1648 = vunpack.c.l.s4 1966171168
    %v1649 = vunpack.c.0.s8 %v1648
    %v1650 = vlaneseq
    %v1651 = vshrl.u32 %v1650, 7
    %v1652 = vsub.s32 %v1649, %v1651
    %v1653 = vrot.slane %v1637, %v1652
    %v1655 = vunpack.c.l.s4 1966171168
    %v1656 = vunpack.c.0.s8 %v1655
    %v1657 = vlaneseq
    %v1658 = vshrl.u32 %v1657, 7
    %v1659 = vsub.s32 %v1656, %v1658
    %v1660 = vrot.slane %v1638, %v1659
    %v1662 = vunpack.c.l.s4 1966171168
    %v1663 = vunpack.c.0.s8 %v1662
    %v1664 = vlaneseq
    %v1665 = vshrl.u32 %v1664, 7
    %v1666 = vsub.s32 %v1663, %v1665
    %v1667 = vrot.slane %v1639, %v1666
    %v1668 = vcombine.high %v1646, %v1646
    %v1669 = vcombine.high %v1653, %v1653
    %v1670 = vcombine.high %v1660, %v1660
    %v1671 = vcombine.high %v1667, %v1667
    %v1672 = vcombine.high %v23, %v23
    %v1674 = vunpack.c.l.s4 1966171168
    %v1675 = vunpack.c.0.s8 %v1674
    %v1676 = vlaneseq
    %v1677 = vshrl.u32 %v1676, 7
    %v1678 = vsub.s32 %v1675, %v1677
    %v1679 = vrot.slane %v23, %v1678
    %v1681 = vunpack.c.l.s4 1966171168
    %v1682 = vunpack.c.0.s8 %v1681
    %v1683 = vlaneseq
    %v1684 = vshrl.u32 %v1683, 7
    %v1685 = vsub.s32 %v1682, %v1684
    %v1686 = vrot.slane %v1672, %v1685
    %v1687 = vcombine.high %v1679, %v1679
    %v1688 = vcombine.high %v1686, %v1686
    %v1690 = vunpack.c.l.s4 1966171168
    %v1691 = vunpack.c.0.s8 %v1690
    %v1692 = vlaneseq
    %v1693 = vshrl.u32 %v1692, 7
    %v1694 = vsub.s32 %v1691, %v1693
    %v1695 = vrot.slane %v1679, %v1694
    %v1697 = vunpack.c.l.s4 1966171168
    %v1698 = vunpack.c.0.s8 %v1697
    %v1699 = vlaneseq
    %v1700 = vshrl.u32 %v1699, 7
    %v1701 = vsub.s32 %v1698, %v1700
    %v1702 = vrot.slane %v1686, %v1701
    %v1704 = vunpack.c.l.s4 1966171168
    %v1705 = vunpack.c.0.s8 %v1704
    %v1706 = vlaneseq
    %v1707 = vshrl.u32 %v1706, 7
    %v1708 = vsub.s32 %v1705, %v1707
    %v1709 = vrot.slane %v1687, %v1708
    %v1711 = vunpack.c.l.s4 1966171168
    %v1712 = vunpack.c.0.s8 %v1711
    %v1713 = vlaneseq
    %v1714 = vshrl.u32 %v1713, 7
    %v1715 = vsub.s32 %v1712, %v1714
    %v1716 = vrot.slane %v1688, %v1715
    %v1717 = vcombine.high %v1695, %v1695
    %v1718 = vcombine.high %v1702, %v1702
    %v1719 = vcombine.high %v1709, %v1709
    %v1720 = vcombine.high %v1716, %v1716
    %v1721 = vcombine.high %v24, %v24
    %v1723 = vunpack.c.l.s4 1966171168
    %v1724 = vunpack.c.0.s8 %v1723
    %v1725 = vlaneseq
    %v1726 = vshrl.u32 %v1725, 7
    %v1727 = vsub.s32 %v1724, %v1726
    %v1728 = vrot.slane %v24, %v1727
    %v1730 = vunpack.c.l.s4 1966171168
    %v1731 = vunpack.c.0.s8 %v1730
    %v1732 = vlaneseq
    %v1733 = vshrl.u32 %v1732, 7
    %v1734 = vsub.s32 %v1731, %v1733
    %v1735 = vrot.slane %v1721, %v1734
    %v1736 = vcombine.high %v1728, %v1728
    %v1737 = vcombine.high %v1735, %v1735
    %v1739 = vunpack.c.l.s4 1966171168
    %v1740 = vunpack.c.0.s8 %v1739
    %v1741 = vlaneseq
    %v1742 = vshrl.u32 %v1741, 7
    %v1743 = vsub.s32 %v1740, %v1742
    %v1744 = vrot.slane %v1728, %v1743
    %v1746 = vunpack.c.l.s4 1966171168
    %v1747 = vunpack.c.0.s8 %v1746
    %v1748 = vlaneseq
    %v1749 = vshrl.u32 %v1748, 7
    %v1750 = vsub.s32 %v1747, %v1749
    %v1751 = vrot.slane %v1735, %v1750
    %v1753 = vunpack.c.l.s4 1966171168
    %v1754 = vunpack.c.0.s8 %v1753
    %v1755 = vlaneseq
    %v1756 = vshrl.u32 %v1755, 7
    %v1757 = vsub.s32 %v1754, %v1756
    %v1758 = vrot.slane %v1736, %v1757
    %v1760 = vunpack.c.l.s4 1966171168
    %v1761 = vunpack.c.0.s8 %v1760
    %v1762 = vlaneseq
    %v1763 = vshrl.u32 %v1762, 7
    %v1764 = vsub.s32 %v1761, %v1763
    %v1765 = vrot.slane %v1737, %v1764
    %v1766 = vcombine.high %v1744, %v1744
    %v1767 = vcombine.high %v1751, %v1751
    %v1768 = vcombine.high %v1758, %v1758
    %v1769 = vcombine.high %v1765, %v1765
    %v1770 = vcombine.high %v25, %v25
    %v1772 = vunpack.c.l.s4 1966171168
    %v1773 = vunpack.c.0.s8 %v1772
    %v1774 = vlaneseq
    %v1775 = vshrl.u32 %v1774, 7
    %v1776 = vsub.s32 %v1773, %v1775
    %v1777 = vrot.slane %v25, %v1776
    %v1779 = vunpack.c.l.s4 1966171168
    %v1780 = vunpack.c.0.s8 %v1779
    %v1781 = vlaneseq
    %v1782 = vshrl.u32 %v1781, 7
    %v1783 = vsub.s32 %v1780, %v1782
    %v1784 = vrot.slane %v1770, %v1783
    %v1785 = vcombine.high %v1777, %v1777
    %v1786 = vcombine.high %v1784, %v1784
    %v1788 = vunpack.c.l.s4 1966171168
    %v1789 = vunpack.c.0.s8 %v1788
    %v1790 = vlaneseq
    %v1791 = vshrl.u32 %v1790, 7
    %v1792 = vsub.s32 %v1789, %v1791
    %v1793 = vrot.slane %v1777, %v1792
    %v1795 = vunpack.c.l.s4 1966171168
    %v1796 = vunpack.c.0.s8 %v1795
    %v1797 = vlaneseq
    %v1798 = vshrl.u32 %v1797, 7
    %v1799 = vsub.s32 %v1796, %v1798
    %v1800 = vrot.slane %v1784, %v1799
    %v1802 = vunpack.c.l.s4 1966171168
    %v1803 = vunpack.c.0.s8 %v1802
    %v1804 = vlaneseq
    %v1805 = vshrl.u32 %v1804, 7
    %v1806 = vsub.s32 %v1803, %v1805
    %v1807 = vrot.slane %v1785, %v1806
    %v1809 = vunpack.c.l.s4 1966171168
    %v1810 = vunpack.c.0.s8 %v1809
    %v1811 = vlaneseq
    %v1812 = vshrl.u32 %v1811, 7
    %v1813 = vsub.s32 %v1810, %v1812
    %v1814 = vrot.slane %v1786, %v1813
    %v1815 = vcombine.high %v1793, %v1793
    %v1816 = vcombine.high %v1800, %v1800
    %v1817 = vcombine.high %v1807, %v1807
    %v1818 = vcombine.high %v1814, %v1814
    %v1819 = vcombine.high %v26, %v26
    %v1821 = vunpack.c.l.s4 1966171168
    %v1822 = vunpack.c.0.s8 %v1821
    %v1823 = vlaneseq
    %v1824 = vshrl.u32 %v1823, 7
    %v1825 = vsub.s32 %v1822, %v1824
    %v1826 = vrot.slane %v26, %v1825
    %v1828 = vunpack.c.l.s4 1966171168
    %v1829 = vunpack.c.0.s8 %v1828
    %v1830 = vlaneseq
    %v1831 = vshrl.u32 %v1830, 7
    %v1832 = vsub.s32 %v1829, %v1831
    %v1833 = vrot.slane %v1819, %v1832
    %v1834 = vcombine.high %v1826, %v1826
    %v1835 = vcombine.high %v1833, %v1833
    %v1837 = vunpack.c.l.s4 1966171168
    %v1838 = vunpack.c.0.s8 %v1837
    %v1839 = vlaneseq
    %v1840 = vshrl.u32 %v1839, 7
    %v1841 = vsub.s32 %v1838, %v1840
    %v1842 = vrot.slane %v1826, %v1841
    %v1844 = vunpack.c.l.s4 1966171168
    %v1845 = vunpack.c.0.s8 %v1844
    %v1846 = vlaneseq
    %v1847 = vshrl.u32 %v1846, 7
    %v1848 = vsub.s32 %v1845, %v1847
    %v1849 = vrot.slane %v1833, %v1848
    %v1851 = vunpack.c.l.s4 1966171168
    %v1852 = vunpack.c.0.s8 %v1851
    %v1853 = vlaneseq
    %v1854 = vshrl.u32 %v1853, 7
    %v1855 = vsub.s32 %v1852, %v1854
    %v1856 = vrot.slane %v1834, %v1855
    %v1858 = vunpack.c.l.s4 1966171168
    %v1859 = vunpack.c.0.s8 %v1858
    %v1860 = vlaneseq
    %v1861 = vshrl.u32 %v1860, 7
    %v1862 = vsub.s32 %v1859, %v1861
    %v1863 = vrot.slane %v1835, %v1862
    %v1864 = vcombine.high %v1842, %v1842
    %v1865 = vcombine.high %v1849, %v1849
    %v1866 = vcombine.high %v1856, %v1856
    %v1867 = vcombine.high %v1863, %v1863
    %v1868 = vcombine.high %v27, %v27
    %v1870 = vunpack.c.l.s4 1966171168
    %v1871 = vunpack.c.0.s8 %v1870
    %v1872 = vlaneseq
    %v1873 = vshrl.u32 %v1872, 7
    %v1874 = vsub.s32 %v1871, %v1873
    %v1875 = vrot.slane %v27, %v1874
    %v1877 = vunpack.c.l.s4 1966171168
    %v1878 = vunpack.c.0.s8 %v1877
    %v1879 = vlaneseq
    %v1880 = vshrl.u32 %v1879, 7
    %v1881 = vsub.s32 %v1878, %v1880
    %v1882 = vrot.slane %v1868, %v1881
    %v1883 = vcombine.high %v1875, %v1875
    %v1884 = vcombine.high %v1882, %v1882
    %v1886 = vunpack.c.l.s4 1966171168
    %v1887 = vunpack.c.0.s8 %v1886
    %v1888 = vlaneseq
    %v1889 = vshrl.u32 %v1888, 7
    %v1890 = vsub.s32 %v1887, %v1889
    %v1891 = vrot.slane %v1875, %v1890
    %v1893 = vunpack.c.l.s4 1966171168
    %v1894 = vunpack.c.0.s8 %v1893
    %v1895 = vlaneseq
    %v1896 = vshrl.u32 %v1895, 7
    %v1897 = vsub.s32 %v1894, %v1896
    %v1898 = vrot.slane %v1882, %v1897
    %v1900 = vunpack.c.l.s4 1966171168
    %v1901 = vunpack.c.0.s8 %v1900
    %v1902 = vlaneseq
    %v1903 = vshrl.u32 %v1902, 7
    %v1904 = vsub.s32 %v1901, %v1903
    %v1905 = vrot.slane %v1883, %v1904
    %v1907 = vunpack.c.l.s4 1966171168
    %v1908 = vunpack.c.0.s8 %v1907
    %v1909 = vlaneseq
    %v1910 = vshrl.u32 %v1909, 7
    %v1911 = vsub.s32 %v1908, %v1910
    %v1912 = vrot.slane %v1884, %v1911
    %v1913 = vcombine.high %v1891, %v1891
    %v1914 = vcombine.high %v1898, %v1898
    %v1915 = vcombine.high %v1905, %v1905
    %v1916 = vcombine.high %v1912, %v1912
    %v1917 = vcombine.high %v28, %v28
    %v1919 = vunpack.c.l.s4 1966171168
    %v1920 = vunpack.c.0.s8 %v1919
    %v1921 = vlaneseq
    %v1922 = vshrl.u32 %v1921, 7
    %v1923 = vsub.s32 %v1920, %v1922
    %v1924 = vrot.slane %v28, %v1923
    %v1926 = vunpack.c.l.s4 1966171168
    %v1927 = vunpack.c.0.s8 %v1926
    %v1928 = vlaneseq
    %v1929 = vshrl.u32 %v1928, 7
    %v1930 = vsub.s32 %v1927, %v1929
    %v1931 = vrot.slane %v1917, %v1930
    %v1932 = vcombine.high %v1924, %v1924
    %v1933 = vcombine.high %v1931, %v1931
    %v1935 = vunpack.c.l.s4 1966171168
    %v1936 = vunpack.c.0.s8 %v1935
    %v1937 = vlaneseq
    %v1938 = vshrl.u32 %v1937, 7
    %v1939 = vsub.s32 %v1936, %v1938
    %v1940 = vrot.slane %v1924, %v1939
    %v1942 = vunpack.c.l.s4 1966171168
    %v1943 = vunpack.c.0.s8 %v1942
    %v1944 = vlaneseq
    %v1945 = vshrl.u32 %v1944, 7
    %v1946 = vsub.s32 %v1943, %v1945
    %v1947 = vrot.slane %v1931, %v1946
    %v1949 = vunpack.c.l.s4 1966171168
    %v1950 = vunpack.c.0.s8 %v1949
    %v1951 = vlaneseq
    %v1952 = vshrl.u32 %v1951, 7
    %v1953 = vsub.s32 %v1950, %v1952
    %v1954 = vrot.slane %v1932, %v1953
    %v1956 = vunpack.c.l.s4 1966171168
    %v1957 = vunpack.c.0.s8 %v1956
    %v1958 = vlaneseq
    %v1959 = vshrl.u32 %v1958, 7
    %v1960 = vsub.s32 %v1957, %v1959
    %v1961 = vrot.slane %v1933, %v1960
    %v1962 = vcombine.high %v1940, %v1940
    %v1963 = vcombine.high %v1947, %v1947
    %v1964 = vcombine.high %v1954, %v1954
    %v1965 = vcombine.high %v1961, %v1961
    %v1966 = vcombine.high %v29, %v29
    %v1968 = vunpack.c.l.s4 1966171168
    %v1969 = vunpack.c.0.s8 %v1968
    %v1970 = vlaneseq
    %v1971 = vshrl.u32 %v1970, 7
    %v1972 = vsub.s32 %v1969, %v1971
    %v1973 = vrot.slane %v29, %v1972
    %v1975 = vunpack.c.l.s4 1966171168
    %v1976 = vunpack.c.0.s8 %v1975
    %v1977 = vlaneseq
    %v1978 = vshrl.u32 %v1977, 7
    %v1979 = vsub.s32 %v1976, %v1978
    %v1980 = vrot.slane %v1966, %v1979
    %v1981 = vcombine.high %v1973, %v1973
    %v1982 = vcombine.high %v1980, %v1980
    %v1984 = vunpack.c.l.s4 1966171168
    %v1985 = vunpack.c.0.s8 %v1984
    %v1986 = vlaneseq
    %v1987 = vshrl.u32 %v1986, 7
    %v1988 = vsub.s32 %v1985, %v1987
    %v1989 = vrot.slane %v1973, %v1988
    %v1991 = vunpack.c.l.s4 1966171168
    %v1992 = vunpack.c.0.s8 %v1991
    %v1993 = vlaneseq
    %v1994 = vshrl.u32 %v1993, 7
    %v1995 = vsub.s32 %v1992, %v1994
    %v1996 = vrot.slane %v1980, %v1995
    %v1998 = vunpack.c.l.s4 1966171168
    %v1999 = vunpack.c.0.s8 %v1998
    %v2000 = vlaneseq
    %v2001 = vshrl.u32 %v2000, 7
    %v2002 = vsub.s32 %v1999, %v2001
    %v2003 = vrot.slane %v1981, %v2002
    %v2005 = vunpack.c.l.s4 1966171168
    %v2006 = vunpack.c.0.s8 %v2005
    %v2007 = vlaneseq
    %v2008 = vshrl.u32 %v2007, 7
    %v2009 = vsub.s32 %v2006, %v2008
    %v2010 = vrot.slane %v1982, %v2009
    %v2011 = vcombine.high %v1989, %v1989
    %v2012 = vcombine.high %v1996, %v1996
    %v2013 = vcombine.high %v2003, %v2003
    %v2014 = vcombine.high %v2010, %v2010
    %v2015 = vcombine.high %v30, %v30
    %v2017 = vunpack.c.l.s4 1966171168
    %v2018 = vunpack.c.0.s8 %v2017
    %v2019 = vlaneseq
    %v2020 = vshrl.u32 %v2019, 7
    %v2021 = vsub.s32 %v2018, %v2020
    %v2022 = vrot.slane %v30, %v2021
    %v2024 = vunpack.c.l.s4 1966171168
    %v2025 = vunpack.c.0.s8 %v2024
    %v2026 = vlaneseq
    %v2027 = vshrl.u32 %v2026, 7
    %v2028 = vsub.s32 %v2025, %v2027
    %v2029 = vrot.slane %v2015, %v2028
    %v2030 = vcombine.high %v2022, %v2022
    %v2031 = vcombine.high %v2029, %v2029
    %v2033 = vunpack.c.l.s4 1966171168
    %v2034 = vunpack.c.0.s8 %v2033
    %v2035 = vlaneseq
    %v2036 = vshrl.u32 %v2035, 7
    %v2037 = vsub.s32 %v2034, %v2036
    %v2038 = vrot.slane %v2022, %v2037
    %v2040 = vunpack.c.l.s4 1966171168
    %v2041 = vunpack.c.0.s8 %v2040
    %v2042 = vlaneseq
    %v2043 = vshrl.u32 %v2042, 7
    %v2044 = vsub.s32 %v2041, %v2043
    %v2045 = vrot.slane %v2029, %v2044
    %v2047 = vunpack.c.l.s4 1966171168
    %v2048 = vunpack.c.0.s8 %v2047
    %v2049 = vlaneseq
    %v2050 = vshrl.u32 %v2049, 7
    %v2051 = vsub.s32 %v2048, %v2050
    %v2052 = vrot.slane %v2030, %v2051
    %v2054 = vunpack.c.l.s4 1966171168
    %v2055 = vunpack.c.0.s8 %v2054
    %v2056 = vlaneseq
    %v2057 = vshrl.u32 %v2056, 7
    %v2058 = vsub.s32 %v2055, %v2057
    %v2059 = vrot.slane %v2031, %v2058
    %v2060 = vcombine.high %v2038, %v2038
    %v2061 = vcombine.high %v2045, %v2045
    %v2062 = vcombine.high %v2052, %v2052
    %v2063 = vcombine.high %v2059, %v2059
    %v2064 = vcombine.high %v31, %v31
    %v2066 = vunpack.c.l.s4 1966171168
    %v2067 = vunpack.c.0.s8 %v2066
    %v2068 = vlaneseq
    %v2069 = vshrl.u32 %v2068, 7
    %v2070 = vsub.s32 %v2067, %v2069
    %v2071 = vrot.slane %v31, %v2070
    %v2073 = vunpack.c.l.s4 1966171168
    %v2074 = vunpack.c.0.s8 %v2073
    %v2075 = vlaneseq
    %v2076 = vshrl.u32 %v2075, 7
    %v2077 = vsub.s32 %v2074, %v2076
    %v2078 = vrot.slane %v2064, %v2077
    %v2079 = vcombine.high %v2071, %v2071
    %v2080 = vcombine.high %v2078, %v2078
    %v2082 = vunpack.c.l.s4 1966171168
    %v2083 = vunpack.c.0.s8 %v2082
    %v2084 = vlaneseq
    %v2085 = vshrl.u32 %v2084, 7
    %v2086 = vsub.s32 %v2083, %v2085
    %v2087 = vrot.slane %v2071, %v2086
    %v2089 = vunpack.c.l.s4 1966171168
    %v2090 = vunpack.c.0.s8 %v2089
    %v2091 = vlaneseq
    %v2092 = vshrl.u32 %v2091, 7
    %v2093 = vsub.s32 %v2090, %v2092
    %v2094 = vrot.slane %v2078, %v2093
    %v2096 = vunpack.c.l.s4 1966171168
    %v2097 = vunpack.c.0.s8 %v2096
    %v2098 = vlaneseq
    %v2099 = vshrl.u32 %v2098, 7
    %v2100 = vsub.s32 %v2097, %v2099
    %v2101 = vrot.slane %v2079, %v2100
    %v2103 = vunpack.c.l.s4 1966171168
    %v2104 = vunpack.c.0.s8 %v2103
    %v2105 = vlaneseq
    %v2106 = vshrl.u32 %v2105, 7
    %v2107 = vsub.s32 %v2104, %v2106
    %v2108 = vrot.slane %v2080, %v2107
    %v2109 = vcombine.high %v2087, %v2087
    %v2110 = vcombine.high %v2094, %v2094
    %v2111 = vcombine.high %v2101, %v2101
    %v2112 = vcombine.high %v2108, %v2108
    %v2113 = vcombine.high %v32, %v32
    %v2115 = vunpack.c.l.s4 1966171168
    %v2116 = vunpack.c.0.s8 %v2115
    %v2117 = vlaneseq
    %v2118 = vshrl.u32 %v2117, 7
    %v2119 = vsub.s32 %v2116, %v2118
    %v2120 = vrot.slane %v32, %v2119
    %v2122 = vunpack.c.l.s4 1966171168
    %v2123 = vunpack.c.0.s8 %v2122
    %v2124 = vlaneseq
    %v2125 = vshrl.u32 %v2124, 7
    %v2126 = vsub.s32 %v2123, %v2125
    %v2127 = vrot.slane %v2113, %v2126
    %v2128 = vcombine.high %v2120, %v2120
    %v2129 = vcombine.high %v2127, %v2127
    %v2131 = vunpack.c.l.s4 1966171168
    %v2132 = vunpack.c.0.s8 %v2131
    %v2133 = vlaneseq
    %v2134 = vshrl.u32 %v2133, 7
    %v2135 = vsub.s32 %v2132, %v2134
    %v2136 = vrot.slane %v2120, %v2135
    %v2138 = vunpack.c.l.s4 1966171168
    %v2139 = vunpack.c.0.s8 %v2138
    %v2140 = vlaneseq
    %v2141 = vshrl.u32 %v2140, 7
    %v2142 = vsub.s32 %v2139, %v2141
    %v2143 = vrot.slane %v2127, %v2142
    %v2145 = vunpack.c.l.s4 1966171168
    %v2146 = vunpack.c.0.s8 %v2145
    %v2147 = vlaneseq
    %v2148 = vshrl.u32 %v2147, 7
    %v2149 = vsub.s32 %v2146, %v2148
    %v2150 = vrot.slane %v2128, %v2149
    %v2152 = vunpack.c.l.s4 1966171168
    %v2153 = vunpack.c.0.s8 %v2152
    %v2154 = vlaneseq
    %v2155 = vshrl.u32 %v2154, 7
    %v2156 = vsub.s32 %v2153, %v2155
    %v2157 = vrot.slane %v2129, %v2156
    %v2158 = vcombine.high %v2136, %v2136
    %v2159 = vcombine.high %v2143, %v2143
    %v2160 = vcombine.high %v2150, %v2150
    %v2161 = vcombine.high %v2157, %v2157
    %v2162 = vcombine.high %v33, %v33
    %v2164 = vunpack.c.l.s4 1966171168
    %v2165 = vunpack.c.0.s8 %v2164
    %v2166 = vlaneseq
    %v2167 = vshrl.u32 %v2166, 7
    %v2168 = vsub.s32 %v2165, %v2167
    %v2169 = vrot.slane %v33, %v2168
    %v2171 = vunpack.c.l.s4 1966171168
    %v2172 = vunpack.c.0.s8 %v2171
    %v2173 = vlaneseq
    %v2174 = vshrl.u32 %v2173, 7
    %v2175 = vsub.s32 %v2172, %v2174
    %v2176 = vrot.slane %v2162, %v2175
    %v2177 = vcombine.high %v2169, %v2169
    %v2178 = vcombine.high %v2176, %v2176
    %v2180 = vunpack.c.l.s4 1966171168
    %v2181 = vunpack.c.0.s8 %v2180
    %v2182 = vlaneseq
    %v2183 = vshrl.u32 %v2182, 7
    %v2184 = vsub.s32 %v2181, %v2183
    %v2185 = vrot.slane %v2169, %v2184
    %v2187 = vunpack.c.l.s4 1966171168
    %v2188 = vunpack.c.0.s8 %v2187
    %v2189 = vlaneseq
    %v2190 = vshrl.u32 %v2189, 7
    %v2191 = vsub.s32 %v2188, %v2190
    %v2192 = vrot.slane %v2176, %v2191
    %v2194 = vunpack.c.l.s4 1966171168
    %v2195 = vunpack.c.0.s8 %v2194
    %v2196 = vlaneseq
    %v2197 = vshrl.u32 %v2196, 7
    %v2198 = vsub.s32 %v2195, %v2197
    %v2199 = vrot.slane %v2177, %v2198
    %v2201 = vunpack.c.l.s4 1966171168
    %v2202 = vunpack.c.0.s8 %v2201
    %v2203 = vlaneseq
    %v2204 = vshrl.u32 %v2203, 7
    %v2205 = vsub.s32 %v2202, %v2204
    %v2206 = vrot.slane %v2178, %v2205
    %v2207 = vcombine.high %v2185, %v2185
    %v2208 = vcombine.high %v2192, %v2192
    %v2209 = vcombine.high %v2199, %v2199
    %v2210 = vcombine.high %v2206, %v2206
    %v2212 = vunpack.c.l.s4 1966171168
    %v2213 = vunpack.c.0.s8 %v2212
    %v2214 = vlaneseq
    %v2215 = vshrl.u32 %v2214, 7
    %v2216 = vsub.s32 %v2213, %v2215
    %v2217 = vrot.slane %v34, %v2216
    %v2218 = vcombine.high %v2217, %v2217
    %v2220 = vunpack.c.l.s4 1966171168
    %v2221 = vunpack.c.0.s8 %v2220
    %v2222 = vlaneseq
    %v2223 = vshrl.u32 %v2222, 7
    %v2224 = vsub.s32 %v2221, %v2223
    %v2225 = vrot.slane %v2217, %v2224
    %v2227 = vunpack.c.l.s4 1966171168
    %v2228 = vunpack.c.0.s8 %v2227
    %v2229 = vlaneseq
    %v2230 = vshrl.u32 %v2229, 7
    %v2231 = vsub.s32 %v2228, %v2230
    %v2232 = vrot.slane %v2218, %v2231
    %v3899 = vunpack.c.l.b16 %v35
    %v3900 = vunpack.c.l.b16 %v36
    %v3901 = vunpack.c.l.b16 %v37
    %v3902 = vunpack.c.l.b16 %v38
    %v3903 = vunpack.c.l.b16 %v39
    %v3904 = vunpack.c.l.b16 %v40
    %v3905 = vunpack.c.l.b16 %v41
    %v3906 = vunpack.c.l.b16 %v42
    %v3907 = vunpack.c.l.b16 %v43
    %v3908 = vunpack.c.l.b16 %v44
    %v3909 = vunpack.c.l.b16 %v45
    %v3910 = vunpack.c.l.b16 %v46
    %v3911 = vunpack.c.l.b16 %v47
    %v3912 = vunpack.c.l.b16 %v48
    %v3913 = vunpack.c.l.b16 %v49
    %v3914 = vunpack.c.l.b16 %v50
    %v3915 = vunpack.c.l.b16 %v51
    %v3916 = vunpack.c.l.b16 %v52
    %v3917 = vunpack.c.l.b16 %v53
    %v3918 = vunpack.c.l.b16 %v54
    %v3919 = vunpack.c.l.b16 %v55
    %v3920 = vunpack.c.l.b16 %v56
    %v3921 = vunpack.c.l.b16 %v57
    %v3922 = vunpack.c.l.b16 %v58
    %v3923 = vunpack.c.l.b16 %v59
    %v3924 = vunpack.c.l.b16 %v60
    %v3925 = vunpack.c.l.b16 %v61
    %v3926 = vunpack.c.l.b16 %v62
    %v3927 = vunpack.c.l.b16 %v63
    %v3928 = vunpack.c.l.b16 %v64
    %v3929 = vunpack.c.l.b16 %v65
    %v3930 = vunpack.c.l.b16 %v66
    %v3931 = vunpack.c.l.b16 %v67
    %v3932 = vunpack.c.l.b16 %v68
    %v3933 = vunpack.c.l.b16 %v69
    %v3934 = vunpack.c.l.b16 %v70
    %v3935 = vunpack.c.l.b16 %v71
    %v3936 = vunpack.c.l.b16 %v72
    %v3937 = vunpack.c.l.b16 %v73
    %v3938 = vunpack.c.l.b16 %v74
    %v3939 = vunpack.c.l.b16 %v75
    %v3940 = vunpack.c.l.b16 %v76
    %v3941 = vunpack.c.l.b16 %v77
    %v3942 = vunpack.c.l.b16 %v78
    %v3943 = vunpack.c.l.b16 %v79
    %v3944 = vunpack.c.l.b16 %v80
    %v3945 = vunpack.c.l.b16 %v81
    %v3946 = vunpack.c.l.b16 %v82
    %v3947 = vunpack.c.l.b16 %v83
    %v3948 = vunpack.c.l.b16 %v84
    %v3949 = vunpack.c.l.b16 %v85
    %v3950 = vunpack.c.l.b16 %v86
    %v3951 = vunpack.c.l.b16 %v87
    %v3952 = vunpack.c.l.b16 %v88
    %v3953 = vunpack.c.l.b16 %v89
    %v3954 = vunpack.c.l.b16 %v90
    %v3955 = vunpack.c.l.b16 %v91
    %v3956 = vunpack.c.l.b16 %v92
    %v3957 = vunpack.c.l.b16 %v93
    %v3958 = vunpack.c.l.b16 %v94
    %v3959 = vunpack.c.l.b16 %v95
    %v3960 = vunpack.c.l.b16 %v96
    %v3961 = vunpack.c.l.b16 %v97
    %v3962 = vunpack.c.l.b16 %v98
    %v3963 = vunpack.c.l.b16 %v99
    %v3964 = vunpack.c.l.b16 %v100
    %v3965 = vunpack.c.l.b16 %v101
    %v3966 = vunpack.c.l.b16 %v102
    %v3967 = vunpack.c.l.b16 %v103
    %v3968 = vunpack.c.l.b16 %v104
    %v3969 = vunpack.c.l.b16 %v105
    %v3970 = vunpack.c.l.b16 %v106
    %v3971 = vunpack.c.l.b16 %v107
    %v3972 = vunpack.c.l.b16 %v108
    %v3973 = vunpack.c.l.b16 %v109
    %v3974 = vunpack.c.l.b16 %v110
    %v3975 = vunpack.c.l.b16 %v111
    %v3976 = vunpack.c.l.b16 %v112
    %v3977 = vunpack.c.l.b16 %v113
    %v3978 = vunpack.c.l.b16 %v114
    %v3979 = vunpack.c.l.b16 %v115
    %v3980 = vunpack.c.l.b16 %v116
    %v3981 = vunpack.c.l.b16 %v117
    %v3982 = vunpack.c.l.b16 %v118
    %v3983 = vunpack.c.l.b16 %v119
    %v3984 = vunpack.c.l.b16 %v120
    %v3985 = vunpack.c.l.b16 %v121
    %v3986 = vunpack.c.l.b16 %v122
    %v3987 = vunpack.c.l.b16 %v123
    %v3988 = vunpack.c.l.b16 %v124
    %v3989 = vunpack.c.l.b16 %v125
    %v3990 = vunpack.c.l.b16 %v126
    %v3991 = vunpack.c.l.b16 %v127
    %v3992 = vunpack.c.l.b16 %v128
    %v3993 = vunpack.c.l.b16 %v129
    %v3994 = vunpack.c.l.b16 %v130
    %v3995 = vunpack.c.l.b16 %v131
    %v3996 = vunpack.c.l.b16 %v132
    %v3997 = vunpack.c.l.b16 %v133
    %v3998 = vunpack.c.l.b16 %v134
    %v3999 = vunpack.c.l.b16 %v135
    %v4000 = vunpack.c.l.b16 %v136
    %v4001 = vunpack.c.l.b16 %v137
    %v4002 = vunpack.c.l.b16 %v138
    %v4003 = vunpack.c.l.b16 %v139
    %v4004 = vunpack.c.l.b16 %v140
    %v4005 = vunpack.c.l.b16 %v141
    %v4006 = vunpack.c.l.b16 %v142
    %v4007 = vunpack.c.l.b16 %v143
    %v4008 = vunpack.c.l.b16 %v144
    %v4009 = vunpack.c.l.b16 %v145
    %v4010 = vunpack.c.l.b16 %v146
    %v4011 = vunpack.c.l.b16 %v147
    %v4012 = vunpack.c.l.b16 %v148
    %v4013 = vunpack.c.l.b16 %v149
    %v4014 = vunpack.c.l.b16 %v150
    %v4015 = vunpack.c.l.b16 %v151
    %v4016 = vunpack.c.l.b16 %v152
    %v4017 = vunpack.c.l.b16 %v153
    %v4018 = vunpack.c.l.b16 %v154
    %v4019 = vunpack.c.l.b16 %v155
    %v4020 = vunpack.c.l.b16 %v156
    %v4021 = vunpack.c.l.b16 %v157
    %v4022 = vunpack.c.l.b16 %v158
    %v4023 = vunpack.c.l.b16 %v159
    %v4024 = vunpack.c.l.b16 %v160
    %v4025 = vunpack.c.l.b16 %v161
    %v4026 = vunpack.c.l.b16 %v162
    %v4027 = vunpack.c.l.b16 %v163
    %v4028 = vunpack.c.l.b16 %v164
    %v4029 = vunpack.c.l.b16 %v165
    %v4030 = vunpack.c.l.b16 %v166
    %v4031 = vunpack.c.l.b16 %v167
    %v4032 = vunpack.c.l.b16 %v168
    %v4033 = vunpack.c.l.b16 %v169
    %v4034 = vunpack.c.l.b16 %v170
    %v4035 = vunpack.c.l.b16 %v171
    %v4036 = vunpack.c.l.b16 %v172
    %v4037 = vunpack.c.l.b16 %v173
    %v4038 = vunpack.c.l.b16 %v174
    %v4039 = vunpack.c.l.b16 %v175
    %v4040 = vunpack.c.l.b16 %v176
    %v4041 = vunpack.c.l.b16 %v177
    %v4042 = vunpack.c.l.b16 %v178
    %v4043 = vunpack.c.l.b16 %v179
    %v4044 = vunpack.c.l.b16 %v180
    %v4045 = vunpack.c.l.b16 %v181
    %v4046 = vunpack.c.l.b16 %v182
    %v4047 = vunpack.c.l.b16 %v183
    %v4048 = vunpack.c.l.b16 %v184
    %v4049 = vunpack.c.l.b16 %v185
    %v4050 = vunpack.c.l.b16 %v186
    %v4051 = vunpack.c.l.b16 %v187
    %v4052 = vunpack.c.l.b16 %v188
    %v4053 = vunpack.c.l.b16 %v189
    %v4054 = vunpack.c.l.b16 %v190
    %v4055 = vunpack.c.l.b16 %v191
    %v4056 = vunpack.c.l.b16 %v192
    %v4057 = vunpack.c.l.b16 %v193
    %v4058 = vunpack.c.l.b16 %v194
    %v4059 = vunpack.c.l.b16 %v195
    %v4060 = vunpack.c.l.b16 %v196
    %v4061 = vunpack.c.l.b16 %v197
    %v4062 = vunpack.c.l.b16 %v198
    %v4063 = vunpack.c.l.b16 %v199
    %v4064 = vunpack.c.l.b16 %v200
    %v4065 = vunpack.c.l.b16 %v201
    %v4066 = vunpack.c.l.b16 %v202
    %v4067 = vunpack.c.l.b16 %v203
    %v4068 = vunpack.c.l.b16 %v204
    %v4069 = vunpack.c.l.b16 %v205
    %v4070 = vunpack.c.l.b16 %v206
    %v4071 = vunpack.c.l.b16 %v207
    %v4072 = vunpack.c.l.b16 %v208
    %v4073 = vunpack.c.l.b16 %v209
    %v4074 = vunpack.c.l.b16 %v210
    %v4075 = vunpack.c.l.b16 %v211
    %v4076 = vunpack.c.l.b16 %v212
    %v4077 = vunpack.c.l.b16 %v213
    %v4078 = vunpack.c.l.b16 %v214
    %v4079 = vunpack.c.l.b16 %v215
    %v4080 = vunpack.c.l.b16 %v216
    %v4081 = vunpack.c.l.b16 %v217
    %v4082 = vunpack.c.l.b16 %v218
    %v4083 = vunpack.c.l.b16 %v219
    %v4084 = vunpack.c.l.b16 %v220
    %v4085 = vunpack.c.l.b16 %v221
    %v4086 = vunpack.c.l.b16 %v222
    %v4087 = vunpack.c.l.b16 %v223
    %v4088 = vunpack.c.l.b16 %v224
    %v4089 = vunpack.c.l.b16 %v225
    %v4090 = vunpack.c.l.b16 %v226
    %v4091 = vunpack.c.l.b16 %v227
    %v4092 = vunpack.c.l.b16 %v228
    %v4093 = vunpack.c.l.b16 %v229
    %v4094 = vunpack.c.l.b16 %v230
    %v4095 = vunpack.c.l.b16 %v231
    %v4096 = vunpack.c.l.b16 %v232
    %v4097 = vunpack.c.l.b16 %v233
    %v4098 = vunpack.c.l.b16 %v234
    %v4099 = vunpack.c.l.b16 %v235
    %v4100 = vunpack.c.l.b16 %v236
    %v4101 = vunpack.c.l.b16 %v237
    %v4102 = vunpack.c.l.b16 %v238
    %v4103 = vunpack.c.l.b16 %v239
    %v4104 = vunpack.c.l.b16 %v240
    %v4105 = vunpack.c.l.b16 %v241
    %v4106 = vunpack.c.l.b16 %v242
    %v4107 = vunpack.c.l.b16 %v243
    %v4108 = vunpack.c.l.b16 %v244
    %v4109 = vunpack.c.l.b16 %v245
    %v4110 = vunpack.c.l.b16 %v246
    %v4111 = vunpack.c.l.b16 %v247
    %v4112 = vunpack.c.l.b16 %v248
    %v4113 = vunpack.c.l.b16 %v249
    %v4114 = vunpack.c.l.b16 %v250
    %v4115 = vunpack.c.l.b16 %v251
    %v4116 = vunpack.c.l.b16 %v252
    %v4117 = vunpack.c.l.b16 %v253
    %v4118 = vunpack.c.l.b16 %v254
    %v4119 = vunpack.c.l.b16 %v255
    %v4120 = vunpack.c.l.b16 %v256
    %v4121 = vunpack.c.l.b16 %v257
    %v4122 = vunpack.c.l.b16 %v258
    %v4123 = vunpack.c.l.b16 %v259
    %v4124 = vunpack.c.l.b16 %v260
    %v4125 = vunpack.c.l.b16 %v261
    %v4126 = vunpack.c.l.b16 %v262
    %v4127 = vunpack.c.l.b16 %v263
    %v4128 = vunpack.c.l.b16 %v264
    %v4129 = vunpack.c.l.b16 %v265
    %v4130 = vunpack.c.l.b16 %v266
    %v4131 = vunpack.c.l.b16 %v267
    %v4132 = vunpack.c.l.b16 %v268
    %v4133 = vunpack.c.l.b16 %v269
    %v4134 = vunpack.c.l.b16 %v270
    %v4135 = vunpack.c.l.b16 %v271
    %v4136 = vunpack.c.l.b16 %v272
    %v4137 = vunpack.c.l.b16 %v273
    %v4138 = vunpack.c.l.b16 %v274
    %v4139 = vunpack.c.l.b16 %v275
    %v4140 = vunpack.c.l.b16 %v276
    %v4141 = vunpack.c.l.b16 %v277
    %v4142 = vunpack.c.l.b16 %v278
    %v4143 = vunpack.c.l.b16 %v279
    %v4144 = vunpack.c.l.b16 %v280
    %v4145 = vunpack.c.l.b16 %v281
    %v4146 = vunpack.c.l.b16 %v282
    %v4147 = vunpack.c.l.b16 %v283
    %v4148 = vunpack.c.l.b16 %v284
    %v4149 = vunpack.c.l.b16 %v285
    %v4150 = vunpack.c.l.b16 %v286
    %v4151 = vunpack.c.l.b16 %v287
    %v4152 = vunpack.c.l.b16 %v288
    %v4153 = vunpack.c.l.b16 %v289
    %v4154 = vunpack.c.l.b16 %v290
    %v4155 = vunpack.c.l.b16 %v291
    %v4156 = vunpack.c.l.b16 %v292
    %v4157 = vunpack.c.l.b16 %v293
    %v4158 = vunpack.c.l.b16 %v294
    %v4159 = vunpack.c.l.b16 %v295
    %v4160 = vunpack.c.l.b16 %v296
    %v4161 = vunpack.c.l.b16 %v297
    %v4162 = vunpack.c.l.b16 %v298
    %v4163 = vunpack.c.l.b16 %v299
    %v4164 = vunpack.c.l.b16 %v300
    %v4165 = vunpack.c.l.b16 %v301
    %v4166 = vunpack.c.l.b16 %v302
    %v4167 = vunpack.c.l.b16 %v303
    %v4168 = vunpack.c.l.b16 %v304
    %v4169 = vunpack.c.l.b16 %v305
    %v4170 = vunpack.c.l.b16 %v306
    %v4171 = vunpack.c.l.b16 %v307
    %v4172 = vunpack.c.l.b16 %v308
    %v4173 = vunpack.c.l.b16 %v309
    %v4174 = vunpack.c.l.b16 %v310
    %v4175 = vunpack.c.l.b16 %v311
    %v4176 = vunpack.c.l.b16 %v312
    %v4177 = vunpack.c.l.b16 %v313
    %v4178 = vunpack.c.l.b16 %v314
    %v4179 = vunpack.c.l.b16 %v315
    %v4180 = vunpack.c.l.b16 %v316
    %v4181 = vunpack.c.l.b16 %v317
    %v4182 = vunpack.c.l.b16 %v318
    %v4183 = vunpack.c.l.b16 %v319
    %v4184 = vunpack.c.l.b16 %v320
    %v4185 = vunpack.c.l.b16 %v321
    %v4186 = vunpack.c.l.b16 %v322
    %v4187 = vunpack.c.l.b16 %v323
    %v4188 = vunpack.c.l.b16 %v324
    %v4189 = vunpack.c.l.b16 %v325
    %v4190 = vunpack.c.l.b16 %v326
    %v4191 = vunpack.c.l.b16 %v327
    %v4192 = vunpack.c.l.b16 %v328
    %v4193 = vunpack.c.l.b16 %v329
    %v4194 = vunpack.c.l.b16 %v330
    %v4195 = vunpack.c.l.b16 %v331
    %v4196 = vunpack.c.l.b16 %v332
    %v4197 = vunpack.c.l.b16 %v333
    %v4198 = vunpack.c.l.b16 %v334
    %v4199 = vunpack.c.l.b16 %v335
    %v4200 = vunpack.c.l.b16 %v336
    %v4201 = vunpack.c.l.b16 %v337
    %v4202 = vunpack.c.l.b16 %v338
    %v4203 = vunpack.c.l.b16 %v339
    %v4204 = vunpack.c.l.b16 %v340
    %v4205 = vunpack.c.l.b16 %v341
    %v4206 = vunpack.c.l.b16 %v342
    %v4207 = vunpack.c.l.b16 %v343
    %v4208 = vunpack.c.l.b16 %v344
    %v4209 = vunpack.c.l.b16 %v345
    %v4210 = vunpack.c.l.b16 %v346
    %v4211 = vunpack.c.l.b16 %v347
    %v4212 = vunpack.c.l.b16 %v348
    %v4213 = vunpack.c.l.b16 %v349
    %v4214 = vunpack.c.l.b16 %v350
    %v4215 = vunpack.c.l.b16 %v351
    %v4216 = vunpack.c.l.b16 %v352
    %v4217 = vunpack.c.l.b16 %v353
    %v4218 = vunpack.c.l.b16 %v354
    %v4219 = vunpack.c.l.b16 %v355
    %v4220 = vunpack.c.l.b16 %v356
    %v4221 = vunpack.c.l.b16 %v357
    %v4222 = vunpack.c.l.b16 %v358
    %v4223 = vunpack.c.l.b16 %v359
    %v4224 = vunpack.c.l.b16 %v360
    %v4225 = vunpack.c.l.b16 %v361
    %v4226 = vunpack.c.l.b16 %v362
    %v4227 = vunpack.c.l.b16 %v363
    %v4228 = vunpack.c.l.b16 %v364
    %v4229 = vunpack.c.l.b16 %v365
    %v4230 = vunpack.c.l.b16 %v366
    %v4231 = vunpack.c.l.b16 %v367
    %v4232 = vunpack.c.l.b16 %v368
    %v4233 = vunpack.c.l.b16 %v369
    %v4234 = vunpack.c.l.b16 %v370
    %v4235 = vunpack.c.l.b16 %v371
    %v4236 = vunpack.c.l.b16 %v372
    %v4237 = vunpack.c.l.b16 %v373
    %v4238 = vunpack.c.l.b16 %v374
    %v4239 = vunpack.c.l.b16 %v375
    %v4240 = vunpack.c.l.b16 %v376
    %v4241 = vunpack.c.l.b16 %v377
    %v4242 = vunpack.c.l.b16 %v378
    %v4243 = vunpack.c.l.b16 %v379
    %v4244 = vunpack.c.l.b16 %v380
    %v4245 = vunpack.c.l.b16 %v381
    %v4246 = vunpack.c.l.b16 %v382
    %v4247 = vunpack.c.l.b16 %v383
    %v4248 = vunpack.c.l.b16 %v384
    %v4249 = vunpack.c.l.b16 %v385
    %v4250 = vunpack.c.l.b16 %v386
    %v4251 = vunpack.c.l.b16 %v387
    %v4252 = vunpack.c.l.b16 %v388
    %v4253 = vunpack.c.l.b16 %v389
    %v4254 = vunpack.c.l.b16 %v390
    %v4255 = vunpack.c.l.b16 %v391
    %v4256 = vunpack.c.l.b16 %v392
    %v4257 = vunpack.c.l.b16 %v393
    %v4258 = vunpack.c.l.b16 %v394
    %v4259 = vunpack.c.l.b16 %v395
    %v4260 = vunpack.c.l.b16 %v396
    %v4261 = vunpack.c.l.b16 %v397
    %v4262 = vunpack.c.l.b16 %v398
    %v4263 = vunpack.c.l.b16 %v399
    %v4264 = vunpack.c.l.b16 %v400
    %v4265 = vunpack.c.l.b16 %v401
    %v4266 = vunpack.c.l.b16 %v402
    %v4267 = vunpack.c.l.b16 %v403
    %v4268 = vunpack.c.l.b16 %v404
    %v4269 = vunpack.c.l.b16 %v405
    %v4270 = vunpack.c.l.b16 %v406
    %v4271 = vunpack.c.l.b16 %v407
    %v4272 = vunpack.c.l.b16 %v408
    %v4273 = vunpack.c.l.b16 %v409
    %v4274 = vunpack.c.l.b16 %v410
    %v4275 = vunpack.c.l.b16 %v411
    %v4276 = vunpack.c.l.b16 %v412
    %v4277 = vunpack.c.l.b16 %v413
    %v4278 = vunpack.c.l.b16 %v414
    %v4279 = vunpack.c.l.b16 %v415
    %v4280 = vunpack.c.l.b16 %v416
    %v4281 = vunpack.c.l.b16 %v417
    %v4282 = vunpack.c.l.b16 %v418
    %v4283 = vunpack.c.l.b16 %v419
    %v4284 = vunpack.c.l.b16 %v420
    %v4285 = vunpack.c.l.b16 %v421
    %v4286 = vunpack.c.l.b16 %v422
    %v4287 = vunpack.c.l.b16 %v423
    %v4288 = vunpack.c.l.b16 %v424
    %v4289 = vunpack.c.l.b16 %v425
    %v4290 = vunpack.c.l.b16 %v426
    %v4291 = vunpack.c.l.b16 %v427
    %v4292 = vunpack.c.l.b16 %v428
    %v4293 = vunpack.c.l.b16 %v429
    %v4294 = vunpack.c.l.b16 %v430
    %v4295 = vunpack.c.l.b16 %v431
    %v4296 = vunpack.c.l.b16 %v432
    %v4297 = vunpack.c.l.b16 %v433
    %v4298 = vunpack.c.l.b16 %v434
    %v4299 = vunpack.c.l.b16 %v435
    %v4300 = vunpack.c.l.b16 %v436
    %v4301 = vunpack.c.l.b16 %v437
    %v4302 = vunpack.c.l.b16 %v438
    %v4303 = vunpack.c.l.b16 %v439
    %v4304 = vunpack.c.l.b16 %v440
    %v4305 = vunpack.c.l.b16 %v441
    %v4306 = vunpack.c.l.b16 %v442
    %v4307 = vunpack.c.l.b16 %v443
    %v4308 = vunpack.c.l.b16 %v444
    %v4309 = vunpack.c.l.b16 %v445
    %v4310 = vunpack.c.l.b16 %v446
    %v4311 = vunpack.c.l.b16 %v447
    %v4312 = vunpack.c.l.b16 %v448
    %v4313 = vunpack.c.l.b16 %v449
    %v4314 = vunpack.c.l.b16 %v450
    %v4315 = vunpack.c.l.b16 %v451
    %v4316 = vunpack.c.l.b16 %v452
    %v4317 = vunpack.c.l.b16 %v453
    %v4318 = vunpack.c.l.b16 %v454
    %v4319 = vunpack.c.l.b16 %v455
    %v4320 = vunpack.c.l.b16 %v456
    %v4321 = vunpack.c.l.b16 %v457
    %v4322 = vunpack.c.l.b16 %v458
    %v4323 = vunpack.c.l.b16 %v459
    %v4324 = vunpack.c.l.b16 %v460
    %v4325 = vunpack.c.l.b16 %v461
    %v4326 = vunpack.c.l.b16 %v462
    %v4327 = vunpack.c.l.b16 %v463
    %v4328 = vunpack.c.l.b16 %v464
    %v4329 = vunpack.c.l.b16 %v465
    %v4330 = vunpack.c.l.b16 %v466
    %v4331 = vunpack.c.l.b16 %v467
    %v4332 = vunpack.c.l.b16 %v468
    %v4333 = vunpack.c.l.b16 %v469
    %v4334 = vunpack.c.l.b16 %v470
    %v4335 = vunpack.c.l.b16 %v471
    %v4336 = vunpack.c.l.b16 %v472
    %v4337 = vunpack.c.l.b16 %v473
    %v4338 = vunpack.c.l.b16 %v474
    %v4339 = vunpack.c.l.b16 %v475
    %v4340 = vunpack.c.l.b16 %v476
    %v4341 = vunpack.c.l.b16 %v477
    %v4342 = vunpack.c.l.b16 %v478
    %v4343 = vunpack.c.l.b16 %v479
    %v4344 = vunpack.c.l.b16 %v480
    %v4345 = vunpack.c.l.b16 %v481
    %v4346 = vunpack.c.l.b16 %v482
    %v4347 = vunpack.c.l.b16 %v483
    %v4348 = vunpack.c.l.b16 %v484
    %v4349 = vunpack.c.l.b16 %v485
    %v4350 = vunpack.c.l.b16 %v486
    %v4351 = vunpack.c.l.b16 %v487
    %v4352 = vunpack.c.l.b16 %v488
    %v4353 = vunpack.c.l.b16 %v489
    %v4354 = vunpack.c.l.b16 %v490
    %v4355 = vunpack.c.l.b16 %v491
    %v4356 = vunpack.c.l.b16 %v492
    %v4357 = vunpack.c.l.b16 %v493
    %v4358 = vunpack.c.l.b16 %v494
    %v4359 = vunpack.c.l.b16 %v495
    %v4360 = vunpack.c.l.b16 %v496
    %v4361 = vunpack.c.l.b16 %v497
    %v4362 = vunpack.c.l.b16 %v498
    %v4363 = vunpack.c.l.b16 %v499
    %v4364 = vunpack.c.l.b16 %v500
    %v4365 = vunpack.c.l.b16 %v501
    %v4366 = vunpack.c.l.b16 %v502
    %v4367 = vunpack.c.l.b16 %v503
    %v4368 = vunpack.c.l.b16 %v504
    %v4369 = vunpack.c.l.b16 %v505
    %v4370 = vunpack.c.l.b16 %v506
    %v4371 = vunpack.c.l.b16 %v507
    %v4372 = vunpack.c.l.b16 %v508
    %v4373 = vunpack.c.l.b16 %v509
    %v4374 = vunpack.c.l.b16 %v510
    %v4375 = vunpack.c.l.b16 %v511
    %v4376 = vunpack.c.l.b16 %v512
    %v4377 = vunpack.c.l.b16 %v513
    %v4378 = vunpack.c.l.b16 %v514
    %v4379 = vunpack.c.l.b16 %v515
    %v4380 = vunpack.c.l.b16 %v516
    %v4381 = vunpack.c.l.b16 %v517
    %v4382 = vunpack.c.l.b16 %v518
    %v4383 = vunpack.c.l.b16 %v519
    %v4384 = vunpack.c.l.b16 %v520
    %v4385 = vunpack.c.l.b16 %v521
    %v4386 = vunpack.c.l.b16 %v522
    %v4387 = vunpack.c.l.b16 %v523
    %v4388 = vunpack.c.l.b16 %v524
    %v4389 = vunpack.c.l.b16 %v525
    %v4390 = vunpack.c.l.b16 %v526
    %v4391 = vunpack.c.l.b16 %v527
    %v4392 = vunpack.c.l.b16 %v528
    %v4393 = vunpack.c.l.b16 %v529
    %v4394 = vunpack.c.l.b16 %v530
    %v4395 = vunpack.c.l.b16 %v531
    %v4396 = vunpack.c.l.b16 %v532
    %v4397 = vunpack.c.l.b16 %v533
    %v4398 = vunpack.c.l.b16 %v534
    %v4399 = vunpack.c.l.b16 %v535
    %v4400 = vunpack.c.l.b16 %v536
    %v4401 = vunpack.c.l.b16 %v537
    %v4402 = vunpack.c.l.b16 %v538
    %v4403 = vunpack.c.l.b16 %v539
    %v4404 = vunpack.c.l.b16 %v540
    %v4405 = vunpack.c.l.b16 %v541
    %v4406 = vunpack.c.l.b16 %v542
    %v4407 = vunpack.c.l.b16 %v543
    %v4408 = vunpack.c.l.b16 %v544
    %v4409 = vunpack.c.l.b16 %v545
    %v4410 = vunpack.c.l.b16 %v546
    %v4411 = vunpack.c.l.b16 %v547
    %v4412 = vunpack.c.l.b16 %v548
    %v4413 = vunpack.c.l.b16 %v549
    %v4414 = vunpack.c.l.b16 %v550
    %v4415 = vunpack.c.l.b16 %v551
    %v4416 = vunpack.c.l.b16 %v552
    %v4417 = vunpack.c.l.b16 %v553
    %v4418 = vunpack.c.l.b16 %v554
    %v4419 = vunpack.c.l.b16 %v555
    %v4420 = vunpack.c.l.b16 %v556
    %v4421 = vunpack.c.l.b16 %v557
    %v4422 = vunpack.c.l.b16 %v558
    %v4423 = vunpack.c.l.b16 %v559
    %v4424 = vunpack.c.l.b16 %v560
    %v4425 = vunpack.c.l.b16 %v561
    %v4426 = vunpack.c.l.b16 %v562
    %v4427 = vunpack.c.l.b16 %v563
    %v4428 = vunpack.c.l.b16 %v564
    %v4429 = vunpack.c.l.b16 %v565
    %v4430 = vunpack.c.l.b16 %v566
    %v4431 = vunpack.c.l.b16 %v567
    %v4432 = vunpack.c.l.b16 %v568
    %v4433 = vunpack.c.l.b16 %v569
    %v4434 = vunpack.c.l.b16 %v570
    %v4435 = vunpack.c.l.b16 %v571
    %v4436 = vunpack.c.l.b16 %v572
    %v4437 = vunpack.c.l.b16 %v573
    %v4438 = vunpack.c.l.b16 %v574
    %v4439 = vunpack.c.l.b16 %v575
    %v4440 = vunpack.c.l.b16 %v576
    %v4441 = vunpack.c.l.b16 %v577
    %v4442 = vunpack.c.l.b16 %v578
    %v4443 = vunpack.c.l.b16 %v579
    %v4444 = vunpack.c.l.b16 %v580
    %v4445 = vunpack.c.l.b16 %v581
    %v4446 = vunpack.c.l.b16 %v582
    %v4447 = vunpack.c.l.b16 %v583
    %v4448 = vunpack.c.l.b16 %v584
    %v4449 = vunpack.c.l.b16 %v585
    %v4450 = vunpack.c.l.b16 %v586
    %v4451 = vunpack.c.l.b16 %v587
    %v4452 = vunpack.c.l.b16 %v588
    %v4453 = vunpack.c.l.b16 %v589
    %v4454 = vunpack.c.l.b16 %v590
    %v4455 = vunpack.c.l.b16 %v591
    %v4456 = vunpack.c.l.b16 %v592
    %v4457 = vunpack.c.l.b16 %v593
    %v4458 = vunpack.c.l.b16 %v594
    %v4459 = vunpack.c.l.b16 %v595
    %v4460 = vunpack.c.l.b16 %v596
    %v4461 = vunpack.c.l.b16 %v597
    %v4462 = vunpack.c.l.b16 %v598
    %v4463 = vunpack.c.l.b16 %v599
    %v4464 = vunpack.c.l.b16 %v600
    %v4465 = vunpack.c.l.b16 %v601
    %v4466 = vunpack.c.l.b16 %v602
    %v4467 = vunpack.c.l.b16 %v603
    %v4468 = vunpack.c.l.b16 %v604
    %v4469 = vunpack.c.l.b16 %v605
    %v4470 = vunpack.c.l.b16 %v606
    %v4471 = vunpack.c.l.b16 %v607
    %v4472 = vunpack.c.l.b16 %v608
    %v4473 = vunpack.c.l.b16 %v609
    %v4474 = vunpack.c.l.b16 %v610
    %v4475 = vunpack.c.l.b16 %v611
    %v4476 = vunpack.c.l.b16 %v612
    %v4477 = vunpack.c.l.b16 %v613
    %v4478 = vunpack.c.l.b16 %v614
    %v4479 = vunpack.c.l.b16 %v615
    %v4480 = vunpack.c.l.b16 %v616
    %v4481 = vunpack.c.l.b16 %v617
    %v4482 = vunpack.c.l.b16 %v618
    %v4483 = vunpack.c.l.b16 %v619
    %v4484 = vunpack.c.l.b16 %v620
    %v4485 = vunpack.c.l.b16 %v621
    %v4486 = vunpack.c.l.b16 %v622
    %v4487 = vunpack.c.l.b16 %v623
    %v4488 = vunpack.c.l.b16 %v624
    %v4489 = vunpack.c.l.b16 %v625
    %v4490 = vunpack.c.l.b16 %v626
    %v4491 = vunpack.c.l.b16 %v627
    %v4492 = vunpack.c.l.b16 %v628
    %v4493 = vunpack.c.l.b16 %v629
    %v4494 = vunpack.c.l.b16 %v630
    %v4495 = vunpack.c.l.b16 %v631
    %v4496 = vunpack.c.l.b16 %v632
    %v4497 = vunpack.c.l.b16 %v633
    %v4498 = vunpack.c.l.b16 %v634
    %v4499 = vunpack.c.l.b16 %v635
    %v4500 = vunpack.c.l.b16 %v636
    %v4501 = vunpack.c.l.b16 %v637
    %v4502 = vunpack.c.l.b16 %v638
    %v4503 = vunpack.c.l.b16 %v639
    %v4504 = vunpack.c.l.b16 %v640
    %v4505 = vunpack.c.l.b16 %v641
    %v4506 = vunpack.c.l.b16 %v642
    %v4507 = vunpack.c.l.b16 %v643
    %v4508 = vunpack.c.l.b16 %v644
    %v4509 = vunpack.c.l.b16 %v645
    %v4510 = vunpack.c.l.b16 %v646
    %v4511 = vunpack.c.l.b16 %v647
    %v4512 = vunpack.c.l.b16 %v648
    %v4513 = vunpack.c.l.b16 %v649
    %v4514 = vunpack.c.l.b16 %v650
    %v4515 = vunpack.c.l.b16 %v651
    %v4516 = vunpack.c.l.b16 %v652
    %v4517 = vunpack.c.l.b16 %v653
    %v4518 = vunpack.c.l.b16 %v654
    %v4519 = vunpack.c.l.b16 %v655
    %v4520 = vunpack.c.l.b16 %v656
    %v4521 = vunpack.c.l.b16 %v657
    %v4522 = vunpack.c.l.b16 %v658
    %v4523 = vunpack.c.l.b16 %v659
    %v4524 = vunpack.c.l.b16 %v660
    %v4525 = vunpack.c.l.b16 %v661
    %v4526 = vunpack.c.l.b16 %v662
    %v4527 = vunpack.c.l.b16 %v663
    %v4528 = vunpack.c.l.b16 %v664
    %v4529 = vunpack.c.l.b16 %v665
    %v4530 = vunpack.c.l.b16 %v666
    %v4531 = vunpack.c.l.b16 %v667
    %v4532 = vunpack.c.l.b16 %v668
    %v4533 = vunpack.c.l.b16 %v669
    %v4534 = vunpack.c.l.b16 %v670
    %v4535 = vunpack.c.l.b16 %v671
    %v4536 = vunpack.c.l.b16 %v672
    %v4537 = vunpack.c.l.b16 %v673
    %v4538 = vunpack.c.l.b16 %v674
    %v4539 = vunpack.c.l.b16 %v675
    %v4540 = vunpack.c.l.b16 %v676
    %v4541 = vunpack.c.l.b16 %v677
    %v4542 = vunpack.c.l.b16 %v678
    %v4543 = vunpack.c.l.b16 %v679
    %v4544 = vunpack.c.l.b16 %v680
    %v4545 = vunpack.c.l.b16 %v681
    %v4546 = vunpack.c.l.b16 %v682
    %v4547 = vunpack.c.l.b16 %v683
    %v4548 = vunpack.c.l.b16 %v684
    %v4549 = vunpack.c.l.b16 %v685
    %v4550 = vunpack.c.l.b16 %v686
    %v4551 = vunpack.c.l.b16 %v687
    %v4552 = vunpack.c.l.b16 %v688
    %v4553 = vunpack.c.l.b16 %v689
    %v4554 = vunpack.c.l.b16 %v690
    %v4555 = vunpack.c.l.b16 %v691
    %v4556 = vunpack.c.l.b16 %v692
    %v4557 = vunpack.c.l.b16 %v693
    %v4558 = vunpack.c.l.b16 %v694
    %v4559 = vunpack.c.l.b16 %v695
    %v4560 = vunpack.c.l.b16 %v696
    %v4561 = vunpack.c.l.b16 %v697
    %v4562 = vunpack.c.l.b16 %v698
    %v4563 = vunpack.c.l.b16 %v699
    %v4564 = vunpack.c.l.b16 %v700
    %v4565 = vunpack.c.l.b16 %v701
    %v4566 = vunpack.c.l.b16 %v702
    %v4567 = vunpack.c.l.b16 %v703
    %v4568 = vunpack.c.l.b16 %v704
    %v4569 = vunpack.c.l.b16 %v705
    %v4570 = vunpack.c.l.b16 %v706
    %v4571 = vunpack.c.l.b16 %v707
    %v4572 = vunpack.c.l.b16 %v708
    %v4573 = vunpack.c.l.b16 %v709
    %v4574 = vunpack.c.l.b16 %v710
    %v4575 = vunpack.c.l.b16 %v711
    %v4576 = vunpack.c.l.b16 %v712
    %v4577 = vunpack.c.l.b16 %v713
    %v4578 = vunpack.c.l.b16 %v714
    %v4579 = vunpack.c.l.b16 %v715
    %v4580 = vunpack.c.l.b16 %v716
    %v4581 = vunpack.c.l.b16 %v717
    %v4582 = vunpack.c.l.b16 %v718
    %v4583 = vunpack.c.l.b16 %v719
    %v4584 = vunpack.c.l.b16 %v720
    %v4585 = vunpack.c.l.b16 %v721
    %v4586 = vunpack.c.l.b16 %v722
    %v4587 = vunpack.c.l.b16 %v723
    %v4588 = vunpack.c.l.b16 %v724
    %v4589 = vunpack.c.l.b16 %v725
    %v4590 = vunpack.c.l.b16 %v726
    %v4591 = vunpack.c.l.b16 %v727
    %v4592 = vunpack.c.l.b16 %v728
    %v4593 = vunpack.c.l.b16 %v729
    %v4594 = vunpack.c.l.b16 %v730
    %v4595 = vunpack.c.l.b16 %v731
    %v4596 = vunpack.c.l.b16 %v732
    %v4597 = vunpack.c.l.b16 %v733
    %v4598 = vunpack.c.l.b16 %v734
    %v4599 = vunpack.c.l.b16 %v735
    %v4600 = vunpack.c.l.b16 %v736
    %v4601 = vunpack.c.l.b16 %v737
    %v4602 = vunpack.c.l.b16 %v738
    %v4603 = vunpack.c.l.b16 %v739
    %v4604 = vunpack.c.l.b16 %v740
    %v4605 = vunpack.c.l.b16 %v741
    %v4606 = vunpack.c.l.b16 %v742
    %v4607 = vunpack.c.l.b16 %v743
    %v4608 = vunpack.c.l.b16 %v744
    %v4609 = vunpack.c.l.b16 %v745
    %v4610 = vunpack.c.l.b16 %v746
    %v4611 = vunpack.c.l.b16 %v747
    %v4612 = vunpack.c.l.b16 %v748
    %v4613 = vunpack.c.l.b16 %v749
    %v4614 = vunpack.c.l.b16 %v750
    %v4615 = vunpack.c.l.b16 %v751
    %v4616 = vunpack.c.l.b16 %v752
    %v4617 = vunpack.c.l.b16 %v753
    %v4618 = vunpack.c.l.b16 %v754
    %v4619 = vunpack.c.l.b16 %v755
    %v4620 = vunpack.c.l.b16 %v756
    %v4621 = vunpack.c.l.b16 %v757
    %v4622 = vunpack.c.l.b16 %v758
    %v4623 = vunpack.c.l.b16 %v759
    %v4624 = vunpack.c.l.b16 %v760
    %v4625 = vunpack.c.l.b16 %v761
    %v4626 = vunpack.c.l.b16 %v762
    %v4627 = vunpack.c.l.b16 %v763
    %v4628 = vunpack.c.l.b16 %v764
    %v4629 = vunpack.c.l.b16 %v765
    %v4630 = vunpack.c.l.b16 %v766
    %v4631 = vunpack.c.l.b16 %v767
    %v4632 = vunpack.c.l.b16 %v768
    %v4633 = vunpack.c.l.b16 %v769
    %v4634 = vunpack.c.l.b16 %v770
    %v4635 = vunpack.c.l.b16 %v771
    %v4636 = vunpack.c.l.b16 %v772
    %v4637 = vunpack.c.l.b16 %v773
    %v4638 = vunpack.c.l.b16 %v774
    %v4639 = vunpack.c.l.b16 %v775
    %v4640 = vunpack.c.l.b16 %v776
    %v4641 = vunpack.c.l.b16 %v777
    %v4642 = vunpack.c.l.b16 %v778
    %v4643 = vunpack.c.l.b16 %v779
    %v4644 = vunpack.c.l.b16 %v780
    %v4645 = vunpack.c.l.b16 %v781
    %v4646 = vunpack.c.l.b16 %v782
    %v4647 = vunpack.c.l.b16 %v783
    %v4648 = vunpack.c.l.b16 %v784
    %v4649 = vunpack.c.l.b16 %v785
    %v4650 = vunpack.c.l.b16 %v786
    %v4651 = vunpack.c.l.b16 %v787
    %v4652 = vunpack.c.l.b16 %v788
    %v4653 = vunpack.c.l.b16 %v789
    %v4654 = vunpack.c.l.b16 %v790
    %v4655 = vunpack.c.l.b16 %v791
    %v4656 = vunpack.c.l.b16 %v792
    %v4657 = vunpack.c.l.b16 %v793
    %v4658 = vunpack.c.l.b16 %v794
    %v4659 = vunpack.c.l.b16 %v795
    %v4660 = vunpack.c.l.b16 %v796
    %v4661 = vunpack.c.l.b16 %v797
    %v4662 = vunpack.c.l.b16 %v798
    %v4663 = vunpack.c.l.b16 %v799
    %v4664 = vunpack.c.l.b16 %v800
    %v4665 = vunpack.c.l.b16 %v801
    %v4666 = vunpack.c.l.b16 %v802
    %v4667 = vunpack.c.l.b16 %v803
    %v4668 = vunpack.c.l.b16 %v804
    %v4669 = vunpack.c.l.b16 %v805
    %v4670 = vunpack.c.l.b16 %v806
    %v4671 = vunpack.c.l.b16 %v807
    %v4672 = vunpack.c.l.b16 %v808
    %v4673 = vunpack.c.l.b16 %v809
    %v4674 = vunpack.c.l.b16 %v810
    %v4675 = vunpack.c.l.b16 %v811
    %v4676 = vunpack.c.l.b16 %v812
    %v4677 = vunpack.c.l.b16 %v813
    %v4678 = vunpack.c.l.b16 %v814
    %v4679 = vunpack.c.l.b16 %v815
    %v4680 = vunpack.c.l.b16 %v816
    %v4681 = vunpack.c.l.b16 %v817
    %v4682 = vunpack.c.l.b16 %v818
    %v4683 = vunpack.c.l.b16 %v819
    %v4684 = vunpack.c.l.b16 %v820
    %v4685 = vunpack.c.l.b16 %v821
    %v4686 = vunpack.c.l.b16 %v822
    %v4687 = vunpack.c.l.b16 %v823
    %v4688 = vunpack.c.l.b16 %v824
    %v4689 = vunpack.c.l.b16 %v825
    %v4690 = vunpack.c.l.b16 %v826
    %v4691 = vunpack.c.l.b16 %v827
    %v4692 = vunpack.c.l.b16 %v828
    %v4693 = vunpack.c.l.b16 %v829
    %v4694 = vunpack.c.l.b16 %v830
    %v4695 = vunpack.c.l.b16 %v831
    %v4696 = vunpack.c.l.b16 %v832
    %v4697 = vunpack.c.l.b16 %v833
    %v4698 = vunpack.c.l.b16 %v834
    %v4699 = vunpack.c.l.b16 %v835
    %v4700 = vunpack.c.l.b16 %v836
    %v4701 = vunpack.c.l.b16 %v837
    %v4702 = vunpack.c.l.b16 %v838
    %v4703 = vunpack.c.l.b16 %v839
    %v4704 = vunpack.c.l.b16 %v840
    %v4705 = vunpack.c.l.b16 %v841
    %v4706 = vunpack.c.l.b16 %v842
    %v4707 = vunpack.c.l.b16 %v843
    %v4708 = vunpack.c.l.b16 %v844
    %v4709 = vunpack.c.l.b16 %v845
    %v4710 = vunpack.c.l.b16 %v846
    %v4711 = vunpack.c.l.b16 %v847
    %v4712 = vunpack.c.l.b16 %v848
    %v4713 = vunpack.c.l.b16 %v849
    %v4714 = vunpack.c.l.b16 %v850
    %v4715 = vunpack.c.l.b16 %v851
    %v4716 = vunpack.c.l.b16 %v852
    %v4717 = vunpack.c.l.b16 %v853
    %v4718 = vunpack.c.l.b16 %v854
    %v4719 = vunpack.c.l.b16 %v855
    %v4720 = vunpack.c.l.b16 %v856
    %v4721 = vunpack.c.l.b16 %v857
    %v4722 = vunpack.c.l.b16 %v858
    %v4723 = vunpack.c.l.b16 %v859
    %v4724 = vunpack.c.l.b16 %v860
    %v4725 = vunpack.c.l.b16 %v861
    %v4726 = vunpack.c.l.b16 %v862
    %v4727 = vunpack.c.l.b16 %v863
    %v4728 = vunpack.c.l.b16 %v864
    %v4729 = vunpack.c.l.b16 %v865
    %v4730 = vunpack.c.l.b16 %v866
    %v4731 = vunpack.c.l.b16 %v867
    %v4732 = vunpack.c.l.b16 %v868
    %v4733 = vunpack.c.l.b16 %v869
    %v4734 = vunpack.c.l.b16 %v870
    %v4735 = vunpack.c.l.b16 %v871
    %v4736 = vunpack.c.l.b16 %v872
    %v4737 = vunpack.c.l.b16 %v873
    %v4738 = vunpack.c.l.b16 %v874
    %v4739 = vunpack.c.l.b16 %v875
    %v4740 = vunpack.c.l.b16 %v876
    %v4741 = vunpack.c.l.b16 %v877
    %v4742 = vunpack.c.l.b16 %v878
    %v4743 = vunpack.c.l.b16 %v879
    %v4744 = vunpack.c.l.b16 %v880
    %v4745 = vunpack.c.l.b16 %v881
    %v4746 = vunpack.c.l.b16 %v882
    %v4747 = vunpack.c.l.b16 %v883
    %v4748 = vunpack.c.l.b16 %v884
    %v4749 = vunpack.c.l.b16 %v885
    %v4750 = vunpack.c.l.b16 %v886
    %v4751 = vunpack.c.l.b16 %v887
    %v4752 = vunpack.c.l.b16 %v888
    %v4753 = vunpack.c.l.b16 %v889
    %v4754 = vunpack.c.l.b16 %v890
    %v4755 = vunpack.c.l.b16 %v891
    %v4756 = vunpack.c.l.b16 %v892
    %v4757 = vunpack.c.l.b16 %v893
    %v4758 = vunpack.c.l.b16 %v894
    %v4759 = vunpack.c.l.b16 %v895
    %v4760 = vunpack.c.l.b16 %v896
    %v4761 = vunpack.c.l.b16 %v897
    %v4762 = vunpack.c.l.b16 %v898
    %v4763 = vunpack.c.l.b16 %v899
    %v4764 = vunpack.c.l.b16 %v900
    %v4765 = vunpack.c.l.b16 %v901
    %v4766 = vunpack.c.l.b16 %v902
    %v4767 = vunpack.c.l.b16 %v903
    %v4768 = vunpack.c.l.b16 %v904
    %v4769 = vunpack.c.l.b16 %v905
    %v4770 = vunpack.c.l.b16 %v906
    %v4771 = vunpack.c.l.b16 %v907
    %v4772 = vunpack.c.l.b16 %v908
    %v4773 = vunpack.c.l.b16 %v909
    %v4774 = vunpack.c.l.b16 %v910
    %v4775 = vunpack.c.l.b16 %v911
    %v4776 = vunpack.c.l.b16 %v912
    %v4777 = vunpack.c.l.b16 %v913
    %v4778 = vunpack.c.l.b16 %v914
    %v4779 = vunpack.c.l.b16 %v915
    %v4780 = vunpack.c.l.b16 %v916
    %v4781 = vunpack.c.l.b16 %v917
    %v4782 = vunpack.c.l.b16 %v918
    %v4783 = vunpack.c.l.b16 %v919
    %v4784 = vunpack.c.l.b16 %v920
    %v4785 = vunpack.c.l.b16 %v921
    %v4786 = vunpack.c.l.b16 %v922
    %v4787 = vunpack.c.l.b16 %v923
    %v4788 = vunpack.c.l.b16 %v924
    %v4789 = vunpack.c.l.b16 %v925
    %v4790 = vunpack.c.l.b16 %v926
    %v4791 = vunpack.c.l.b16 %v927
    %v4792 = vunpack.c.l.b16 %v928
    %v4793 = vunpack.c.l.b16 %v929
    %v4794 = vunpack.c.l.b16 %v930
    %v4795 = vunpack.c.l.b16 %v931
    %v4796 = vunpack.c.l.b16 %v932
    %v4797 = vunpack.c.l.b16 %v933
    %v4798 = vunpack.c.l.b16 %v934
    %v4799 = vunpack.c.l.b16 %v935
    %v4800 = vunpack.c.l.b16 %v936
    %v4801 = vunpack.c.l.b16 %v937
    %v4802 = vunpack.c.l.b16 %v938
    %v4803 = vunpack.c.l.b16 %v939
    %v4804 = vunpack.c.l.b16 %v940
    %v4805 = vunpack.c.l.b16 %v941
    %v4806 = vunpack.c.l.b16 %v942
    %v4807 = vunpack.c.l.b16 %v943
    %v4808 = vunpack.c.l.b16 %v944
    %v4809 = vunpack.c.l.b16 %v945
    %v4810 = vunpack.c.l.b16 %v946
    %v4811 = vunpack.c.l.b16 %v947
    %v4812 = vunpack.c.l.b16 %v948
    %v4813 = vunpack.c.l.b16 %v949
    %v4814 = vunpack.c.l.b16 %v950
    %v4815 = vunpack.c.l.b16 %v951
    %v4816 = vunpack.c.l.b16 %v952
    %v4817 = vunpack.c.l.b16 %v953
    %v4818 = vunpack.c.l.b16 %v954
    %v4819 = vunpack.c.l.b16 %v955
    %v4820 = vunpack.c.l.b16 %v956
    %v4821 = vunpack.c.l.b16 %v957
    %v4822 = vunpack.c.l.b16 %v958
    %v4823 = vunpack.c.l.b16 %v959
    %v4824 = vunpack.c.l.b16 %v960
    %v4825 = vunpack.c.l.b16 %v961
    %v4826 = vunpack.c.l.b16 %v962
    %v4827 = vunpack.c.l.b16 %v963
    %v4828 = vunpack.c.l.b16 %v964
    %v4829 = vunpack.c.l.b16 %v965
    %v4830 = vunpack.c.l.b16 %v966
    %v4831 = vunpack.c.l.b16 %v967
    %v4832 = vunpack.c.l.b16 %v968
    %v4833 = vunpack.c.l.b16 %v969
    %v4834 = vunpack.c.l.b16 %v970
    %v4835 = vunpack.c.l.b16 %v971
    %v4836 = vunpack.c.l.b16 %v972
    %v4837 = vunpack.c.l.b16 %v973
    %v4838 = vunpack.c.l.b16 %v974
    %v4839 = vunpack.c.l.b16 %v975
    %v4840 = vunpack.c.l.b16 %v976
    %v4841 = vunpack.c.l.b16 %v977
    %v4842 = vunpack.c.l.b16 %v978
    %v4843 = vunpack.c.l.b16 %v979
    %v4844 = vunpack.c.l.b16 %v980
    %v4845 = vunpack.c.l.b16 %v981
    %v4846 = vunpack.c.l.b16 %v982
    %v4847 = vunpack.c.l.b16 %v983
    %v4848 = vunpack.c.l.b16 %v984
    %v4849 = vunpack.c.l.b16 %v985
    %v4850 = vunpack.c.l.b16 %v986
    %v4851 = vunpack.c.l.b16 %v987
    %v4852 = vunpack.c.l.b16 %v988
    %v4853 = vunpack.c.l.b16 %v989
    %v4854 = vunpack.c.l.b16 %v990
    %v4855 = vunpack.c.l.b16 %v991
    %v4856 = vunpack.c.l.b16 %v992
    %v4857 = vunpack.c.l.b16 %v993
    %v4858 = vunpack.c.l.b16 %v994
    %v4859 = vunpack.c.l.b16 %v995
    %v4860 = vunpack.c.l.b16 %v996
    %v4861 = vunpack.c.l.b16 %v997
    %v4862 = vunpack.c.l.b16 %v998
    %v4863 = vunpack.c.l.b16 %v999
    %v4864 = vunpack.c.l.b16 %v1000
    %v4865 = vunpack.c.l.b16 %v1001
    %v4866 = vunpack.c.l.b16 %v1002
    %v4867 = vunpack.c.l.b16 %v1003
    %v4868 = vunpack.c.l.b16 %v1004
    %v4869 = vunpack.c.l.b16 %v1005
    %v4870 = vunpack.c.l.b16 %v1006
    %v4871 = vunpack.c.l.b16 %v1007
    %v4872 = vunpack.c.l.b16 %v1008
    %v4873 = vunpack.c.l.b16 %v1009
    %v4874 = vunpack.c.l.b16 %v1010
    %v4875 = vunpack.c.l.b16 %v1011
    %v4876 = vunpack.c.l.b16 %v1012
    %v4877 = vunpack.c.l.b16 %v1013
    %v4878 = vunpack.c.l.b16 %v1014
    %v4879 = vunpack.c.l.b16 %v1015
    %v4880 = vunpack.c.l.b16 %v1016
    %v4881 = vunpack.c.l.b16 %v1017
    %v4882 = vunpack.c.l.b16 %v1018
    %v4883 = vunpack.c.l.b16 %v1019
    %v4884 = vunpack.c.l.b16 %v1020
    %v4885 = vunpack.c.l.b16 %v1021
    %v4886 = vunpack.c.l.b16 %v1022
    %v4887 = vunpack.c.l.b16 %v1023
    %v4888 = vunpack.c.l.b16 %v1024
    %v4889 = vunpack.c.l.b16 %v1025
    %v4890 = vunpack.c.l.b16 %v1026
    %v4891 = vunpack.c.l.b16 %v1027
    %v4892 = vunpack.c.l.b16 %v1028
    %v4893 = vunpack.c.l.b16 %v1029
    %v4894 = vunpack.c.l.b16 %v1030
    %v4895 = vunpack.c.l.b16 %v1031
    %v4896 = vunpack.c.l.b16 %v1032
    %v4897 = vunpack.c.l.b16 %v1033
    %v4898 = vunpack.c.l.b16 %v1034
    %v4899 = vunpack.c.l.b16 %v1035
    %v4900 = vunpack.c.l.b16 %v1036
    %v4901 = vunpack.c.l.b16 %v1037
    %v4902 = vunpack.c.l.b16 %v1038
    %v4903 = vunpack.c.l.b16 %v1039
    %v4904 = vunpack.c.l.b16 %v1040
    %v4905 = vunpack.c.l.b16 %v1041
    %v4906 = vunpack.c.l.b16 %v1042
    %v4907 = vunpack.c.l.b16 %v1043
    %v4908 = vunpack.c.l.b16 %v1044
    %v4909 = vunpack.c.l.b16 %v1045
    %v4910 = vunpack.c.l.b16 %v1046
    %v4911 = vunpack.c.l.b16 %v1047
    %v4912 = vunpack.c.l.b16 %v1048
    %v4913 = vunpack.c.l.b16 %v1049
    %v4914 = vunpack.c.l.b16 %v1050
    %v4915 = vunpack.c.l.b16 %v1051
    %v4916 = vunpack.c.l.b16 %v1052
    %v4917 = vunpack.c.l.b16 %v1053
    %v4918 = vunpack.c.l.b16 %v1054
    %v4919 = vunpack.c.l.b16 %v1055
    %v4920 = vunpack.c.l.b16 %v1056
    %v4921 = vunpack.c.l.b16 %v1057
    %v4922 = vunpack.c.l.b16 %v1058
    %v4923 = vunpack.c.l.b16 %v1059
    %v4924 = vunpack.c.l.b16 %v1060
    %v4925 = vunpack.c.l.b16 %v1061
    %v4926 = vunpack.c.l.b16 %v1062
    %v4927 = vunpack.c.l.b16 %v1063
    %v4928 = vunpack.c.l.b16 %v1064
    %v4929 = vunpack.c.l.b16 %v1065
    %v4930 = vunpack.c.l.b16 %v1066
    %v4931 = vunpack.c.l.b16 %v1067
    %v4932 = vunpack.c.l.b16 %v1068
    %v4933 = vunpack.c.l.b16 %v1069
    %v4934 = vunpack.c.l.b16 %v1070
    %v4935 = vunpack.c.l.b16 %v1071
    %v4936 = vunpack.c.l.b16 %v1072
    %v4937 = vunpack.c.l.b16 %v1073
    %v4938 = vunpack.c.l.b16 %v1074
    %v4939 = vunpack.c.l.b16 %v1075
    %v4940 = vunpack.c.l.b16 %v1076
    %v4941 = vunpack.c.l.b16 %v1077
    %v4942 = vunpack.c.l.b16 %v1078
    %v4943 = vunpack.c.l.b16 %v1079
    %v4944 = vunpack.c.l.b16 %v1080
    %v4945 = vunpack.c.l.b16 %v1081
    %v4946 = vunpack.c.l.b16 %v1082
    %v4947 = vunpack.c.l.b16 %v1083
    %v4948 = vunpack.c.l.b16 %v1084
    %v4949 = vunpack.c.l.b16 %v1085
    %v4950 = vunpack.c.l.b16 %v1086
    %v4951 = vunpack.c.l.b16 %v1087
    %v4952 = vunpack.c.l.b16 %v1088
    %v4953 = vunpack.c.l.b16 %v1089
    %v4954 = vunpack.c.l.b16 %v1090
    %v4955 = vunpack.c.l.b16 %v1091
    %v4956 = vunpack.c.l.b16 %v1092
    %v4957 = vunpack.c.l.b16 %v1093
    %v4958 = vunpack.c.l.b16 %v1094
    %v4959 = vunpack.c.l.b16 %v1095
    %v4960 = vunpack.c.l.b16 %v1096
    %v4961 = vunpack.c.l.b16 %v1097
    %v4962 = vunpack.c.l.b16 %v1098
    %v4963 = vunpack.c.l.b16 %v1099
    %v4964 = vunpack.c.l.b16 %v1100
    %v4965 = vunpack.c.l.b16 %v1101
    %v4966 = vunpack.c.l.b16 %v1102
    %v4967 = vunpack.c.l.b16 %v1103
    %v4968 = vunpack.c.l.b16 %v1104
    %v4969 = vunpack.c.l.b16 %v1105
    %v4970 = vunpack.c.l.b16 %v1106
    %v4971 = vunpack.c.l.b16 %v1107
    %v4972 = vunpack.c.l.b16 %v1108
    %v4973 = vunpack.c.l.b16 %v1109
    %v4974 = vunpack.c.l.b16 %v1110
    %v4975 = vunpack.c.l.b16 %v1111
    %v4976 = vunpack.c.l.b16 %v1112
    %v4977 = vunpack.c.l.b16 %v1113
    %v4978 = vunpack.c.l.b16 %v1114
    %v4979 = vunpack.c.l.b16 %v1115
    %v4980 = vunpack.c.l.b16 %v1116
    %v4981 = vunpack.c.l.b16 %v1117
    %v4982 = vunpack.c.l.b16 %v1118
    %v4983 = vunpack.c.l.b16 %v1119
    %v4984 = vunpack.c.l.b16 %v1120
    %v4985 = vunpack.c.l.b16 %v1121
    %v4986 = vunpack.c.l.b16 %v1122
    %v4987 = vunpack.c.l.b16 %v1123
    %v4988 = vunpack.c.l.b16 %v1124
    %v4989 = vunpack.c.l.b16 %v1125
    %v4990 = vunpack.c.l.b16 %v1126
    %v4991 = vunpack.c.l.b16 %v1127
    %v4992 = vunpack.c.l.b16 %v1128
    %v4993 = vunpack.c.l.b16 %v1129
    %v4994 = vunpack.c.l.b16 %v1130
    %v4995 = vunpack.c.l.b16 %v1131
    %v4996 = vunpack.c.l.b16 %v1132
    %v4997 = vunpack.c.l.b16 %v1133
    %v4998 = vunpack.c.l.b16 %v1134
    %v4999 = vunpack.c.l.b16 %v1135
    %v5000 = vunpack.c.l.b16 %v1136
    %v5001 = vunpack.c.l.b16 %v1137
    %v5002 = vunpack.c.l.b16 %v1138
    %v5003 = vunpack.c.l.b16 %v1139
    %v5004 = vunpack.c.l.b16 %v1140
    %v5005 = vunpack.c.l.b16 %v1141
    %v5006 = vunpack.c.l.b16 %v1142
    %v5007 = vunpack.c.l.b16 %v1143
    %v5008 = vunpack.c.l.b16 %v1144
    %v5009 = vunpack.c.l.b16 %v1145
    %v5010 = vunpack.c.l.b16 %v1146
    %v5011 = vunpack.c.l.b16 %v1147
    %v5012 = vunpack.c.l.b16 %v1148
    %v5013 = vunpack.c.l.b16 %v1149
    %v5014 = vunpack.c.l.b16 %v1150
    %v5015 = vunpack.c.l.b16 %v1151
    %v5016 = vunpack.c.l.b16 %v1152
    %v5017 = vunpack.c.l.b16 %v1153
    %v5018 = vunpack.c.l.b16 %v1154
    %v5019 = vunpack.c.l.b16 %v1155
    %v5020 = vunpack.c.l.b16 %v1156
    %v5021 = vunpack.c.l.b16 %v1157
    %v5022 = vunpack.c.l.b16 %v1158
    %v5023 = vunpack.c.l.b16 %v1159
    %v5024 = vunpack.c.l.b16 %v1160
    %v5025 = vunpack.c.l.b16 %v1161
    %v5026 = vunpack.c.l.b16 %v1162
    %v5027 = vunpack.c.l.b16 %v1163
    %v5028 = vunpack.c.l.b16 %v1164
    %v5029 = vunpack.c.l.b16 %v1165
    %v5030 = vunpack.c.l.b16 %v1166
    %v5031 = vunpack.c.l.b16 %v1167
    %v5032 = vunpack.c.l.b16 %v1168
    %v5033 = vunpack.c.l.b16 %v1169
    %v5034 = vunpack.c.l.b16 %v1170
    %v5035 = vunpack.c.l.b16 %v1171
    %v5036 = vunpack.c.l.b16 %v1172
    %v5037 = vunpack.c.l.b16 %v1173
    %v5038 = vunpack.c.l.b16 %v1174
    %v5039 = vunpack.c.l.b16 %v1175
    %v5040 = vunpack.c.l.b16 %v1176
    %v5041 = vunpack.c.l.b16 %v1177
    %v5042 = vunpack.c.l.b16 %v1178
    %v5043 = vunpack.c.l.b16 %v1179
    %v5044 = vunpack.c.l.b16 %v1180
    %v5045 = vunpack.c.l.b16 %v1181
    %v5046 = vunpack.c.l.b16 %v1182
    %v5047 = vunpack.c.l.b16 %v1183
    %v5048 = vunpack.c.l.b16 %v1184
    %v5049 = vunpack.c.l.b16 %v1185
    %v5050 = vunpack.c.l.b16 %v1186
    %v5051 = vunpack.c.l.b16 %v1187
    %v5052 = vunpack.c.l.b16 %v1188
    %v5053 = vunpack.c.l.b16 %v1189
    %v5054 = vunpack.c.l.b16 %v1190
    %v5055 = vunpack.c.l.b16 %v1191
    %v5056 = vunpack.c.l.b16 %v1192
    %v5057 = vunpack.c.l.b16 %v1193
    %v5058 = vunpack.c.l.b16 %v1194
    %v5059 = vunpack.c.l.b16 %v1195
    %v5060 = vunpack.c.l.b16 %v1196
    %v5061 = vunpack.c.l.b16 %v1197
    %v5062 = vunpack.c.l.b16 %v1198
    %v5063 = vunpack.c.l.b16 %v1199
    %v5064 = vunpack.c.l.b16 %v1200
    %v5065 = vunpack.c.l.b16 %v1201
    %v5066 = vunpack.c.l.b16 %v1202
    %v5067 = vunpack.c.l.b16 %v1203
    %v5068 = vunpack.c.l.b16 %v1204
    %v5069 = vunpack.c.l.b16 %v1205
    %v5070 = vunpack.c.l.b16 %v1206
    %v5071 = vunpack.c.l.b16 %v1207
    %v5072 = vunpack.c.l.b16 %v1208
    %v5073 = vunpack.c.l.b16 %v1209
    %v5074 = vunpack.c.l.b16 %v1210
    %v5075 = vunpack.c.l.b16 %v1211
    %v5076 = vunpack.c.l.b16 %v1212
    %v5077 = vunpack.c.l.b16 %v1213
    %v5078 = vunpack.c.l.b16 %v1214
    %v5079 = vunpack.c.l.b16 %v1215
    %v5080 = vunpack.c.l.b16 %v1216
    %v5081 = vunpack.c.l.b16 %v1217
    %v5082 = vunpack.c.l.b16 %v1218
    %v5083 = vunpack.c.l.b16 %v1219
    %v5084 = vunpack.c.l.b16 %v1220
    %v5085 = vunpack.c.l.b16 %v1221
    %v5086 = vunpack.c.l.b16 %v1222
    %v5087 = vunpack.c.l.b16 %v1223
    %v5088 = vunpack.c.l.b16 %v1224
    %v5089 = vunpack.c.l.b16 %v1225
    %v5090 = vunpack.c.l.b16 %v1226
    %v5091 = vunpack.c.l.b16 %v1227
    %v5092 = vunpack.c.l.b16 %v1228
    %v5093 = vunpack.c.l.b16 %v1229
    %v5094 = vunpack.c.l.b16 %v1230
    %v5095 = vunpack.c.l.b16 %v1231
    %v5096 = vunpack.c.l.b16 %v1232
    %v5097 = vunpack.c.l.b16 %v1233
    %v5098 = vunpack.c.l.b16 %v1234
    %v5099 = vunpack.c.l.b16 %v1235
    %v5100 = vunpack.c.l.b16 %v1236
    %v5101 = vunpack.c.l.b16 %v1237
    %v5102 = vunpack.c.l.b16 %v1238
    %v5103 = vunpack.c.l.b16 %v1239
    %v5104 = vunpack.c.l.b16 %v1240
    %v5105 = vunpack.c.l.b16 %v1241
    %v5106 = vunpack.c.l.b16 %v1242
    %v5107 = vunpack.c.l.b16 %v1243
    %v5108 = vunpack.c.l.b16 %v1244
    %v5109 = vunpack.c.l.b16 %v1245
    %v5110 = vunpack.c.l.b16 %v1246
    %v5111 = vunpack.c.l.b16 %v1247
    %v5112 = vunpack.c.l.b16 %v1248
    %v5113 = vunpack.c.l.b16 %v1249
    %v5114 = vunpack.c.l.b16 %v1250
    %v5115 = vunpack.c.l.b16 %v1251
    %v5116 = vunpack.c.l.b16 %v1252
    %v5117 = vunpack.c.l.b16 %v1253
    %v5118 = vunpack.c.l.b16 %v1254
    %v5119 = vunpack.c.l.b16 %v1255
    %v5120 = vunpack.c.l.b16 %v1256
    %v5121 = vunpack.c.l.b16 %v1257
    %v5122 = vunpack.c.l.b16 %v1258
    %v5123 = vunpack.c.l.b16 %v1259
    %v5124 = vunpack.c.l.b16 %v1260
    %v5125 = vunpack.c.l.b16 %v1261
    %v5126 = vunpack.c.l.b16 %v1262
    %v5127 = vunpack.c.l.b16 %v1263
    %v5128 = vunpack.c.l.b16 %v1264
    %v5129 = vunpack.c.l.b16 %v1265
    %v5130 = vunpack.c.l.b16 %v1266
    %v5131 = vunpack.c.l.b16 %v1267
    %v5132 = vunpack.c.l.b16 %v1268
    %v5133 = vunpack.c.l.b16 %v1269
    %v5134 = vunpack.c.l.b16 %v1270
    %v5135 = vunpack.c.l.b16 %v1271
    %v5136 = vunpack.c.l.b16 %v1272
    %v5137 = vunpack.c.l.b16 %v1273
    %v5138 = vunpack.c.l.b16 %v1274
    %v5139 = vunpack.c.l.b16 %v1275
    %v5140 = vunpack.c.l.b16 %v1276
    %v5141 = vunpack.c.l.b16 %v1277
    %v5142 = vunpack.c.l.b16 %v1278
    %v5143 = vunpack.c.l.b16 %v1279
    %v5144 = vunpack.c.l.b16 %v1280
    %v5145 = vunpack.c.l.b16 %v1281
    %v5146 = vunpack.c.l.b16 %v1282
    %v5147 = vunpack.c.l.b16 %v1283
    %v5148 = vunpack.c.l.b16 %v1284
    %v5149 = vunpack.c.l.b16 %v1285
    %v5150 = vunpack.c.l.b16 %v1286
    %v5151 = vunpack.c.l.b16 %v1287
    %v5152 = vunpack.c.l.b16 %v1288
    %v5153 = vunpack.c.l.b16 %v1289
    %v5154 = vunpack.c.l.b16 %v1290
    %v5155 = vunpack.c.l.b16 %v1291
    %v5156 = vunpack.c.l.b16 %v1292
    %v5157 = vunpack.c.l.b16 %v1293
    %v5158 = vunpack.c.l.b16 %v1294
    %v5159 = vunpack.c.l.b16 %v1295
    %v5160 = vunpack.c.l.b16 %v1296
    %v5161 = vunpack.c.l.b16 %v1297
    %v5162 = vunpack.c.l.b16 %v1298
    %v5163 = vunpack.c.l.b16 %v1299
    %v5164 = vunpack.c.l.b16 %v1300
    %v5165 = vunpack.c.l.b16 %v1301
    %v5166 = vunpack.c.l.b16 %v1302
    %v5167 = vunpack.c.l.b16 %v1303
    %v5168 = vunpack.c.l.b16 %v1304
    %v5169 = vunpack.c.l.b16 %v1305
    %v5170 = vunpack.c.l.b16 %v1306
    %v5171 = vunpack.c.l.b16 %v1307
    %v5172 = vunpack.c.l.b16 %v1308
    %v5173 = vunpack.c.l.b16 %v1309
    %v5174 = vunpack.c.l.b16 %v1310
    %v5175 = vunpack.c.l.b16 %v1311
    %v5176 = vunpack.c.l.b16 %v1312
    %v5177 = vunpack.c.l.b16 %v1313
    %v5178 = vunpack.c.l.b16 %v1314
    %v5179 = vunpack.c.l.b16 %v1315
    %v5180 = vunpack.c.l.b16 %v1316
    %v5181 = vunpack.c.l.b16 %v1317
    %v5182 = vunpack.c.l.b16 %v1318
    %v5183 = vunpack.c.l.b16 %v1319
    %v5184 = vunpack.c.l.b16 %v1320
    %v5185 = vunpack.c.l.b16 %v1321
    %v5186 = vunpack.c.l.b16 %v1322
    %v5187 = vunpack.c.l.b16 %v1323
    %v5188 = vunpack.c.l.b16 %v1324
    %v5189 = vunpack.c.l.b16 %v1325
    %v5190 = vunpack.c.l.b16 %v1326
    %v5191 = vunpack.c.l.b16 %v1327
    %v5192 = vunpack.c.l.b16 %v1328
    %v5193 = vunpack.c.l.b16 %v1329
    %v5194 = vunpack.c.l.b16 %v1330
    %v5195 = vunpack.c.l.b16 %v1331
    %v5196 = vunpack.c.l.b16 %v1332
    %v5197 = vunpack.c.l.b16 %v1333
    %v5198 = vunpack.c.l.b16 %v1334
    %v5199 = vunpack.c.l.b16 %v1335
    %v5200 = vunpack.c.l.b16 %v1336
    %v5201 = vunpack.c.l.b16 %v1337
    %v5202 = vunpack.c.l.b16 %v1338
    %v5203 = vunpack.c.l.b16 %v1339
    %v5204 = vunpack.c.l.b16 %v1340
    %v5205 = vunpack.c.l.b16 %v1341
    %v5206 = vunpack.c.l.b16 %v1342
    %v5207 = vunpack.c.l.b16 %v1343
    %v5208 = vunpack.c.l.b16 %v1344
    %v5209 = vunpack.c.l.b16 %v1345
    %v5210 = vunpack.c.l.b16 %v1346
    %v5211 = vunpack.c.l.b16 %v1347
    %v5212 = vunpack.c.l.b16 %v1348
    %v5213 = vunpack.c.l.b16 %v1349
    %v5214 = vunpack.c.l.b16 %v1350
    %v5215 = vunpack.c.l.b16 %v1351
    %v5216 = vunpack.c.l.b16 %v1352
    %v5217 = vunpack.c.l.b16 %v1353
    %v5218 = vunpack.c.l.b16 %v1354
    %v5219 = vunpack.c.l.b16 %v1355
    %v5220 = vunpack.c.l.b16 %v1356
    %v5221 = vunpack.c.l.b16 %v1357
    %v5222 = vunpack.c.l.b16 %v1358
    %v5223 = vunpack.c.l.b16 %v1359
    %v5224 = vunpack.c.l.b16 %v1360
    %v5225 = vunpack.c.l.b16 %v1361
    %v5226 = vunpack.c.l.b16 %v1362
    %v5227 = vunpack.c.l.b16 %v1363
    %v5228 = vunpack.c.l.b16 %v1364
    %v5229 = vunpack.c.l.b16 %v1365
    %v5230 = vunpack.c.l.b16 %v1366
    %v5231 = vunpack.c.l.b16 %v1367
    %v5232 = vunpack.c.l.b16 %v1368
    %v5233 = vunpack.c.l.b16 %v1369
    %v5234 = vunpack.c.l.b16 %v1370
    %v5235 = vunpack.c.l.b16 %v1371
    %v5236 = vunpack.c.l.b16 %v1372
    %v5237 = vunpack.c.l.b16 %v1373
    %v5238 = vunpack.c.l.b16 %v1374
    %v5239 = vunpack.c.l.b16 %v1375
    %v5240 = vunpack.c.l.b16 %v1376
    %v5241 = vunpack.c.l.b16 %v1377
    %v5242 = vunpack.c.l.b16 %v1378
    %v5243 = vunpack.c.l.b16 %v1379
    %v5244 = vunpack.c.l.b16 %v1380
    %v5245 = vunpack.c.l.b16 %v1381
    %v5246 = vunpack.c.l.b16 %v1382
    %v5247 = vunpack.c.l.b16 %v1383
    %v5248 = vunpack.c.l.b16 %v1384
    %v5249 = vunpack.c.l.b16 %v1385
    %v5250 = vunpack.c.l.b16 %v1386
    %v5251 = vunpack.c.l.b16 %v1387
    %v5252 = vunpack.c.l.b16 %v1388
    %v5253 = vunpack.c.l.b16 %v1389
    %v5254 = vunpack.c.l.b16 %v1390
    %v5255 = vunpack.c.l.b16 %v1391
    %v5256 = vunpack.c.l.b16 %v1392
    %v5257 = vunpack.c.l.b16 %v1393
    %v5258 = vunpack.c.l.b16 %v1394
    %v5259 = vunpack.c.l.b16 %v1395
    %v5260 = vunpack.c.l.b16 %v1396
    %v5261 = vunpack.c.l.b16 %v1397
    %v5262 = vunpack.c.l.b16 %v1398
    %v5263 = vunpack.c.l.b16 %v1399
    %v5264 = vunpack.c.l.b16 %v1400
    %v5265 = vunpack.c.l.b16 %v1401
    %v5266 = vunpack.c.l.b16 %v1402
    %v5267 = vunpack.c.l.b16 %v1403
    %v5268 = vunpack.c.l.b16 %v1404
    %v5269 = vunpack.c.l.b16 %v1405
    %v5270 = vunpack.c.l.b16 %v1406
    %v5271 = vunpack.c.l.b16 %v1407
    %v5272 = vunpack.c.l.b16 %v1408
    %v5273 = vunpack.c.l.b16 %v1409
    %v5274 = vunpack.c.l.b16 %v1410
    %v5275 = vunpack.c.l.b16 %v1411
    %v5276 = vunpack.c.l.b16 %v1412
    %v5277 = vunpack.c.l.b16 %v1413
    %v5278 = vunpack.c.l.b16 %v1414
    %v5279 = vunpack.c.l.b16 %v1415
    %v5280 = vunpack.c.l.b16 %v1416
    %v5281 = vunpack.c.l.b16 %v1417
    %v5282 = vunpack.c.l.b16 %v1418
    %v5283 = vunpack.c.l.b16 %v1419
    %v5284 = vunpack.c.l.b16 %v1420
    %v5285 = vunpack.c.l.b16 %v1421
    %v5286 = vunpack.c.l.b16 %v1422
    %v5287 = vunpack.c.l.b16 %v1423
    %v5288 = vunpack.c.l.b16 %v1424
    %v5289 = vunpack.c.l.b16 %v1425
    %v5290 = vunpack.c.l.b16 %v1426
    %v5291 = vunpack.c.l.b16 %v1427
    %v5292 = vunpack.c.l.b16 %v1428
    %v5293 = vunpack.c.l.b16 %v1429
    %v5294 = vunpack.c.l.b16 %v1430
    %v5295 = vunpack.c.l.b16 %v1431
    %v5296 = vunpack.c.l.b16 %v1432
    %v5297 = vunpack.c.l.b16 %v1433
    %v5298 = vunpack.c.l.b16 %v1434
    %v5299 = vunpack.c.l.b16 %v1435
    %v5300 = vunpack.c.l.b16 %v1436
    %v5301 = vunpack.c.l.b16 %v1437
    %v5302 = vunpack.c.l.b16 %v1438
    %v5303 = vunpack.c.l.b16 %v1439
    %v5304 = vunpack.c.l.b16 %v1440
    %v5305 = vunpack.c.l.b16 %v1441
    %v5306 = vunpack.c.l.b16 %v1442
    %v5307 = vunpack.c.l.b16 %v1443
    %v5308 = vunpack.c.l.b16 %v1444
    %v5309 = vunpack.c.l.b16 %v1445
    %v5310 = vunpack.c.l.b16 %v1446
    %v5311 = vunpack.c.l.b16 %v1447
    %v5312 = vunpack.c.l.b16 %v1448
    %v5313 = vunpack.c.l.b16 %v1449
    %v5314 = vunpack.c.l.b16 %v1450
    %v5315 = vunpack.c.l.b16 %v1451
    %v5316 = vunpack.c.l.b16 %v1452
    %v5317 = vunpack.c.l.b16 %v1453
    %v5318 = vunpack.c.l.b16 %v1454
    %v5319 = vunpack.c.l.b16 %v1455
    %v5320 = vunpack.c.l.b16 %v1456
    %v5321 = vunpack.c.l.b16 %v1457
    %v5322 = vunpack.c.l.b16 %v1458
    %v5323 = vunpack.c.l.b16 %v1459
    %v5324 = vunpack.c.l.b16 %v1460
    %v5325 = vunpack.c.l.b16 %v1461
    %v5326 = vunpack.c.l.b16 %v1462
    %v5327 = vunpack.c.l.b16 %v1463
    %v5328 = vunpack.c.l.b16 %v1464
    %v5329 = vunpack.c.l.b16 %v1465
    %v5330 = vunpack.c.l.b16 %v1466
    %v5331 = vunpack.c.l.b16 %v1467
    %v5332 = vunpack.c.l.b16 %v1468
    %v5333 = vunpack.c.l.b16 %v1469
    %v5334 = vunpack.c.l.b16 %v1470
    %v5335 = vunpack.c.l.b16 %v1471
    %v5336 = vunpack.c.l.b16 %v1472
    %v5337 = vunpack.c.l.b16 %v1473
    %v5338 = vunpack.c.l.b16 %v1474
    %v5339 = vunpack.c.l.b16 %v1475
    %v5340 = vunpack.c.l.b16 %v1476
    %v5341 = vunpack.c.l.b16 %v1477
    %v5342 = vunpack.c.l.b16 %v1478
    %v5343 = vunpack.c.l.b16 %v1479
    %v5344 = vunpack.c.l.b16 %v1480
    %v5345 = vunpack.c.l.b16 %v1481
    %v5346 = vunpack.c.l.b16 %v1482
    %v5347 = vunpack.c.l.b16 %v1483
    %v5348 = vunpack.c.l.b16 %v1484
    %v5349 = vunpack.c.l.b16 %v1485
    %v5350 = vunpack.c.l.b16 %v1486
    %v5351 = vunpack.c.l.b16 %v1487
    %v5352 = vunpack.c.l.b16 %v1488
    %v5353 = vunpack.c.l.b16 %v1489
    %v5354 = vunpack.c.l.b16 %v1490
    %v5355 = vunpack.c.l.b16 %v1491
    %v5356 = vunpack.c.l.b16 %v1492
    %v5357 = vunpack.c.l.b16 %v1493
    %v5358 = vunpack.c.l.b16 %v1494
    %v5359 = vunpack.c.l.b16 %v1495
    %v5360 = vunpack.c.l.b16 %v1496
    %v5361 = vunpack.c.l.b16 %v1497
    %v5362 = vunpack.c.l.b16 %v1498
    %v5363 = vunpack.c.l.b16 %v1499
    %v5364 = vunpack.c.l.b16 %v1500
    %v5365 = vunpack.c.l.b16 %v1501
    %v5366 = vunpack.c.l.b16 %v1502
    %v5367 = vunpack.c.l.b16 %v1503
    %v5368 = vunpack.c.l.b16 %v1504
    %v5369 = vunpack.c.l.b16 %v1505
    %v5370 = vunpack.c.l.b16 %v1506
    %v5371 = vunpack.c.l.b16 %v1507
    %v5372 = vunpack.c.l.b16 %v1508
    %v5373 = vunpack.c.l.b16 %v1509
    %v5374 = vunpack.c.l.b16 %v1510
    %v5375 = vunpack.c.l.b16 %v1511
    %v5376 = vunpack.c.l.b16 %v1512
    %v5377 = vunpack.c.l.b16 %v1513
    %v5378 = vunpack.c.l.b16 %v1514
    %v5379 = vunpack.c.l.b16 %v1515
    %v5380 = vunpack.c.l.b16 %v1516
    %v5381 = vunpack.c.l.b16 %v1517
    %v5382 = vunpack.c.l.b16 %v1518
    %v5383 = vunpack.c.l.b16 %v1519
    %v5384 = vunpack.c.l.b16 %v1520
    %v5385 = vunpack.c.l.b16 %v1521
    %v5386 = vunpack.c.l.b16 %v1522
    %v5387 = vunpack.c.l.b16 %v1523
    %v5388 = vunpack.c.l.b16 %v1524
    %v5389 = vunpack.c.l.b16 %v1525
    %v5390 = vunpack.c.l.b16 %v1526
    %v5391 = vunpack.c.l.b16 %v1527
    %v5392 = vunpack.c.l.b16 %v1528
    %v5393 = vunpack.c.l.b16 %v1529
    %v5394 = vunpack.c.l.b16 %v1530
    %v5395 = vunpack.c.l.b16 %v1531
    %v5396 = vunpack.c.l.b16 %v1532
    %v5397 = vunpack.c.l.b16 %v1533
    %v5398 = vunpack.c.l.b16 %v1534
    %v5399 = vunpack.c.l.b16 %v1535
    %v5400 = vunpack.c.l.b16 %v1536
    %v5401 = vunpack.c.l.b16 %v1537
    %v5402 = vunpack.c.l.b16 %v1538
    %v5403 = vunpack.c.l.b16 %v1539
    %v5404 = vunpack.c.l.b16 %v1540
    %v5405 = vunpack.c.l.b16 %v1541
    %v5406 = vunpack.c.l.b16 %v1542
    %v5407 = vunpack.c.l.b16 %v1543
    %v5408 = vunpack.c.l.b16 %v1544
    %v5409 = vunpack.c.l.b16 %v1545
    %v5410 = vunpack.c.l.b16 %v1546
    %v5411 = vunpack.c.l.b16 %v1547
    %v5412 = vunpack.c.l.b16 %v1548
    %v5413 = vunpack.c.l.b16 %v1549
    %v5414 = vunpack.c.l.b16 %v1550
    %v5415 = vunpack.c.l.b16 %v1551
    %v5416 = vunpack.c.l.b16 %v1552
    %v5417 = vunpack.c.l.b16 %v1553
    %v5418 = vunpack.c.l.b16 %v1554
    %v5419 = vunpack.c.l.b16 %v1555
    %v5420 = vunpack.c.l.b16 %v1556
    %v5421 = vunpack.c.l.b16 %v1557
    %v5422 = vunpack.c.l.b16 %v1558
    %v5423 = vunpack.c.l.b16 %v1559
    %v5424 = vunpack.c.l.b16 %v1560
    %v5425 = vunpack.c.l.b16 %v1561
    %v5426 = vunpack.c.l.b16 %v1562
    %v5427 = vunpack.c.l.b16 %v1563
    %v5428 = vunpack.c.l.b16 %v1564
    %v5429 = vunpack.c.l.b16 %v1565
    %v5430 = vunpack.c.l.b16 %v1566
    %v5431 = vunpack.c.l.b16 %v1567
    %v5432 = vunpack.c.l.b16 %v1568
    %v5433 = vunpack.c.l.b16 %v1569
    %v5434 = vunpack.c.l.b16 %v1570
    %v5435 = vunpack.c.l.b16 %v1571
    %v5436 = vunpack.c.l.b16 %v1572
    %v5437 = vunpack.c.l.b16 %v1573
    %v5438 = vunpack.c.l.b16 %v1574
    %v5439 = vunpack.c.l.b16 %v1575
    %v5440 = vunpack.c.l.b16 %v1576
    %v5441 = vunpack.c.l.b16 %v1577
    %v5442 = vunpack.c.l.b16 %v1578
    %v5443 = vunpack.c.l.b16 %v1579
    %v5444 = vunpack.c.l.b16 %v1580
    %v5445 = vunpack.c.l.b16 %v1581
    %v5446 = vunpack.c.l.b16 %v1582
    %v5447 = vunpack.c.l.b16 %v1583
    %v5448 = vunpack.c.l.b16 %v1584
    %v5449 = vunpack.c.l.b16 %v1585
    %v5450 = vunpack.c.l.b16 %v1586
    %v5451 = vunpack.c.l.b16 %v1587
    %v5452 = vunpack.c.l.b16 %v1588
    %v5453 = vunpack.c.l.b16 %v1589
    %v5454 = vunpack.c.l.b16 %v1590
    %v5455 = vunpack.c.l.b16 %v1591
    %v5456 = vunpack.c.l.b16 %v1592
    %v5457 = vunpack.c.l.b16 %v1593
    %v5458 = vunpack.c.l.b16 %v1594
    %v5459 = vunpack.c.l.b16 %v1595
    %v5460 = vunpack.c.l.b16 %v1596
    %v5461 = vunpack.c.l.b16 %v1597
    %v5462 = vunpack.c.l.b16 %v1598
    %v5463 = vunpack.c.l.b16 %v1599
    %v5464 = vunpack.c.l.b16 %v1600
    %v5465 = vunpack.c.l.b16 %v1601
    %v5466 = vunpack.c.l.b16 %v1602
    %v5467 = vpack.c.b16 %v3900, %v3899
    %v5468 = vpack.c.b16 %v3902, %v3901
    %v5469 = vpack.c.b16 %v3904, %v3903
    %v5470 = vpack.c.b16 %v3906, %v3905
    %v5471 = vpack.c.b16 %v3908, %v3907
    %v5472 = vpack.c.b16 %v3910, %v3909
    %v5473 = vpack.c.b16 %v3912, %v3911
    %v5474 = vpack.c.b16 %v3914, %v3913
    %v5475 = vpack.c.b16 %v3916, %v3915
    %v5476 = vpack.c.b16 %v3918, %v3917
    %v5477 = vpack.c.b16 %v3920, %v3919
    %v5478 = vpack.c.b16 %v3922, %v3921
    %v5479 = vpack.c.b16 %v3924, %v3923
    %v5480 = vpack.c.b16 %v3926, %v3925
    %v5481 = vpack.c.b16 %v3928, %v3927
    %v5482 = vpack.c.b16 %v3930, %v3929
    %v5483 = vpack.c.b16 %v3932, %v3931
    %v5484 = vpack.c.b16 %v3934, %v3933
    %v5485 = vpack.c.b16 %v3936, %v3935
    %v5486 = vpack.c.b16 %v3938, %v3937
    %v5487 = vpack.c.b16 %v3940, %v3939
    %v5488 = vpack.c.b16 %v3942, %v3941
    %v5489 = vpack.c.b16 %v3944, %v3943
    %v5490 = vpack.c.b16 %v3946, %v3945
    %v5491 = vpack.c.b16 %v3948, %v3947
    %v5492 = vpack.c.b16 %v3950, %v3949
    %v5493 = vpack.c.b16 %v3952, %v3951
    %v5494 = vpack.c.b16 %v3954, %v3953
    %v5495 = vpack.c.b16 %v3956, %v3955
    %v5496 = vpack.c.b16 %v3958, %v3957
    %v5497 = vpack.c.b16 %v3960, %v3959
    %v5498 = vpack.c.b16 %v3962, %v3961
    %v5499 = vpack.c.b16 %v3964, %v3963
    %v5500 = vpack.c.b16 %v3966, %v3965
    %v5501 = vpack.c.b16 %v3968, %v3967
    %v5502 = vpack.c.b16 %v3970, %v3969
    %v5503 = vpack.c.b16 %v3972, %v3971
    %v5504 = vpack.c.b16 %v3974, %v3973
    %v5505 = vpack.c.b16 %v3976, %v3975
    %v5506 = vpack.c.b16 %v3978, %v3977
    %v5507 = vpack.c.b16 %v3980, %v3979
    %v5508 = vpack.c.b16 %v3982, %v3981
    %v5509 = vpack.c.b16 %v3984, %v3983
    %v5510 = vpack.c.b16 %v3986, %v3985
    %v5511 = vpack.c.b16 %v3988, %v3987
    %v5512 = vpack.c.b16 %v3990, %v3989
    %v5513 = vpack.c.b16 %v3992, %v3991
    %v5514 = vpack.c.b16 %v3994, %v3993
    %v5515 = vpack.c.b16 %v3996, %v3995
    %v5516 = vpack.c.b16 %v3998, %v3997
    %v5517 = vpack.c.b16 %v4000, %v3999
    %v5518 = vpack.c.b16 %v4002, %v4001
    %v5519 = vpack.c.b16 %v4004, %v4003
    %v5520 = vpack.c.b16 %v4006, %v4005
    %v5521 = vpack.c.b16 %v4008, %v4007
    %v5522 = vpack.c.b16 %v4010, %v4009
    %v5523 = vpack.c.b16 %v4012, %v4011
    %v5524 = vpack.c.b16 %v4014, %v4013
    %v5525 = vpack.c.b16 %v4016, %v4015
    %v5526 = vpack.c.b16 %v4018, %v4017
    %v5527 = vpack.c.b16 %v4020, %v4019
    %v5528 = vpack.c.b16 %v4022, %v4021
    %v5529 = vpack.c.b16 %v4024, %v4023
    %v5530 = vpack.c.b16 %v4026, %v4025
    %v5531 = vpack.c.b16 %v4028, %v4027
    %v5532 = vpack.c.b16 %v4030, %v4029
    %v5533 = vpack.c.b16 %v4032, %v4031
    %v5534 = vpack.c.b16 %v4034, %v4033
    %v5535 = vpack.c.b16 %v4036, %v4035
    %v5536 = vpack.c.b16 %v4038, %v4037
    %v5537 = vpack.c.b16 %v4040, %v4039
    %v5538 = vpack.c.b16 %v4042, %v4041
    %v5539 = vpack.c.b16 %v4044, %v4043
    %v5540 = vpack.c.b16 %v4046, %v4045
    %v5541 = vpack.c.b16 %v4048, %v4047
    %v5542 = vpack.c.b16 %v4050, %v4049
    %v5543 = vpack.c.b16 %v4052, %v4051
    %v5544 = vpack.c.b16 %v4054, %v4053
    %v5545 = vpack.c.b16 %v4056, %v4055
    %v5546 = vpack.c.b16 %v4058, %v4057
    %v5547 = vpack.c.b16 %v4060, %v4059
    %v5548 = vpack.c.b16 %v4062, %v4061
    %v5549 = vpack.c.b16 %v4064, %v4063
    %v5550 = vpack.c.b16 %v4066, %v4065
    %v5551 = vpack.c.b16 %v4068, %v4067
    %v5552 = vpack.c.b16 %v4070, %v4069
    %v5553 = vpack.c.b16 %v4072, %v4071
    %v5554 = vpack.c.b16 %v4074, %v4073
    %v5555 = vpack.c.b16 %v4076, %v4075
    %v5556 = vpack.c.b16 %v4078, %v4077
    %v5557 = vpack.c.b16 %v4080, %v4079
    %v5558 = vpack.c.b16 %v4082, %v4081
    %v5559 = vpack.c.b16 %v4084, %v4083
    %v5560 = vpack.c.b16 %v4086, %v4085
    %v5561 = vpack.c.b16 %v4088, %v4087
    %v5562 = vpack.c.b16 %v4090, %v4089
    %v5563 = vpack.c.b16 %v4092, %v4091
    %v5564 = vpack.c.b16 %v4094, %v4093
    %v5565 = vpack.c.b16 %v4096, %v4095
    %v5566 = vpack.c.b16 %v4098, %v4097
    %v5567 = vpack.c.b16 %v4100, %v4099
    %v5568 = vpack.c.b16 %v4102, %v4101
    %v5569 = vpack.c.b16 %v4104, %v4103
    %v5570 = vpack.c.b16 %v4106, %v4105
    %v5571 = vpack.c.b16 %v4108, %v4107
    %v5572 = vpack.c.b16 %v4110, %v4109
    %v5573 = vpack.c.b16 %v4112, %v4111
    %v5574 = vpack.c.b16 %v4114, %v4113
    %v5575 = vpack.c.b16 %v4116, %v4115
    %v5576 = vpack.c.b16 %v4118, %v4117
    %v5577 = vpack.c.b16 %v4120, %v4119
    %v5578 = vpack.c.b16 %v4122, %v4121
    %v5579 = vpack.c.b16 %v4124, %v4123
    %v5580 = vpack.c.b16 %v4126, %v4125
    %v5581 = vpack.c.b16 %v4128, %v4127
    %v5582 = vpack.c.b16 %v4130, %v4129
    %v5583 = vpack.c.b16 %v4132, %v4131
    %v5584 = vpack.c.b16 %v4134, %v4133
    %v5585 = vpack.c.b16 %v4136, %v4135
    %v5586 = vpack.c.b16 %v4138, %v4137
    %v5587 = vpack.c.b16 %v4140, %v4139
    %v5588 = vpack.c.b16 %v4142, %v4141
    %v5589 = vpack.c.b16 %v4144, %v4143
    %v5590 = vpack.c.b16 %v4146, %v4145
    %v5591 = vpack.c.b16 %v4148, %v4147
    %v5592 = vpack.c.b16 %v4150, %v4149
    %v5593 = vpack.c.b16 %v4152, %v4151
    %v5594 = vpack.c.b16 %v4154, %v4153
    %v5595 = vpack.c.b16 %v4156, %v4155
    %v5596 = vpack.c.b16 %v4158, %v4157
    %v5597 = vpack.c.b16 %v4160, %v4159
    %v5598 = vpack.c.b16 %v4162, %v4161
    %v5599 = vpack.c.b16 %v4164, %v4163
    %v5600 = vpack.c.b16 %v4166, %v4165
    %v5601 = vpack.c.b16 %v4168, %v4167
    %v5602 = vpack.c.b16 %v4170, %v4169
    %v5603 = vpack.c.b16 %v4172, %v4171
    %v5604 = vpack.c.b16 %v4174, %v4173
    %v5605 = vpack.c.b16 %v4176, %v4175
    %v5606 = vpack.c.b16 %v4178, %v4177
    %v5607 = vpack.c.b16 %v4180, %v4179
    %v5608 = vpack.c.b16 %v4182, %v4181
    %v5609 = vpack.c.b16 %v4184, %v4183
    %v5610 = vpack.c.b16 %v4186, %v4185
    %v5611 = vpack.c.b16 %v4188, %v4187
    %v5612 = vpack.c.b16 %v4190, %v4189
    %v5613 = vpack.c.b16 %v4192, %v4191
    %v5614 = vpack.c.b16 %v4194, %v4193
    %v5615 = vpack.c.b16 %v4196, %v4195
    %v5616 = vpack.c.b16 %v4198, %v4197
    %v5617 = vpack.c.b16 %v4200, %v4199
    %v5618 = vpack.c.b16 %v4202, %v4201
    %v5619 = vpack.c.b16 %v4204, %v4203
    %v5620 = vpack.c.b16 %v4206, %v4205
    %v5621 = vpack.c.b16 %v4208, %v4207
    %v5622 = vpack.c.b16 %v4210, %v4209
    %v5623 = vpack.c.b16 %v4212, %v4211
    %v5624 = vpack.c.b16 %v4214, %v4213
    %v5625 = vpack.c.b16 %v4216, %v4215
    %v5626 = vpack.c.b16 %v4218, %v4217
    %v5627 = vpack.c.b16 %v4220, %v4219
    %v5628 = vpack.c.b16 %v4222, %v4221
    %v5629 = vpack.c.b16 %v4224, %v4223
    %v5630 = vpack.c.b16 %v4226, %v4225
    %v5631 = vpack.c.b16 %v4228, %v4227
    %v5632 = vpack.c.b16 %v4230, %v4229
    %v5633 = vpack.c.b16 %v4232, %v4231
    %v5634 = vpack.c.b16 %v4234, %v4233
    %v5635 = vpack.c.b16 %v4236, %v4235
    %v5636 = vpack.c.b16 %v4238, %v4237
    %v5637 = vpack.c.b16 %v4240, %v4239
    %v5638 = vpack.c.b16 %v4242, %v4241
    %v5639 = vpack.c.b16 %v4244, %v4243
    %v5640 = vpack.c.b16 %v4246, %v4245
    %v5641 = vpack.c.b16 %v4248, %v4247
    %v5642 = vpack.c.b16 %v4250, %v4249
    %v5643 = vpack.c.b16 %v4252, %v4251
    %v5644 = vpack.c.b16 %v4254, %v4253
    %v5645 = vpack.c.b16 %v4256, %v4255
    %v5646 = vpack.c.b16 %v4258, %v4257
    %v5647 = vpack.c.b16 %v4260, %v4259
    %v5648 = vpack.c.b16 %v4262, %v4261
    %v5649 = vpack.c.b16 %v4264, %v4263
    %v5650 = vpack.c.b16 %v4266, %v4265
    %v5651 = vpack.c.b16 %v4268, %v4267
    %v5652 = vpack.c.b16 %v4270, %v4269
    %v5653 = vpack.c.b16 %v4272, %v4271
    %v5654 = vpack.c.b16 %v4274, %v4273
    %v5655 = vpack.c.b16 %v4276, %v4275
    %v5656 = vpack.c.b16 %v4278, %v4277
    %v5657 = vpack.c.b16 %v4280, %v4279
    %v5658 = vpack.c.b16 %v4282, %v4281
    %v5659 = vpack.c.b16 %v4284, %v4283
    %v5660 = vpack.c.b16 %v4286, %v4285
    %v5661 = vpack.c.b16 %v4288, %v4287
    %v5662 = vpack.c.b16 %v4290, %v4289
    %v5663 = vpack.c.b16 %v4292, %v4291
    %v5664 = vpack.c.b16 %v4294, %v4293
    %v5665 = vpack.c.b16 %v4296, %v4295
    %v5666 = vpack.c.b16 %v4298, %v4297
    %v5667 = vpack.c.b16 %v4300, %v4299
    %v5668 = vpack.c.b16 %v4302, %v4301
    %v5669 = vpack.c.b16 %v4304, %v4303
    %v5670 = vpack.c.b16 %v4306, %v4305
    %v5671 = vpack.c.b16 %v4308, %v4307
    %v5672 = vpack.c.b16 %v4310, %v4309
    %v5673 = vpack.c.b16 %v4312, %v4311
    %v5674 = vpack.c.b16 %v4314, %v4313
    %v5675 = vpack.c.b16 %v4316, %v4315
    %v5676 = vpack.c.b16 %v4318, %v4317
    %v5677 = vpack.c.b16 %v4320, %v4319
    %v5678 = vpack.c.b16 %v4322, %v4321
    %v5679 = vpack.c.b16 %v4324, %v4323
    %v5680 = vpack.c.b16 %v4326, %v4325
    %v5681 = vpack.c.b16 %v4328, %v4327
    %v5682 = vpack.c.b16 %v4330, %v4329
    %v5683 = vpack.c.b16 %v4332, %v4331
    %v5684 = vpack.c.b16 %v4334, %v4333
    %v5685 = vpack.c.b16 %v4336, %v4335
    %v5686 = vpack.c.b16 %v4338, %v4337
    %v5687 = vpack.c.b16 %v4340, %v4339
    %v5688 = vpack.c.b16 %v4342, %v4341
    %v5689 = vpack.c.b16 %v4344, %v4343
    %v5690 = vpack.c.b16 %v4346, %v4345
    %v5691 = vpack.c.b16 %v4348, %v4347
    %v5692 = vpack.c.b16 %v4350, %v4349
    %v5693 = vpack.c.b16 %v4352, %v4351
    %v5694 = vpack.c.b16 %v4354, %v4353
    %v5695 = vpack.c.b16 %v4356, %v4355
    %v5696 = vpack.c.b16 %v4358, %v4357
    %v5697 = vpack.c.b16 %v4360, %v4359
    %v5698 = vpack.c.b16 %v4362, %v4361
    %v5699 = vpack.c.b16 %v4364, %v4363
    %v5700 = vpack.c.b16 %v4366, %v4365
    %v5701 = vpack.c.b16 %v4368, %v4367
    %v5702 = vpack.c.b16 %v4370, %v4369
    %v5703 = vpack.c.b16 %v4372, %v4371
    %v5704 = vpack.c.b16 %v4374, %v4373
    %v5705 = vpack.c.b16 %v4376, %v4375
    %v5706 = vpack.c.b16 %v4378, %v4377
    %v5707 = vpack.c.b16 %v4380, %v4379
    %v5708 = vpack.c.b16 %v4382, %v4381
    %v5709 = vpack.c.b16 %v4384, %v4383
    %v5710 = vpack.c.b16 %v4386, %v4385
    %v5711 = vpack.c.b16 %v4388, %v4387
    %v5712 = vpack.c.b16 %v4390, %v4389
    %v5713 = vpack.c.b16 %v4392, %v4391
    %v5714 = vpack.c.b16 %v4394, %v4393
    %v5715 = vpack.c.b16 %v4396, %v4395
    %v5716 = vpack.c.b16 %v4398, %v4397
    %v5717 = vpack.c.b16 %v4400, %v4399
    %v5718 = vpack.c.b16 %v4402, %v4401
    %v5719 = vpack.c.b16 %v4404, %v4403
    %v5720 = vpack.c.b16 %v4406, %v4405
    %v5721 = vpack.c.b16 %v4408, %v4407
    %v5722 = vpack.c.b16 %v4410, %v4409
    %v5723 = vpack.c.b16 %v4412, %v4411
    %v5724 = vpack.c.b16 %v4414, %v4413
    %v5725 = vpack.c.b16 %v4416, %v4415
    %v5726 = vpack.c.b16 %v4418, %v4417
    %v5727 = vpack.c.b16 %v4420, %v4419
    %v5728 = vpack.c.b16 %v4422, %v4421
    %v5729 = vpack.c.b16 %v4424, %v4423
    %v5730 = vpack.c.b16 %v4426, %v4425
    %v5731 = vpack.c.b16 %v4428, %v4427
    %v5732 = vpack.c.b16 %v4430, %v4429
    %v5733 = vpack.c.b16 %v4432, %v4431
    %v5734 = vpack.c.b16 %v4434, %v4433
    %v5735 = vpack.c.b16 %v4436, %v4435
    %v5736 = vpack.c.b16 %v4438, %v4437
    %v5737 = vpack.c.b16 %v4440, %v4439
    %v5738 = vpack.c.b16 %v4442, %v4441
    %v5739 = vpack.c.b16 %v4444, %v4443
    %v5740 = vpack.c.b16 %v4446, %v4445
    %v5741 = vpack.c.b16 %v4448, %v4447
    %v5742 = vpack.c.b16 %v4450, %v4449
    %v5743 = vpack.c.b16 %v4452, %v4451
    %v5744 = vpack.c.b16 %v4454, %v4453
    %v5745 = vpack.c.b16 %v4456, %v4455
    %v5746 = vpack.c.b16 %v4458, %v4457
    %v5747 = vpack.c.b16 %v4460, %v4459
    %v5748 = vpack.c.b16 %v4462, %v4461
    %v5749 = vpack.c.b16 %v4464, %v4463
    %v5750 = vpack.c.b16 %v4466, %v4465
    %v5751 = vpack.c.b16 %v4468, %v4467
    %v5752 = vpack.c.b16 %v4470, %v4469
    %v5753 = vpack.c.b16 %v4472, %v4471
    %v5754 = vpack.c.b16 %v4474, %v4473
    %v5755 = vpack.c.b16 %v4476, %v4475
    %v5756 = vpack.c.b16 %v4478, %v4477
    %v5757 = vpack.c.b16 %v4480, %v4479
    %v5758 = vpack.c.b16 %v4482, %v4481
    %v5759 = vpack.c.b16 %v4484, %v4483
    %v5760 = vpack.c.b16 %v4486, %v4485
    %v5761 = vpack.c.b16 %v4488, %v4487
    %v5762 = vpack.c.b16 %v4490, %v4489
    %v5763 = vpack.c.b16 %v4492, %v4491
    %v5764 = vpack.c.b16 %v4494, %v4493
    %v5765 = vpack.c.b16 %v4496, %v4495
    %v5766 = vpack.c.b16 %v4498, %v4497
    %v5767 = vpack.c.b16 %v4500, %v4499
    %v5768 = vpack.c.b16 %v4502, %v4501
    %v5769 = vpack.c.b16 %v4504, %v4503
    %v5770 = vpack.c.b16 %v4506, %v4505
    %v5771 = vpack.c.b16 %v4508, %v4507
    %v5772 = vpack.c.b16 %v4510, %v4509
    %v5773 = vpack.c.b16 %v4512, %v4511
    %v5774 = vpack.c.b16 %v4514, %v4513
    %v5775 = vpack.c.b16 %v4516, %v4515
    %v5776 = vpack.c.b16 %v4518, %v4517
    %v5777 = vpack.c.b16 %v4520, %v4519
    %v5778 = vpack.c.b16 %v4522, %v4521
    %v5779 = vpack.c.b16 %v4524, %v4523
    %v5780 = vpack.c.b16 %v4526, %v4525
    %v5781 = vpack.c.b16 %v4528, %v4527
    %v5782 = vpack.c.b16 %v4530, %v4529
    %v5783 = vpack.c.b16 %v4532, %v4531
    %v5784 = vpack.c.b16 %v4534, %v4533
    %v5785 = vpack.c.b16 %v4536, %v4535
    %v5786 = vpack.c.b16 %v4538, %v4537
    %v5787 = vpack.c.b16 %v4540, %v4539
    %v5788 = vpack.c.b16 %v4542, %v4541
    %v5789 = vpack.c.b16 %v4544, %v4543
    %v5790 = vpack.c.b16 %v4546, %v4545
    %v5791 = vpack.c.b16 %v4548, %v4547
    %v5792 = vpack.c.b16 %v4550, %v4549
    %v5793 = vpack.c.b16 %v4552, %v4551
    %v5794 = vpack.c.b16 %v4554, %v4553
    %v5795 = vpack.c.b16 %v4556, %v4555
    %v5796 = vpack.c.b16 %v4558, %v4557
    %v5797 = vpack.c.b16 %v4560, %v4559
    %v5798 = vpack.c.b16 %v4562, %v4561
    %v5799 = vpack.c.b16 %v4564, %v4563
    %v5800 = vpack.c.b16 %v4566, %v4565
    %v5801 = vpack.c.b16 %v4568, %v4567
    %v5802 = vpack.c.b16 %v4570, %v4569
    %v5803 = vpack.c.b16 %v4572, %v4571
    %v5804 = vpack.c.b16 %v4574, %v4573
    %v5805 = vpack.c.b16 %v4576, %v4575
    %v5806 = vpack.c.b16 %v4578, %v4577
    %v5807 = vpack.c.b16 %v4580, %v4579
    %v5808 = vpack.c.b16 %v4582, %v4581
    %v5809 = vpack.c.b16 %v4584, %v4583
    %v5810 = vpack.c.b16 %v4586, %v4585
    %v5811 = vpack.c.b16 %v4588, %v4587
    %v5812 = vpack.c.b16 %v4590, %v4589
    %v5813 = vpack.c.b16 %v4592, %v4591
    %v5814 = vpack.c.b16 %v4594, %v4593
    %v5815 = vpack.c.b16 %v4596, %v4595
    %v5816 = vpack.c.b16 %v4598, %v4597
    %v5817 = vpack.c.b16 %v4600, %v4599
    %v5818 = vpack.c.b16 %v4602, %v4601
    %v5819 = vpack.c.b16 %v4604, %v4603
    %v5820 = vpack.c.b16 %v4606, %v4605
    %v5821 = vpack.c.b16 %v4608, %v4607
    %v5822 = vpack.c.b16 %v4610, %v4609
    %v5823 = vpack.c.b16 %v4612, %v4611
    %v5824 = vpack.c.b16 %v4614, %v4613
    %v5825 = vpack.c.b16 %v4616, %v4615
    %v5826 = vpack.c.b16 %v4618, %v4617
    %v5827 = vpack.c.b16 %v4620, %v4619
    %v5828 = vpack.c.b16 %v4622, %v4621
    %v5829 = vpack.c.b16 %v4624, %v4623
    %v5830 = vpack.c.b16 %v4626, %v4625
    %v5831 = vpack.c.b16 %v4628, %v4627
    %v5832 = vpack.c.b16 %v4630, %v4629
    %v5833 = vpack.c.b16 %v4632, %v4631
    %v5834 = vpack.c.b16 %v4634, %v4633
    %v5835 = vpack.c.b16 %v4636, %v4635
    %v5836 = vpack.c.b16 %v4638, %v4637
    %v5837 = vpack.c.b16 %v4640, %v4639
    %v5838 = vpack.c.b16 %v4642, %v4641
    %v5839 = vpack.c.b16 %v4644, %v4643
    %v5840 = vpack.c.b16 %v4646, %v4645
    %v5841 = vpack.c.b16 %v4648, %v4647
    %v5842 = vpack.c.b16 %v4650, %v4649
    %v5843 = vpack.c.b16 %v4652, %v4651
    %v5844 = vpack.c.b16 %v4654, %v4653
    %v5845 = vpack.c.b16 %v4656, %v4655
    %v5846 = vpack.c.b16 %v4658, %v4657
    %v5847 = vpack.c.b16 %v4660, %v4659
    %v5848 = vpack.c.b16 %v4662, %v4661
    %v5849 = vpack.c.b16 %v4664, %v4663
    %v5850 = vpack.c.b16 %v4666, %v4665
    %v5851 = vpack.c.b16 %v4668, %v4667
    %v5852 = vpack.c.b16 %v4670, %v4669
    %v5853 = vpack.c.b16 %v4672, %v4671
    %v5854 = vpack.c.b16 %v4674, %v4673
    %v5855 = vpack.c.b16 %v4676, %v4675
    %v5856 = vpack.c.b16 %v4678, %v4677
    %v5857 = vpack.c.b16 %v4680, %v4679
    %v5858 = vpack.c.b16 %v4682, %v4681
    %v5859 = vpack.c.b16 %v4684, %v4683
    %v5860 = vpack.c.b16 %v4686, %v4685
    %v5861 = vpack.c.b16 %v4688, %v4687
    %v5862 = vpack.c.b16 %v4690, %v4689
    %v5863 = vpack.c.b16 %v4692, %v4691
    %v5864 = vpack.c.b16 %v4694, %v4693
    %v5865 = vpack.c.b16 %v4696, %v4695
    %v5866 = vpack.c.b16 %v4698, %v4697
    %v5867 = vpack.c.b16 %v4700, %v4699
    %v5868 = vpack.c.b16 %v4702, %v4701
    %v5869 = vpack.c.b16 %v4704, %v4703
    %v5870 = vpack.c.b16 %v4706, %v4705
    %v5871 = vpack.c.b16 %v4708, %v4707
    %v5872 = vpack.c.b16 %v4710, %v4709
    %v5873 = vpack.c.b16 %v4712, %v4711
    %v5874 = vpack.c.b16 %v4714, %v4713
    %v5875 = vpack.c.b16 %v4716, %v4715
    %v5876 = vpack.c.b16 %v4718, %v4717
    %v5877 = vpack.c.b16 %v4720, %v4719
    %v5878 = vpack.c.b16 %v4722, %v4721
    %v5879 = vpack.c.b16 %v4724, %v4723
    %v5880 = vpack.c.b16 %v4726, %v4725
    %v5881 = vpack.c.b16 %v4728, %v4727
    %v5882 = vpack.c.b16 %v4730, %v4729
    %v5883 = vpack.c.b16 %v4732, %v4731
    %v5884 = vpack.c.b16 %v4734, %v4733
    %v5885 = vpack.c.b16 %v4736, %v4735
    %v5886 = vpack.c.b16 %v4738, %v4737
    %v5887 = vpack.c.b16 %v4740, %v4739
    %v5888 = vpack.c.b16 %v4742, %v4741
    %v5889 = vpack.c.b16 %v4744, %v4743
    %v5890 = vpack.c.b16 %v4746, %v4745
    %v5891 = vpack.c.b16 %v4748, %v4747
    %v5892 = vpack.c.b16 %v4750, %v4749
    %v5893 = vpack.c.b16 %v4752, %v4751
    %v5894 = vpack.c.b16 %v4754, %v4753
    %v5895 = vpack.c.b16 %v4756, %v4755
    %v5896 = vpack.c.b16 %v4758, %v4757
    %v5897 = vpack.c.b16 %v4760, %v4759
    %v5898 = vpack.c.b16 %v4762, %v4761
    %v5899 = vpack.c.b16 %v4764, %v4763
    %v5900 = vpack.c.b16 %v4766, %v4765
    %v5901 = vpack.c.b16 %v4768, %v4767
    %v5902 = vpack.c.b16 %v4770, %v4769
    %v5903 = vpack.c.b16 %v4772, %v4771
    %v5904 = vpack.c.b16 %v4774, %v4773
    %v5905 = vpack.c.b16 %v4776, %v4775
    %v5906 = vpack.c.b16 %v4778, %v4777
    %v5907 = vpack.c.b16 %v4780, %v4779
    %v5908 = vpack.c.b16 %v4782, %v4781
    %v5909 = vpack.c.b16 %v4784, %v4783
    %v5910 = vpack.c.b16 %v4786, %v4785
    %v5911 = vpack.c.b16 %v4788, %v4787
    %v5912 = vpack.c.b16 %v4790, %v4789
    %v5913 = vpack.c.b16 %v4792, %v4791
    %v5914 = vpack.c.b16 %v4794, %v4793
    %v5915 = vpack.c.b16 %v4796, %v4795
    %v5916 = vpack.c.b16 %v4798, %v4797
    %v5917 = vpack.c.b16 %v4800, %v4799
    %v5918 = vpack.c.b16 %v4802, %v4801
    %v5919 = vpack.c.b16 %v4804, %v4803
    %v5920 = vpack.c.b16 %v4806, %v4805
    %v5921 = vpack.c.b16 %v4808, %v4807
    %v5922 = vpack.c.b16 %v4810, %v4809
    %v5923 = vpack.c.b16 %v4812, %v4811
    %v5924 = vpack.c.b16 %v4814, %v4813
    %v5925 = vpack.c.b16 %v4816, %v4815
    %v5926 = vpack.c.b16 %v4818, %v4817
    %v5927 = vpack.c.b16 %v4820, %v4819
    %v5928 = vpack.c.b16 %v4822, %v4821
    %v5929 = vpack.c.b16 %v4824, %v4823
    %v5930 = vpack.c.b16 %v4826, %v4825
    %v5931 = vpack.c.b16 %v4828, %v4827
    %v5932 = vpack.c.b16 %v4830, %v4829
    %v5933 = vpack.c.b16 %v4832, %v4831
    %v5934 = vpack.c.b16 %v4834, %v4833
    %v5935 = vpack.c.b16 %v4836, %v4835
    %v5936 = vpack.c.b16 %v4838, %v4837
    %v5937 = vpack.c.b16 %v4840, %v4839
    %v5938 = vpack.c.b16 %v4842, %v4841
    %v5939 = vpack.c.b16 %v4844, %v4843
    %v5940 = vpack.c.b16 %v4846, %v4845
    %v5941 = vpack.c.b16 %v4848, %v4847
    %v5942 = vpack.c.b16 %v4850, %v4849
    %v5943 = vpack.c.b16 %v4852, %v4851
    %v5944 = vpack.c.b16 %v4854, %v4853
    %v5945 = vpack.c.b16 %v4856, %v4855
    %v5946 = vpack.c.b16 %v4858, %v4857
    %v5947 = vpack.c.b16 %v4860, %v4859
    %v5948 = vpack.c.b16 %v4862, %v4861
    %v5949 = vpack.c.b16 %v4864, %v4863
    %v5950 = vpack.c.b16 %v4866, %v4865
    %v5951 = vpack.c.b16 %v4868, %v4867
    %v5952 = vpack.c.b16 %v4870, %v4869
    %v5953 = vpack.c.b16 %v4872, %v4871
    %v5954 = vpack.c.b16 %v4874, %v4873
    %v5955 = vpack.c.b16 %v4876, %v4875
    %v5956 = vpack.c.b16 %v4878, %v4877
    %v5957 = vpack.c.b16 %v4880, %v4879
    %v5958 = vpack.c.b16 %v4882, %v4881
    %v5959 = vpack.c.b16 %v4884, %v4883
    %v5960 = vpack.c.b16 %v4886, %v4885
    %v5961 = vpack.c.b16 %v4888, %v4887
    %v5962 = vpack.c.b16 %v4890, %v4889
    %v5963 = vpack.c.b16 %v4892, %v4891
    %v5964 = vpack.c.b16 %v4894, %v4893
    %v5965 = vpack.c.b16 %v4896, %v4895
    %v5966 = vpack.c.b16 %v4898, %v4897
    %v5967 = vpack.c.b16 %v4900, %v4899
    %v5968 = vpack.c.b16 %v4902, %v4901
    %v5969 = vpack.c.b16 %v4904, %v4903
    %v5970 = vpack.c.b16 %v4906, %v4905
    %v5971 = vpack.c.b16 %v4908, %v4907
    %v5972 = vpack.c.b16 %v4910, %v4909
    %v5973 = vpack.c.b16 %v4912, %v4911
    %v5974 = vpack.c.b16 %v4914, %v4913
    %v5975 = vpack.c.b16 %v4916, %v4915
    %v5976 = vpack.c.b16 %v4918, %v4917
    %v5977 = vpack.c.b16 %v4920, %v4919
    %v5978 = vpack.c.b16 %v4922, %v4921
    %v5979 = vpack.c.b16 %v4924, %v4923
    %v5980 = vpack.c.b16 %v4926, %v4925
    %v5981 = vpack.c.b16 %v4928, %v4927
    %v5982 = vpack.c.b16 %v4930, %v4929
    %v5983 = vpack.c.b16 %v4932, %v4931
    %v5984 = vpack.c.b16 %v4934, %v4933
    %v5985 = vpack.c.b16 %v4936, %v4935
    %v5986 = vpack.c.b16 %v4938, %v4937
    %v5987 = vpack.c.b16 %v4940, %v4939
    %v5988 = vpack.c.b16 %v4942, %v4941
    %v5989 = vpack.c.b16 %v4944, %v4943
    %v5990 = vpack.c.b16 %v4946, %v4945
    %v5991 = vpack.c.b16 %v4948, %v4947
    %v5992 = vpack.c.b16 %v4950, %v4949
    %v5993 = vpack.c.b16 %v4952, %v4951
    %v5994 = vpack.c.b16 %v4954, %v4953
    %v5995 = vpack.c.b16 %v4956, %v4955
    %v5996 = vpack.c.b16 %v4958, %v4957
    %v5997 = vpack.c.b16 %v4960, %v4959
    %v5998 = vpack.c.b16 %v4962, %v4961
    %v5999 = vpack.c.b16 %v4964, %v4963
    %v6000 = vpack.c.b16 %v4966, %v4965
    %v6001 = vpack.c.b16 %v4968, %v4967
    %v6002 = vpack.c.b16 %v4970, %v4969
    %v6003 = vpack.c.b16 %v4972, %v4971
    %v6004 = vpack.c.b16 %v4974, %v4973
    %v6005 = vpack.c.b16 %v4976, %v4975
    %v6006 = vpack.c.b16 %v4978, %v4977
    %v6007 = vpack.c.b16 %v4980, %v4979
    %v6008 = vpack.c.b16 %v4982, %v4981
    %v6009 = vpack.c.b16 %v4984, %v4983
    %v6010 = vpack.c.b16 %v4986, %v4985
    %v6011 = vpack.c.b16 %v4988, %v4987
    %v6012 = vpack.c.b16 %v4990, %v4989
    %v6013 = vpack.c.b16 %v4992, %v4991
    %v6014 = vpack.c.b16 %v4994, %v4993
    %v6015 = vpack.c.b16 %v4996, %v4995
    %v6016 = vpack.c.b16 %v4998, %v4997
    %v6017 = vpack.c.b16 %v5000, %v4999
    %v6018 = vpack.c.b16 %v5002, %v5001
    %v6019 = vpack.c.b16 %v5004, %v5003
    %v6020 = vpack.c.b16 %v5006, %v5005
    %v6021 = vpack.c.b16 %v5008, %v5007
    %v6022 = vpack.c.b16 %v5010, %v5009
    %v6023 = vpack.c.b16 %v5012, %v5011
    %v6024 = vpack.c.b16 %v5014, %v5013
    %v6025 = vpack.c.b16 %v5016, %v5015
    %v6026 = vpack.c.b16 %v5018, %v5017
    %v6027 = vpack.c.b16 %v5020, %v5019
    %v6028 = vpack.c.b16 %v5022, %v5021
    %v6029 = vpack.c.b16 %v5024, %v5023
    %v6030 = vpack.c.b16 %v5026, %v5025
    %v6031 = vpack.c.b16 %v5028, %v5027
    %v6032 = vpack.c.b16 %v5030, %v5029
    %v6033 = vpack.c.b16 %v5032, %v5031
    %v6034 = vpack.c.b16 %v5034, %v5033
    %v6035 = vpack.c.b16 %v5036, %v5035
    %v6036 = vpack.c.b16 %v5038, %v5037
    %v6037 = vpack.c.b16 %v5040, %v5039
    %v6038 = vpack.c.b16 %v5042, %v5041
    %v6039 = vpack.c.b16 %v5044, %v5043
    %v6040 = vpack.c.b16 %v5046, %v5045
    %v6041 = vpack.c.b16 %v5048, %v5047
    %v6042 = vpack.c.b16 %v5050, %v5049
    %v6043 = vpack.c.b16 %v5052, %v5051
    %v6044 = vpack.c.b16 %v5054, %v5053
    %v6045 = vpack.c.b16 %v5056, %v5055
    %v6046 = vpack.c.b16 %v5058, %v5057
    %v6047 = vpack.c.b16 %v5060, %v5059
    %v6048 = vpack.c.b16 %v5062, %v5061
    %v6049 = vpack.c.b16 %v5064, %v5063
    %v6050 = vpack.c.b16 %v5066, %v5065
    %v6051 = vpack.c.b16 %v5068, %v5067
    %v6052 = vpack.c.b16 %v5070, %v5069
    %v6053 = vpack.c.b16 %v5072, %v5071
    %v6054 = vpack.c.b16 %v5074, %v5073
    %v6055 = vpack.c.b16 %v5076, %v5075
    %v6056 = vpack.c.b16 %v5078, %v5077
    %v6057 = vpack.c.b16 %v5080, %v5079
    %v6058 = vpack.c.b16 %v5082, %v5081
    %v6059 = vpack.c.b16 %v5084, %v5083
    %v6060 = vpack.c.b16 %v5086, %v5085
    %v6061 = vpack.c.b16 %v5088, %v5087
    %v6062 = vpack.c.b16 %v5090, %v5089
    %v6063 = vpack.c.b16 %v5092, %v5091
    %v6064 = vpack.c.b16 %v5094, %v5093
    %v6065 = vpack.c.b16 %v5096, %v5095
    %v6066 = vpack.c.b16 %v5098, %v5097
    %v6067 = vpack.c.b16 %v5100, %v5099
    %v6068 = vpack.c.b16 %v5102, %v5101
    %v6069 = vpack.c.b16 %v5104, %v5103
    %v6070 = vpack.c.b16 %v5106, %v5105
    %v6071 = vpack.c.b16 %v5108, %v5107
    %v6072 = vpack.c.b16 %v5110, %v5109
    %v6073 = vpack.c.b16 %v5112, %v5111
    %v6074 = vpack.c.b16 %v5114, %v5113
    %v6075 = vpack.c.b16 %v5116, %v5115
    %v6076 = vpack.c.b16 %v5118, %v5117
    %v6077 = vpack.c.b16 %v5120, %v5119
    %v6078 = vpack.c.b16 %v5122, %v5121
    %v6079 = vpack.c.b16 %v5124, %v5123
    %v6080 = vpack.c.b16 %v5126, %v5125
    %v6081 = vpack.c.b16 %v5128, %v5127
    %v6082 = vpack.c.b16 %v5130, %v5129
    %v6083 = vpack.c.b16 %v5132, %v5131
    %v6084 = vpack.c.b16 %v5134, %v5133
    %v6085 = vpack.c.b16 %v5136, %v5135
    %v6086 = vpack.c.b16 %v5138, %v5137
    %v6087 = vpack.c.b16 %v5140, %v5139
    %v6088 = vpack.c.b16 %v5142, %v5141
    %v6089 = vpack.c.b16 %v5144, %v5143
    %v6090 = vpack.c.b16 %v5146, %v5145
    %v6091 = vpack.c.b16 %v5148, %v5147
    %v6092 = vpack.c.b16 %v5150, %v5149
    %v6093 = vpack.c.b16 %v5152, %v5151
    %v6094 = vpack.c.b16 %v5154, %v5153
    %v6095 = vpack.c.b16 %v5156, %v5155
    %v6096 = vpack.c.b16 %v5158, %v5157
    %v6097 = vpack.c.b16 %v5160, %v5159
    %v6098 = vpack.c.b16 %v5162, %v5161
    %v6099 = vpack.c.b16 %v5164, %v5163
    %v6100 = vpack.c.b16 %v5166, %v5165
    %v6101 = vpack.c.b16 %v5168, %v5167
    %v6102 = vpack.c.b16 %v5170, %v5169
    %v6103 = vpack.c.b16 %v5172, %v5171
    %v6104 = vpack.c.b16 %v5174, %v5173
    %v6105 = vpack.c.b16 %v5176, %v5175
    %v6106 = vpack.c.b16 %v5178, %v5177
    %v6107 = vpack.c.b16 %v5180, %v5179
    %v6108 = vpack.c.b16 %v5182, %v5181
    %v6109 = vpack.c.b16 %v5184, %v5183
    %v6110 = vpack.c.b16 %v5186, %v5185
    %v6111 = vpack.c.b16 %v5188, %v5187
    %v6112 = vpack.c.b16 %v5190, %v5189
    %v6113 = vpack.c.b16 %v5192, %v5191
    %v6114 = vpack.c.b16 %v5194, %v5193
    %v6115 = vpack.c.b16 %v5196, %v5195
    %v6116 = vpack.c.b16 %v5198, %v5197
    %v6117 = vpack.c.b16 %v5200, %v5199
    %v6118 = vpack.c.b16 %v5202, %v5201
    %v6119 = vpack.c.b16 %v5204, %v5203
    %v6120 = vpack.c.b16 %v5206, %v5205
    %v6121 = vpack.c.b16 %v5208, %v5207
    %v6122 = vpack.c.b16 %v5210, %v5209
    %v6123 = vpack.c.b16 %v5212, %v5211
    %v6124 = vpack.c.b16 %v5214, %v5213
    %v6125 = vpack.c.b16 %v5216, %v5215
    %v6126 = vpack.c.b16 %v5218, %v5217
    %v6127 = vpack.c.b16 %v5220, %v5219
    %v6128 = vpack.c.b16 %v5222, %v5221
    %v6129 = vpack.c.b16 %v5224, %v5223
    %v6130 = vpack.c.b16 %v5226, %v5225
    %v6131 = vpack.c.b16 %v5228, %v5227
    %v6132 = vpack.c.b16 %v5230, %v5229
    %v6133 = vpack.c.b16 %v5232, %v5231
    %v6134 = vpack.c.b16 %v5234, %v5233
    %v6135 = vpack.c.b16 %v5236, %v5235
    %v6136 = vpack.c.b16 %v5238, %v5237
    %v6137 = vpack.c.b16 %v5240, %v5239
    %v6138 = vpack.c.b16 %v5242, %v5241
    %v6139 = vpack.c.b16 %v5244, %v5243
    %v6140 = vpack.c.b16 %v5246, %v5245
    %v6141 = vpack.c.b16 %v5248, %v5247
    %v6142 = vpack.c.b16 %v5250, %v5249
    %v6143 = vpack.c.b16 %v5252, %v5251
    %v6144 = vpack.c.b16 %v5254, %v5253
    %v6145 = vpack.c.b16 %v5256, %v5255
    %v6146 = vpack.c.b16 %v5258, %v5257
    %v6147 = vpack.c.b16 %v5260, %v5259
    %v6148 = vpack.c.b16 %v5262, %v5261
    %v6149 = vpack.c.b16 %v5264, %v5263
    %v6150 = vpack.c.b16 %v5266, %v5265
    %v6151 = vpack.c.b16 %v5268, %v5267
    %v6152 = vpack.c.b16 %v5270, %v5269
    %v6153 = vpack.c.b16 %v5272, %v5271
    %v6154 = vpack.c.b16 %v5274, %v5273
    %v6155 = vpack.c.b16 %v5276, %v5275
    %v6156 = vpack.c.b16 %v5278, %v5277
    %v6157 = vpack.c.b16 %v5280, %v5279
    %v6158 = vpack.c.b16 %v5282, %v5281
    %v6159 = vpack.c.b16 %v5284, %v5283
    %v6160 = vpack.c.b16 %v5286, %v5285
    %v6161 = vpack.c.b16 %v5288, %v5287
    %v6162 = vpack.c.b16 %v5290, %v5289
    %v6163 = vpack.c.b16 %v5292, %v5291
    %v6164 = vpack.c.b16 %v5294, %v5293
    %v6165 = vpack.c.b16 %v5296, %v5295
    %v6166 = vpack.c.b16 %v5298, %v5297
    %v6167 = vpack.c.b16 %v5300, %v5299
    %v6168 = vpack.c.b16 %v5302, %v5301
    %v6169 = vpack.c.b16 %v5304, %v5303
    %v6170 = vpack.c.b16 %v5306, %v5305
    %v6171 = vpack.c.b16 %v5308, %v5307
    %v6172 = vpack.c.b16 %v5310, %v5309
    %v6173 = vpack.c.b16 %v5312, %v5311
    %v6174 = vpack.c.b16 %v5314, %v5313
    %v6175 = vpack.c.b16 %v5316, %v5315
    %v6176 = vpack.c.b16 %v5318, %v5317
    %v6177 = vpack.c.b16 %v5320, %v5319
    %v6178 = vpack.c.b16 %v5322, %v5321
    %v6179 = vpack.c.b16 %v5324, %v5323
    %v6180 = vpack.c.b16 %v5326, %v5325
    %v6181 = vpack.c.b16 %v5328, %v5327
    %v6182 = vpack.c.b16 %v5330, %v5329
    %v6183 = vpack.c.b16 %v5332, %v5331
    %v6184 = vpack.c.b16 %v5334, %v5333
    %v6185 = vpack.c.b16 %v5336, %v5335
    %v6186 = vpack.c.b16 %v5338, %v5337
    %v6187 = vpack.c.b16 %v5340, %v5339
    %v6188 = vpack.c.b16 %v5342, %v5341
    %v6189 = vpack.c.b16 %v5344, %v5343
    %v6190 = vpack.c.b16 %v5346, %v5345
    %v6191 = vpack.c.b16 %v5348, %v5347
    %v6192 = vpack.c.b16 %v5350, %v5349
    %v6193 = vpack.c.b16 %v5352, %v5351
    %v6194 = vpack.c.b16 %v5354, %v5353
    %v6195 = vpack.c.b16 %v5356, %v5355
    %v6196 = vpack.c.b16 %v5358, %v5357
    %v6197 = vpack.c.b16 %v5360, %v5359
    %v6198 = vpack.c.b16 %v5362, %v5361
    %v6199 = vpack.c.b16 %v5364, %v5363
    %v6200 = vpack.c.b16 %v5366, %v5365
    %v6201 = vpack.c.b16 %v5368, %v5367
    %v6202 = vpack.c.b16 %v5370, %v5369
    %v6203 = vpack.c.b16 %v5372, %v5371
    %v6204 = vpack.c.b16 %v5374, %v5373
    %v6205 = vpack.c.b16 %v5376, %v5375
    %v6206 = vpack.c.b16 %v5378, %v5377
    %v6207 = vpack.c.b16 %v5380, %v5379
    %v6208 = vpack.c.b16 %v5382, %v5381
    %v6209 = vpack.c.b16 %v5384, %v5383
    %v6210 = vpack.c.b16 %v5386, %v5385
    %v6211 = vpack.c.b16 %v5388, %v5387
    %v6212 = vpack.c.b16 %v5390, %v5389
    %v6213 = vpack.c.b16 %v5392, %v5391
    %v6214 = vpack.c.b16 %v5394, %v5393
    %v6215 = vpack.c.b16 %v5396, %v5395
    %v6216 = vpack.c.b16 %v5398, %v5397
    %v6217 = vpack.c.b16 %v5400, %v5399
    %v6218 = vpack.c.b16 %v5402, %v5401
    %v6219 = vpack.c.b16 %v5404, %v5403
    %v6220 = vpack.c.b16 %v5406, %v5405
    %v6221 = vpack.c.b16 %v5408, %v5407
    %v6222 = vpack.c.b16 %v5410, %v5409
    %v6223 = vpack.c.b16 %v5412, %v5411
    %v6224 = vpack.c.b16 %v5414, %v5413
    %v6225 = vpack.c.b16 %v5416, %v5415
    %v6226 = vpack.c.b16 %v5418, %v5417
    %v6227 = vpack.c.b16 %v5420, %v5419
    %v6228 = vpack.c.b16 %v5422, %v5421
    %v6229 = vpack.c.b16 %v5424, %v5423
    %v6230 = vpack.c.b16 %v5426, %v5425
    %v6231 = vpack.c.b16 %v5428, %v5427
    %v6232 = vpack.c.b16 %v5430, %v5429
    %v6233 = vpack.c.b16 %v5432, %v5431
    %v6234 = vpack.c.b16 %v5434, %v5433
    %v6235 = vpack.c.b16 %v5436, %v5435
    %v6236 = vpack.c.b16 %v5438, %v5437
    %v6237 = vpack.c.b16 %v5440, %v5439
    %v6238 = vpack.c.b16 %v5442, %v5441
    %v6239 = vpack.c.b16 %v5444, %v5443
    %v6240 = vpack.c.b16 %v5446, %v5445
    %v6241 = vpack.c.b16 %v5448, %v5447
    %v6242 = vpack.c.b16 %v5450, %v5449
    %v6243 = vpack.c.b16 %v5452, %v5451
    %v6244 = vpack.c.b16 %v5454, %v5453
    %v6245 = vpack.c.b16 %v5456, %v5455
    %v6246 = vpack.c.b16 %v5458, %v5457
    %v6247 = vpack.c.b16 %v5460, %v5459
    %v6248 = vpack.c.b16 %v5462, %v5461
    %v6249 = vpack.c.b16 %v5464, %v5463
    %v6250 = vpack.c.b16 %v5466, %v5465
    %7035 = vmatprep.subr.bf16.mxu0 0
    %7036 = vmatpush1.bf16.msra.mxu0 %v5474
    %7037 = vmatprep.subr.bf16.mxu0 0
    %7038 = vmatpush1.bf16.msra.mxu0 %v5473
    %7039 = vmatprep.subr.bf16.mxu0 0
    %7040 = vmatpush1.bf16.msra.mxu0 %v5472
    %7041 = vmatprep.subr.bf16.mxu0 0
    %7042 = vmatpush1.bf16.msra.mxu0 %v5471
    %7043 = vmatprep.subr.bf16.mxu0 0
    %7044 = vmatpush1.bf16.msra.mxu0 %v5470
    %7045 = vmatprep.subr.bf16.mxu0 0
    %7046 = vmatpush1.bf16.msra.mxu0 %v5469
    %7047 = vmatprep.subr.bf16.mxu0 0
    %7048 = vmatpush1.bf16.msra.mxu0 %v5468
    %7049 = vmatprep.subr.bf16.mxu0 0
    %7050 = vmatpush1.bf16.msra.mxu0 %v5467
    %7051 = vmatprep.subr.bf16.mxu0 0
    %7052 = vmatpush2.bf16.msra.mxu0 %v5482
    %7053 = vmatprep.subr.bf16.mxu0 0
    %7054 = vmatpush2.bf16.msra.mxu0 %v5481
    %7055 = vmatprep.subr.bf16.mxu0 0
    %7056 = vmatpush2.bf16.msra.mxu0 %v5480
    %7057 = vmatprep.subr.bf16.mxu0 0
    %7058 = vmatpush2.bf16.msra.mxu0 %v5479
    %7059 = vmatprep.subr.bf16.mxu0 0
    %7060 = vmatpush2.bf16.msra.mxu0 %v5478
    %7061 = vmatprep.subr.bf16.mxu0 0
    %7062 = vmatpush2.bf16.msra.mxu0 %v5477
    %7063 = vmatprep.subr.bf16.mxu0 0
    %7064 = vmatpush2.bf16.msra.mxu0 %v5476
    %7065 = vmatprep.subr.bf16.mxu0 0
    %7066 = vmatpush2.bf16.msra.mxu0 %v5475
    %7067 = vmatprep.mubr.bf16.mxu0 %v1660
    %7068 = vmatmul.mubr.bf16.gmra.mxu0 %v1646
    %v7069 = vpop.f32.mrf.mxu0
    %v7070 = vadd.f32 %v1608, %v7069
    %v7071 = vpop.f32.mrf.mxu0
    %v7072 = vpop.f32.mrf.mxu0
    %v7073 = vpop.f32.mrf.mxu0
    %7074 = vdwg.mxu0
    %7075 = vmatprep.subr.bf16.mxu0 0
    %7076 = vmatpush1.bf16.msra.mxu0 %v5490
    %7077 = vmatprep.subr.bf16.mxu0 0
    %7078 = vmatpush1.bf16.msra.mxu0 %v5489
    %7079 = vmatprep.subr.bf16.mxu0 0
    %7080 = vmatpush1.bf16.msra.mxu0 %v5488
    %7081 = vmatprep.subr.bf16.mxu0 0
    %7082 = vmatpush1.bf16.msra.mxu0 %v5487
    %7083 = vmatprep.subr.bf16.mxu0 0
    %7084 = vmatpush1.bf16.msra.mxu0 %v5486
    %7085 = vmatprep.subr.bf16.mxu0 0
    %7086 = vmatpush1.bf16.msra.mxu0 %v5485
    %7087 = vmatprep.subr.bf16.mxu0 0
    %7088 = vmatpush1.bf16.msra.mxu0 %v5484
    %7089 = vmatprep.subr.bf16.mxu0 0
    %7090 = vmatpush1.bf16.msra.mxu0 %v5483
    %7091 = vmatprep.subr.bf16.mxu0 0
    %7092 = vmatpush2.bf16.msra.mxu0 %v5498
    %7093 = vmatprep.subr.bf16.mxu0 0
    %7094 = vmatpush2.bf16.msra.mxu0 %v5497
    %7095 = vmatprep.subr.bf16.mxu0 0
    %7096 = vmatpush2.bf16.msra.mxu0 %v5496
    %7097 = vmatprep.subr.bf16.mxu0 0
    %7098 = vmatpush2.bf16.msra.mxu0 %v5495
    %7099 = vmatprep.subr.bf16.mxu0 0
    %7100 = vmatpush2.bf16.msra.mxu0 %v5494
    %7101 = vmatprep.subr.bf16.mxu0 0
    %7102 = vmatpush2.bf16.msra.mxu0 %v5493
    %7103 = vmatprep.subr.bf16.mxu0 0
    %7104 = vmatpush2.bf16.msra.mxu0 %v5492
    %7105 = vmatprep.subr.bf16.mxu0 0
    %7106 = vmatpush2.bf16.msra.mxu0 %v5491
    %7107 = vmatprep.mubr.bf16.mxu0 %v1670
    %7108 = vmatmul.mubr.bf16.gmra.mxu0 %v1668
    %v7109 = vpop.f32.mrf.mxu0
    %v7110 = vadd.f32 %v7070, %v7109
    %v7111 = vpop.f32.mrf.mxu0
    %v7112 = vpop.f32.mrf.mxu0
    %v7113 = vpop.f32.mrf.mxu0
    %7114 = vdwg.mxu0
    %7115 = vmatprep.subr.bf16.mxu0 0
    %7116 = vmatpush1.bf16.msra.mxu0 %v5506
    %7117 = vmatprep.subr.bf16.mxu0 0
    %7118 = vmatpush1.bf16.msra.mxu0 %v5505
    %7119 = vmatprep.subr.bf16.mxu0 0
    %7120 = vmatpush1.bf16.msra.mxu0 %v5504
    %7121 = vmatprep.subr.bf16.mxu0 0
    %7122 = vmatpush1.bf16.msra.mxu0 %v5503
    %7123 = vmatprep.subr.bf16.mxu0 0
    %7124 = vmatpush1.bf16.msra.mxu0 %v5502
    %7125 = vmatprep.subr.bf16.mxu0 0
    %7126 = vmatpush1.bf16.msra.mxu0 %v5501
    %7127 = vmatprep.subr.bf16.mxu0 0
    %7128 = vmatpush1.bf16.msra.mxu0 %v5500
    %7129 = vmatprep.subr.bf16.mxu0 0
    %7130 = vmatpush1.bf16.msra.mxu0 %v5499
    %7131 = vmatprep.subr.bf16.mxu0 0
    %7132 = vmatpush2.bf16.msra.mxu0 %v5514
    %7133 = vmatprep.subr.bf16.mxu0 0
    %7134 = vmatpush2.bf16.msra.mxu0 %v5513
    %7135 = vmatprep.subr.bf16.mxu0 0
    %7136 = vmatpush2.bf16.msra.mxu0 %v5512
    %7137 = vmatprep.subr.bf16.mxu0 0
    %7138 = vmatpush2.bf16.msra.mxu0 %v5511
    %7139 = vmatprep.subr.bf16.mxu0 0
    %7140 = vmatpush2.bf16.msra.mxu0 %v5510
    %7141 = vmatprep.subr.bf16.mxu0 0
    %7142 = vmatpush2.bf16.msra.mxu0 %v5509
    %7143 = vmatprep.subr.bf16.mxu0 0
    %7144 = vmatpush2.bf16.msra.mxu0 %v5508
    %7145 = vmatprep.subr.bf16.mxu0 0
    %7146 = vmatpush2.bf16.msra.mxu0 %v5507
    %7147 = vmatprep.mubr.bf16.mxu0 %v1667
    %7148 = vmatmul.mubr.bf16.gmra.mxu0 %v1653
    %v7149 = vpop.f32.mrf.mxu0
    %v7150 = vadd.f32 %v7110, %v7149
    %v7151 = vpop.f32.mrf.mxu0
    %v7152 = vpop.f32.mrf.mxu0
    %v7153 = vpop.f32.mrf.mxu0
    %7154 = vdwg.mxu0
    %7155 = vmatprep.subr.bf16.mxu0 0
    %7156 = vmatpush1.bf16.msra.mxu0 %v5522
    %7157 = vmatprep.subr.bf16.mxu0 0
    %7158 = vmatpush1.bf16.msra.mxu0 %v5521
    %7159 = vmatprep.subr.bf16.mxu0 0
    %7160 = vmatpush1.bf16.msra.mxu0 %v5520
    %7161 = vmatprep.subr.bf16.mxu0 0
    %7162 = vmatpush1.bf16.msra.mxu0 %v5519
    %7163 = vmatprep.subr.bf16.mxu0 0
    %7164 = vmatpush1.bf16.msra.mxu0 %v5518
    %7165 = vmatprep.subr.bf16.mxu0 0
    %7166 = vmatpush1.bf16.msra.mxu0 %v5517
    %7167 = vmatprep.subr.bf16.mxu0 0
    %7168 = vmatpush1.bf16.msra.mxu0 %v5516
    %7169 = vmatprep.subr.bf16.mxu0 0
    %7170 = vmatpush1.bf16.msra.mxu0 %v5515
    %7171 = vmatprep.subr.bf16.mxu0 0
    %7172 = vmatpush2.bf16.msra.mxu0 %v5530
    %7173 = vmatprep.subr.bf16.mxu0 0
    %7174 = vmatpush2.bf16.msra.mxu0 %v5529
    %7175 = vmatprep.subr.bf16.mxu0 0
    %7176 = vmatpush2.bf16.msra.mxu0 %v5528
    %7177 = vmatprep.subr.bf16.mxu0 0
    %7178 = vmatpush2.bf16.msra.mxu0 %v5527
    %7179 = vmatprep.subr.bf16.mxu0 0
    %7180 = vmatpush2.bf16.msra.mxu0 %v5526
    %7181 = vmatprep.subr.bf16.mxu0 0
    %7182 = vmatpush2.bf16.msra.mxu0 %v5525
    %7183 = vmatprep.subr.bf16.mxu0 0
    %7184 = vmatpush2.bf16.msra.mxu0 %v5524
    %7185 = vmatprep.subr.bf16.mxu0 0
    %7186 = vmatpush2.bf16.msra.mxu0 %v5523
    %7187 = vmatprep.mubr.bf16.mxu0 %v1671
    %7188 = vmatmul.mubr.bf16.gmra.mxu0 %v1669
    %v7189 = vpop.f32.mrf.mxu0
    %v7190 = vadd.f32 %v7150, %v7189
    %v7191 = vpop.f32.mrf.mxu0
    %v7192 = vpop.f32.mrf.mxu0
    %v7193 = vpop.f32.mrf.mxu0
    %7194 = vdwg.mxu0
    %7195 = vmatprep.subr.bf16.mxu0 0
    %7196 = vmatpush1.bf16.msra.mxu0 %v5538
    %7197 = vmatprep.subr.bf16.mxu0 0
    %7198 = vmatpush1.bf16.msra.mxu0 %v5537
    %7199 = vmatprep.subr.bf16.mxu0 0
    %7200 = vmatpush1.bf16.msra.mxu0 %v5536
    %7201 = vmatprep.subr.bf16.mxu0 0
    %7202 = vmatpush1.bf16.msra.mxu0 %v5535
    %7203 = vmatprep.subr.bf16.mxu0 0
    %7204 = vmatpush1.bf16.msra.mxu0 %v5534
    %7205 = vmatprep.subr.bf16.mxu0 0
    %7206 = vmatpush1.bf16.msra.mxu0 %v5533
    %7207 = vmatprep.subr.bf16.mxu0 0
    %7208 = vmatpush1.bf16.msra.mxu0 %v5532
    %7209 = vmatprep.subr.bf16.mxu0 0
    %7210 = vmatpush1.bf16.msra.mxu0 %v5531
    %7211 = vmatprep.subr.bf16.mxu0 0
    %7212 = vmatpush2.bf16.msra.mxu0 %v5546
    %7213 = vmatprep.subr.bf16.mxu0 0
    %7214 = vmatpush2.bf16.msra.mxu0 %v5545
    %7215 = vmatprep.subr.bf16.mxu0 0
    %7216 = vmatpush2.bf16.msra.mxu0 %v5544
    %7217 = vmatprep.subr.bf16.mxu0 0
    %7218 = vmatpush2.bf16.msra.mxu0 %v5543
    %7219 = vmatprep.subr.bf16.mxu0 0
    %7220 = vmatpush2.bf16.msra.mxu0 %v5542
    %7221 = vmatprep.subr.bf16.mxu0 0
    %7222 = vmatpush2.bf16.msra.mxu0 %v5541
    %7223 = vmatprep.subr.bf16.mxu0 0
    %7224 = vmatpush2.bf16.msra.mxu0 %v5540
    %7225 = vmatprep.subr.bf16.mxu0 0
    %7226 = vmatpush2.bf16.msra.mxu0 %v5539
    %7227 = vmatprep.mubr.bf16.mxu0 %v1709
    %7228 = vmatmul.mubr.bf16.gmra.mxu0 %v1695
    %v7229 = vpop.f32.mrf.mxu0
    %v7230 = vadd.f32 %v7190, %v7229
    %v7231 = vpop.f32.mrf.mxu0
    %v7232 = vpop.f32.mrf.mxu0
    %v7233 = vpop.f32.mrf.mxu0
    %7234 = vdwg.mxu0
    %7235 = vmatprep.subr.bf16.mxu0 0
    %7236 = vmatpush1.bf16.msra.mxu0 %v5554
    %7237 = vmatprep.subr.bf16.mxu0 0
    %7238 = vmatpush1.bf16.msra.mxu0 %v5553
    %7239 = vmatprep.subr.bf16.mxu0 0
    %7240 = vmatpush1.bf16.msra.mxu0 %v5552
    %7241 = vmatprep.subr.bf16.mxu0 0
    %7242 = vmatpush1.bf16.msra.mxu0 %v5551
    %7243 = vmatprep.subr.bf16.mxu0 0
    %7244 = vmatpush1.bf16.msra.mxu0 %v5550
    %7245 = vmatprep.subr.bf16.mxu0 0
    %7246 = vmatpush1.bf16.msra.mxu0 %v5549
    %7247 = vmatprep.subr.bf16.mxu0 0
    %7248 = vmatpush1.bf16.msra.mxu0 %v5548
    %7249 = vmatprep.subr.bf16.mxu0 0
    %7250 = vmatpush1.bf16.msra.mxu0 %v5547
    %7251 = vmatprep.subr.bf16.mxu0 0
    %7252 = vmatpush2.bf16.msra.mxu0 %v5562
    %7253 = vmatprep.subr.bf16.mxu0 0
    %7254 = vmatpush2.bf16.msra.mxu0 %v5561
    %7255 = vmatprep.subr.bf16.mxu0 0
    %7256 = vmatpush2.bf16.msra.mxu0 %v5560
    %7257 = vmatprep.subr.bf16.mxu0 0
    %7258 = vmatpush2.bf16.msra.mxu0 %v5559
    %7259 = vmatprep.subr.bf16.mxu0 0
    %7260 = vmatpush2.bf16.msra.mxu0 %v5558
    %7261 = vmatprep.subr.bf16.mxu0 0
    %7262 = vmatpush2.bf16.msra.mxu0 %v5557
    %7263 = vmatprep.subr.bf16.mxu0 0
    %7264 = vmatpush2.bf16.msra.mxu0 %v5556
    %7265 = vmatprep.subr.bf16.mxu0 0
    %7266 = vmatpush2.bf16.msra.mxu0 %v5555
    %7267 = vmatprep.mubr.bf16.mxu0 %v1719
    %7268 = vmatmul.mubr.bf16.gmra.mxu0 %v1717
    %v7269 = vpop.f32.mrf.mxu0
    %v7270 = vadd.f32 %v7230, %v7269
    %v7271 = vpop.f32.mrf.mxu0
    %v7272 = vpop.f32.mrf.mxu0
    %v7273 = vpop.f32.mrf.mxu0
    %7274 = vdwg.mxu0
    %7275 = vmatprep.subr.bf16.mxu0 0
    %7276 = vmatpush1.bf16.msra.mxu0 %v5570
    %7277 = vmatprep.subr.bf16.mxu0 0
    %7278 = vmatpush1.bf16.msra.mxu0 %v5569
    %7279 = vmatprep.subr.bf16.mxu0 0
    %7280 = vmatpush1.bf16.msra.mxu0 %v5568
    %7281 = vmatprep.subr.bf16.mxu0 0
    %7282 = vmatpush1.bf16.msra.mxu0 %v5567
    %7283 = vmatprep.subr.bf16.mxu0 0
    %7284 = vmatpush1.bf16.msra.mxu0 %v5566
    %7285 = vmatprep.subr.bf16.mxu0 0
    %7286 = vmatpush1.bf16.msra.mxu0 %v5565
    %7287 = vmatprep.subr.bf16.mxu0 0
    %7288 = vmatpush1.bf16.msra.mxu0 %v5564
    %7289 = vmatprep.subr.bf16.mxu0 0
    %7290 = vmatpush1.bf16.msra.mxu0 %v5563
    %7291 = vmatprep.subr.bf16.mxu0 0
    %7292 = vmatpush2.bf16.msra.mxu0 %v5578
    %7293 = vmatprep.subr.bf16.mxu0 0
    %7294 = vmatpush2.bf16.msra.mxu0 %v5577
    %7295 = vmatprep.subr.bf16.mxu0 0
    %7296 = vmatpush2.bf16.msra.mxu0 %v5576
    %7297 = vmatprep.subr.bf16.mxu0 0
    %7298 = vmatpush2.bf16.msra.mxu0 %v5575
    %7299 = vmatprep.subr.bf16.mxu0 0
    %7300 = vmatpush2.bf16.msra.mxu0 %v5574
    %7301 = vmatprep.subr.bf16.mxu0 0
    %7302 = vmatpush2.bf16.msra.mxu0 %v5573
    %7303 = vmatprep.subr.bf16.mxu0 0
    %7304 = vmatpush2.bf16.msra.mxu0 %v5572
    %7305 = vmatprep.subr.bf16.mxu0 0
    %7306 = vmatpush2.bf16.msra.mxu0 %v5571
    %7307 = vmatprep.mubr.bf16.mxu0 %v1716
    %7308 = vmatmul.mubr.bf16.gmra.mxu0 %v1702
    %v7309 = vpop.f32.mrf.mxu0
    %v7310 = vadd.f32 %v7270, %v7309
    %v7311 = vpop.f32.mrf.mxu0
    %v7312 = vpop.f32.mrf.mxu0
    %v7313 = vpop.f32.mrf.mxu0
    %7314 = vdwg.mxu0
    %7315 = vmatprep.subr.bf16.mxu0 0
    %7316 = vmatpush1.bf16.msra.mxu0 %v5586
    %7317 = vmatprep.subr.bf16.mxu0 0
    %7318 = vmatpush1.bf16.msra.mxu0 %v5585
    %7319 = vmatprep.subr.bf16.mxu0 0
    %7320 = vmatpush1.bf16.msra.mxu0 %v5584
    %7321 = vmatprep.subr.bf16.mxu0 0
    %7322 = vmatpush1.bf16.msra.mxu0 %v5583
    %7323 = vmatprep.subr.bf16.mxu0 0
    %7324 = vmatpush1.bf16.msra.mxu0 %v5582
    %7325 = vmatprep.subr.bf16.mxu0 0
    %7326 = vmatpush1.bf16.msra.mxu0 %v5581
    %7327 = vmatprep.subr.bf16.mxu0 0
    %7328 = vmatpush1.bf16.msra.mxu0 %v5580
    %7329 = vmatprep.subr.bf16.mxu0 0
    %7330 = vmatpush1.bf16.msra.mxu0 %v5579
    %7331 = vmatprep.subr.bf16.mxu0 0
    %7332 = vmatpush2.bf16.msra.mxu0 %v5594
    %7333 = vmatprep.subr.bf16.mxu0 0
    %7334 = vmatpush2.bf16.msra.mxu0 %v5593
    %7335 = vmatprep.subr.bf16.mxu0 0
    %7336 = vmatpush2.bf16.msra.mxu0 %v5592
    %7337 = vmatprep.subr.bf16.mxu0 0
    %7338 = vmatpush2.bf16.msra.mxu0 %v5591
    %7339 = vmatprep.subr.bf16.mxu0 0
    %7340 = vmatpush2.bf16.msra.mxu0 %v5590
    %7341 = vmatprep.subr.bf16.mxu0 0
    %7342 = vmatpush2.bf16.msra.mxu0 %v5589
    %7343 = vmatprep.subr.bf16.mxu0 0
    %7344 = vmatpush2.bf16.msra.mxu0 %v5588
    %7345 = vmatprep.subr.bf16.mxu0 0
    %7346 = vmatpush2.bf16.msra.mxu0 %v5587
    %7347 = vmatprep.mubr.bf16.mxu0 %v1720
    %7348 = vmatmul.mubr.bf16.gmra.mxu0 %v1718
    %v7349 = vpop.f32.mrf.mxu0
    %v7350 = vadd.f32 %v7310, %v7349
    %v7351 = vpop.f32.mrf.mxu0
    %v7352 = vpop.f32.mrf.mxu0
    %v7353 = vpop.f32.mrf.mxu0
    %7354 = vdwg.mxu0
    %7355 = vmatprep.subr.bf16.mxu0 0
    %7356 = vmatpush1.bf16.msra.mxu0 %v5602
    %7357 = vmatprep.subr.bf16.mxu0 0
    %7358 = vmatpush1.bf16.msra.mxu0 %v5601
    %7359 = vmatprep.subr.bf16.mxu0 0
    %7360 = vmatpush1.bf16.msra.mxu0 %v5600
    %7361 = vmatprep.subr.bf16.mxu0 0
    %7362 = vmatpush1.bf16.msra.mxu0 %v5599
    %7363 = vmatprep.subr.bf16.mxu0 0
    %7364 = vmatpush1.bf16.msra.mxu0 %v5598
    %7365 = vmatprep.subr.bf16.mxu0 0
    %7366 = vmatpush1.bf16.msra.mxu0 %v5597
    %7367 = vmatprep.subr.bf16.mxu0 0
    %7368 = vmatpush1.bf16.msra.mxu0 %v5596
    %7369 = vmatprep.subr.bf16.mxu0 0
    %7370 = vmatpush1.bf16.msra.mxu0 %v5595
    %7371 = vmatprep.subr.bf16.mxu0 0
    %7372 = vmatpush2.bf16.msra.mxu0 %v5610
    %7373 = vmatprep.subr.bf16.mxu0 0
    %7374 = vmatpush2.bf16.msra.mxu0 %v5609
    %7375 = vmatprep.subr.bf16.mxu0 0
    %7376 = vmatpush2.bf16.msra.mxu0 %v5608
    %7377 = vmatprep.subr.bf16.mxu0 0
    %7378 = vmatpush2.bf16.msra.mxu0 %v5607
    %7379 = vmatprep.subr.bf16.mxu0 0
    %7380 = vmatpush2.bf16.msra.mxu0 %v5606
    %7381 = vmatprep.subr.bf16.mxu0 0
    %7382 = vmatpush2.bf16.msra.mxu0 %v5605
    %7383 = vmatprep.subr.bf16.mxu0 0
    %7384 = vmatpush2.bf16.msra.mxu0 %v5604
    %7385 = vmatprep.subr.bf16.mxu0 0
    %7386 = vmatpush2.bf16.msra.mxu0 %v5603
    %7387 = vmatprep.mubr.bf16.mxu0 %v1758
    %7388 = vmatmul.mubr.bf16.gmra.mxu0 %v1744
    %v7389 = vpop.f32.mrf.mxu0
    %v7390 = vadd.f32 %v7350, %v7389
    %v7391 = vpop.f32.mrf.mxu0
    %v7392 = vpop.f32.mrf.mxu0
    %v7393 = vpop.f32.mrf.mxu0
    %7394 = vdwg.mxu0
    %7395 = vmatprep.subr.bf16.mxu0 0
    %7396 = vmatpush1.bf16.msra.mxu0 %v5618
    %7397 = vmatprep.subr.bf16.mxu0 0
    %7398 = vmatpush1.bf16.msra.mxu0 %v5617
    %7399 = vmatprep.subr.bf16.mxu0 0
    %7400 = vmatpush1.bf16.msra.mxu0 %v5616
    %7401 = vmatprep.subr.bf16.mxu0 0
    %7402 = vmatpush1.bf16.msra.mxu0 %v5615
    %7403 = vmatprep.subr.bf16.mxu0 0
    %7404 = vmatpush1.bf16.msra.mxu0 %v5614
    %7405 = vmatprep.subr.bf16.mxu0 0
    %7406 = vmatpush1.bf16.msra.mxu0 %v5613
    %7407 = vmatprep.subr.bf16.mxu0 0
    %7408 = vmatpush1.bf16.msra.mxu0 %v5612
    %7409 = vmatprep.subr.bf16.mxu0 0
    %7410 = vmatpush1.bf16.msra.mxu0 %v5611
    %7411 = vmatprep.subr.bf16.mxu0 0
    %7412 = vmatpush2.bf16.msra.mxu0 %v5626
    %7413 = vmatprep.subr.bf16.mxu0 0
    %7414 = vmatpush2.bf16.msra.mxu0 %v5625
    %7415 = vmatprep.subr.bf16.mxu0 0
    %7416 = vmatpush2.bf16.msra.mxu0 %v5624
    %7417 = vmatprep.subr.bf16.mxu0 0
    %7418 = vmatpush2.bf16.msra.mxu0 %v5623
    %7419 = vmatprep.subr.bf16.mxu0 0
    %7420 = vmatpush2.bf16.msra.mxu0 %v5622
    %7421 = vmatprep.subr.bf16.mxu0 0
    %7422 = vmatpush2.bf16.msra.mxu0 %v5621
    %7423 = vmatprep.subr.bf16.mxu0 0
    %7424 = vmatpush2.bf16.msra.mxu0 %v5620
    %7425 = vmatprep.subr.bf16.mxu0 0
    %7426 = vmatpush2.bf16.msra.mxu0 %v5619
    %7427 = vmatprep.mubr.bf16.mxu0 %v1768
    %7428 = vmatmul.mubr.bf16.gmra.mxu0 %v1766
    %v7429 = vpop.f32.mrf.mxu0
    %v7430 = vadd.f32 %v7390, %v7429
    %v7431 = vpop.f32.mrf.mxu0
    %v7432 = vpop.f32.mrf.mxu0
    %v7433 = vpop.f32.mrf.mxu0
    %7434 = vdwg.mxu0
    %7435 = vmatprep.subr.bf16.mxu0 0
    %7436 = vmatpush1.bf16.msra.mxu0 %v5634
    %7437 = vmatprep.subr.bf16.mxu0 0
    %7438 = vmatpush1.bf16.msra.mxu0 %v5633
    %7439 = vmatprep.subr.bf16.mxu0 0
    %7440 = vmatpush1.bf16.msra.mxu0 %v5632
    %7441 = vmatprep.subr.bf16.mxu0 0
    %7442 = vmatpush1.bf16.msra.mxu0 %v5631
    %7443 = vmatprep.subr.bf16.mxu0 0
    %7444 = vmatpush1.bf16.msra.mxu0 %v5630
    %7445 = vmatprep.subr.bf16.mxu0 0
    %7446 = vmatpush1.bf16.msra.mxu0 %v5629
    %7447 = vmatprep.subr.bf16.mxu0 0
    %7448 = vmatpush1.bf16.msra.mxu0 %v5628
    %7449 = vmatprep.subr.bf16.mxu0 0
    %7450 = vmatpush1.bf16.msra.mxu0 %v5627
    %7451 = vmatprep.subr.bf16.mxu0 0
    %7452 = vmatpush2.bf16.msra.mxu0 %v5642
    %7453 = vmatprep.subr.bf16.mxu0 0
    %7454 = vmatpush2.bf16.msra.mxu0 %v5641
    %7455 = vmatprep.subr.bf16.mxu0 0
    %7456 = vmatpush2.bf16.msra.mxu0 %v5640
    %7457 = vmatprep.subr.bf16.mxu0 0
    %7458 = vmatpush2.bf16.msra.mxu0 %v5639
    %7459 = vmatprep.subr.bf16.mxu0 0
    %7460 = vmatpush2.bf16.msra.mxu0 %v5638
    %7461 = vmatprep.subr.bf16.mxu0 0
    %7462 = vmatpush2.bf16.msra.mxu0 %v5637
    %7463 = vmatprep.subr.bf16.mxu0 0
    %7464 = vmatpush2.bf16.msra.mxu0 %v5636
    %7465 = vmatprep.subr.bf16.mxu0 0
    %7466 = vmatpush2.bf16.msra.mxu0 %v5635
    %7467 = vmatprep.mubr.bf16.mxu0 %v1765
    %7468 = vmatmul.mubr.bf16.gmra.mxu0 %v1751
    %v7469 = vpop.f32.mrf.mxu0
    %v7470 = vadd.f32 %v7430, %v7469
    %v7471 = vpop.f32.mrf.mxu0
    %v7472 = vpop.f32.mrf.mxu0
    %v7473 = vpop.f32.mrf.mxu0
    %7474 = vdwg.mxu0
    %7475 = vmatprep.subr.bf16.mxu0 0
    %7476 = vmatpush1.bf16.msra.mxu0 %v5650
    %7477 = vmatprep.subr.bf16.mxu0 0
    %7478 = vmatpush1.bf16.msra.mxu0 %v5649
    %7479 = vmatprep.subr.bf16.mxu0 0
    %7480 = vmatpush1.bf16.msra.mxu0 %v5648
    %7481 = vmatprep.subr.bf16.mxu0 0
    %7482 = vmatpush1.bf16.msra.mxu0 %v5647
    %7483 = vmatprep.subr.bf16.mxu0 0
    %7484 = vmatpush1.bf16.msra.mxu0 %v5646
    %7485 = vmatprep.subr.bf16.mxu0 0
    %7486 = vmatpush1.bf16.msra.mxu0 %v5645
    %7487 = vmatprep.subr.bf16.mxu0 0
    %7488 = vmatpush1.bf16.msra.mxu0 %v5644
    %7489 = vmatprep.subr.bf16.mxu0 0
    %7490 = vmatpush1.bf16.msra.mxu0 %v5643
    %7491 = vmatprep.subr.bf16.mxu0 0
    %7492 = vmatpush2.bf16.msra.mxu0 %v5658
    %7493 = vmatprep.subr.bf16.mxu0 0
    %7494 = vmatpush2.bf16.msra.mxu0 %v5657
    %7495 = vmatprep.subr.bf16.mxu0 0
    %7496 = vmatpush2.bf16.msra.mxu0 %v5656
    %7497 = vmatprep.subr.bf16.mxu0 0
    %7498 = vmatpush2.bf16.msra.mxu0 %v5655
    %7499 = vmatprep.subr.bf16.mxu0 0
    %7500 = vmatpush2.bf16.msra.mxu0 %v5654
    %7501 = vmatprep.subr.bf16.mxu0 0
    %7502 = vmatpush2.bf16.msra.mxu0 %v5653
    %7503 = vmatprep.subr.bf16.mxu0 0
    %7504 = vmatpush2.bf16.msra.mxu0 %v5652
    %7505 = vmatprep.subr.bf16.mxu0 0
    %7506 = vmatpush2.bf16.msra.mxu0 %v5651
    %7507 = vmatprep.mubr.bf16.mxu0 %v1769
    %7508 = vmatmul.mubr.bf16.gmra.mxu0 %v1767
    %v7509 = vpop.f32.mrf.mxu0
    %v7510 = vadd.f32 %v7470, %v7509
    %v7511 = vpop.f32.mrf.mxu0
    %v7512 = vpop.f32.mrf.mxu0
    %v7513 = vpop.f32.mrf.mxu0
    %7514 = vdwg.mxu0
    %7515 = vmatprep.subr.bf16.mxu0 0
    %7516 = vmatpush1.bf16.msra.mxu0 %v5666
    %7517 = vmatprep.subr.bf16.mxu0 0
    %7518 = vmatpush1.bf16.msra.mxu0 %v5665
    %7519 = vmatprep.subr.bf16.mxu0 0
    %7520 = vmatpush1.bf16.msra.mxu0 %v5664
    %7521 = vmatprep.subr.bf16.mxu0 0
    %7522 = vmatpush1.bf16.msra.mxu0 %v5663
    %7523 = vmatprep.subr.bf16.mxu0 0
    %7524 = vmatpush1.bf16.msra.mxu0 %v5662
    %7525 = vmatprep.subr.bf16.mxu0 0
    %7526 = vmatpush1.bf16.msra.mxu0 %v5661
    %7527 = vmatprep.subr.bf16.mxu0 0
    %7528 = vmatpush1.bf16.msra.mxu0 %v5660
    %7529 = vmatprep.subr.bf16.mxu0 0
    %7530 = vmatpush1.bf16.msra.mxu0 %v5659
    %7531 = vmatprep.subr.bf16.mxu0 0
    %7532 = vmatpush2.bf16.msra.mxu0 %v5674
    %7533 = vmatprep.subr.bf16.mxu0 0
    %7534 = vmatpush2.bf16.msra.mxu0 %v5673
    %7535 = vmatprep.subr.bf16.mxu0 0
    %7536 = vmatpush2.bf16.msra.mxu0 %v5672
    %7537 = vmatprep.subr.bf16.mxu0 0
    %7538 = vmatpush2.bf16.msra.mxu0 %v5671
    %7539 = vmatprep.subr.bf16.mxu0 0
    %7540 = vmatpush2.bf16.msra.mxu0 %v5670
    %7541 = vmatprep.subr.bf16.mxu0 0
    %7542 = vmatpush2.bf16.msra.mxu0 %v5669
    %7543 = vmatprep.subr.bf16.mxu0 0
    %7544 = vmatpush2.bf16.msra.mxu0 %v5668
    %7545 = vmatprep.subr.bf16.mxu0 0
    %7546 = vmatpush2.bf16.msra.mxu0 %v5667
    %7547 = vmatprep.mubr.bf16.mxu0 %v1807
    %7548 = vmatmul.mubr.bf16.gmra.mxu0 %v1793
    %v7549 = vpop.f32.mrf.mxu0
    %v7550 = vadd.f32 %v7510, %v7549
    %v7551 = vpop.f32.mrf.mxu0
    %v7552 = vpop.f32.mrf.mxu0
    %v7553 = vpop.f32.mrf.mxu0
    %7554 = vdwg.mxu0
    %7555 = vmatprep.subr.bf16.mxu0 0
    %7556 = vmatpush1.bf16.msra.mxu0 %v5682
    %7557 = vmatprep.subr.bf16.mxu0 0
    %7558 = vmatpush1.bf16.msra.mxu0 %v5681
    %7559 = vmatprep.subr.bf16.mxu0 0
    %7560 = vmatpush1.bf16.msra.mxu0 %v5680
    %7561 = vmatprep.subr.bf16.mxu0 0
    %7562 = vmatpush1.bf16.msra.mxu0 %v5679
    %7563 = vmatprep.subr.bf16.mxu0 0
    %7564 = vmatpush1.bf16.msra.mxu0 %v5678
    %7565 = vmatprep.subr.bf16.mxu0 0
    %7566 = vmatpush1.bf16.msra.mxu0 %v5677
    %7567 = vmatprep.subr.bf16.mxu0 0
    %7568 = vmatpush1.bf16.msra.mxu0 %v5676
    %7569 = vmatprep.subr.bf16.mxu0 0
    %7570 = vmatpush1.bf16.msra.mxu0 %v5675
    %7571 = vmatprep.subr.bf16.mxu0 0
    %7572 = vmatpush2.bf16.msra.mxu0 %v5690
    %7573 = vmatprep.subr.bf16.mxu0 0
    %7574 = vmatpush2.bf16.msra.mxu0 %v5689
    %7575 = vmatprep.subr.bf16.mxu0 0
    %7576 = vmatpush2.bf16.msra.mxu0 %v5688
    %7577 = vmatprep.subr.bf16.mxu0 0
    %7578 = vmatpush2.bf16.msra.mxu0 %v5687
    %7579 = vmatprep.subr.bf16.mxu0 0
    %7580 = vmatpush2.bf16.msra.mxu0 %v5686
    %7581 = vmatprep.subr.bf16.mxu0 0
    %7582 = vmatpush2.bf16.msra.mxu0 %v5685
    %7583 = vmatprep.subr.bf16.mxu0 0
    %7584 = vmatpush2.bf16.msra.mxu0 %v5684
    %7585 = vmatprep.subr.bf16.mxu0 0
    %7586 = vmatpush2.bf16.msra.mxu0 %v5683
    %7587 = vmatprep.mubr.bf16.mxu0 %v1817
    %7588 = vmatmul.mubr.bf16.gmra.mxu0 %v1815
    %v7589 = vpop.f32.mrf.mxu0
    %v7590 = vadd.f32 %v7550, %v7589
    %v7591 = vpop.f32.mrf.mxu0
    %v7592 = vpop.f32.mrf.mxu0
    %v7593 = vpop.f32.mrf.mxu0
    %7594 = vdwg.mxu0
    %7595 = vmatprep.subr.bf16.mxu0 0
    %7596 = vmatpush1.bf16.msra.mxu0 %v5698
    %7597 = vmatprep.subr.bf16.mxu0 0
    %7598 = vmatpush1.bf16.msra.mxu0 %v5697
    %7599 = vmatprep.subr.bf16.mxu0 0
    %7600 = vmatpush1.bf16.msra.mxu0 %v5696
    %7601 = vmatprep.subr.bf16.mxu0 0
    %7602 = vmatpush1.bf16.msra.mxu0 %v5695
    %7603 = vmatprep.subr.bf16.mxu0 0
    %7604 = vmatpush1.bf16.msra.mxu0 %v5694
    %7605 = vmatprep.subr.bf16.mxu0 0
    %7606 = vmatpush1.bf16.msra.mxu0 %v5693
    %7607 = vmatprep.subr.bf16.mxu0 0
    %7608 = vmatpush1.bf16.msra.mxu0 %v5692
    %7609 = vmatprep.subr.bf16.mxu0 0
    %7610 = vmatpush1.bf16.msra.mxu0 %v5691
    %7611 = vmatprep.subr.bf16.mxu0 0
    %7612 = vmatpush2.bf16.msra.mxu0 %v5706
    %7613 = vmatprep.subr.bf16.mxu0 0
    %7614 = vmatpush2.bf16.msra.mxu0 %v5705
    %7615 = vmatprep.subr.bf16.mxu0 0
    %7616 = vmatpush2.bf16.msra.mxu0 %v5704
    %7617 = vmatprep.subr.bf16.mxu0 0
    %7618 = vmatpush2.bf16.msra.mxu0 %v5703
    %7619 = vmatprep.subr.bf16.mxu0 0
    %7620 = vmatpush2.bf16.msra.mxu0 %v5702
    %7621 = vmatprep.subr.bf16.mxu0 0
    %7622 = vmatpush2.bf16.msra.mxu0 %v5701
    %7623 = vmatprep.subr.bf16.mxu0 0
    %7624 = vmatpush2.bf16.msra.mxu0 %v5700
    %7625 = vmatprep.subr.bf16.mxu0 0
    %7626 = vmatpush2.bf16.msra.mxu0 %v5699
    %7627 = vmatprep.mubr.bf16.mxu0 %v1814
    %7628 = vmatmul.mubr.bf16.gmra.mxu0 %v1800
    %v7629 = vpop.f32.mrf.mxu0
    %v7630 = vadd.f32 %v7590, %v7629
    %v7631 = vpop.f32.mrf.mxu0
    %v7632 = vpop.f32.mrf.mxu0
    %v7633 = vpop.f32.mrf.mxu0
    %7634 = vdwg.mxu0
    %7635 = vmatprep.subr.bf16.mxu0 0
    %7636 = vmatpush1.bf16.msra.mxu0 %v5714
    %7637 = vmatprep.subr.bf16.mxu0 0
    %7638 = vmatpush1.bf16.msra.mxu0 %v5713
    %7639 = vmatprep.subr.bf16.mxu0 0
    %7640 = vmatpush1.bf16.msra.mxu0 %v5712
    %7641 = vmatprep.subr.bf16.mxu0 0
    %7642 = vmatpush1.bf16.msra.mxu0 %v5711
    %7643 = vmatprep.subr.bf16.mxu0 0
    %7644 = vmatpush1.bf16.msra.mxu0 %v5710
    %7645 = vmatprep.subr.bf16.mxu0 0
    %7646 = vmatpush1.bf16.msra.mxu0 %v5709
    %7647 = vmatprep.subr.bf16.mxu0 0
    %7648 = vmatpush1.bf16.msra.mxu0 %v5708
    %7649 = vmatprep.subr.bf16.mxu0 0
    %7650 = vmatpush1.bf16.msra.mxu0 %v5707
    %7651 = vmatprep.subr.bf16.mxu0 0
    %7652 = vmatpush2.bf16.msra.mxu0 %v5722
    %7653 = vmatprep.subr.bf16.mxu0 0
    %7654 = vmatpush2.bf16.msra.mxu0 %v5721
    %7655 = vmatprep.subr.bf16.mxu0 0
    %7656 = vmatpush2.bf16.msra.mxu0 %v5720
    %7657 = vmatprep.subr.bf16.mxu0 0
    %7658 = vmatpush2.bf16.msra.mxu0 %v5719
    %7659 = vmatprep.subr.bf16.mxu0 0
    %7660 = vmatpush2.bf16.msra.mxu0 %v5718
    %7661 = vmatprep.subr.bf16.mxu0 0
    %7662 = vmatpush2.bf16.msra.mxu0 %v5717
    %7663 = vmatprep.subr.bf16.mxu0 0
    %7664 = vmatpush2.bf16.msra.mxu0 %v5716
    %7665 = vmatprep.subr.bf16.mxu0 0
    %7666 = vmatpush2.bf16.msra.mxu0 %v5715
    %7667 = vmatprep.mubr.bf16.mxu0 %v1818
    %7668 = vmatmul.mubr.bf16.gmra.mxu0 %v1816
    %v7669 = vpop.f32.mrf.mxu0
    %v7670 = vadd.f32 %v7630, %v7669
    %v7671 = vpop.f32.mrf.mxu0
    %v7672 = vpop.f32.mrf.mxu0
    %v7673 = vpop.f32.mrf.mxu0
    %7674 = vdwg.mxu0
    %7675 = vmatprep.subr.bf16.mxu0 0
    %7676 = vmatpush1.bf16.msra.mxu0 %v5730
    %7677 = vmatprep.subr.bf16.mxu0 0
    %7678 = vmatpush1.bf16.msra.mxu0 %v5729
    %7679 = vmatprep.subr.bf16.mxu0 0
    %7680 = vmatpush1.bf16.msra.mxu0 %v5728
    %7681 = vmatprep.subr.bf16.mxu0 0
    %7682 = vmatpush1.bf16.msra.mxu0 %v5727
    %7683 = vmatprep.subr.bf16.mxu0 0
    %7684 = vmatpush1.bf16.msra.mxu0 %v5726
    %7685 = vmatprep.subr.bf16.mxu0 0
    %7686 = vmatpush1.bf16.msra.mxu0 %v5725
    %7687 = vmatprep.subr.bf16.mxu0 0
    %7688 = vmatpush1.bf16.msra.mxu0 %v5724
    %7689 = vmatprep.subr.bf16.mxu0 0
    %7690 = vmatpush1.bf16.msra.mxu0 %v5723
    %7691 = vmatprep.subr.bf16.mxu0 0
    %7692 = vmatpush2.bf16.msra.mxu0 %v5738
    %7693 = vmatprep.subr.bf16.mxu0 0
    %7694 = vmatpush2.bf16.msra.mxu0 %v5737
    %7695 = vmatprep.subr.bf16.mxu0 0
    %7696 = vmatpush2.bf16.msra.mxu0 %v5736
    %7697 = vmatprep.subr.bf16.mxu0 0
    %7698 = vmatpush2.bf16.msra.mxu0 %v5735
    %7699 = vmatprep.subr.bf16.mxu0 0
    %7700 = vmatpush2.bf16.msra.mxu0 %v5734
    %7701 = vmatprep.subr.bf16.mxu0 0
    %7702 = vmatpush2.bf16.msra.mxu0 %v5733
    %7703 = vmatprep.subr.bf16.mxu0 0
    %7704 = vmatpush2.bf16.msra.mxu0 %v5732
    %7705 = vmatprep.subr.bf16.mxu0 0
    %7706 = vmatpush2.bf16.msra.mxu0 %v5731
    %7707 = vmatprep.mubr.bf16.mxu0 %v1856
    %7708 = vmatmul.mubr.bf16.gmra.mxu0 %v1842
    %v7709 = vpop.f32.mrf.mxu0
    %v7710 = vadd.f32 %v7670, %v7709
    %v7711 = vpop.f32.mrf.mxu0
    %v7712 = vpop.f32.mrf.mxu0
    %v7713 = vpop.f32.mrf.mxu0
    %7714 = vdwg.mxu0
    %7715 = vmatprep.subr.bf16.mxu0 0
    %7716 = vmatpush1.bf16.msra.mxu0 %v5746
    %7717 = vmatprep.subr.bf16.mxu0 0
    %7718 = vmatpush1.bf16.msra.mxu0 %v5745
    %7719 = vmatprep.subr.bf16.mxu0 0
    %7720 = vmatpush1.bf16.msra.mxu0 %v5744
    %7721 = vmatprep.subr.bf16.mxu0 0
    %7722 = vmatpush1.bf16.msra.mxu0 %v5743
    %7723 = vmatprep.subr.bf16.mxu0 0
    %7724 = vmatpush1.bf16.msra.mxu0 %v5742
    %7725 = vmatprep.subr.bf16.mxu0 0
    %7726 = vmatpush1.bf16.msra.mxu0 %v5741
    %7727 = vmatprep.subr.bf16.mxu0 0
    %7728 = vmatpush1.bf16.msra.mxu0 %v5740
    %7729 = vmatprep.subr.bf16.mxu0 0
    %7730 = vmatpush1.bf16.msra.mxu0 %v5739
    %7731 = vmatprep.subr.bf16.mxu0 0
    %7732 = vmatpush2.bf16.msra.mxu0 %v5754
    %7733 = vmatprep.subr.bf16.mxu0 0
    %7734 = vmatpush2.bf16.msra.mxu0 %v5753
    %7735 = vmatprep.subr.bf16.mxu0 0
    %7736 = vmatpush2.bf16.msra.mxu0 %v5752
    %7737 = vmatprep.subr.bf16.mxu0 0
    %7738 = vmatpush2.bf16.msra.mxu0 %v5751
    %7739 = vmatprep.subr.bf16.mxu0 0
    %7740 = vmatpush2.bf16.msra.mxu0 %v5750
    %7741 = vmatprep.subr.bf16.mxu0 0
    %7742 = vmatpush2.bf16.msra.mxu0 %v5749
    %7743 = vmatprep.subr.bf16.mxu0 0
    %7744 = vmatpush2.bf16.msra.mxu0 %v5748
    %7745 = vmatprep.subr.bf16.mxu0 0
    %7746 = vmatpush2.bf16.msra.mxu0 %v5747
    %7747 = vmatprep.mubr.bf16.mxu0 %v1866
    %7748 = vmatmul.mubr.bf16.gmra.mxu0 %v1864
    %v7749 = vpop.f32.mrf.mxu0
    %v7750 = vadd.f32 %v7710, %v7749
    %v7751 = vpop.f32.mrf.mxu0
    %v7752 = vpop.f32.mrf.mxu0
    %v7753 = vpop.f32.mrf.mxu0
    %7754 = vdwg.mxu0
    %7755 = vmatprep.subr.bf16.mxu0 0
    %7756 = vmatpush1.bf16.msra.mxu0 %v5762
    %7757 = vmatprep.subr.bf16.mxu0 0
    %7758 = vmatpush1.bf16.msra.mxu0 %v5761
    %7759 = vmatprep.subr.bf16.mxu0 0
    %7760 = vmatpush1.bf16.msra.mxu0 %v5760
    %7761 = vmatprep.subr.bf16.mxu0 0
    %7762 = vmatpush1.bf16.msra.mxu0 %v5759
    %7763 = vmatprep.subr.bf16.mxu0 0
    %7764 = vmatpush1.bf16.msra.mxu0 %v5758
    %7765 = vmatprep.subr.bf16.mxu0 0
    %7766 = vmatpush1.bf16.msra.mxu0 %v5757
    %7767 = vmatprep.subr.bf16.mxu0 0
    %7768 = vmatpush1.bf16.msra.mxu0 %v5756
    %7769 = vmatprep.subr.bf16.mxu0 0
    %7770 = vmatpush1.bf16.msra.mxu0 %v5755
    %7771 = vmatprep.subr.bf16.mxu0 0
    %7772 = vmatpush2.bf16.msra.mxu0 %v5770
    %7773 = vmatprep.subr.bf16.mxu0 0
    %7774 = vmatpush2.bf16.msra.mxu0 %v5769
    %7775 = vmatprep.subr.bf16.mxu0 0
    %7776 = vmatpush2.bf16.msra.mxu0 %v5768
    %7777 = vmatprep.subr.bf16.mxu0 0
    %7778 = vmatpush2.bf16.msra.mxu0 %v5767
    %7779 = vmatprep.subr.bf16.mxu0 0
    %7780 = vmatpush2.bf16.msra.mxu0 %v5766
    %7781 = vmatprep.subr.bf16.mxu0 0
    %7782 = vmatpush2.bf16.msra.mxu0 %v5765
    %7783 = vmatprep.subr.bf16.mxu0 0
    %7784 = vmatpush2.bf16.msra.mxu0 %v5764
    %7785 = vmatprep.subr.bf16.mxu0 0
    %7786 = vmatpush2.bf16.msra.mxu0 %v5763
    %7787 = vmatprep.mubr.bf16.mxu0 %v1863
    %7788 = vmatmul.mubr.bf16.gmra.mxu0 %v1849
    %v7789 = vpop.f32.mrf.mxu0
    %v7790 = vadd.f32 %v7750, %v7789
    %v7791 = vpop.f32.mrf.mxu0
    %v7792 = vpop.f32.mrf.mxu0
    %v7793 = vpop.f32.mrf.mxu0
    %7794 = vdwg.mxu0
    %7795 = vmatprep.subr.bf16.mxu0 0
    %7796 = vmatpush1.bf16.msra.mxu0 %v5778
    %7797 = vmatprep.subr.bf16.mxu0 0
    %7798 = vmatpush1.bf16.msra.mxu0 %v5777
    %7799 = vmatprep.subr.bf16.mxu0 0
    %7800 = vmatpush1.bf16.msra.mxu0 %v5776
    %7801 = vmatprep.subr.bf16.mxu0 0
    %7802 = vmatpush1.bf16.msra.mxu0 %v5775
    %7803 = vmatprep.subr.bf16.mxu0 0
    %7804 = vmatpush1.bf16.msra.mxu0 %v5774
    %7805 = vmatprep.subr.bf16.mxu0 0
    %7806 = vmatpush1.bf16.msra.mxu0 %v5773
    %7807 = vmatprep.subr.bf16.mxu0 0
    %7808 = vmatpush1.bf16.msra.mxu0 %v5772
    %7809 = vmatprep.subr.bf16.mxu0 0
    %7810 = vmatpush1.bf16.msra.mxu0 %v5771
    %7811 = vmatprep.subr.bf16.mxu0 0
    %7812 = vmatpush2.bf16.msra.mxu0 %v5786
    %7813 = vmatprep.subr.bf16.mxu0 0
    %7814 = vmatpush2.bf16.msra.mxu0 %v5785
    %7815 = vmatprep.subr.bf16.mxu0 0
    %7816 = vmatpush2.bf16.msra.mxu0 %v5784
    %7817 = vmatprep.subr.bf16.mxu0 0
    %7818 = vmatpush2.bf16.msra.mxu0 %v5783
    %7819 = vmatprep.subr.bf16.mxu0 0
    %7820 = vmatpush2.bf16.msra.mxu0 %v5782
    %7821 = vmatprep.subr.bf16.mxu0 0
    %7822 = vmatpush2.bf16.msra.mxu0 %v5781
    %7823 = vmatprep.subr.bf16.mxu0 0
    %7824 = vmatpush2.bf16.msra.mxu0 %v5780
    %7825 = vmatprep.subr.bf16.mxu0 0
    %7826 = vmatpush2.bf16.msra.mxu0 %v5779
    %7827 = vmatprep.mubr.bf16.mxu0 %v1867
    %7828 = vmatmul.mubr.bf16.gmra.mxu0 %v1865
    %v7829 = vpop.f32.mrf.mxu0
    %v7830 = vadd.f32 %v7790, %v7829
    %v7831 = vpop.f32.mrf.mxu0
    %v7832 = vpop.f32.mrf.mxu0
    %v7833 = vpop.f32.mrf.mxu0
    %7834 = vdwg.mxu0
    %7835 = vmatprep.subr.bf16.mxu0 0
    %7836 = vmatpush1.bf16.msra.mxu0 %v5794
    %7837 = vmatprep.subr.bf16.mxu0 0
    %7838 = vmatpush1.bf16.msra.mxu0 %v5793
    %7839 = vmatprep.subr.bf16.mxu0 0
    %7840 = vmatpush1.bf16.msra.mxu0 %v5792
    %7841 = vmatprep.subr.bf16.mxu0 0
    %7842 = vmatpush1.bf16.msra.mxu0 %v5791
    %7843 = vmatprep.subr.bf16.mxu0 0
    %7844 = vmatpush1.bf16.msra.mxu0 %v5790
    %7845 = vmatprep.subr.bf16.mxu0 0
    %7846 = vmatpush1.bf16.msra.mxu0 %v5789
    %7847 = vmatprep.subr.bf16.mxu0 0
    %7848 = vmatpush1.bf16.msra.mxu0 %v5788
    %7849 = vmatprep.subr.bf16.mxu0 0
    %7850 = vmatpush1.bf16.msra.mxu0 %v5787
    %7851 = vmatprep.subr.bf16.mxu0 0
    %7852 = vmatpush2.bf16.msra.mxu0 %v5802
    %7853 = vmatprep.subr.bf16.mxu0 0
    %7854 = vmatpush2.bf16.msra.mxu0 %v5801
    %7855 = vmatprep.subr.bf16.mxu0 0
    %7856 = vmatpush2.bf16.msra.mxu0 %v5800
    %7857 = vmatprep.subr.bf16.mxu0 0
    %7858 = vmatpush2.bf16.msra.mxu0 %v5799
    %7859 = vmatprep.subr.bf16.mxu0 0
    %7860 = vmatpush2.bf16.msra.mxu0 %v5798
    %7861 = vmatprep.subr.bf16.mxu0 0
    %7862 = vmatpush2.bf16.msra.mxu0 %v5797
    %7863 = vmatprep.subr.bf16.mxu0 0
    %7864 = vmatpush2.bf16.msra.mxu0 %v5796
    %7865 = vmatprep.subr.bf16.mxu0 0
    %7866 = vmatpush2.bf16.msra.mxu0 %v5795
    %7867 = vmatprep.mubr.bf16.mxu0 %v1905
    %7868 = vmatmul.mubr.bf16.gmra.mxu0 %v1891
    %v7869 = vpop.f32.mrf.mxu0
    %v7870 = vadd.f32 %v7830, %v7869
    %v7871 = vpop.f32.mrf.mxu0
    %v7872 = vpop.f32.mrf.mxu0
    %v7873 = vpop.f32.mrf.mxu0
    %7874 = vdwg.mxu0
    %7875 = vmatprep.subr.bf16.mxu0 0
    %7876 = vmatpush1.bf16.msra.mxu0 %v5810
    %7877 = vmatprep.subr.bf16.mxu0 0
    %7878 = vmatpush1.bf16.msra.mxu0 %v5809
    %7879 = vmatprep.subr.bf16.mxu0 0
    %7880 = vmatpush1.bf16.msra.mxu0 %v5808
    %7881 = vmatprep.subr.bf16.mxu0 0
    %7882 = vmatpush1.bf16.msra.mxu0 %v5807
    %7883 = vmatprep.subr.bf16.mxu0 0
    %7884 = vmatpush1.bf16.msra.mxu0 %v5806
    %7885 = vmatprep.subr.bf16.mxu0 0
    %7886 = vmatpush1.bf16.msra.mxu0 %v5805
    %7887 = vmatprep.subr.bf16.mxu0 0
    %7888 = vmatpush1.bf16.msra.mxu0 %v5804
    %7889 = vmatprep.subr.bf16.mxu0 0
    %7890 = vmatpush1.bf16.msra.mxu0 %v5803
    %7891 = vmatprep.subr.bf16.mxu0 0
    %7892 = vmatpush2.bf16.msra.mxu0 %v5818
    %7893 = vmatprep.subr.bf16.mxu0 0
    %7894 = vmatpush2.bf16.msra.mxu0 %v5817
    %7895 = vmatprep.subr.bf16.mxu0 0
    %7896 = vmatpush2.bf16.msra.mxu0 %v5816
    %7897 = vmatprep.subr.bf16.mxu0 0
    %7898 = vmatpush2.bf16.msra.mxu0 %v5815
    %7899 = vmatprep.subr.bf16.mxu0 0
    %7900 = vmatpush2.bf16.msra.mxu0 %v5814
    %7901 = vmatprep.subr.bf16.mxu0 0
    %7902 = vmatpush2.bf16.msra.mxu0 %v5813
    %7903 = vmatprep.subr.bf16.mxu0 0
    %7904 = vmatpush2.bf16.msra.mxu0 %v5812
    %7905 = vmatprep.subr.bf16.mxu0 0
    %7906 = vmatpush2.bf16.msra.mxu0 %v5811
    %7907 = vmatprep.mubr.bf16.mxu0 %v1915
    %7908 = vmatmul.mubr.bf16.gmra.mxu0 %v1913
    %v7909 = vpop.f32.mrf.mxu0
    %v7910 = vadd.f32 %v7870, %v7909
    %v7911 = vpop.f32.mrf.mxu0
    %v7912 = vpop.f32.mrf.mxu0
    %v7913 = vpop.f32.mrf.mxu0
    %7914 = vdwg.mxu0
    %7915 = vmatprep.subr.bf16.mxu0 0
    %7916 = vmatpush1.bf16.msra.mxu0 %v5826
    %7917 = vmatprep.subr.bf16.mxu0 0
    %7918 = vmatpush1.bf16.msra.mxu0 %v5825
    %7919 = vmatprep.subr.bf16.mxu0 0
    %7920 = vmatpush1.bf16.msra.mxu0 %v5824
    %7921 = vmatprep.subr.bf16.mxu0 0
    %7922 = vmatpush1.bf16.msra.mxu0 %v5823
    %7923 = vmatprep.subr.bf16.mxu0 0
    %7924 = vmatpush1.bf16.msra.mxu0 %v5822
    %7925 = vmatprep.subr.bf16.mxu0 0
    %7926 = vmatpush1.bf16.msra.mxu0 %v5821
    %7927 = vmatprep.subr.bf16.mxu0 0
    %7928 = vmatpush1.bf16.msra.mxu0 %v5820
    %7929 = vmatprep.subr.bf16.mxu0 0
    %7930 = vmatpush1.bf16.msra.mxu0 %v5819
    %7931 = vmatprep.subr.bf16.mxu0 0
    %7932 = vmatpush2.bf16.msra.mxu0 %v5834
    %7933 = vmatprep.subr.bf16.mxu0 0
    %7934 = vmatpush2.bf16.msra.mxu0 %v5833
    %7935 = vmatprep.subr.bf16.mxu0 0
    %7936 = vmatpush2.bf16.msra.mxu0 %v5832
    %7937 = vmatprep.subr.bf16.mxu0 0
    %7938 = vmatpush2.bf16.msra.mxu0 %v5831
    %7939 = vmatprep.subr.bf16.mxu0 0
    %7940 = vmatpush2.bf16.msra.mxu0 %v5830
    %7941 = vmatprep.subr.bf16.mxu0 0
    %7942 = vmatpush2.bf16.msra.mxu0 %v5829
    %7943 = vmatprep.subr.bf16.mxu0 0
    %7944 = vmatpush2.bf16.msra.mxu0 %v5828
    %7945 = vmatprep.subr.bf16.mxu0 0
    %7946 = vmatpush2.bf16.msra.mxu0 %v5827
    %7947 = vmatprep.mubr.bf16.mxu0 %v1912
    %7948 = vmatmul.mubr.bf16.gmra.mxu0 %v1898
    %v7949 = vpop.f32.mrf.mxu0
    %v7950 = vadd.f32 %v7910, %v7949
    %v7951 = vpop.f32.mrf.mxu0
    %v7952 = vpop.f32.mrf.mxu0
    %v7953 = vpop.f32.mrf.mxu0
    %7954 = vdwg.mxu0
    %7955 = vmatprep.subr.bf16.mxu0 0
    %7956 = vmatpush1.bf16.msra.mxu0 %v5842
    %7957 = vmatprep.subr.bf16.mxu0 0
    %7958 = vmatpush1.bf16.msra.mxu0 %v5841
    %7959 = vmatprep.subr.bf16.mxu0 0
    %7960 = vmatpush1.bf16.msra.mxu0 %v5840
    %7961 = vmatprep.subr.bf16.mxu0 0
    %7962 = vmatpush1.bf16.msra.mxu0 %v5839
    %7963 = vmatprep.subr.bf16.mxu0 0
    %7964 = vmatpush1.bf16.msra.mxu0 %v5838
    %7965 = vmatprep.subr.bf16.mxu0 0
    %7966 = vmatpush1.bf16.msra.mxu0 %v5837
    %7967 = vmatprep.subr.bf16.mxu0 0
    %7968 = vmatpush1.bf16.msra.mxu0 %v5836
    %7969 = vmatprep.subr.bf16.mxu0 0
    %7970 = vmatpush1.bf16.msra.mxu0 %v5835
    %7971 = vmatprep.subr.bf16.mxu0 0
    %7972 = vmatpush2.bf16.msra.mxu0 %v5850
    %7973 = vmatprep.subr.bf16.mxu0 0
    %7974 = vmatpush2.bf16.msra.mxu0 %v5849
    %7975 = vmatprep.subr.bf16.mxu0 0
    %7976 = vmatpush2.bf16.msra.mxu0 %v5848
    %7977 = vmatprep.subr.bf16.mxu0 0
    %7978 = vmatpush2.bf16.msra.mxu0 %v5847
    %7979 = vmatprep.subr.bf16.mxu0 0
    %7980 = vmatpush2.bf16.msra.mxu0 %v5846
    %7981 = vmatprep.subr.bf16.mxu0 0
    %7982 = vmatpush2.bf16.msra.mxu0 %v5845
    %7983 = vmatprep.subr.bf16.mxu0 0
    %7984 = vmatpush2.bf16.msra.mxu0 %v5844
    %7985 = vmatprep.subr.bf16.mxu0 0
    %7986 = vmatpush2.bf16.msra.mxu0 %v5843
    %7987 = vmatprep.mubr.bf16.mxu0 %v1916
    %7988 = vmatmul.mubr.bf16.gmra.mxu0 %v1914
    %v7989 = vpop.f32.mrf.mxu0
    %v7990 = vadd.f32 %v7950, %v7989
    %v7991 = vpop.f32.mrf.mxu0
    %v7992 = vpop.f32.mrf.mxu0
    %v7993 = vpop.f32.mrf.mxu0
    %7994 = vdwg.mxu0
    %7995 = vmatprep.subr.bf16.mxu0 0
    %7996 = vmatpush1.bf16.msra.mxu0 %v5858
    %7997 = vmatprep.subr.bf16.mxu0 0
    %7998 = vmatpush1.bf16.msra.mxu0 %v5857
    %7999 = vmatprep.subr.bf16.mxu0 0
    %8000 = vmatpush1.bf16.msra.mxu0 %v5856
    %8001 = vmatprep.subr.bf16.mxu0 0
    %8002 = vmatpush1.bf16.msra.mxu0 %v5855
    %8003 = vmatprep.subr.bf16.mxu0 0
    %8004 = vmatpush1.bf16.msra.mxu0 %v5854
    %8005 = vmatprep.subr.bf16.mxu0 0
    %8006 = vmatpush1.bf16.msra.mxu0 %v5853
    %8007 = vmatprep.subr.bf16.mxu0 0
    %8008 = vmatpush1.bf16.msra.mxu0 %v5852
    %8009 = vmatprep.subr.bf16.mxu0 0
    %8010 = vmatpush1.bf16.msra.mxu0 %v5851
    %8011 = vmatprep.subr.bf16.mxu0 0
    %8012 = vmatpush2.bf16.msra.mxu0 %v5866
    %8013 = vmatprep.subr.bf16.mxu0 0
    %8014 = vmatpush2.bf16.msra.mxu0 %v5865
    %8015 = vmatprep.subr.bf16.mxu0 0
    %8016 = vmatpush2.bf16.msra.mxu0 %v5864
    %8017 = vmatprep.subr.bf16.mxu0 0
    %8018 = vmatpush2.bf16.msra.mxu0 %v5863
    %8019 = vmatprep.subr.bf16.mxu0 0
    %8020 = vmatpush2.bf16.msra.mxu0 %v5862
    %8021 = vmatprep.subr.bf16.mxu0 0
    %8022 = vmatpush2.bf16.msra.mxu0 %v5861
    %8023 = vmatprep.subr.bf16.mxu0 0
    %8024 = vmatpush2.bf16.msra.mxu0 %v5860
    %8025 = vmatprep.subr.bf16.mxu0 0
    %8026 = vmatpush2.bf16.msra.mxu0 %v5859
    %8027 = vmatprep.mubr.bf16.mxu0 %v1954
    %8028 = vmatmul.mubr.bf16.gmra.mxu0 %v1940
    %v8029 = vpop.f32.mrf.mxu0
    %v8030 = vadd.f32 %v7990, %v8029
    %v8031 = vpop.f32.mrf.mxu0
    %v8032 = vpop.f32.mrf.mxu0
    %v8033 = vpop.f32.mrf.mxu0
    %8034 = vdwg.mxu0
    %8035 = vmatprep.subr.bf16.mxu0 0
    %8036 = vmatpush1.bf16.msra.mxu0 %v5874
    %8037 = vmatprep.subr.bf16.mxu0 0
    %8038 = vmatpush1.bf16.msra.mxu0 %v5873
    %8039 = vmatprep.subr.bf16.mxu0 0
    %8040 = vmatpush1.bf16.msra.mxu0 %v5872
    %8041 = vmatprep.subr.bf16.mxu0 0
    %8042 = vmatpush1.bf16.msra.mxu0 %v5871
    %8043 = vmatprep.subr.bf16.mxu0 0
    %8044 = vmatpush1.bf16.msra.mxu0 %v5870
    %8045 = vmatprep.subr.bf16.mxu0 0
    %8046 = vmatpush1.bf16.msra.mxu0 %v5869
    %8047 = vmatprep.subr.bf16.mxu0 0
    %8048 = vmatpush1.bf16.msra.mxu0 %v5868
    %8049 = vmatprep.subr.bf16.mxu0 0
    %8050 = vmatpush1.bf16.msra.mxu0 %v5867
    %8051 = vmatprep.subr.bf16.mxu0 0
    %8052 = vmatpush2.bf16.msra.mxu0 %v5882
    %8053 = vmatprep.subr.bf16.mxu0 0
    %8054 = vmatpush2.bf16.msra.mxu0 %v5881
    %8055 = vmatprep.subr.bf16.mxu0 0
    %8056 = vmatpush2.bf16.msra.mxu0 %v5880
    %8057 = vmatprep.subr.bf16.mxu0 0
    %8058 = vmatpush2.bf16.msra.mxu0 %v5879
    %8059 = vmatprep.subr.bf16.mxu0 0
    %8060 = vmatpush2.bf16.msra.mxu0 %v5878
    %8061 = vmatprep.subr.bf16.mxu0 0
    %8062 = vmatpush2.bf16.msra.mxu0 %v5877
    %8063 = vmatprep.subr.bf16.mxu0 0
    %8064 = vmatpush2.bf16.msra.mxu0 %v5876
    %8065 = vmatprep.subr.bf16.mxu0 0
    %8066 = vmatpush2.bf16.msra.mxu0 %v5875
    %8067 = vmatprep.mubr.bf16.mxu0 %v1964
    %8068 = vmatmul.mubr.bf16.gmra.mxu0 %v1962
    %v8069 = vpop.f32.mrf.mxu0
    %v8070 = vadd.f32 %v8030, %v8069
    %v8071 = vpop.f32.mrf.mxu0
    %v8072 = vpop.f32.mrf.mxu0
    %v8073 = vpop.f32.mrf.mxu0
    %8074 = vdwg.mxu0
    %8075 = vmatprep.subr.bf16.mxu0 0
    %8076 = vmatpush1.bf16.msra.mxu0 %v5890
    %8077 = vmatprep.subr.bf16.mxu0 0
    %8078 = vmatpush1.bf16.msra.mxu0 %v5889
    %8079 = vmatprep.subr.bf16.mxu0 0
    %8080 = vmatpush1.bf16.msra.mxu0 %v5888
    %8081 = vmatprep.subr.bf16.mxu0 0
    %8082 = vmatpush1.bf16.msra.mxu0 %v5887
    %8083 = vmatprep.subr.bf16.mxu0 0
    %8084 = vmatpush1.bf16.msra.mxu0 %v5886
    %8085 = vmatprep.subr.bf16.mxu0 0
    %8086 = vmatpush1.bf16.msra.mxu0 %v5885
    %8087 = vmatprep.subr.bf16.mxu0 0
    %8088 = vmatpush1.bf16.msra.mxu0 %v5884
    %8089 = vmatprep.subr.bf16.mxu0 0
    %8090 = vmatpush1.bf16.msra.mxu0 %v5883
    %8091 = vmatprep.subr.bf16.mxu0 0
    %8092 = vmatpush2.bf16.msra.mxu0 %v5898
    %8093 = vmatprep.subr.bf16.mxu0 0
    %8094 = vmatpush2.bf16.msra.mxu0 %v5897
    %8095 = vmatprep.subr.bf16.mxu0 0
    %8096 = vmatpush2.bf16.msra.mxu0 %v5896
    %8097 = vmatprep.subr.bf16.mxu0 0
    %8098 = vmatpush2.bf16.msra.mxu0 %v5895
    %8099 = vmatprep.subr.bf16.mxu0 0
    %8100 = vmatpush2.bf16.msra.mxu0 %v5894
    %8101 = vmatprep.subr.bf16.mxu0 0
    %8102 = vmatpush2.bf16.msra.mxu0 %v5893
    %8103 = vmatprep.subr.bf16.mxu0 0
    %8104 = vmatpush2.bf16.msra.mxu0 %v5892
    %8105 = vmatprep.subr.bf16.mxu0 0
    %8106 = vmatpush2.bf16.msra.mxu0 %v5891
    %8107 = vmatprep.mubr.bf16.mxu0 %v1961
    %8108 = vmatmul.mubr.bf16.gmra.mxu0 %v1947
    %v8109 = vpop.f32.mrf.mxu0
    %v8110 = vadd.f32 %v8070, %v8109
    %v8111 = vpop.f32.mrf.mxu0
    %v8112 = vpop.f32.mrf.mxu0
    %v8113 = vpop.f32.mrf.mxu0
    %8114 = vdwg.mxu0
    %8115 = vmatprep.subr.bf16.mxu0 0
    %8116 = vmatpush1.bf16.msra.mxu0 %v5906
    %8117 = vmatprep.subr.bf16.mxu0 0
    %8118 = vmatpush1.bf16.msra.mxu0 %v5905
    %8119 = vmatprep.subr.bf16.mxu0 0
    %8120 = vmatpush1.bf16.msra.mxu0 %v5904
    %8121 = vmatprep.subr.bf16.mxu0 0
    %8122 = vmatpush1.bf16.msra.mxu0 %v5903
    %8123 = vmatprep.subr.bf16.mxu0 0
    %8124 = vmatpush1.bf16.msra.mxu0 %v5902
    %8125 = vmatprep.subr.bf16.mxu0 0
    %8126 = vmatpush1.bf16.msra.mxu0 %v5901
    %8127 = vmatprep.subr.bf16.mxu0 0
    %8128 = vmatpush1.bf16.msra.mxu0 %v5900
    %8129 = vmatprep.subr.bf16.mxu0 0
    %8130 = vmatpush1.bf16.msra.mxu0 %v5899
    %8131 = vmatprep.subr.bf16.mxu0 0
    %8132 = vmatpush2.bf16.msra.mxu0 %v5914
    %8133 = vmatprep.subr.bf16.mxu0 0
    %8134 = vmatpush2.bf16.msra.mxu0 %v5913
    %8135 = vmatprep.subr.bf16.mxu0 0
    %8136 = vmatpush2.bf16.msra.mxu0 %v5912
    %8137 = vmatprep.subr.bf16.mxu0 0
    %8138 = vmatpush2.bf16.msra.mxu0 %v5911
    %8139 = vmatprep.subr.bf16.mxu0 0
    %8140 = vmatpush2.bf16.msra.mxu0 %v5910
    %8141 = vmatprep.subr.bf16.mxu0 0
    %8142 = vmatpush2.bf16.msra.mxu0 %v5909
    %8143 = vmatprep.subr.bf16.mxu0 0
    %8144 = vmatpush2.bf16.msra.mxu0 %v5908
    %8145 = vmatprep.subr.bf16.mxu0 0
    %8146 = vmatpush2.bf16.msra.mxu0 %v5907
    %8147 = vmatprep.mubr.bf16.mxu0 %v1965
    %8148 = vmatmul.mubr.bf16.gmra.mxu0 %v1963
    %v8149 = vpop.f32.mrf.mxu0
    %v8150 = vadd.f32 %v8110, %v8149
    %v8151 = vpop.f32.mrf.mxu0
    %v8152 = vpop.f32.mrf.mxu0
    %v8153 = vpop.f32.mrf.mxu0
    %8154 = vdwg.mxu0
    %8155 = vmatprep.subr.bf16.mxu0 0
    %8156 = vmatpush1.bf16.msra.mxu0 %v5922
    %8157 = vmatprep.subr.bf16.mxu0 0
    %8158 = vmatpush1.bf16.msra.mxu0 %v5921
    %8159 = vmatprep.subr.bf16.mxu0 0
    %8160 = vmatpush1.bf16.msra.mxu0 %v5920
    %8161 = vmatprep.subr.bf16.mxu0 0
    %8162 = vmatpush1.bf16.msra.mxu0 %v5919
    %8163 = vmatprep.subr.bf16.mxu0 0
    %8164 = vmatpush1.bf16.msra.mxu0 %v5918
    %8165 = vmatprep.subr.bf16.mxu0 0
    %8166 = vmatpush1.bf16.msra.mxu0 %v5917
    %8167 = vmatprep.subr.bf16.mxu0 0
    %8168 = vmatpush1.bf16.msra.mxu0 %v5916
    %8169 = vmatprep.subr.bf16.mxu0 0
    %8170 = vmatpush1.bf16.msra.mxu0 %v5915
    %8171 = vmatprep.subr.bf16.mxu0 0
    %8172 = vmatpush2.bf16.msra.mxu0 %v5930
    %8173 = vmatprep.subr.bf16.mxu0 0
    %8174 = vmatpush2.bf16.msra.mxu0 %v5929
    %8175 = vmatprep.subr.bf16.mxu0 0
    %8176 = vmatpush2.bf16.msra.mxu0 %v5928
    %8177 = vmatprep.subr.bf16.mxu0 0
    %8178 = vmatpush2.bf16.msra.mxu0 %v5927
    %8179 = vmatprep.subr.bf16.mxu0 0
    %8180 = vmatpush2.bf16.msra.mxu0 %v5926
    %8181 = vmatprep.subr.bf16.mxu0 0
    %8182 = vmatpush2.bf16.msra.mxu0 %v5925
    %8183 = vmatprep.subr.bf16.mxu0 0
    %8184 = vmatpush2.bf16.msra.mxu0 %v5924
    %8185 = vmatprep.subr.bf16.mxu0 0
    %8186 = vmatpush2.bf16.msra.mxu0 %v5923
    %8187 = vmatprep.mubr.bf16.mxu0 %v2003
    %8188 = vmatmul.mubr.bf16.gmra.mxu0 %v1989
    %v8189 = vpop.f32.mrf.mxu0
    %v8190 = vadd.f32 %v8150, %v8189
    %v8191 = vpop.f32.mrf.mxu0
    %v8192 = vpop.f32.mrf.mxu0
    %v8193 = vpop.f32.mrf.mxu0
    %8194 = vdwg.mxu0
    %8195 = vmatprep.subr.bf16.mxu0 0
    %8196 = vmatpush1.bf16.msra.mxu0 %v5938
    %8197 = vmatprep.subr.bf16.mxu0 0
    %8198 = vmatpush1.bf16.msra.mxu0 %v5937
    %8199 = vmatprep.subr.bf16.mxu0 0
    %8200 = vmatpush1.bf16.msra.mxu0 %v5936
    %8201 = vmatprep.subr.bf16.mxu0 0
    %8202 = vmatpush1.bf16.msra.mxu0 %v5935
    %8203 = vmatprep.subr.bf16.mxu0 0
    %8204 = vmatpush1.bf16.msra.mxu0 %v5934
    %8205 = vmatprep.subr.bf16.mxu0 0
    %8206 = vmatpush1.bf16.msra.mxu0 %v5933
    %8207 = vmatprep.subr.bf16.mxu0 0
    %8208 = vmatpush1.bf16.msra.mxu0 %v5932
    %8209 = vmatprep.subr.bf16.mxu0 0
    %8210 = vmatpush1.bf16.msra.mxu0 %v5931
    %8211 = vmatprep.subr.bf16.mxu0 0
    %8212 = vmatpush2.bf16.msra.mxu0 %v5946
    %8213 = vmatprep.subr.bf16.mxu0 0
    %8214 = vmatpush2.bf16.msra.mxu0 %v5945
    %8215 = vmatprep.subr.bf16.mxu0 0
    %8216 = vmatpush2.bf16.msra.mxu0 %v5944
    %8217 = vmatprep.subr.bf16.mxu0 0
    %8218 = vmatpush2.bf16.msra.mxu0 %v5943
    %8219 = vmatprep.subr.bf16.mxu0 0
    %8220 = vmatpush2.bf16.msra.mxu0 %v5942
    %8221 = vmatprep.subr.bf16.mxu0 0
    %8222 = vmatpush2.bf16.msra.mxu0 %v5941
    %8223 = vmatprep.subr.bf16.mxu0 0
    %8224 = vmatpush2.bf16.msra.mxu0 %v5940
    %8225 = vmatprep.subr.bf16.mxu0 0
    %8226 = vmatpush2.bf16.msra.mxu0 %v5939
    %8227 = vmatprep.mubr.bf16.mxu0 %v2013
    %8228 = vmatmul.mubr.bf16.gmra.mxu0 %v2011
    %v8229 = vpop.f32.mrf.mxu0
    %v8230 = vadd.f32 %v8190, %v8229
    %v8231 = vpop.f32.mrf.mxu0
    %v8232 = vpop.f32.mrf.mxu0
    %v8233 = vpop.f32.mrf.mxu0
    %8234 = vdwg.mxu0
    %8235 = vmatprep.subr.bf16.mxu0 0
    %8236 = vmatpush1.bf16.msra.mxu0 %v5954
    %8237 = vmatprep.subr.bf16.mxu0 0
    %8238 = vmatpush1.bf16.msra.mxu0 %v5953
    %8239 = vmatprep.subr.bf16.mxu0 0
    %8240 = vmatpush1.bf16.msra.mxu0 %v5952
    %8241 = vmatprep.subr.bf16.mxu0 0
    %8242 = vmatpush1.bf16.msra.mxu0 %v5951
    %8243 = vmatprep.subr.bf16.mxu0 0
    %8244 = vmatpush1.bf16.msra.mxu0 %v5950
    %8245 = vmatprep.subr.bf16.mxu0 0
    %8246 = vmatpush1.bf16.msra.mxu0 %v5949
    %8247 = vmatprep.subr.bf16.mxu0 0
    %8248 = vmatpush1.bf16.msra.mxu0 %v5948
    %8249 = vmatprep.subr.bf16.mxu0 0
    %8250 = vmatpush1.bf16.msra.mxu0 %v5947
    %8251 = vmatprep.subr.bf16.mxu0 0
    %8252 = vmatpush2.bf16.msra.mxu0 %v5962
    %8253 = vmatprep.subr.bf16.mxu0 0
    %8254 = vmatpush2.bf16.msra.mxu0 %v5961
    %8255 = vmatprep.subr.bf16.mxu0 0
    %8256 = vmatpush2.bf16.msra.mxu0 %v5960
    %8257 = vmatprep.subr.bf16.mxu0 0
    %8258 = vmatpush2.bf16.msra.mxu0 %v5959
    %8259 = vmatprep.subr.bf16.mxu0 0
    %8260 = vmatpush2.bf16.msra.mxu0 %v5958
    %8261 = vmatprep.subr.bf16.mxu0 0
    %8262 = vmatpush2.bf16.msra.mxu0 %v5957
    %8263 = vmatprep.subr.bf16.mxu0 0
    %8264 = vmatpush2.bf16.msra.mxu0 %v5956
    %8265 = vmatprep.subr.bf16.mxu0 0
    %8266 = vmatpush2.bf16.msra.mxu0 %v5955
    %8267 = vmatprep.mubr.bf16.mxu0 %v2010
    %8268 = vmatmul.mubr.bf16.gmra.mxu0 %v1996
    %v8269 = vpop.f32.mrf.mxu0
    %v8270 = vadd.f32 %v8230, %v8269
    %v8271 = vpop.f32.mrf.mxu0
    %v8272 = vpop.f32.mrf.mxu0
    %v8273 = vpop.f32.mrf.mxu0
    %8274 = vdwg.mxu0
    %8275 = vmatprep.subr.bf16.mxu0 0
    %8276 = vmatpush1.bf16.msra.mxu0 %v5970
    %8277 = vmatprep.subr.bf16.mxu0 0
    %8278 = vmatpush1.bf16.msra.mxu0 %v5969
    %8279 = vmatprep.subr.bf16.mxu0 0
    %8280 = vmatpush1.bf16.msra.mxu0 %v5968
    %8281 = vmatprep.subr.bf16.mxu0 0
    %8282 = vmatpush1.bf16.msra.mxu0 %v5967
    %8283 = vmatprep.subr.bf16.mxu0 0
    %8284 = vmatpush1.bf16.msra.mxu0 %v5966
    %8285 = vmatprep.subr.bf16.mxu0 0
    %8286 = vmatpush1.bf16.msra.mxu0 %v5965
    %8287 = vmatprep.subr.bf16.mxu0 0
    %8288 = vmatpush1.bf16.msra.mxu0 %v5964
    %8289 = vmatprep.subr.bf16.mxu0 0
    %8290 = vmatpush1.bf16.msra.mxu0 %v5963
    %8291 = vmatprep.subr.bf16.mxu0 0
    %8292 = vmatpush2.bf16.msra.mxu0 %v5978
    %8293 = vmatprep.subr.bf16.mxu0 0
    %8294 = vmatpush2.bf16.msra.mxu0 %v5977
    %8295 = vmatprep.subr.bf16.mxu0 0
    %8296 = vmatpush2.bf16.msra.mxu0 %v5976
    %8297 = vmatprep.subr.bf16.mxu0 0
    %8298 = vmatpush2.bf16.msra.mxu0 %v5975
    %8299 = vmatprep.subr.bf16.mxu0 0
    %8300 = vmatpush2.bf16.msra.mxu0 %v5974
    %8301 = vmatprep.subr.bf16.mxu0 0
    %8302 = vmatpush2.bf16.msra.mxu0 %v5973
    %8303 = vmatprep.subr.bf16.mxu0 0
    %8304 = vmatpush2.bf16.msra.mxu0 %v5972
    %8305 = vmatprep.subr.bf16.mxu0 0
    %8306 = vmatpush2.bf16.msra.mxu0 %v5971
    %8307 = vmatprep.mubr.bf16.mxu0 %v2014
    %8308 = vmatmul.mubr.bf16.gmra.mxu0 %v2012
    %v8309 = vpop.f32.mrf.mxu0
    %v8310 = vadd.f32 %v8270, %v8309
    %v8311 = vpop.f32.mrf.mxu0
    %v8312 = vpop.f32.mrf.mxu0
    %v8313 = vpop.f32.mrf.mxu0
    %8314 = vdwg.mxu0
    %8315 = vmatprep.subr.bf16.mxu0 0
    %8316 = vmatpush1.bf16.msra.mxu0 %v5986
    %8317 = vmatprep.subr.bf16.mxu0 0
    %8318 = vmatpush1.bf16.msra.mxu0 %v5985
    %8319 = vmatprep.subr.bf16.mxu0 0
    %8320 = vmatpush1.bf16.msra.mxu0 %v5984
    %8321 = vmatprep.subr.bf16.mxu0 0
    %8322 = vmatpush1.bf16.msra.mxu0 %v5983
    %8323 = vmatprep.subr.bf16.mxu0 0
    %8324 = vmatpush1.bf16.msra.mxu0 %v5982
    %8325 = vmatprep.subr.bf16.mxu0 0
    %8326 = vmatpush1.bf16.msra.mxu0 %v5981
    %8327 = vmatprep.subr.bf16.mxu0 0
    %8328 = vmatpush1.bf16.msra.mxu0 %v5980
    %8329 = vmatprep.subr.bf16.mxu0 0
    %8330 = vmatpush1.bf16.msra.mxu0 %v5979
    %8331 = vmatprep.subr.bf16.mxu0 0
    %8332 = vmatpush2.bf16.msra.mxu0 %v5994
    %8333 = vmatprep.subr.bf16.mxu0 0
    %8334 = vmatpush2.bf16.msra.mxu0 %v5993
    %8335 = vmatprep.subr.bf16.mxu0 0
    %8336 = vmatpush2.bf16.msra.mxu0 %v5992
    %8337 = vmatprep.subr.bf16.mxu0 0
    %8338 = vmatpush2.bf16.msra.mxu0 %v5991
    %8339 = vmatprep.subr.bf16.mxu0 0
    %8340 = vmatpush2.bf16.msra.mxu0 %v5990
    %8341 = vmatprep.subr.bf16.mxu0 0
    %8342 = vmatpush2.bf16.msra.mxu0 %v5989
    %8343 = vmatprep.subr.bf16.mxu0 0
    %8344 = vmatpush2.bf16.msra.mxu0 %v5988
    %8345 = vmatprep.subr.bf16.mxu0 0
    %8346 = vmatpush2.bf16.msra.mxu0 %v5987
    %8347 = vmatprep.mubr.bf16.mxu0 %v2052
    %8348 = vmatmul.mubr.bf16.gmra.mxu0 %v2038
    %v8349 = vpop.f32.mrf.mxu0
    %v8350 = vadd.f32 %v8310, %v8349
    %v8351 = vpop.f32.mrf.mxu0
    %v8352 = vpop.f32.mrf.mxu0
    %v8353 = vpop.f32.mrf.mxu0
    %8354 = vdwg.mxu0
    %8355 = vmatprep.subr.bf16.mxu0 0
    %8356 = vmatpush1.bf16.msra.mxu0 %v6002
    %8357 = vmatprep.subr.bf16.mxu0 0
    %8358 = vmatpush1.bf16.msra.mxu0 %v6001
    %8359 = vmatprep.subr.bf16.mxu0 0
    %8360 = vmatpush1.bf16.msra.mxu0 %v6000
    %8361 = vmatprep.subr.bf16.mxu0 0
    %8362 = vmatpush1.bf16.msra.mxu0 %v5999
    %8363 = vmatprep.subr.bf16.mxu0 0
    %8364 = vmatpush1.bf16.msra.mxu0 %v5998
    %8365 = vmatprep.subr.bf16.mxu0 0
    %8366 = vmatpush1.bf16.msra.mxu0 %v5997
    %8367 = vmatprep.subr.bf16.mxu0 0
    %8368 = vmatpush1.bf16.msra.mxu0 %v5996
    %8369 = vmatprep.subr.bf16.mxu0 0
    %8370 = vmatpush1.bf16.msra.mxu0 %v5995
    %8371 = vmatprep.subr.bf16.mxu0 0
    %8372 = vmatpush2.bf16.msra.mxu0 %v6010
    %8373 = vmatprep.subr.bf16.mxu0 0
    %8374 = vmatpush2.bf16.msra.mxu0 %v6009
    %8375 = vmatprep.subr.bf16.mxu0 0
    %8376 = vmatpush2.bf16.msra.mxu0 %v6008
    %8377 = vmatprep.subr.bf16.mxu0 0
    %8378 = vmatpush2.bf16.msra.mxu0 %v6007
    %8379 = vmatprep.subr.bf16.mxu0 0
    %8380 = vmatpush2.bf16.msra.mxu0 %v6006
    %8381 = vmatprep.subr.bf16.mxu0 0
    %8382 = vmatpush2.bf16.msra.mxu0 %v6005
    %8383 = vmatprep.subr.bf16.mxu0 0
    %8384 = vmatpush2.bf16.msra.mxu0 %v6004
    %8385 = vmatprep.subr.bf16.mxu0 0
    %8386 = vmatpush2.bf16.msra.mxu0 %v6003
    %8387 = vmatprep.mubr.bf16.mxu0 %v2062
    %8388 = vmatmul.mubr.bf16.gmra.mxu0 %v2060
    %v8389 = vpop.f32.mrf.mxu0
    %v8390 = vadd.f32 %v8350, %v8389
    %v8391 = vpop.f32.mrf.mxu0
    %v8392 = vpop.f32.mrf.mxu0
    %v8393 = vpop.f32.mrf.mxu0
    %8394 = vdwg.mxu0
    %8395 = vmatprep.subr.bf16.mxu0 0
    %8396 = vmatpush1.bf16.msra.mxu0 %v6018
    %8397 = vmatprep.subr.bf16.mxu0 0
    %8398 = vmatpush1.bf16.msra.mxu0 %v6017
    %8399 = vmatprep.subr.bf16.mxu0 0
    %8400 = vmatpush1.bf16.msra.mxu0 %v6016
    %8401 = vmatprep.subr.bf16.mxu0 0
    %8402 = vmatpush1.bf16.msra.mxu0 %v6015
    %8403 = vmatprep.subr.bf16.mxu0 0
    %8404 = vmatpush1.bf16.msra.mxu0 %v6014
    %8405 = vmatprep.subr.bf16.mxu0 0
    %8406 = vmatpush1.bf16.msra.mxu0 %v6013
    %8407 = vmatprep.subr.bf16.mxu0 0
    %8408 = vmatpush1.bf16.msra.mxu0 %v6012
    %8409 = vmatprep.subr.bf16.mxu0 0
    %8410 = vmatpush1.bf16.msra.mxu0 %v6011
    %8411 = vmatprep.subr.bf16.mxu0 0
    %8412 = vmatpush2.bf16.msra.mxu0 %v6026
    %8413 = vmatprep.subr.bf16.mxu0 0
    %8414 = vmatpush2.bf16.msra.mxu0 %v6025
    %8415 = vmatprep.subr.bf16.mxu0 0
    %8416 = vmatpush2.bf16.msra.mxu0 %v6024
    %8417 = vmatprep.subr.bf16.mxu0 0
    %8418 = vmatpush2.bf16.msra.mxu0 %v6023
    %8419 = vmatprep.subr.bf16.mxu0 0
    %8420 = vmatpush2.bf16.msra.mxu0 %v6022
    %8421 = vmatprep.subr.bf16.mxu0 0
    %8422 = vmatpush2.bf16.msra.mxu0 %v6021
    %8423 = vmatprep.subr.bf16.mxu0 0
    %8424 = vmatpush2.bf16.msra.mxu0 %v6020
    %8425 = vmatprep.subr.bf16.mxu0 0
    %8426 = vmatpush2.bf16.msra.mxu0 %v6019
    %8427 = vmatprep.mubr.bf16.mxu0 %v2059
    %8428 = vmatmul.mubr.bf16.gmra.mxu0 %v2045
    %v8429 = vpop.f32.mrf.mxu0
    %v8430 = vadd.f32 %v8390, %v8429
    %v8431 = vpop.f32.mrf.mxu0
    %v8432 = vpop.f32.mrf.mxu0
    %v8433 = vpop.f32.mrf.mxu0
    %8434 = vdwg.mxu0
    %8435 = vmatprep.subr.bf16.mxu0 0
    %8436 = vmatpush1.bf16.msra.mxu0 %v6034
    %8437 = vmatprep.subr.bf16.mxu0 0
    %8438 = vmatpush1.bf16.msra.mxu0 %v6033
    %8439 = vmatprep.subr.bf16.mxu0 0
    %8440 = vmatpush1.bf16.msra.mxu0 %v6032
    %8441 = vmatprep.subr.bf16.mxu0 0
    %8442 = vmatpush1.bf16.msra.mxu0 %v6031
    %8443 = vmatprep.subr.bf16.mxu0 0
    %8444 = vmatpush1.bf16.msra.mxu0 %v6030
    %8445 = vmatprep.subr.bf16.mxu0 0
    %8446 = vmatpush1.bf16.msra.mxu0 %v6029
    %8447 = vmatprep.subr.bf16.mxu0 0
    %8448 = vmatpush1.bf16.msra.mxu0 %v6028
    %8449 = vmatprep.subr.bf16.mxu0 0
    %8450 = vmatpush1.bf16.msra.mxu0 %v6027
    %8451 = vmatprep.subr.bf16.mxu0 0
    %8452 = vmatpush2.bf16.msra.mxu0 %v6042
    %8453 = vmatprep.subr.bf16.mxu0 0
    %8454 = vmatpush2.bf16.msra.mxu0 %v6041
    %8455 = vmatprep.subr.bf16.mxu0 0
    %8456 = vmatpush2.bf16.msra.mxu0 %v6040
    %8457 = vmatprep.subr.bf16.mxu0 0
    %8458 = vmatpush2.bf16.msra.mxu0 %v6039
    %8459 = vmatprep.subr.bf16.mxu0 0
    %8460 = vmatpush2.bf16.msra.mxu0 %v6038
    %8461 = vmatprep.subr.bf16.mxu0 0
    %8462 = vmatpush2.bf16.msra.mxu0 %v6037
    %8463 = vmatprep.subr.bf16.mxu0 0
    %8464 = vmatpush2.bf16.msra.mxu0 %v6036
    %8465 = vmatprep.subr.bf16.mxu0 0
    %8466 = vmatpush2.bf16.msra.mxu0 %v6035
    %8467 = vmatprep.mubr.bf16.mxu0 %v2063
    %8468 = vmatmul.mubr.bf16.gmra.mxu0 %v2061
    %v8469 = vpop.f32.mrf.mxu0
    %v8470 = vadd.f32 %v8430, %v8469
    %v8471 = vpop.f32.mrf.mxu0
    %v8472 = vpop.f32.mrf.mxu0
    %v8473 = vpop.f32.mrf.mxu0
    %8474 = vdwg.mxu0
    %8475 = vmatprep.subr.bf16.mxu0 0
    %8476 = vmatpush1.bf16.msra.mxu0 %v6050
    %8477 = vmatprep.subr.bf16.mxu0 0
    %8478 = vmatpush1.bf16.msra.mxu0 %v6049
    %8479 = vmatprep.subr.bf16.mxu0 0
    %8480 = vmatpush1.bf16.msra.mxu0 %v6048
    %8481 = vmatprep.subr.bf16.mxu0 0
    %8482 = vmatpush1.bf16.msra.mxu0 %v6047
    %8483 = vmatprep.subr.bf16.mxu0 0
    %8484 = vmatpush1.bf16.msra.mxu0 %v6046
    %8485 = vmatprep.subr.bf16.mxu0 0
    %8486 = vmatpush1.bf16.msra.mxu0 %v6045
    %8487 = vmatprep.subr.bf16.mxu0 0
    %8488 = vmatpush1.bf16.msra.mxu0 %v6044
    %8489 = vmatprep.subr.bf16.mxu0 0
    %8490 = vmatpush1.bf16.msra.mxu0 %v6043
    %8491 = vmatprep.subr.bf16.mxu0 0
    %8492 = vmatpush2.bf16.msra.mxu0 %v6058
    %8493 = vmatprep.subr.bf16.mxu0 0
    %8494 = vmatpush2.bf16.msra.mxu0 %v6057
    %8495 = vmatprep.subr.bf16.mxu0 0
    %8496 = vmatpush2.bf16.msra.mxu0 %v6056
    %8497 = vmatprep.subr.bf16.mxu0 0
    %8498 = vmatpush2.bf16.msra.mxu0 %v6055
    %8499 = vmatprep.subr.bf16.mxu0 0
    %8500 = vmatpush2.bf16.msra.mxu0 %v6054
    %8501 = vmatprep.subr.bf16.mxu0 0
    %8502 = vmatpush2.bf16.msra.mxu0 %v6053
    %8503 = vmatprep.subr.bf16.mxu0 0
    %8504 = vmatpush2.bf16.msra.mxu0 %v6052
    %8505 = vmatprep.subr.bf16.mxu0 0
    %8506 = vmatpush2.bf16.msra.mxu0 %v6051
    %8507 = vmatprep.mubr.bf16.mxu0 %v2101
    %8508 = vmatmul.mubr.bf16.gmra.mxu0 %v2087
    %v8509 = vpop.f32.mrf.mxu0
    %v8510 = vadd.f32 %v8470, %v8509
    %v8511 = vpop.f32.mrf.mxu0
    %v8512 = vpop.f32.mrf.mxu0
    %v8513 = vpop.f32.mrf.mxu0
    %8514 = vdwg.mxu0
    %8515 = vmatprep.subr.bf16.mxu0 0
    %8516 = vmatpush1.bf16.msra.mxu0 %v6066
    %8517 = vmatprep.subr.bf16.mxu0 0
    %8518 = vmatpush1.bf16.msra.mxu0 %v6065
    %8519 = vmatprep.subr.bf16.mxu0 0
    %8520 = vmatpush1.bf16.msra.mxu0 %v6064
    %8521 = vmatprep.subr.bf16.mxu0 0
    %8522 = vmatpush1.bf16.msra.mxu0 %v6063
    %8523 = vmatprep.subr.bf16.mxu0 0
    %8524 = vmatpush1.bf16.msra.mxu0 %v6062
    %8525 = vmatprep.subr.bf16.mxu0 0
    %8526 = vmatpush1.bf16.msra.mxu0 %v6061
    %8527 = vmatprep.subr.bf16.mxu0 0
    %8528 = vmatpush1.bf16.msra.mxu0 %v6060
    %8529 = vmatprep.subr.bf16.mxu0 0
    %8530 = vmatpush1.bf16.msra.mxu0 %v6059
    %8531 = vmatprep.subr.bf16.mxu0 0
    %8532 = vmatpush2.bf16.msra.mxu0 %v6074
    %8533 = vmatprep.subr.bf16.mxu0 0
    %8534 = vmatpush2.bf16.msra.mxu0 %v6073
    %8535 = vmatprep.subr.bf16.mxu0 0
    %8536 = vmatpush2.bf16.msra.mxu0 %v6072
    %8537 = vmatprep.subr.bf16.mxu0 0
    %8538 = vmatpush2.bf16.msra.mxu0 %v6071
    %8539 = vmatprep.subr.bf16.mxu0 0
    %8540 = vmatpush2.bf16.msra.mxu0 %v6070
    %8541 = vmatprep.subr.bf16.mxu0 0
    %8542 = vmatpush2.bf16.msra.mxu0 %v6069
    %8543 = vmatprep.subr.bf16.mxu0 0
    %8544 = vmatpush2.bf16.msra.mxu0 %v6068
    %8545 = vmatprep.subr.bf16.mxu0 0
    %8546 = vmatpush2.bf16.msra.mxu0 %v6067
    %8547 = vmatprep.mubr.bf16.mxu0 %v2111
    %8548 = vmatmul.mubr.bf16.gmra.mxu0 %v2109
    %v8549 = vpop.f32.mrf.mxu0
    %v8550 = vadd.f32 %v8510, %v8549
    %v8551 = vpop.f32.mrf.mxu0
    %v8552 = vpop.f32.mrf.mxu0
    %v8553 = vpop.f32.mrf.mxu0
    %8554 = vdwg.mxu0
    %8555 = vmatprep.subr.bf16.mxu0 0
    %8556 = vmatpush1.bf16.msra.mxu0 %v6082
    %8557 = vmatprep.subr.bf16.mxu0 0
    %8558 = vmatpush1.bf16.msra.mxu0 %v6081
    %8559 = vmatprep.subr.bf16.mxu0 0
    %8560 = vmatpush1.bf16.msra.mxu0 %v6080
    %8561 = vmatprep.subr.bf16.mxu0 0
    %8562 = vmatpush1.bf16.msra.mxu0 %v6079
    %8563 = vmatprep.subr.bf16.mxu0 0
    %8564 = vmatpush1.bf16.msra.mxu0 %v6078
    %8565 = vmatprep.subr.bf16.mxu0 0
    %8566 = vmatpush1.bf16.msra.mxu0 %v6077
    %8567 = vmatprep.subr.bf16.mxu0 0
    %8568 = vmatpush1.bf16.msra.mxu0 %v6076
    %8569 = vmatprep.subr.bf16.mxu0 0
    %8570 = vmatpush1.bf16.msra.mxu0 %v6075
    %8571 = vmatprep.subr.bf16.mxu0 0
    %8572 = vmatpush2.bf16.msra.mxu0 %v6090
    %8573 = vmatprep.subr.bf16.mxu0 0
    %8574 = vmatpush2.bf16.msra.mxu0 %v6089
    %8575 = vmatprep.subr.bf16.mxu0 0
    %8576 = vmatpush2.bf16.msra.mxu0 %v6088
    %8577 = vmatprep.subr.bf16.mxu0 0
    %8578 = vmatpush2.bf16.msra.mxu0 %v6087
    %8579 = vmatprep.subr.bf16.mxu0 0
    %8580 = vmatpush2.bf16.msra.mxu0 %v6086
    %8581 = vmatprep.subr.bf16.mxu0 0
    %8582 = vmatpush2.bf16.msra.mxu0 %v6085
    %8583 = vmatprep.subr.bf16.mxu0 0
    %8584 = vmatpush2.bf16.msra.mxu0 %v6084
    %8585 = vmatprep.subr.bf16.mxu0 0
    %8586 = vmatpush2.bf16.msra.mxu0 %v6083
    %8587 = vmatprep.mubr.bf16.mxu0 %v2108
    %8588 = vmatmul.mubr.bf16.gmra.mxu0 %v2094
    %v8589 = vpop.f32.mrf.mxu0
    %v8590 = vadd.f32 %v8550, %v8589
    %v8591 = vpop.f32.mrf.mxu0
    %v8592 = vpop.f32.mrf.mxu0
    %v8593 = vpop.f32.mrf.mxu0
    %8594 = vdwg.mxu0
    %8595 = vmatprep.subr.bf16.mxu0 0
    %8596 = vmatpush1.bf16.msra.mxu0 %v6098
    %8597 = vmatprep.subr.bf16.mxu0 0
    %8598 = vmatpush1.bf16.msra.mxu0 %v6097
    %8599 = vmatprep.subr.bf16.mxu0 0
    %8600 = vmatpush1.bf16.msra.mxu0 %v6096
    %8601 = vmatprep.subr.bf16.mxu0 0
    %8602 = vmatpush1.bf16.msra.mxu0 %v6095
    %8603 = vmatprep.subr.bf16.mxu0 0
    %8604 = vmatpush1.bf16.msra.mxu0 %v6094
    %8605 = vmatprep.subr.bf16.mxu0 0
    %8606 = vmatpush1.bf16.msra.mxu0 %v6093
    %8607 = vmatprep.subr.bf16.mxu0 0
    %8608 = vmatpush1.bf16.msra.mxu0 %v6092
    %8609 = vmatprep.subr.bf16.mxu0 0
    %8610 = vmatpush1.bf16.msra.mxu0 %v6091
    %8611 = vmatprep.subr.bf16.mxu0 0
    %8612 = vmatpush2.bf16.msra.mxu0 %v6106
    %8613 = vmatprep.subr.bf16.mxu0 0
    %8614 = vmatpush2.bf16.msra.mxu0 %v6105
    %8615 = vmatprep.subr.bf16.mxu0 0
    %8616 = vmatpush2.bf16.msra.mxu0 %v6104
    %8617 = vmatprep.subr.bf16.mxu0 0
    %8618 = vmatpush2.bf16.msra.mxu0 %v6103
    %8619 = vmatprep.subr.bf16.mxu0 0
    %8620 = vmatpush2.bf16.msra.mxu0 %v6102
    %8621 = vmatprep.subr.bf16.mxu0 0
    %8622 = vmatpush2.bf16.msra.mxu0 %v6101
    %8623 = vmatprep.subr.bf16.mxu0 0
    %8624 = vmatpush2.bf16.msra.mxu0 %v6100
    %8625 = vmatprep.subr.bf16.mxu0 0
    %8626 = vmatpush2.bf16.msra.mxu0 %v6099
    %8627 = vmatprep.mubr.bf16.mxu0 %v2112
    %8628 = vmatmul.mubr.bf16.gmra.mxu0 %v2110
    %v8629 = vpop.f32.mrf.mxu0
    %v8630 = vadd.f32 %v8590, %v8629
    %v8631 = vpop.f32.mrf.mxu0
    %v8632 = vpop.f32.mrf.mxu0
    %v8633 = vpop.f32.mrf.mxu0
    %8634 = vdwg.mxu0
    %8635 = vmatprep.subr.bf16.mxu0 0
    %8636 = vmatpush1.bf16.msra.mxu0 %v6114
    %8637 = vmatprep.subr.bf16.mxu0 0
    %8638 = vmatpush1.bf16.msra.mxu0 %v6113
    %8639 = vmatprep.subr.bf16.mxu0 0
    %8640 = vmatpush1.bf16.msra.mxu0 %v6112
    %8641 = vmatprep.subr.bf16.mxu0 0
    %8642 = vmatpush1.bf16.msra.mxu0 %v6111
    %8643 = vmatprep.subr.bf16.mxu0 0
    %8644 = vmatpush1.bf16.msra.mxu0 %v6110
    %8645 = vmatprep.subr.bf16.mxu0 0
    %8646 = vmatpush1.bf16.msra.mxu0 %v6109
    %8647 = vmatprep.subr.bf16.mxu0 0
    %8648 = vmatpush1.bf16.msra.mxu0 %v6108
    %8649 = vmatprep.subr.bf16.mxu0 0
    %8650 = vmatpush1.bf16.msra.mxu0 %v6107
    %8651 = vmatprep.subr.bf16.mxu0 0
    %8652 = vmatpush2.bf16.msra.mxu0 %v6122
    %8653 = vmatprep.subr.bf16.mxu0 0
    %8654 = vmatpush2.bf16.msra.mxu0 %v6121
    %8655 = vmatprep.subr.bf16.mxu0 0
    %8656 = vmatpush2.bf16.msra.mxu0 %v6120
    %8657 = vmatprep.subr.bf16.mxu0 0
    %8658 = vmatpush2.bf16.msra.mxu0 %v6119
    %8659 = vmatprep.subr.bf16.mxu0 0
    %8660 = vmatpush2.bf16.msra.mxu0 %v6118
    %8661 = vmatprep.subr.bf16.mxu0 0
    %8662 = vmatpush2.bf16.msra.mxu0 %v6117
    %8663 = vmatprep.subr.bf16.mxu0 0
    %8664 = vmatpush2.bf16.msra.mxu0 %v6116
    %8665 = vmatprep.subr.bf16.mxu0 0
    %8666 = vmatpush2.bf16.msra.mxu0 %v6115
    %8667 = vmatprep.mubr.bf16.mxu0 %v2150
    %8668 = vmatmul.mubr.bf16.gmra.mxu0 %v2136
    %v8669 = vpop.f32.mrf.mxu0
    %v8670 = vadd.f32 %v8630, %v8669
    %v8671 = vpop.f32.mrf.mxu0
    %v8672 = vpop.f32.mrf.mxu0
    %v8673 = vpop.f32.mrf.mxu0
    %8674 = vdwg.mxu0
    %8675 = vmatprep.subr.bf16.mxu0 0
    %8676 = vmatpush1.bf16.msra.mxu0 %v6130
    %8677 = vmatprep.subr.bf16.mxu0 0
    %8678 = vmatpush1.bf16.msra.mxu0 %v6129
    %8679 = vmatprep.subr.bf16.mxu0 0
    %8680 = vmatpush1.bf16.msra.mxu0 %v6128
    %8681 = vmatprep.subr.bf16.mxu0 0
    %8682 = vmatpush1.bf16.msra.mxu0 %v6127
    %8683 = vmatprep.subr.bf16.mxu0 0
    %8684 = vmatpush1.bf16.msra.mxu0 %v6126
    %8685 = vmatprep.subr.bf16.mxu0 0
    %8686 = vmatpush1.bf16.msra.mxu0 %v6125
    %8687 = vmatprep.subr.bf16.mxu0 0
    %8688 = vmatpush1.bf16.msra.mxu0 %v6124
    %8689 = vmatprep.subr.bf16.mxu0 0
    %8690 = vmatpush1.bf16.msra.mxu0 %v6123
    %8691 = vmatprep.subr.bf16.mxu0 0
    %8692 = vmatpush2.bf16.msra.mxu0 %v6138
    %8693 = vmatprep.subr.bf16.mxu0 0
    %8694 = vmatpush2.bf16.msra.mxu0 %v6137
    %8695 = vmatprep.subr.bf16.mxu0 0
    %8696 = vmatpush2.bf16.msra.mxu0 %v6136
    %8697 = vmatprep.subr.bf16.mxu0 0
    %8698 = vmatpush2.bf16.msra.mxu0 %v6135
    %8699 = vmatprep.subr.bf16.mxu0 0
    %8700 = vmatpush2.bf16.msra.mxu0 %v6134
    %8701 = vmatprep.subr.bf16.mxu0 0
    %8702 = vmatpush2.bf16.msra.mxu0 %v6133
    %8703 = vmatprep.subr.bf16.mxu0 0
    %8704 = vmatpush2.bf16.msra.mxu0 %v6132
    %8705 = vmatprep.subr.bf16.mxu0 0
    %8706 = vmatpush2.bf16.msra.mxu0 %v6131
    %8707 = vmatprep.mubr.bf16.mxu0 %v2160
    %8708 = vmatmul.mubr.bf16.gmra.mxu0 %v2158
    %v8709 = vpop.f32.mrf.mxu0
    %v8710 = vadd.f32 %v8670, %v8709
    %v8711 = vpop.f32.mrf.mxu0
    %v8712 = vpop.f32.mrf.mxu0
    %v8713 = vpop.f32.mrf.mxu0
    %8714 = vdwg.mxu0
    %8715 = vmatprep.subr.bf16.mxu0 0
    %8716 = vmatpush1.bf16.msra.mxu0 %v6146
    %8717 = vmatprep.subr.bf16.mxu0 0
    %8718 = vmatpush1.bf16.msra.mxu0 %v6145
    %8719 = vmatprep.subr.bf16.mxu0 0
    %8720 = vmatpush1.bf16.msra.mxu0 %v6144
    %8721 = vmatprep.subr.bf16.mxu0 0
    %8722 = vmatpush1.bf16.msra.mxu0 %v6143
    %8723 = vmatprep.subr.bf16.mxu0 0
    %8724 = vmatpush1.bf16.msra.mxu0 %v6142
    %8725 = vmatprep.subr.bf16.mxu0 0
    %8726 = vmatpush1.bf16.msra.mxu0 %v6141
    %8727 = vmatprep.subr.bf16.mxu0 0
    %8728 = vmatpush1.bf16.msra.mxu0 %v6140
    %8729 = vmatprep.subr.bf16.mxu0 0
    %8730 = vmatpush1.bf16.msra.mxu0 %v6139
    %8731 = vmatprep.subr.bf16.mxu0 0
    %8732 = vmatpush2.bf16.msra.mxu0 %v6154
    %8733 = vmatprep.subr.bf16.mxu0 0
    %8734 = vmatpush2.bf16.msra.mxu0 %v6153
    %8735 = vmatprep.subr.bf16.mxu0 0
    %8736 = vmatpush2.bf16.msra.mxu0 %v6152
    %8737 = vmatprep.subr.bf16.mxu0 0
    %8738 = vmatpush2.bf16.msra.mxu0 %v6151
    %8739 = vmatprep.subr.bf16.mxu0 0
    %8740 = vmatpush2.bf16.msra.mxu0 %v6150
    %8741 = vmatprep.subr.bf16.mxu0 0
    %8742 = vmatpush2.bf16.msra.mxu0 %v6149
    %8743 = vmatprep.subr.bf16.mxu0 0
    %8744 = vmatpush2.bf16.msra.mxu0 %v6148
    %8745 = vmatprep.subr.bf16.mxu0 0
    %8746 = vmatpush2.bf16.msra.mxu0 %v6147
    %8747 = vmatprep.mubr.bf16.mxu0 %v2157
    %8748 = vmatmul.mubr.bf16.gmra.mxu0 %v2143
    %v8749 = vpop.f32.mrf.mxu0
    %v8750 = vadd.f32 %v8710, %v8749
    %v8751 = vpop.f32.mrf.mxu0
    %v8752 = vpop.f32.mrf.mxu0
    %v8753 = vpop.f32.mrf.mxu0
    %8754 = vdwg.mxu0
    %8755 = vmatprep.subr.bf16.mxu0 0
    %8756 = vmatpush1.bf16.msra.mxu0 %v6162
    %8757 = vmatprep.subr.bf16.mxu0 0
    %8758 = vmatpush1.bf16.msra.mxu0 %v6161
    %8759 = vmatprep.subr.bf16.mxu0 0
    %8760 = vmatpush1.bf16.msra.mxu0 %v6160
    %8761 = vmatprep.subr.bf16.mxu0 0
    %8762 = vmatpush1.bf16.msra.mxu0 %v6159
    %8763 = vmatprep.subr.bf16.mxu0 0
    %8764 = vmatpush1.bf16.msra.mxu0 %v6158
    %8765 = vmatprep.subr.bf16.mxu0 0
    %8766 = vmatpush1.bf16.msra.mxu0 %v6157
    %8767 = vmatprep.subr.bf16.mxu0 0
    %8768 = vmatpush1.bf16.msra.mxu0 %v6156
    %8769 = vmatprep.subr.bf16.mxu0 0
    %8770 = vmatpush1.bf16.msra.mxu0 %v6155
    %8771 = vmatprep.subr.bf16.mxu0 0
    %8772 = vmatpush2.bf16.msra.mxu0 %v6170
    %8773 = vmatprep.subr.bf16.mxu0 0
    %8774 = vmatpush2.bf16.msra.mxu0 %v6169
    %8775 = vmatprep.subr.bf16.mxu0 0
    %8776 = vmatpush2.bf16.msra.mxu0 %v6168
    %8777 = vmatprep.subr.bf16.mxu0 0
    %8778 = vmatpush2.bf16.msra.mxu0 %v6167
    %8779 = vmatprep.subr.bf16.mxu0 0
    %8780 = vmatpush2.bf16.msra.mxu0 %v6166
    %8781 = vmatprep.subr.bf16.mxu0 0
    %8782 = vmatpush2.bf16.msra.mxu0 %v6165
    %8783 = vmatprep.subr.bf16.mxu0 0
    %8784 = vmatpush2.bf16.msra.mxu0 %v6164
    %8785 = vmatprep.subr.bf16.mxu0 0
    %8786 = vmatpush2.bf16.msra.mxu0 %v6163
    %8787 = vmatprep.mubr.bf16.mxu0 %v2161
    %8788 = vmatmul.mubr.bf16.gmra.mxu0 %v2159
    %v8789 = vpop.f32.mrf.mxu0
    %v8790 = vadd.f32 %v8750, %v8789
    %v8791 = vpop.f32.mrf.mxu0
    %v8792 = vpop.f32.mrf.mxu0
    %v8793 = vpop.f32.mrf.mxu0
    %8794 = vdwg.mxu0
    %8795 = vmatprep.subr.bf16.mxu0 0
    %8796 = vmatpush1.bf16.msra.mxu0 %v6178
    %8797 = vmatprep.subr.bf16.mxu0 0
    %8798 = vmatpush1.bf16.msra.mxu0 %v6177
    %8799 = vmatprep.subr.bf16.mxu0 0
    %8800 = vmatpush1.bf16.msra.mxu0 %v6176
    %8801 = vmatprep.subr.bf16.mxu0 0
    %8802 = vmatpush1.bf16.msra.mxu0 %v6175
    %8803 = vmatprep.subr.bf16.mxu0 0
    %8804 = vmatpush1.bf16.msra.mxu0 %v6174
    %8805 = vmatprep.subr.bf16.mxu0 0
    %8806 = vmatpush1.bf16.msra.mxu0 %v6173
    %8807 = vmatprep.subr.bf16.mxu0 0
    %8808 = vmatpush1.bf16.msra.mxu0 %v6172
    %8809 = vmatprep.subr.bf16.mxu0 0
    %8810 = vmatpush1.bf16.msra.mxu0 %v6171
    %8811 = vmatprep.subr.bf16.mxu0 0
    %8812 = vmatpush2.bf16.msra.mxu0 %v6186
    %8813 = vmatprep.subr.bf16.mxu0 0
    %8814 = vmatpush2.bf16.msra.mxu0 %v6185
    %8815 = vmatprep.subr.bf16.mxu0 0
    %8816 = vmatpush2.bf16.msra.mxu0 %v6184
    %8817 = vmatprep.subr.bf16.mxu0 0
    %8818 = vmatpush2.bf16.msra.mxu0 %v6183
    %8819 = vmatprep.subr.bf16.mxu0 0
    %8820 = vmatpush2.bf16.msra.mxu0 %v6182
    %8821 = vmatprep.subr.bf16.mxu0 0
    %8822 = vmatpush2.bf16.msra.mxu0 %v6181
    %8823 = vmatprep.subr.bf16.mxu0 0
    %8824 = vmatpush2.bf16.msra.mxu0 %v6180
    %8825 = vmatprep.subr.bf16.mxu0 0
    %8826 = vmatpush2.bf16.msra.mxu0 %v6179
    %8827 = vmatprep.mubr.bf16.mxu0 %v2199
    %8828 = vmatmul.mubr.bf16.gmra.mxu0 %v2185
    %v8829 = vpop.f32.mrf.mxu0
    %v8830 = vadd.f32 %v8790, %v8829
    %v8831 = vpop.f32.mrf.mxu0
    %v8832 = vpop.f32.mrf.mxu0
    %v8833 = vpop.f32.mrf.mxu0
    %8834 = vdwg.mxu0
    %8835 = vmatprep.subr.bf16.mxu0 0
    %8836 = vmatpush1.bf16.msra.mxu0 %v6194
    %8837 = vmatprep.subr.bf16.mxu0 0
    %8838 = vmatpush1.bf16.msra.mxu0 %v6193
    %8839 = vmatprep.subr.bf16.mxu0 0
    %8840 = vmatpush1.bf16.msra.mxu0 %v6192
    %8841 = vmatprep.subr.bf16.mxu0 0
    %8842 = vmatpush1.bf16.msra.mxu0 %v6191
    %8843 = vmatprep.subr.bf16.mxu0 0
    %8844 = vmatpush1.bf16.msra.mxu0 %v6190
    %8845 = vmatprep.subr.bf16.mxu0 0
    %8846 = vmatpush1.bf16.msra.mxu0 %v6189
    %8847 = vmatprep.subr.bf16.mxu0 0
    %8848 = vmatpush1.bf16.msra.mxu0 %v6188
    %8849 = vmatprep.subr.bf16.mxu0 0
    %8850 = vmatpush1.bf16.msra.mxu0 %v6187
    %8851 = vmatprep.subr.bf16.mxu0 0
    %8852 = vmatpush2.bf16.msra.mxu0 %v6202
    %8853 = vmatprep.subr.bf16.mxu0 0
    %8854 = vmatpush2.bf16.msra.mxu0 %v6201
    %8855 = vmatprep.subr.bf16.mxu0 0
    %8856 = vmatpush2.bf16.msra.mxu0 %v6200
    %8857 = vmatprep.subr.bf16.mxu0 0
    %8858 = vmatpush2.bf16.msra.mxu0 %v6199
    %8859 = vmatprep.subr.bf16.mxu0 0
    %8860 = vmatpush2.bf16.msra.mxu0 %v6198
    %8861 = vmatprep.subr.bf16.mxu0 0
    %8862 = vmatpush2.bf16.msra.mxu0 %v6197
    %8863 = vmatprep.subr.bf16.mxu0 0
    %8864 = vmatpush2.bf16.msra.mxu0 %v6196
    %8865 = vmatprep.subr.bf16.mxu0 0
    %8866 = vmatpush2.bf16.msra.mxu0 %v6195
    %8867 = vmatprep.mubr.bf16.mxu0 %v2209
    %8868 = vmatmul.mubr.bf16.gmra.mxu0 %v2207
    %v8869 = vpop.f32.mrf.mxu0
    %v8870 = vadd.f32 %v8830, %v8869
    %v8871 = vpop.f32.mrf.mxu0
    %v8872 = vpop.f32.mrf.mxu0
    %v8873 = vpop.f32.mrf.mxu0
    %8874 = vdwg.mxu0
    %8875 = vmatprep.subr.bf16.mxu0 0
    %8876 = vmatpush1.bf16.msra.mxu0 %v6210
    %8877 = vmatprep.subr.bf16.mxu0 0
    %8878 = vmatpush1.bf16.msra.mxu0 %v6209
    %8879 = vmatprep.subr.bf16.mxu0 0
    %8880 = vmatpush1.bf16.msra.mxu0 %v6208
    %8881 = vmatprep.subr.bf16.mxu0 0
    %8882 = vmatpush1.bf16.msra.mxu0 %v6207
    %8883 = vmatprep.subr.bf16.mxu0 0
    %8884 = vmatpush1.bf16.msra.mxu0 %v6206
    %8885 = vmatprep.subr.bf16.mxu0 0
    %8886 = vmatpush1.bf16.msra.mxu0 %v6205
    %8887 = vmatprep.subr.bf16.mxu0 0
    %8888 = vmatpush1.bf16.msra.mxu0 %v6204
    %8889 = vmatprep.subr.bf16.mxu0 0
    %8890 = vmatpush1.bf16.msra.mxu0 %v6203
    %8891 = vmatprep.subr.bf16.mxu0 0
    %8892 = vmatpush2.bf16.msra.mxu0 %v6218
    %8893 = vmatprep.subr.bf16.mxu0 0
    %8894 = vmatpush2.bf16.msra.mxu0 %v6217
    %8895 = vmatprep.subr.bf16.mxu0 0
    %8896 = vmatpush2.bf16.msra.mxu0 %v6216
    %8897 = vmatprep.subr.bf16.mxu0 0
    %8898 = vmatpush2.bf16.msra.mxu0 %v6215
    %8899 = vmatprep.subr.bf16.mxu0 0
    %8900 = vmatpush2.bf16.msra.mxu0 %v6214
    %8901 = vmatprep.subr.bf16.mxu0 0
    %8902 = vmatpush2.bf16.msra.mxu0 %v6213
    %8903 = vmatprep.subr.bf16.mxu0 0
    %8904 = vmatpush2.bf16.msra.mxu0 %v6212
    %8905 = vmatprep.subr.bf16.mxu0 0
    %8906 = vmatpush2.bf16.msra.mxu0 %v6211
    %8907 = vmatprep.mubr.bf16.mxu0 %v2206
    %8908 = vmatmul.mubr.bf16.gmra.mxu0 %v2192
    %v8909 = vpop.f32.mrf.mxu0
    %v8910 = vadd.f32 %v8870, %v8909
    %v8911 = vpop.f32.mrf.mxu0
    %v8912 = vpop.f32.mrf.mxu0
    %v8913 = vpop.f32.mrf.mxu0
    %8914 = vdwg.mxu0
    %8915 = vmatprep.subr.bf16.mxu0 0
    %8916 = vmatpush1.bf16.msra.mxu0 %v6226
    %8917 = vmatprep.subr.bf16.mxu0 0
    %8918 = vmatpush1.bf16.msra.mxu0 %v6225
    %8919 = vmatprep.subr.bf16.mxu0 0
    %8920 = vmatpush1.bf16.msra.mxu0 %v6224
    %8921 = vmatprep.subr.bf16.mxu0 0
    %8922 = vmatpush1.bf16.msra.mxu0 %v6223
    %8923 = vmatprep.subr.bf16.mxu0 0
    %8924 = vmatpush1.bf16.msra.mxu0 %v6222
    %8925 = vmatprep.subr.bf16.mxu0 0
    %8926 = vmatpush1.bf16.msra.mxu0 %v6221
    %8927 = vmatprep.subr.bf16.mxu0 0
    %8928 = vmatpush1.bf16.msra.mxu0 %v6220
    %8929 = vmatprep.subr.bf16.mxu0 0
    %8930 = vmatpush1.bf16.msra.mxu0 %v6219
    %8931 = vmatprep.subr.bf16.mxu0 0
    %8932 = vmatpush2.bf16.msra.mxu0 %v6234
    %8933 = vmatprep.subr.bf16.mxu0 0
    %8934 = vmatpush2.bf16.msra.mxu0 %v6233
    %8935 = vmatprep.subr.bf16.mxu0 0
    %8936 = vmatpush2.bf16.msra.mxu0 %v6232
    %8937 = vmatprep.subr.bf16.mxu0 0
    %8938 = vmatpush2.bf16.msra.mxu0 %v6231
    %8939 = vmatprep.subr.bf16.mxu0 0
    %8940 = vmatpush2.bf16.msra.mxu0 %v6230
    %8941 = vmatprep.subr.bf16.mxu0 0
    %8942 = vmatpush2.bf16.msra.mxu0 %v6229
    %8943 = vmatprep.subr.bf16.mxu0 0
    %8944 = vmatpush2.bf16.msra.mxu0 %v6228
    %8945 = vmatprep.subr.bf16.mxu0 0
    %8946 = vmatpush2.bf16.msra.mxu0 %v6227
    %8947 = vmatprep.mubr.bf16.mxu0 %v2210
    %8948 = vmatmul.mubr.bf16.gmra.mxu0 %v2208
    %v8949 = vpop.f32.mrf.mxu0
    %v8950 = vadd.f32 %v8910, %v8949
    %v8951 = vpop.f32.mrf.mxu0
    %v8952 = vpop.f32.mrf.mxu0
    %v8953 = vpop.f32.mrf.mxu0
    %8954 = vdwg.mxu0
    %8955 = vmatprep.subr.bf16.mxu0 0
    %8956 = vmatpush1.bf16.msra.mxu0 %v6242
    %8957 = vmatprep.subr.bf16.mxu0 0
    %8958 = vmatpush1.bf16.msra.mxu0 %v6241
    %8959 = vmatprep.subr.bf16.mxu0 0
    %8960 = vmatpush1.bf16.msra.mxu0 %v6240
    %8961 = vmatprep.subr.bf16.mxu0 0
    %8962 = vmatpush1.bf16.msra.mxu0 %v6239
    %8963 = vmatprep.subr.bf16.mxu0 0
    %8964 = vmatpush1.bf16.msra.mxu0 %v6238
    %8965 = vmatprep.subr.bf16.mxu0 0
    %8966 = vmatpush1.bf16.msra.mxu0 %v6237
    %8967 = vmatprep.subr.bf16.mxu0 0
    %8968 = vmatpush1.bf16.msra.mxu0 %v6236
    %8969 = vmatprep.subr.bf16.mxu0 0
    %8970 = vmatpush1.bf16.msra.mxu0 %v6235
    %8971 = vmatprep.subr.bf16.mxu0 0
    %8972 = vmatpush2.bf16.msra.mxu0 %v6250
    %8973 = vmatprep.subr.bf16.mxu0 0
    %8974 = vmatpush2.bf16.msra.mxu0 %v6249
    %8975 = vmatprep.subr.bf16.mxu0 0
    %8976 = vmatpush2.bf16.msra.mxu0 %v6248
    %8977 = vmatprep.subr.bf16.mxu0 0
    %8978 = vmatpush2.bf16.msra.mxu0 %v6247
    %8979 = vmatprep.subr.bf16.mxu0 0
    %8980 = vmatpush2.bf16.msra.mxu0 %v6246
    %8981 = vmatprep.subr.bf16.mxu0 0
    %8982 = vmatpush2.bf16.msra.mxu0 %v6245
    %8983 = vmatprep.subr.bf16.mxu0 0
    %8984 = vmatpush2.bf16.msra.mxu0 %v6244
    %8985 = vmatprep.subr.bf16.mxu0 0
    %8986 = vmatpush2.bf16.msra.mxu0 %v6243
    %8987 = vmatprep.mubr.bf16.mxu0 %v2232
    %8988 = vmatmul.mubr.bf16.gmra.mxu0 %v2225
    %v8989 = vpop.f32.mrf.mxu0
    %v8990 = vadd.f32 %v8950, %v8989
    %v8991 = vpop.f32.mrf.mxu0
    %v8992 = vpop.f32.mrf.mxu0
    %v8993 = vpop.f32.mrf.mxu0
    %8994 = vdwg.mxu0
    %v8995 = vld [vmem:[%s3] sm:$0xff]
    %v8996 = vld [vmem:[%s3 + $0x8] sm:$0xff]
    %v8997 = vld [vmem:[%s3 + $0x10] sm:$0xff]
    %v8998 = vld [vmem:[%s3 + $0x18] sm:$0xff]
    %v8999 = vld [vmem:[%s3 + $0x20] sm:$0xff]
    %v9000 = vld [vmem:[%s3 + $0x28] sm:$0xff]
    %v9001 = vld [vmem:[%s3 + $0x30] sm:$0xff]
    %v9002 = vld [vmem:[%s3 + $0x38] sm:$0xff]
    %v9003 = vld [vmem:[%s3 + $0x40] sm:$0xff]
    %v9004 = vld [vmem:[%s3 + $0x48] sm:$0xff]
    %v9005 = vld [vmem:[%s3 + $0x50] sm:$0xff]
    %v9006 = vld [vmem:[%s3 + $0x58] sm:$0xff]
    %v9007 = vld [vmem:[%s3 + $0x60] sm:$0xf]
    %v9008 = vld [vmem:[%s4] sm:$0x1]
    %v9010 = vlaneseq
    %v9011 = vshrl.u32 %v9010, 7
    %v9012 = vsub.s32 0, %v9011
    %v9013 = vrot.slane %v9008, %v9012
    %vm9015 = vcmask 818176
    %v9017 = vsel %vm9015, %v8990, 0
    %vm9019 = vcmask 1043456
    %v9021 = vsel %vm9019, %v9007, 0
    %9023 = vmatprep.subr.mxu0 0.0
    %9024 = vmatpush1.msra.mxu0 0.0
    %9025 = vmatprep.subr.mxu0 0.0
    %9026 = vmatpush1.msra.mxu0 0.0
    %9027 = vmatprep.subr.mxu0 0.0
    %9028 = vmatpush1.msra.mxu0 0.0
    %9029 = vmatprep.subr.mxu0 0.0
    %9030 = vmatpush1.msra.mxu0 %v9021
    %9031 = vmatprep.subr.mxu0 0.0
    %9032 = vmatpush1.msra.mxu0 %v9006
    %9033 = vmatprep.subr.mxu0 0.0
    %9034 = vmatpush1.msra.mxu0 %v9005
    %9035 = vmatprep.subr.mxu0 0.0
    %9036 = vmatpush1.msra.mxu0 %v9004
    %9037 = vmatprep.subr.mxu0 0.0
    %9038 = vmatpush1.msra.mxu0 %v9003
    %9039 = vmatprep.subr.mxu0 0.0
    %9040 = vmatpush1.msra.mxu0 %v9002
    %9041 = vmatprep.subr.mxu0 0.0
    %9042 = vmatpush1.msra.mxu0 %v9001
    %9043 = vmatprep.subr.mxu0 0.0
    %9044 = vmatpush1.msra.mxu0 %v9000
    %9045 = vmatprep.subr.mxu0 0.0
    %9046 = vmatpush1.msra.mxu0 %v8999
    %9047 = vmatprep.subr.mxu0 0.0
    %9048 = vmatpush1.msra.mxu0 %v8998
    %9049 = vmatprep.subr.mxu0 0.0
    %9050 = vmatpush1.msra.mxu0 %v8997
    %9051 = vmatprep.subr.mxu0 0.0
    %9052 = vmatpush1.msra.mxu0 %v8996
    %9053 = vmatprep.subr.mxu0 0.0
    %9054 = vmatpush1.msra.mxu0 %v8995
    %9055 = vmatprep.subr.mxu0 0.0
    %9056 = vmatpush2.msra.mxu0 0.0
    %9057 = vmatprep.subr.mxu0 0.0
    %9058 = vmatpush2.msra.mxu0 0.0
    %9059 = vmatprep.subr.mxu0 0.0
    %9060 = vmatpush2.msra.mxu0 0.0
    %9061 = vmatprep.subr.mxu0 0.0
    %9062 = vmatpush2.msra.mxu0 0.0
    %9063 = vmatprep.subr.mxu0 0.0
    %9064 = vmatpush2.msra.mxu0 0.0
    %9065 = vmatprep.subr.mxu0 0.0
    %9066 = vmatpush2.msra.mxu0 0.0
    %9067 = vmatprep.subr.mxu0 0.0
    %9068 = vmatpush2.msra.mxu0 0.0
    %9069 = vmatprep.subr.mxu0 0.0
    %9070 = vmatpush2.msra.mxu0 0.0
    %9071 = vmatprep.subr.mxu0 0.0
    %9072 = vmatpush2.msra.mxu0 0.0
    %9073 = vmatprep.subr.mxu0 0.0
    %9074 = vmatpush2.msra.mxu0 0.0
    %9075 = vmatprep.subr.mxu0 0.0
    %9076 = vmatpush2.msra.mxu0 0.0
    %9077 = vmatprep.subr.mxu0 0.0
    %9078 = vmatpush2.msra.mxu0 0.0
    %9079 = vmatprep.subr.mxu0 0.0
    %9080 = vmatpush2.msra.mxu0 0.0
    %9081 = vmatprep.subr.mxu0 0.0
    %9082 = vmatpush2.msra.mxu0 0.0
    %9083 = vmatprep.subr.mxu0 0.0
    %9084 = vmatpush2.msra.mxu0 0.0
    %9085 = vmatprep.subr.mxu0 0.0
    %9086 = vmatpush2.msra.mxu0 0.0
    %9087 = vmatprep.mubr.f32.mxu0 0.0
    %9088 = vmatmul.mubr.f32.gmra.mxu0 %v9017
    %v9089 = vpop.f32.mrf.mxu0
    %v9090 = vadd.f32 %v9013, %v9089
    %v9091 = vpop.f32.mrf.mxu0
    %9092 = vdwg.mxu0
    %vm9093 = vcmask 9216
    %9094 = vst.msk [vmem:[#allocation2] sm:$0x3] %vm9093, %v9090
    // Predicated region
    $region22: #{cnn_forward.3} parent=1 // pred_check
      _
    $region23: #{cnn_forward.3} parent=1 // pred_check_branch
      %9096 = sbr.rel (0) target = $region25
    $region24: #{cnn_forward.3} parent=1 // pred_region
      %s9098 = ssub.s32 32, 32
      %9099 = vsyncadd [#allocation3], %s9098
      %s9101 = sshll.u32 [#allocation2], 4
      %s9102 = int_to_ptr.vmem [resolvable:$true] %s9101
      %9104 = dma.vmem_to_hbm [thread:$0]  %s9102, 32, %s5, [#allocation3]
    $region25: #{cnn_forward.3} parent=1 // pred_fallthru
      _
    // Predicated region
    $region26: #{cnn_forward.3} parent=1 // pred_check
      _
    $region27: #{cnn_forward.3} parent=1 // pred_check_branch
      %9106 = sbr.rel (0) target = $region29
    $region28: #{cnn_forward.3} parent=1 // pred_region
      %9107 = dma.done [#allocation3], 32
    $region29: #{cnn_forward.3} parent=1 // pred_fallthru
      _
    %9108 = vsyncpa [#allocation3], 1

</llo_original>
